<compile_context>
chip_gen: v5e
topology: v5e:2x2
jax: 0.10.0
libtpu: 0.0.40
codegen_flags: <defaults>
</compile_context>

<pallas_src>
import jax
import jax.numpy as jnp
from jax.experimental import pallas as pl
from jax.experimental.pallas import tpu as pltpu


def _swish(x):
    return x * jax.nn.sigmoid(x)


# ----------------------------------- kernel ----------------------------------------

def _make_kernel(H, W, C, Ho, Wo, RB, matmul_dtype):
    HW = H * W
    C2 = 2 * C
    NT = H // RB          # row blocks per image
    HB = RB // 2          # pooled row pairs produced per block
    f32 = jnp.float32

    def kernel(x_ref, lat_ref,
               w1_ref, b1_ref, g1_ref, be1_ref,
               w2_ref, b2_ref, g2_ref, be2_ref,
               wd_ref, bd_ref,
               out_ref,
               pad_ref, patch_ref, conv_ref, hpad4_ref, wpad_ref):
        # ---- zero only the halo borders, once per grid step ----------------------
        # (interiors are fully overwritten before every read; borders stay zero)
        pad_ref[0:1, :, :] = jnp.zeros((1, W + 2, C), f32)
        pad_ref[H + 1:H + 2, :, :] = jnp.zeros((1, W + 2, C), f32)
        pad_ref[:, 0:1, :] = jnp.zeros((H + 2, 1, C), f32)
        pad_ref[:, W + 1:W + 2, :] = jnp.zeros((H + 2, 1, C), f32)
        hpad4_ref[0:1, 0:1, :, :] = jnp.zeros((1, 1, W, C2), f32)       # padded row 0
        hpad4_ref[Ho:Ho + 1, 1:2, :, :] = jnp.zeros((1, 1, W, C2), f32)  # padded row H+1
        wpad_ref[:, 0:1, :] = jnp.zeros((Ho, 1, C2), f32)
        wpad_ref[:, W + 1:W + 2, :] = jnp.zeros((Ho, 1, C2), f32)

        # ---- FiLM gain/bias (linears precomputed for the whole batch in wrapper) --
        lat = lat_ref[0]                                          # (1, 4C) f32
        fg1, fb1 = lat[:, 0:C], lat[:, C:2 * C]
        fg2, fb2 = lat[:, 2 * C:3 * C], lat[:, 3 * C:4 * C]

        def conv_rowblock(wmat_ref, b_row, t):
            """3x3 conv (pad 1) for output rows [t*RB, (t+1)*RB) as one im2col matmul.

            Patch layout (RB, W, 9C): every tap copy is a rank-preserving 3-D slice
            store in matmul_dtype; the reshape to (RB*W, 9C) is layout-compatible.
            """
            r = t * RB
            for kh in range(3):
                for kw in range(3):
                    tap = kh * 3 + kw
                    patch_ref[:, :, tap * C:(tap + 1) * C] = (
                        pad_ref[r + kh:r + kh + RB, kw:kw + W, :].astype(matmul_dtype))
            patches = patch_ref[...].reshape(RB * W, 9 * C)
            return jnp.dot(patches, wmat_ref[...],
                           preferred_element_type=jnp.float32) + b_row

        def norm_conv(wmat_ref, b_row, gamma, beta, f_gain, f_bias):
            """conv3x3 -> InstanceNorm2d(affine) -> FiLM -> swish -> pad_ref interior."""
            s1 = jnp.zeros((1, C), f32)
            s2 = jnp.zeros((1, C), f32)
            for t in range(NT):                      # static loop: few, short-lived iters
                blk = conv_rowblock(wmat_ref, b_row, t)           # (RB*W, C) f32
                conv_ref[t * RB * W:(t + 1) * RB * W, :] = blk
                s1 = s1 + jnp.sum(blk, axis=0, keepdims=True)     # stats fused w/ conv
                s2 = s2 + jnp.sum(blk * blk, axis=0, keepdims=True)
            mean = s1 * (1.0 / HW)
            var = s2 * (1.0 / HW) - mean * mean                   # single-pass, biased
            inv = jax.lax.rsqrt(var + 1e-5)
            scale = f_gain * gamma * inv
            shift = f_gain * (beta - gamma * mean * inv) + f_bias
            a = _swish(conv_ref[...] * scale + shift)             # (HW, C) f32
            pad_ref[1:H + 1, 1:W + 1, :] = a.reshape(H, W, C)

        # padded conv input (f32 interior; x block may arrive in bf16)
        pad_ref[1:H + 1, 1:W + 1, :] = x_ref[0].astype(f32)

        norm_conv(w1_ref, b1_ref[...], g1_ref[...], be1_ref[...], fg1, fb1)
        norm_conv(w2_ref, b2_ref[...], g2_ref[...], be2_ref[...], fg2, fb2)

        # ---- conv_downsample: write rows straight into the even/odd padded buffer --
        # hpad4[p, s] holds zero-padded conv_d row 2p+s  (p in [0,Ho], s in {0,1}).
        for t in range(NT):
            blk = conv_rowblock(wd_ref, bd_ref[...], t)           # (RB*W, 2C) f32
            b3 = blk.reshape(RB, W, C2)
            q = t * HB                                            # first padded pair idx
            hpad4_ref[q:q + 1, 1:2, :, :] = b3[0:1][None]             # padded row 2q+1
            if RB > 2:
                hpad4_ref[q + 1:q + HB, :, :, :] = (
                    b3[1:RB - 1].reshape(HB - 1, 2, W, C2))           # full pairs
            hpad4_ref[q + HB:q + HB + 1, 0:1, :, :] = b3[RB - 1:RB][None]

        # ---- AvgPool2d(3, stride 2, pad 1, count_include_pad=True), separable ------
        # vertical: pooled row i = padded rows 2i + (2i+1) + (2i+2)  (no discarded rows)
        rowp = (hpad4_ref[0:Ho, 0:1, :, :] + hpad4_ref[0:Ho, 1:2, :, :]
                + hpad4_ref[1:Ho + 1, 0:1, :, :]).reshape(Ho, W, C2)
        # horizontal: 3-tap sums over padded columns, keep even columns
        wpad_ref[:, 1:W + 1, :] = rowp
        csum = (wpad_ref[:, 0:W, :] + wpad_ref[:, 1:W + 1, :]
                + wpad_ref[:, 2:W + 2, :])                        # (Ho, W, 2C)
        pooled = csum.reshape(Ho, Wo, 2, C2)[:, :, 0, :] * (1.0 / 9.0)
        out_ref[...] = _swish(pooled)[None]                       # (1, Ho, Wo, 2C)

    return kernel


# ----------------------------------- wrapper ----------------------------------------

def cond_res_block_pallas(x_nchw, y, params, *, matmul_dtype=jnp.bfloat16, row_block=8):
    """PyTorch-style NCHW in / NCHW out; params hold HWIO conv weights (see below)."""
    B, C, H, W = x_nchw.shape
    assert H % 2 == 0 and W % 2 == 0, "this kernel assumes even spatial dims"
    RB = row_block if (H % row_block == 0) else H
    assert RB % 2 == 0 and H % RB == 0, "row block must be even and divide H"
    Ho, Wo = H // 2, W // 2
    C2 = 2 * C

    # Activations enter the kernel in the MXU operand dtype (halves the HBM->VMEM DMA
    # and the double-buffered block footprint when bf16).
    x_nhwc = jnp.transpose(x_nchw, (0, 2, 3, 1)).astype(matmul_dtype)

    # FiLM linears hoisted out of the kernel: one small XLA matmul for the batch.
    yf = y.astype(jnp.float32)
    lat1 = yf @ params['lm1_w'] + params['lm1_b']                 # (B, 2C)
    lat2 = yf @ params['lm2_w'] + params['lm2_b']                 # (B, 2C)
    lat = jnp.concatenate([lat1, lat2], axis=1)[:, None, :]       # (B, 1, 4C) f32

    def fold(w_hwio):
        # (3, 3, Cin, Cout) -> (9*Cin, Cout); row order = (kh, kw, cin) = im2col order.
        # Cast to the MXU operand dtype AFTER weight standardization.
        kh, kw, ci, co = w_hwio.shape
        return w_hwio.reshape(kh * kw * ci, co).astype(matmul_dtype)

    inputs = [
        x_nhwc, lat,
        fold(params['w1']), params['b1'], params['g1'], params['be1'],
        fold(params['w2']), params['b2'], params['g2'], params['be2'],
        fold(params['wd']), params['bd'],
    ]

    def resident(a):
        # full-array block, same block index every grid step (stays VMEM-resident)
        # TODO(synk): pipeline_mode=pl.Buffered(1) to single-buffer these constants.
        nd = a.ndim
        return pl.BlockSpec(a.shape, lambda b, _nd=nd: (0,) * _nd)

    in_specs = [pl.BlockSpec((1, H, W, C), lambda b: (b, 0, 0, 0)),
                pl.BlockSpec((1, 1, 4 * C), lambda b: (b, 0, 0))]
    in_specs += [resident(a) for a in inputs[2:]]

    scratch_defs = [
        ((H + 2, W + 2, C), jnp.float32),      # padded conv input (1-px halo)
        ((RB, W, 9 * C), matmul_dtype),        # im2col patches, one row block
        ((H * W, C), jnp.float32),             # conv1/conv2 output (for IN stats/apply)
        ((Ho + 1, 2, W, C2), jnp.float32),     # conv_d output, even/odd padded rows
        ((Ho, W + 2, C2), jnp.float32),        # row-pooled, padded columns
    ]
    scratch_shapes = [pltpu.VMEM(s, d) for s, d in scratch_defs]

    # ---- explicit scoped-VMEM budget: scratch + double-buffered I/O + weights ------
    def nbytes(shape, dt):
        n = 1
        for s in shape:
            n *= int(s)
        return n * jnp.dtype(dt).itemsize

    scratch_b = sum(nbytes(s, d) for s, d in scratch_defs)
    io_b = 2 * (nbytes((1, H, W, C), matmul_dtype)
                + nbytes((1, 1, 4 * C), jnp.float32)
                + nbytes((1, Ho, Wo, C2), jnp.float32))
    wgt_b = 2 * sum(nbytes(a.shape, a.dtype) for a in inputs[2:])
    vmem_limit = int(min(max(2 * (scratch_b + io_b + wgt_b), 32 << 20), 64 << 20))

    out_nhwc = pl.pallas_call(
        _make_kernel(H, W, C, Ho, Wo, RB, matmul_dtype),
        out_shape=jax.ShapeDtypeStruct((B, Ho, Wo, C2), jnp.float32),
        grid_spec=pltpu.PrefetchScalarGridSpec(
            num_scalar_prefetch=0,
            grid=(B,),                                    # B >= 2 keeps both v7x TCs busy
            in_specs=in_specs,
            out_specs=pl.BlockSpec((1, Ho, Wo, C2), lambda b: (b, 0, 0, 0)),
            scratch_shapes=scratch_shapes,
        ),
        compiler_params=pltpu.CompilerParams(
            dimension_semantics=("parallel",),            # batch split on v7x megacore
            vmem_limit_bytes=vmem_limit),
    )(*inputs)

    return jnp.transpose(out_nhwc, (0, 3, 1, 2))          # back to NCHW


# ----------------------------- parameter setup (glue) --------------------------------

def weight_standardize_oihw(w):
    # WSConv2d.forward: subtract mean over (I,Kh,Kw); divide by unbiased std + 1e-5
    mean = jnp.mean(w, axis=(1, 2, 3), keepdims=True)
    w = w - mean
    std = jnp.std(w.reshape(w.shape[0], -1), axis=1, ddof=1).reshape(-1, 1, 1, 1) + 1e-5
    return w / std


def make_params(key, C, K):
    ks = jax.random.split(key, 14)
    conv1_w = 0.3 * jax.random.normal(ks[0], (C, C, 3, 3), jnp.float32)
    conv1_b = 0.1 * jax.random.normal(ks[1], (C,), jnp.float32)
    conv2_w = 0.3 * jax.random.normal(ks[2], (C, C, 3, 3), jnp.float32)
    conv2_b = 0.1 * jax.random.normal(ks[3], (C,), jnp.float32)
    convd_w = 0.3 * jax.random.normal(ks[4], (2 * C, C, 3, 3), jnp.float32)
    convd_b = 0.1 * jax.random.normal(ks[5], (2 * C,), jnp.float32)
    lm1_w = 0.2 * jax.random.normal(ks[6], (2 * C, K), jnp.float32)     # PyTorch (out, in)
    lm1_b = 0.1 * jax.random.normal(ks[7], (2 * C,), jnp.float32)
    lm2_w = 0.2 * jax.random.normal(ks[8], (2 * C, K), jnp.float32)
    lm2_b = 0.1 * jax.random.normal(ks[9], (2 * C,), jnp.float32)
    g1 = 1.0 + 0.1 * jax.random.normal(ks[10], (C,), jnp.float32)
    be1 = 0.1 * jax.random.normal(ks[11], (C,), jnp.float32)
    g2 = 1.0 + 0.1 * jax.random.normal(ks[12], (C,), jnp.float32)
    be2 = 0.1 * jax.random.normal(ks[13], (C,), jnp.float32)

    def to_hwio(w_oihw):
        return jnp.transpose(w_oihw, (2, 3, 1, 0))

    return dict(
        w1=to_hwio(weight_standardize_oihw(conv1_w)), b1=conv1_b[None, :],
        w2=to_hwio(weight_standardize_oihw(conv2_w)), b2=conv2_b[None, :],
        wd=to_hwio(convd_w), bd=convd_b[None, :],
        lm1_w=jnp.transpose(lm1_w), lm1_b=lm1_b[None, :],
        lm2_w=jnp.transpose(lm2_w), lm2_b=lm2_b[None, :],
        g1=g1[None, :], be1=be1[None, :],
        g2=g2[None, :], be2=be2[None, :],
    )


# ------------------------------ pure-JAX reference -----------------------------------

def reference_forward(x_nchw, y, params, *, matmul_dtype=jnp.float32):
    """Reference with the same mixed-precision policy as the kernel:
    conv operands in matmul_dtype, f32 accumulation / norm / FiLM / pooling."""
    x = jnp.transpose(x_nchw, (0, 2, 3, 1)).astype(jnp.float32)
    C = x.shape[-1]

    def conv(xin, w_hwio, b_row):
        o = jax.lax.conv_general_dilated(
            xin.astype(matmul_dtype), w_hwio.astype(matmul_dtype),
            window_strides=(1, 1), padding=((1, 1), (1, 1)),
            dimension_numbers=('NHWC', 'HWIO', 'NHWC'),
            preferred_element_type=jnp.float32)
        return o + b_row

    def inorm(xin, g_row, be_row):
        mean = jnp.mean(xin, axis=(1, 2), keepdims=True)
        var = jnp.mean((xin - mean) ** 2, axis=(1, 2), keepdims=True)
        return (xin - mean) * jax.lax.rsqrt(var + 1e-5) * g_row + be_row

    lat1 = y @ params['lm1_w'] + params['lm1_b']
    gain1, bias1 = lat1[:, :C][:, None, None, :], lat1[:, C:][:, None, None, :]
    lat2 = y @ params['lm2_w'] + params['lm2_b']
    gain2, bias2 = lat2[:, :C][:, None, None, :], lat2[:, C:][:, None, None, :]

    h = _swish(gain1 * inorm(conv(x, params['w1'], params['b1']),
                             params['g1'], params['be1']) + bias1)
    h = _swish(gain2 * inorm(conv(h, params['w2'], params['b2']),
                             params['g2'], params['be2']) + bias2)
    h = conv(h, params['wd'], params['bd'])
    s = jax.lax.reduce_window(h, 0.0, jax.lax.add,
                              (1, 3, 3, 1), (1, 2, 2, 1),
                              padding=((0, 0), (1, 1), (1, 1), (0, 0)))
    h = _swish(s / 9.0)                     # count_include_pad=True -> always /9
    return jnp.transpose(h, (0, 3, 1, 2))


# ----------------------------------- main ---------------------------------------------

if __name__ == "__main__":
    # CondResBlock-consistent toy shapes: batch=2, filters=8, im=16x16, classes=16
    # (tune / benchmark only at production shapes, e.g. C=128, H=W=64).
    B, C, H, W, K = 2, 8, 16, 16, 16
    key = jax.random.PRNGKey(0)
    kx, ky, kp = jax.random.split(key, 3)
    x = jax.random.normal(kx, (B, C, H, W), jnp.float32)   # NCHW, like the PyTorch input
    y = jax.random.normal(ky, (B, K), jnp.float32)
    params = make_params(kp, C, K)

    # 1) exact-precision path: tight check against the pure-JAX f32 reference.
    out_f32 = jax.block_until_ready(
        cond_res_block_pallas(x, y, params, matmul_dtype=jnp.float32))
    ref_f32 = reference_forward(x, y, params, matmul_dtype=jnp.float32)
    assert out_f32.shape == (B, 2 * C, H // 2, W // 2), out_f32.shape
    if not bool(jnp.allclose(out_f32, ref_f32, atol=2e-3, rtol=2e-3)):
        max_err = float(jnp.max(jnp.abs(out_f32 - ref_f32)))
        raise AssertionError(f"f32 kernel/reference mismatch, max abs err {max_err}")

    # 2) default path (bf16 MXU operands, f32 accumulation): checked against a
    #    reference using the identical mixed-precision policy.
    out_bf16 = jax.block_until_ready(cond_res_block_pallas(x, y, params))
    ref_bf16 = reference_forward(x, y, params, matmul_dtype=jnp.bfloat16)
    assert out_bf16.shape == (B, 2 * C, H // 2, W // 2), out_bf16.shape
    if not bool(jnp.allclose(out_bf16, ref_bf16, atol=1e-2, rtol=1e-2)):
        max_err = float(jnp.max(jnp.abs(out_bf16 - ref_bf16)))
        raise AssertionError(f"bf16 kernel/reference mismatch, max abs err {max_err}")

    print("KERNEL_OK")
</pallas_src>

<mosaic_0001>
module attributes {stable_mosaic.version = 11 : i64} {
  func.func @kernel(%arg0: i32, %arg1: memref<1x16x16x8xf32, #tpu.memory_space<vmem>>, %arg2: memref<1x1x32xf32, #tpu.memory_space<vmem>>, %arg3: memref<72x8xf32, #tpu.memory_space<vmem>>, %arg4: memref<1x8xf32, #tpu.memory_space<vmem>>, %arg5: memref<1x8xf32, #tpu.memory_space<vmem>>, %arg6: memref<1x8xf32, #tpu.memory_space<vmem>>, %arg7: memref<72x8xf32, #tpu.memory_space<vmem>>, %arg8: memref<1x8xf32, #tpu.memory_space<vmem>>, %arg9: memref<1x8xf32, #tpu.memory_space<vmem>>, %arg10: memref<1x8xf32, #tpu.memory_space<vmem>>, %arg11: memref<72x16xf32, #tpu.memory_space<vmem>>, %arg12: memref<1x16xf32, #tpu.memory_space<vmem>>, %arg13: memref<1x8x8x16xf32, #tpu.memory_space<vmem>>, %arg14: memref<18x18x8xf32, #tpu.memory_space<vmem>>, %arg15: memref<8x16x72xf32, #tpu.memory_space<vmem>>, %arg16: memref<256x8xf32, #tpu.memory_space<vmem>>, %arg17: memref<9x2x16x16xf32, #tpu.memory_space<vmem>>, %arg18: memref<8x18x16xf32, #tpu.memory_space<vmem>>) attributes {dimension_semantics = [#tpu.dimension_semantics<parallel>], iteration_bounds = array<i64: 2>, scalar_prefetch = 0 : i64, scratch_operands = 5 : i64, tpu.core_type = #tpu.core_type<tc>, window_params = [{transform_indices = @transform_0, window_bounds = array<i64: 1, 16, 16, 8>}, {transform_indices = @transform_1, window_bounds = array<i64: 1, 1, 32>}, {pipeline_mode = #tpu.pipeline_mode<synchronous>, transform_indices = @transform_2, window_bounds = array<i64: 72, 8>}, {pipeline_mode = #tpu.pipeline_mode<synchronous>, transform_indices = @transform_3, window_bounds = array<i64: 1, 8>}, {pipeline_mode = #tpu.pipeline_mode<synchronous>, transform_indices = @transform_4, window_bounds = array<i64: 1, 8>}, {pipeline_mode = #tpu.pipeline_mode<synchronous>, transform_indices = @transform_5, window_bounds = array<i64: 1, 8>}, {pipeline_mode = #tpu.pipeline_mode<synchronous>, transform_indices = @transform_6, window_bounds = array<i64: 72, 8>}, {pipeline_mode = #tpu.pipeline_mode<synchronous>, transform_indices = @transform_7, window_bounds = array<i64: 1, 8>}, {pipeline_mode = #tpu.pipeline_mode<synchronous>, transform_indices = @transform_8, window_bounds = array<i64: 1, 8>}, {pipeline_mode = #tpu.pipeline_mode<synchronous>, transform_indices = @transform_9, window_bounds = array<i64: 1, 8>}, {pipeline_mode = #tpu.pipeline_mode<synchronous>, transform_indices = @transform_10, window_bounds = array<i64: 72, 16>}, {pipeline_mode = #tpu.pipeline_mode<synchronous>, transform_indices = @transform_11, window_bounds = array<i64: 1, 16>}, {transform_indices = @transform_12, window_bounds = array<i64: 1, 8, 8, 16>}]} {
    %cst = arith.constant 0.000000e+00 : f32
    %0 = vector.broadcast %cst : f32 to vector<1x18x8xf32>
    %c0 = arith.constant 0 : index
    %c0_0 = arith.constant 0 : index
    %c0_1 = arith.constant 0 : index
    %1 = vector.load %arg14[%c0, %c0_0, %c0_1] : memref<18x18x8xf32, #tpu.memory_space<vmem>>, vector<1x18x8xf32>
    tpu.vector_store %arg14[%c0, %c0_0, %c0_1], %0 {strides = array<i32>} : memref<18x18x8xf32, #tpu.memory_space<vmem>>, vector<1x18x8xf32>,
    %cst_2 = arith.constant 0.000000e+00 : f32
    %2 = vector.broadcast %cst_2 : f32 to vector<1x18x8xf32>
    %c17 = arith.constant 17 : index
    %c0_3 = arith.constant 0 : index
    %c0_4 = arith.constant 0 : index
    %3 = vector.load %arg14[%c17, %c0_3, %c0_4] : memref<18x18x8xf32, #tpu.memory_space<vmem>>, vector<1x18x8xf32>
    tpu.vector_store %arg14[%c17, %c0_3, %c0_4], %2 {strides = array<i32>} : memref<18x18x8xf32, #tpu.memory_space<vmem>>, vector<1x18x8xf32>,
    %cst_5 = arith.constant 0.000000e+00 : f32
    %4 = vector.broadcast %cst_5 : f32 to vector<18x1x8xf32>
    %c0_6 = arith.constant 0 : index
    %c0_7 = arith.constant 0 : index
    %c0_8 = arith.constant 0 : index
    %5 = vector.load %arg14[%c0_6, %c0_7, %c0_8] : memref<18x18x8xf32, #tpu.memory_space<vmem>>, vector<18x1x8xf32>
    tpu.vector_store %arg14[%c0_6, %c0_7, %c0_8], %4 {strides = array<i32>} : memref<18x18x8xf32, #tpu.memory_space<vmem>>, vector<18x1x8xf32>,
    %cst_9 = arith.constant 0.000000e+00 : f32
    %6 = vector.broadcast %cst_9 : f32 to vector<18x1x8xf32>
    %c0_10 = arith.constant 0 : index
    %c17_11 = arith.constant 17 : index
    %c0_12 = arith.constant 0 : index
    %7 = vector.load %arg14[%c0_10, %c17_11, %c0_12] : memref<18x18x8xf32, #tpu.memory_space<vmem>>, vector<18x1x8xf32>
    tpu.vector_store %arg14[%c0_10, %c17_11, %c0_12], %6 {strides = array<i32>} : memref<18x18x8xf32, #tpu.memory_space<vmem>>, vector<18x1x8xf32>,
    %cst_13 = arith.constant 0.000000e+00 : f32
    %8 = vector.broadcast %cst_13 : f32 to vector<1x1x16x16xf32>
    %c0_14 = arith.constant 0 : index
    %c0_15 = arith.constant 0 : index
    %c0_16 = arith.constant 0 : index
    %c0_17 = arith.constant 0 : index
    %9 = vector.load %arg17[%c0_14, %c0_15, %c0_16, %c0_17] : memref<9x2x16x16xf32, #tpu.memory_space<vmem>>, vector<1x1x16x16xf32>
    tpu.vector_store %arg17[%c0_14, %c0_15, %c0_16, %c0_17], %8 {strides = array<i32>} : memref<9x2x16x16xf32, #tpu.memory_space<vmem>>, vector<1x1x16x16xf32>,
    %cst_18 = arith.constant 0.000000e+00 : f32
    %10 = vector.broadcast %cst_18 : f32 to vector<1x1x16x16xf32>
    %c8 = arith.constant 8 : index
    %c1 = arith.constant 1 : index
    %c0_19 = arith.constant 0 : index
    %c0_20 = arith.constant 0 : index
    %11 = vector.load %arg17[%c8, %c1, %c0_19, %c0_20] : memref<9x2x16x16xf32, #tpu.memory_space<vmem>>, vector<1x1x16x16xf32>
    tpu.vector_store %arg17[%c8, %c1, %c0_19, %c0_20], %10 {strides = array<i32>} : memref<9x2x16x16xf32, #tpu.memory_space<vmem>>, vector<1x1x16x16xf32>,
    %cst_21 = arith.constant 0.000000e+00 : f32
    %12 = vector.broadcast %cst_21 : f32 to vector<8x1x16xf32>
    %c0_22 = arith.constant 0 : index
    %c0_23 = arith.constant 0 : index
    %c0_24 = arith.constant 0 : index
    %13 = vector.load %arg18[%c0_22, %c0_23, %c0_24] : memref<8x18x16xf32, #tpu.memory_space<vmem>>, vector<8x1x16xf32>
    tpu.vector_store %arg18[%c0_22, %c0_23, %c0_24], %12 {strides = array<i32>} : memref<8x18x16xf32, #tpu.memory_space<vmem>>, vector<8x1x16xf32>,
    %cst_25 = arith.constant 0.000000e+00 : f32
    %14 = vector.broadcast %cst_25 : f32 to vector<8x1x16xf32>
    %c0_26 = arith.constant 0 : index
    %c17_27 = arith.constant 17 : index
    %c0_28 = arith.constant 0 : index
    %15 = vector.load %arg18[%c0_26, %c17_27, %c0_28] : memref<8x18x16xf32, #tpu.memory_space<vmem>>, vector<8x1x16xf32>
    tpu.vector_store %arg18[%c0_26, %c17_27, %c0_28], %14 {strides = array<i32>} : memref<8x18x16xf32, #tpu.memory_space<vmem>>, vector<8x1x16xf32>,
    %c0_29 = arith.constant 0 : index
    %c0_30 = arith.constant 0 : index
    %c0_31 = arith.constant 0 : index
    %16 = vector.load %arg2[%c0_29, %c0_30, %c0_31] : memref<1x1x32xf32, #tpu.memory_space<vmem>>, vector<1x1x32xf32>
    %17 = vector.shape_cast %16 : vector<1x1x32xf32> to vector<1x32xf32>
    %18 = vector.extract_strided_slice %17 {offsets = [0, 0], sizes = [1, 8], strides = [1, 1]} : vector<1x32xf32> to vector<1x8xf32>
    %19 = vector.extract_strided_slice %17 {offsets = [0, 8], sizes = [1, 8], strides = [1, 1]} : vector<1x32xf32> to vector<1x8xf32>
    %20 = vector.extract_strided_slice %17 {offsets = [0, 16], sizes = [1, 8], strides = [1, 1]} : vector<1x32xf32> to vector<1x8xf32>
    %21 = vector.extract_strided_slice %17 {offsets = [0, 24], sizes = [1, 8], strides = [1, 1]} : vector<1x32xf32> to vector<1x8xf32>
    %c0_32 = arith.constant 0 : index
    %c0_33 = arith.constant 0 : index
    %c0_34 = arith.constant 0 : index
    %c0_35 = arith.constant 0 : index
    %22 = vector.load %arg1[%c0_32, %c0_33, %c0_34, %c0_35] : memref<1x16x16x8xf32, #tpu.memory_space<vmem>>, vector<1x16x16x8xf32>
    %23 = vector.shape_cast %22 : vector<1x16x16x8xf32> to vector<16x16x8xf32>
    %c1_36 = arith.constant 1 : index
    %c1_37 = arith.constant 1 : index
    %c0_38 = arith.constant 0 : index
    %24 = vector.load %arg14[%c1_36, %c1_37, %c0_38] : memref<18x18x8xf32, #tpu.memory_space<vmem>>, vector<16x16x8xf32>
    tpu.vector_store %arg14[%c1_36, %c1_37, %c0_38], %23 {strides = array<i32>} : memref<18x18x8xf32, #tpu.memory_space<vmem>>, vector<16x16x8xf32>,
    %c0_39 = arith.constant 0 : index
    %c0_40 = arith.constant 0 : index
    %25 = vector.load %arg4[%c0_39, %c0_40] : memref<1x8xf32, #tpu.memory_space<vmem>>, vector<1x8xf32>
    %c0_41 = arith.constant 0 : index
    %c0_42 = arith.constant 0 : index
    %26 = vector.load %arg5[%c0_41, %c0_42] : memref<1x8xf32, #tpu.memory_space<vmem>>, vector<1x8xf32>
    %c0_43 = arith.constant 0 : index
    %c0_44 = arith.constant 0 : index
    %27 = vector.load %arg6[%c0_43, %c0_44] : memref<1x8xf32, #tpu.memory_space<vmem>>, vector<1x8xf32>
    %cst_45 = arith.constant 0.000000e+00 : f32
    %28 = vector.broadcast %cst_45 : f32 to vector<1x8xf32>
    %cst_46 = arith.constant 0.000000e+00 : f32
    %29 = vector.broadcast %cst_46 : f32 to vector<1x8xf32>
    %c0_47 = arith.constant 0 : index
    %c0_48 = arith.constant 0 : index
    %c0_49 = arith.constant 0 : index
    %30 = vector.load %arg14[%c0_47, %c0_48, %c0_49] : memref<18x18x8xf32, #tpu.memory_space<vmem>>, vector<8x16x8xf32>
    %c0_50 = arith.constant 0 : index
    %c0_51 = arith.constant 0 : index
    %c0_52 = arith.constant 0 : index
    %31 = vector.load %arg15[%c0_50, %c0_51, %c0_52] : memref<8x16x72xf32, #tpu.memory_space<vmem>>, vector<8x16x8xf32>
    tpu.vector_store %arg15[%c0_50, %c0_51, %c0_52], %30 {strides = array<i32>} : memref<8x16x72xf32, #tpu.memory_space<vmem>>, vector<8x16x8xf32>,
    %c0_53 = arith.constant 0 : index
    %c1_54 = arith.constant 1 : index
    %c0_55 = arith.constant 0 : index
    %32 = vector.load %arg14[%c0_53, %c1_54, %c0_55] : memref<18x18x8xf32, #tpu.memory_space<vmem>>, vector<8x16x8xf32>
    %c0_56 = arith.constant 0 : index
    %c0_57 = arith.constant 0 : index
    %c8_58 = arith.constant 8 : index
    %33 = vector.load %arg15[%c0_56, %c0_57, %c8_58] : memref<8x16x72xf32, #tpu.memory_space<vmem>>, vector<8x16x8xf32>
    tpu.vector_store %arg15[%c0_56, %c0_57, %c8_58], %32 {strides = array<i32>} : memref<8x16x72xf32, #tpu.memory_space<vmem>>, vector<8x16x8xf32>,
    %c0_59 = arith.constant 0 : index
    %c2 = arith.constant 2 : index
    %c0_60 = arith.constant 0 : index
    %34 = vector.load %arg14[%c0_59, %c2, %c0_60] : memref<18x18x8xf32, #tpu.memory_space<vmem>>, vector<8x16x8xf32>
    %c0_61 = arith.constant 0 : index
    %c0_62 = arith.constant 0 : index
    %c16 = arith.constant 16 : index
    %35 = vector.load %arg15[%c0_61, %c0_62, %c16] : memref<8x16x72xf32, #tpu.memory_space<vmem>>, vector<8x16x8xf32>
    tpu.vector_store %arg15[%c0_61, %c0_62, %c16], %34 {strides = array<i32>} : memref<8x16x72xf32, #tpu.memory_space<vmem>>, vector<8x16x8xf32>,
    %c1_63 = arith.constant 1 : index
    %c0_64 = arith.constant 0 : index
    %c0_65 = arith.constant 0 : index
    %36 = vector.load %arg14[%c1_63, %c0_64, %c0_65] : memref<18x18x8xf32, #tpu.memory_space<vmem>>, vector<8x16x8xf32>
    %c0_66 = arith.constant 0 : index
    %c0_67 = arith.constant 0 : index
    %c24 = arith.constant 24 : index
    %37 = vector.load %arg15[%c0_66, %c0_67, %c24] : memref<8x16x72xf32, #tpu.memory_space<vmem>>, vector<8x16x8xf32>
    tpu.vector_store %arg15[%c0_66, %c0_67, %c24], %36 {strides = array<i32>} : memref<8x16x72xf32, #tpu.memory_space<vmem>>, vector<8x16x8xf32>,
    %c1_68 = arith.constant 1 : index
    %c1_69 = arith.constant 1 : index
    %c0_70 = arith.constant 0 : index
    %38 = vector.load %arg14[%c1_68, %c1_69, %c0_70] : memref<18x18x8xf32, #tpu.memory_space<vmem>>, vector<8x16x8xf32>
    %c0_71 = arith.constant 0 : index
    %c0_72 = arith.constant 0 : index
    %c32 = arith.constant 32 : index
    %39 = vector.load %arg15[%c0_71, %c0_72, %c32] : memref<8x16x72xf32, #tpu.memory_space<vmem>>, vector<8x16x8xf32>
    tpu.vector_store %arg15[%c0_71, %c0_72, %c32], %38 {strides = array<i32>} : memref<8x16x72xf32, #tpu.memory_space<vmem>>, vector<8x16x8xf32>,
    %c1_73 = arith.constant 1 : index
    %c2_74 = arith.constant 2 : index
    %c0_75 = arith.constant 0 : index
    %40 = vector.load %arg14[%c1_73, %c2_74, %c0_75] : memref<18x18x8xf32, #tpu.memory_space<vmem>>, vector<8x16x8xf32>
    %c0_76 = arith.constant 0 : index
    %c0_77 = arith.constant 0 : index
    %c40 = arith.constant 40 : index
    %41 = vector.load %arg15[%c0_76, %c0_77, %c40] : memref<8x16x72xf32, #tpu.memory_space<vmem>>, vector<8x16x8xf32>
    tpu.vector_store %arg15[%c0_76, %c0_77, %c40], %40 {strides = array<i32>} : memref<8x16x72xf32, #tpu.memory_space<vmem>>, vector<8x16x8xf32>,
    %c2_78 = arith.constant 2 : index
    %c0_79 = arith.constant 0 : index
    %c0_80 = arith.constant 0 : index
    %42 = vector.load %arg14[%c2_78, %c0_79, %c0_80] : memref<18x18x8xf32, #tpu.memory_space<vmem>>, vector<8x16x8xf32>
    %c0_81 = arith.constant 0 : index
    %c0_82 = arith.constant 0 : index
    %c48 = arith.constant 48 : index
    %43 = vector.load %arg15[%c0_81, %c0_82, %c48] : memref<8x16x72xf32, #tpu.memory_space<vmem>>, vector<8x16x8xf32>
    tpu.vector_store %arg15[%c0_81, %c0_82, %c48], %42 {strides = array<i32>} : memref<8x16x72xf32, #tpu.memory_space<vmem>>, vector<8x16x8xf32>,
    %c2_83 = arith.constant 2 : index
    %c1_84 = arith.constant 1 : index
    %c0_85 = arith.constant 0 : index
    %44 = vector.load %arg14[%c2_83, %c1_84, %c0_85] : memref<18x18x8xf32, #tpu.memory_space<vmem>>, vector<8x16x8xf32>
    %c0_86 = arith.constant 0 : index
    %c0_87 = arith.constant 0 : index
    %c56 = arith.constant 56 : index
    %45 = vector.load %arg15[%c0_86, %c0_87, %c56] : memref<8x16x72xf32, #tpu.memory_space<vmem>>, vector<8x16x8xf32>
    tpu.vector_store %arg15[%c0_86, %c0_87, %c56], %44 {strides = array<i32>} : memref<8x16x72xf32, #tpu.memory_space<vmem>>, vector<8x16x8xf32>,
    %c2_88 = arith.constant 2 : index
    %c2_89 = arith.constant 2 : index
    %c0_90 = arith.constant 0 : index
    %46 = vector.load %arg14[%c2_88, %c2_89, %c0_90] : memref<18x18x8xf32, #tpu.memory_space<vmem>>, vector<8x16x8xf32>
    %c0_91 = arith.constant 0 : index
    %c0_92 = arith.constant 0 : index
    %c64 = arith.constant 64 : index
    %47 = vector.load %arg15[%c0_91, %c0_92, %c64] : memref<8x16x72xf32, #tpu.memory_space<vmem>>, vector<8x16x8xf32>
    tpu.vector_store %arg15[%c0_91, %c0_92, %c64], %46 {strides = array<i32>} : memref<8x16x72xf32, #tpu.memory_space<vmem>>, vector<8x16x8xf32>,
    %c0_93 = arith.constant 0 : index
    %c0_94 = arith.constant 0 : index
    %c0_95 = arith.constant 0 : index
    %48 = vector.load %arg15[%c0_93, %c0_94, %c0_95] : memref<8x16x72xf32, #tpu.memory_space<vmem>>, vector<8x16x72xf32>
    %49 = vector.shape_cast %48 : vector<8x16x72xf32> to vector<128x72xf32>
    %c0_96 = arith.constant 0 : index
    %c0_97 = arith.constant 0 : index
    %50 = vector.load %arg3[%c0_96, %c0_97] : memref<72x8xf32, #tpu.memory_space<vmem>>, vector<72x8xf32>
    %cst_98 = arith.constant dense<0.000000e+00> : vector<128x8xf32>
    %51 = tpu.matmul %49, %50, %cst_98 {dimension_numbers = #tpu.dot_dimension_numbers<[1], [0], [0], [1], [0, 0, 1, 1], [], []>} : vector<128x72xf32>, vector<72x8xf32>, vector<128x8xf32> -> vector<128x8xf32>
    %52 = vector.broadcast %25 : vector<1x8xf32> to vector<128x8xf32>
    %53 = arith.addf %51, %52 : vector<128x8xf32>
    %c0_99 = arith.constant 0 : index
    %c0_100 = arith.constant 0 : index
    %54 = vector.load %arg16[%c0_99, %c0_100] : memref<256x8xf32, #tpu.memory_space<vmem>>, vector<128x8xf32>
    tpu.vector_store %arg16[%c0_99, %c0_100], %53 {strides = array<i32>} : memref<256x8xf32, #tpu.memory_space<vmem>>, vector<128x8xf32>,
    %cst_101 = arith.constant dense<0.000000e+00> : vector<8xf32>
    %55 = vector.multi_reduction <add>, %53, %cst_101 [0] : vector<128x8xf32> to vector<8xf32>
    %56 = vector.shape_cast %55 : vector<8xf32> to vector<1x8xf32>
    %57 = arith.addf %28, %56 : vector<1x8xf32>
    %58 = arith.mulf %53, %53 : vector<128x8xf32>
    %cst_102 = arith.constant dense<0.000000e+00> : vector<8xf32>
    %59 = vector.multi_reduction <add>, %58, %cst_102 [0] : vector<128x8xf32> to vector<8xf32>
    %60 = vector.shape_cast %59 : vector<8xf32> to vector<1x8xf32>
    %61 = arith.addf %29, %60 : vector<1x8xf32>
    %c8_103 = arith.constant 8 : index
    %c0_104 = arith.constant 0 : index
    %c0_105 = arith.constant 0 : index
    %62 = vector.load %arg14[%c8_103, %c0_104, %c0_105] : memref<18x18x8xf32, #tpu.memory_space<vmem>>, vector<8x16x8xf32>
    %c0_106 = arith.constant 0 : index
    %c0_107 = arith.constant 0 : index
    %c0_108 = arith.constant 0 : index
    %63 = vector.load %arg15[%c0_106, %c0_107, %c0_108] : memref<8x16x72xf32, #tpu.memory_space<vmem>>, vector<8x16x8xf32>
    tpu.vector_store %arg15[%c0_106, %c0_107, %c0_108], %62 {strides = array<i32>} : memref<8x16x72xf32, #tpu.memory_space<vmem>>, vector<8x16x8xf32>,
    %c8_109 = arith.constant 8 : index
    %c1_110 = arith.constant 1 : index
    %c0_111 = arith.constant 0 : index
    %64 = vector.load %arg14[%c8_109, %c1_110, %c0_111] : memref<18x18x8xf32, #tpu.memory_space<vmem>>, vector<8x16x8xf32>
    %c0_112 = arith.constant 0 : index
    %c0_113 = arith.constant 0 : index
    %c8_114 = arith.constant 8 : index
    %65 = vector.load %arg15[%c0_112, %c0_113, %c8_114] : memref<8x16x72xf32, #tpu.memory_space<vmem>>, vector<8x16x8xf32>
    tpu.vector_store %arg15[%c0_112, %c0_113, %c8_114], %64 {strides = array<i32>} : memref<8x16x72xf32, #tpu.memory_space<vmem>>, vector<8x16x8xf32>,
    %c8_115 = arith.constant 8 : index
    %c2_116 = arith.constant 2 : index
    %c0_117 = arith.constant 0 : index
    %66 = vector.load %arg14[%c8_115, %c2_116, %c0_117] : memref<18x18x8xf32, #tpu.memory_space<vmem>>, vector<8x16x8xf32>
    %c0_118 = arith.constant 0 : index
    %c0_119 = arith.constant 0 : index
    %c16_120 = arith.constant 16 : index
    %67 = vector.load %arg15[%c0_118, %c0_119, %c16_120] : memref<8x16x72xf32, #tpu.memory_space<vmem>>, vector<8x16x8xf32>
    tpu.vector_store %arg15[%c0_118, %c0_119, %c16_120], %66 {strides = array<i32>} : memref<8x16x72xf32, #tpu.memory_space<vmem>>, vector<8x16x8xf32>,
    %c9 = arith.constant 9 : index
    %c0_121 = arith.constant 0 : index
    %c0_122 = arith.constant 0 : index
    %68 = vector.load %arg14[%c9, %c0_121, %c0_122] : memref<18x18x8xf32, #tpu.memory_space<vmem>>, vector<8x16x8xf32>
    %c0_123 = arith.constant 0 : index
    %c0_124 = arith.constant 0 : index
    %c24_125 = arith.constant 24 : index
    %69 = vector.load %arg15[%c0_123, %c0_124, %c24_125] : memref<8x16x72xf32, #tpu.memory_space<vmem>>, vector<8x16x8xf32>
    tpu.vector_store %arg15[%c0_123, %c0_124, %c24_125], %68 {strides = array<i32>} : memref<8x16x72xf32, #tpu.memory_space<vmem>>, vector<8x16x8xf32>,
    %c9_126 = arith.constant 9 : index
    %c1_127 = arith.constant 1 : index
    %c0_128 = arith.constant 0 : index
    %70 = vector.load %arg14[%c9_126, %c1_127, %c0_128] : memref<18x18x8xf32, #tpu.memory_space<vmem>>, vector<8x16x8xf32>
    %c0_129 = arith.constant 0 : index
    %c0_130 = arith.constant 0 : index
    %c32_131 = arith.constant 32 : index
    %71 = vector.load %arg15[%c0_129, %c0_130, %c32_131] : memref<8x16x72xf32, #tpu.memory_space<vmem>>, vector<8x16x8xf32>
    tpu.vector_store %arg15[%c0_129, %c0_130, %c32_131], %70 {strides = array<i32>} : memref<8x16x72xf32, #tpu.memory_space<vmem>>, vector<8x16x8xf32>,
    %c9_132 = arith.constant 9 : index
    %c2_133 = arith.constant 2 : index
    %c0_134 = arith.constant 0 : index
    %72 = vector.load %arg14[%c9_132, %c2_133, %c0_134] : memref<18x18x8xf32, #tpu.memory_space<vmem>>, vector<8x16x8xf32>
    %c0_135 = arith.constant 0 : index
    %c0_136 = arith.constant 0 : index
    %c40_137 = arith.constant 40 : index
    %73 = vector.load %arg15[%c0_135, %c0_136, %c40_137] : memref<8x16x72xf32, #tpu.memory_space<vmem>>, vector<8x16x8xf32>
    tpu.vector_store %arg15[%c0_135, %c0_136, %c40_137], %72 {strides = array<i32>} : memref<8x16x72xf32, #tpu.memory_space<vmem>>, vector<8x16x8xf32>,
    %c10 = arith.constant 10 : index
    %c0_138 = arith.constant 0 : index
    %c0_139 = arith.constant 0 : index
    %74 = vector.load %arg14[%c10, %c0_138, %c0_139] : memref<18x18x8xf32, #tpu.memory_space<vmem>>, vector<8x16x8xf32>
    %c0_140 = arith.constant 0 : index
    %c0_141 = arith.constant 0 : index
    %c48_142 = arith.constant 48 : index
    %75 = vector.load %arg15[%c0_140, %c0_141, %c48_142] : memref<8x16x72xf32, #tpu.memory_space<vmem>>, vector<8x16x8xf32>
    tpu.vector_store %arg15[%c0_140, %c0_141, %c48_142], %74 {strides = array<i32>} : memref<8x16x72xf32, #tpu.memory_space<vmem>>, vector<8x16x8xf32>,
    %c10_143 = arith.constant 10 : index
    %c1_144 = arith.constant 1 : index
    %c0_145 = arith.constant 0 : index
    %76 = vector.load %arg14[%c10_143, %c1_144, %c0_145] : memref<18x18x8xf32, #tpu.memory_space<vmem>>, vector<8x16x8xf32>
    %c0_146 = arith.constant 0 : index
    %c0_147 = arith.constant 0 : index
    %c56_148 = arith.constant 56 : index
    %77 = vector.load %arg15[%c0_146, %c0_147, %c56_148] : memref<8x16x72xf32, #tpu.memory_space<vmem>>, vector<8x16x8xf32>
    tpu.vector_store %arg15[%c0_146, %c0_147, %c56_148], %76 {strides = array<i32>} : memref<8x16x72xf32, #tpu.memory_space<vmem>>, vector<8x16x8xf32>,
    %c10_149 = arith.constant 10 : index
    %c2_150 = arith.constant 2 : index
    %c0_151 = arith.constant 0 : index
    %78 = vector.load %arg14[%c10_149, %c2_150, %c0_151] : memref<18x18x8xf32, #tpu.memory_space<vmem>>, vector<8x16x8xf32>
    %c0_152 = arith.constant 0 : index
    %c0_153 = arith.constant 0 : index
    %c64_154 = arith.constant 64 : index
    %79 = vector.load %arg15[%c0_152, %c0_153, %c64_154] : memref<8x16x72xf32, #tpu.memory_space<vmem>>, vector<8x16x8xf32>
    tpu.vector_store %arg15[%c0_152, %c0_153, %c64_154], %78 {strides = array<i32>} : memref<8x16x72xf32, #tpu.memory_space<vmem>>, vector<8x16x8xf32>,
    %c0_155 = arith.constant 0 : index
    %c0_156 = arith.constant 0 : index
    %c0_157 = arith.constant 0 : index
    %80 = vector.load %arg15[%c0_155, %c0_156, %c0_157] : memref<8x16x72xf32, #tpu.memory_space<vmem>>, vector<8x16x72xf32>
    %81 = vector.shape_cast %80 : vector<8x16x72xf32> to vector<128x72xf32>
    %c0_158 = arith.constant 0 : index
    %c0_159 = arith.constant 0 : index
    %82 = vector.load %arg3[%c0_158, %c0_159] : memref<72x8xf32, #tpu.memory_space<vmem>>, vector<72x8xf32>
    %cst_160 = arith.constant dense<0.000000e+00> : vector<128x8xf32>
    %83 = tpu.matmul %81, %82, %cst_160 {dimension_numbers = #tpu.dot_dimension_numbers<[1], [0], [0], [1], [0, 0, 1, 1], [], []>} : vector<128x72xf32>, vector<72x8xf32>, vector<128x8xf32> -> vector<128x8xf32>
    %84 = vector.broadcast %25 : vector<1x8xf32> to vector<128x8xf32>
    %85 = arith.addf %83, %84 : vector<128x8xf32>
    %c128 = arith.constant 128 : index
    %c0_161 = arith.constant 0 : index
    %86 = vector.load %arg16[%c128, %c0_161] : memref<256x8xf32, #tpu.memory_space<vmem>>, vector<128x8xf32>
    tpu.vector_store %arg16[%c128, %c0_161], %85 {strides = array<i32>} : memref<256x8xf32, #tpu.memory_space<vmem>>, vector<128x8xf32>,
    %cst_162 = arith.constant dense<0.000000e+00> : vector<8xf32>
    %87 = vector.multi_reduction <add>, %85, %cst_162 [0] : vector<128x8xf32> to vector<8xf32>
    %88 = vector.shape_cast %87 : vector<8xf32> to vector<1x8xf32>
    %89 = arith.addf %57, %88 : vector<1x8xf32>
    %90 = arith.mulf %85, %85 : vector<128x8xf32>
    %cst_163 = arith.constant dense<0.000000e+00> : vector<8xf32>
    %91 = vector.multi_reduction <add>, %90, %cst_163 [0] : vector<128x8xf32> to vector<8xf32>
    %92 = vector.shape_cast %91 : vector<8xf32> to vector<1x8xf32>
    %93 = arith.addf %61, %92 : vector<1x8xf32>
    %cst_164 = arith.constant 3.906250e-03 : f32
    %94 = vector.broadcast %cst_164 : f32 to vector<1x8xf32>
    %95 = arith.mulf %89, %94 : vector<1x8xf32>
    %cst_165 = arith.constant 3.906250e-03 : f32
    %96 = vector.broadcast %cst_165 : f32 to vector<1x8xf32>
    %97 = arith.mulf %93, %96 : vector<1x8xf32>
    %98 = arith.mulf %95, %95 : vector<1x8xf32>
    %99 = arith.subf %97, %98 : vector<1x8xf32>
    %cst_166 = arith.constant 9.99999974E-6 : f32
    %100 = vector.broadcast %cst_166 : f32 to vector<1x8xf32>
    %101 = arith.addf %99, %100 : vector<1x8xf32>
    %102 = math.rsqrt %101 : vector<1x8xf32>
    %103 = arith.mulf %18, %26 : vector<1x8xf32>
    %104 = arith.mulf %103, %102 : vector<1x8xf32>
    %105 = arith.mulf %26, %95 : vector<1x8xf32>
    %106 = arith.mulf %105, %102 : vector<1x8xf32>
    %107 = arith.subf %27, %106 : vector<1x8xf32>
    %108 = arith.mulf %18, %107 : vector<1x8xf32>
    %109 = arith.addf %108, %19 : vector<1x8xf32>
    %c0_167 = arith.constant 0 : index
    %c0_168 = arith.constant 0 : index
    %110 = vector.load %arg16[%c0_167, %c0_168] : memref<256x8xf32, #tpu.memory_space<vmem>>, vector<256x8xf32>
    %111 = vector.broadcast %104 : vector<1x8xf32> to vector<256x8xf32>
    %112 = arith.mulf %110, %111 : vector<256x8xf32>
    %113 = vector.broadcast %109 : vector<1x8xf32> to vector<256x8xf32>
    %114 = arith.addf %112, %113 : vector<256x8xf32>
    %115 = arith.negf %114 : vector<256x8xf32>
    %116 = math.exp %115 : vector<256x8xf32>
    %cst_169 = arith.constant 1.000000e+00 : f32
    %117 = vector.broadcast %cst_169 : f32 to vector<256x8xf32>
    %118 = arith.addf %117, %116 : vector<256x8xf32>
    %119 = arith.divf %117, %118 : vector<256x8xf32>
    %120 = arith.mulf %114, %119 : vector<256x8xf32>
    %121 = vector.shape_cast %120 : vector<256x8xf32> to vector<16x16x8xf32>
    %c1_170 = arith.constant 1 : index
    %c1_171 = arith.constant 1 : index
    %c0_172 = arith.constant 0 : index
    %122 = vector.load %arg14[%c1_170, %c1_171, %c0_172] : memref<18x18x8xf32, #tpu.memory_space<vmem>>, vector<16x16x8xf32>
    tpu.vector_store %arg14[%c1_170, %c1_171, %c0_172], %121 {strides = array<i32>} : memref<18x18x8xf32, #tpu.memory_space<vmem>>, vector<16x16x8xf32>,
    %c0_173 = arith.constant 0 : index
    %c0_174 = arith.constant 0 : index
    %123 = vector.load %arg8[%c0_173, %c0_174] : memref<1x8xf32, #tpu.memory_space<vmem>>, vector<1x8xf32>
    %c0_175 = arith.constant 0 : index
    %c0_176 = arith.constant 0 : index
    %124 = vector.load %arg9[%c0_175, %c0_176] : memref<1x8xf32, #tpu.memory_space<vmem>>, vector<1x8xf32>
    %c0_177 = arith.constant 0 : index
    %c0_178 = arith.constant 0 : index
    %125 = vector.load %arg10[%c0_177, %c0_178] : memref<1x8xf32, #tpu.memory_space<vmem>>, vector<1x8xf32>
    %cst_179 = arith.constant 0.000000e+00 : f32
    %126 = vector.broadcast %cst_179 : f32 to vector<1x8xf32>
    %cst_180 = arith.constant 0.000000e+00 : f32
    %127 = vector.broadcast %cst_180 : f32 to vector<1x8xf32>
    %c0_181 = arith.constant 0 : index
    %c0_182 = arith.constant 0 : index
    %c0_183 = arith.constant 0 : index
    %128 = vector.load %arg14[%c0_181, %c0_182, %c0_183] : memref<18x18x8xf32, #tpu.memory_space<vmem>>, vector<8x16x8xf32>
    %c0_184 = arith.constant 0 : index
    %c0_185 = arith.constant 0 : index
    %c0_186 = arith.constant 0 : index
    %129 = vector.load %arg15[%c0_184, %c0_185, %c0_186] : memref<8x16x72xf32, #tpu.memory_space<vmem>>, vector<8x16x8xf32>
    tpu.vector_store %arg15[%c0_184, %c0_185, %c0_186], %128 {strides = array<i32>} : memref<8x16x72xf32, #tpu.memory_space<vmem>>, vector<8x16x8xf32>,
    %c0_187 = arith.constant 0 : index
    %c1_188 = arith.constant 1 : index
    %c0_189 = arith.constant 0 : index
    %130 = vector.load %arg14[%c0_187, %c1_188, %c0_189] : memref<18x18x8xf32, #tpu.memory_space<vmem>>, vector<8x16x8xf32>
    %c0_190 = arith.constant 0 : index
    %c0_191 = arith.constant 0 : index
    %c8_192 = arith.constant 8 : index
    %131 = vector.load %arg15[%c0_190, %c0_191, %c8_192] : memref<8x16x72xf32, #tpu.memory_space<vmem>>, vector<8x16x8xf32>
    tpu.vector_store %arg15[%c0_190, %c0_191, %c8_192], %130 {strides = array<i32>} : memref<8x16x72xf32, #tpu.memory_space<vmem>>, vector<8x16x8xf32>,
    %c0_193 = arith.constant 0 : index
    %c2_194 = arith.constant 2 : index
    %c0_195 = arith.constant 0 : index
    %132 = vector.load %arg14[%c0_193, %c2_194, %c0_195] : memref<18x18x8xf32, #tpu.memory_space<vmem>>, vector<8x16x8xf32>
    %c0_196 = arith.constant 0 : index
    %c0_197 = arith.constant 0 : index
    %c16_198 = arith.constant 16 : index
    %133 = vector.load %arg15[%c0_196, %c0_197, %c16_198] : memref<8x16x72xf32, #tpu.memory_space<vmem>>, vector<8x16x8xf32>
    tpu.vector_store %arg15[%c0_196, %c0_197, %c16_198], %132 {strides = array<i32>} : memref<8x16x72xf32, #tpu.memory_space<vmem>>, vector<8x16x8xf32>,
    %c1_199 = arith.constant 1 : index
    %c0_200 = arith.constant 0 : index
    %c0_201 = arith.constant 0 : index
    %134 = vector.load %arg14[%c1_199, %c0_200, %c0_201] : memref<18x18x8xf32, #tpu.memory_space<vmem>>, vector<8x16x8xf32>
    %c0_202 = arith.constant 0 : index
    %c0_203 = arith.constant 0 : index
    %c24_204 = arith.constant 24 : index
    %135 = vector.load %arg15[%c0_202, %c0_203, %c24_204] : memref<8x16x72xf32, #tpu.memory_space<vmem>>, vector<8x16x8xf32>
    tpu.vector_store %arg15[%c0_202, %c0_203, %c24_204], %134 {strides = array<i32>} : memref<8x16x72xf32, #tpu.memory_space<vmem>>, vector<8x16x8xf32>,
    %c1_205 = arith.constant 1 : index
    %c1_206 = arith.constant 1 : index
    %c0_207 = arith.constant 0 : index
    %136 = vector.load %arg14[%c1_205, %c1_206, %c0_207] : memref<18x18x8xf32, #tpu.memory_space<vmem>>, vector<8x16x8xf32>
    %c0_208 = arith.constant 0 : index
    %c0_209 = arith.constant 0 : index
    %c32_210 = arith.constant 32 : index
    %137 = vector.load %arg15[%c0_208, %c0_209, %c32_210] : memref<8x16x72xf32, #tpu.memory_space<vmem>>, vector<8x16x8xf32>
    tpu.vector_store %arg15[%c0_208, %c0_209, %c32_210], %136 {strides = array<i32>} : memref<8x16x72xf32, #tpu.memory_space<vmem>>, vector<8x16x8xf32>,
    %c1_211 = arith.constant 1 : index
    %c2_212 = arith.constant 2 : index
    %c0_213 = arith.constant 0 : index
    %138 = vector.load %arg14[%c1_211, %c2_212, %c0_213] : memref<18x18x8xf32, #tpu.memory_space<vmem>>, vector<8x16x8xf32>
    %c0_214 = arith.constant 0 : index
    %c0_215 = arith.constant 0 : index
    %c40_216 = arith.constant 40 : index
    %139 = vector.load %arg15[%c0_214, %c0_215, %c40_216] : memref<8x16x72xf32, #tpu.memory_space<vmem>>, vector<8x16x8xf32>
    tpu.vector_store %arg15[%c0_214, %c0_215, %c40_216], %138 {strides = array<i32>} : memref<8x16x72xf32, #tpu.memory_space<vmem>>, vector<8x16x8xf32>,
    %c2_217 = arith.constant 2 : index
    %c0_218 = arith.constant 0 : index
    %c0_219 = arith.constant 0 : index
    %140 = vector.load %arg14[%c2_217, %c0_218, %c0_219] : memref<18x18x8xf32, #tpu.memory_space<vmem>>, vector<8x16x8xf32>
    %c0_220 = arith.constant 0 : index
    %c0_221 = arith.constant 0 : index
    %c48_222 = arith.constant 48 : index
    %141 = vector.load %arg15[%c0_220, %c0_221, %c48_222] : memref<8x16x72xf32, #tpu.memory_space<vmem>>, vector<8x16x8xf32>
    tpu.vector_store %arg15[%c0_220, %c0_221, %c48_222], %140 {strides = array<i32>} : memref<8x16x72xf32, #tpu.memory_space<vmem>>, vector<8x16x8xf32>,
    %c2_223 = arith.constant 2 : index
    %c1_224 = arith.constant 1 : index
    %c0_225 = arith.constant 0 : index
    %142 = vector.load %arg14[%c2_223, %c1_224, %c0_225] : memref<18x18x8xf32, #tpu.memory_space<vmem>>, vector<8x16x8xf32>
    %c0_226 = arith.constant 0 : index
    %c0_227 = arith.constant 0 : index
    %c56_228 = arith.constant 56 : index
    %143 = vector.load %arg15[%c0_226, %c0_227, %c56_228] : memref<8x16x72xf32, #tpu.memory_space<vmem>>, vector<8x16x8xf32>
    tpu.vector_store %arg15[%c0_226, %c0_227, %c56_228], %142 {strides = array<i32>} : memref<8x16x72xf32, #tpu.memory_space<vmem>>, vector<8x16x8xf32>,
    %c2_229 = arith.constant 2 : index
    %c2_230 = arith.constant 2 : index
    %c0_231 = arith.constant 0 : index
    %144 = vector.load %arg14[%c2_229, %c2_230, %c0_231] : memref<18x18x8xf32, #tpu.memory_space<vmem>>, vector<8x16x8xf32>
    %c0_232 = arith.constant 0 : index
    %c0_233 = arith.constant 0 : index
    %c64_234 = arith.constant 64 : index
    %145 = vector.load %arg15[%c0_232, %c0_233, %c64_234] : memref<8x16x72xf32, #tpu.memory_space<vmem>>, vector<8x16x8xf32>
    tpu.vector_store %arg15[%c0_232, %c0_233, %c64_234], %144 {strides = array<i32>} : memref<8x16x72xf32, #tpu.memory_space<vmem>>, vector<8x16x8xf32>,
    %c0_235 = arith.constant 0 : index
    %c0_236 = arith.constant 0 : index
    %c0_237 = arith.constant 0 : index
    %146 = vector.load %arg15[%c0_235, %c0_236, %c0_237] : memref<8x16x72xf32, #tpu.memory_space<vmem>>, vector<8x16x72xf32>
    %147 = vector.shape_cast %146 : vector<8x16x72xf32> to vector<128x72xf32>
    %c0_238 = arith.constant 0 : index
    %c0_239 = arith.constant 0 : index
    %148 = vector.load %arg7[%c0_238, %c0_239] : memref<72x8xf32, #tpu.memory_space<vmem>>, vector<72x8xf32>
    %cst_240 = arith.constant dense<0.000000e+00> : vector<128x8xf32>
    %149 = tpu.matmul %147, %148, %cst_240 {dimension_numbers = #tpu.dot_dimension_numbers<[1], [0], [0], [1], [0, 0, 1, 1], [], []>} : vector<128x72xf32>, vector<72x8xf32>, vector<128x8xf32> -> vector<128x8xf32>
    %150 = vector.broadcast %123 : vector<1x8xf32> to vector<128x8xf32>
    %151 = arith.addf %149, %150 : vector<128x8xf32>
    %c0_241 = arith.constant 0 : index
    %c0_242 = arith.constant 0 : index
    %152 = vector.load %arg16[%c0_241, %c0_242] : memref<256x8xf32, #tpu.memory_space<vmem>>, vector<128x8xf32>
    tpu.vector_store %arg16[%c0_241, %c0_242], %151 {strides = array<i32>} : memref<256x8xf32, #tpu.memory_space<vmem>>, vector<128x8xf32>,
    %cst_243 = arith.constant dense<0.000000e+00> : vector<8xf32>
    %153 = vector.multi_reduction <add>, %151, %cst_243 [0] : vector<128x8xf32> to vector<8xf32>
    %154 = vector.shape_cast %153 : vector<8xf32> to vector<1x8xf32>
    %155 = arith.addf %126, %154 : vector<1x8xf32>
    %156 = arith.mulf %151, %151 : vector<128x8xf32>
    %cst_244 = arith.constant dense<0.000000e+00> : vector<8xf32>
    %157 = vector.multi_reduction <add>, %156, %cst_244 [0] : vector<128x8xf32> to vector<8xf32>
    %158 = vector.shape_cast %157 : vector<8xf32> to vector<1x8xf32>
    %159 = arith.addf %127, %158 : vector<1x8xf32>
    %c8_245 = arith.constant 8 : index
    %c0_246 = arith.constant 0 : index
    %c0_247 = arith.constant 0 : index
    %160 = vector.load %arg14[%c8_245, %c0_246, %c0_247] : memref<18x18x8xf32, #tpu.memory_space<vmem>>, vector<8x16x8xf32>
    %c0_248 = arith.constant 0 : index
    %c0_249 = arith.constant 0 : index
    %c0_250 = arith.constant 0 : index
    %161 = vector.load %arg15[%c0_248, %c0_249, %c0_250] : memref<8x16x72xf32, #tpu.memory_space<vmem>>, vector<8x16x8xf32>
    tpu.vector_store %arg15[%c0_248, %c0_249, %c0_250], %160 {strides = array<i32>} : memref<8x16x72xf32, #tpu.memory_space<vmem>>, vector<8x16x8xf32>,
    %c8_251 = arith.constant 8 : index
    %c1_252 = arith.constant 1 : index
    %c0_253 = arith.constant 0 : index
    %162 = vector.load %arg14[%c8_251, %c1_252, %c0_253] : memref<18x18x8xf32, #tpu.memory_space<vmem>>, vector<8x16x8xf32>
    %c0_254 = arith.constant 0 : index
    %c0_255 = arith.constant 0 : index
    %c8_256 = arith.constant 8 : index
    %163 = vector.load %arg15[%c0_254, %c0_255, %c8_256] : memref<8x16x72xf32, #tpu.memory_space<vmem>>, vector<8x16x8xf32>
    tpu.vector_store %arg15[%c0_254, %c0_255, %c8_256], %162 {strides = array<i32>} : memref<8x16x72xf32, #tpu.memory_space<vmem>>, vector<8x16x8xf32>,
    %c8_257 = arith.constant 8 : index
    %c2_258 = arith.constant 2 : index
    %c0_259 = arith.constant 0 : index
    %164 = vector.load %arg14[%c8_257, %c2_258, %c0_259] : memref<18x18x8xf32, #tpu.memory_space<vmem>>, vector<8x16x8xf32>
    %c0_260 = arith.constant 0 : index
    %c0_261 = arith.constant 0 : index
    %c16_262 = arith.constant 16 : index
    %165 = vector.load %arg15[%c0_260, %c0_261, %c16_262] : memref<8x16x72xf32, #tpu.memory_space<vmem>>, vector<8x16x8xf32>
    tpu.vector_store %arg15[%c0_260, %c0_261, %c16_262], %164 {strides = array<i32>} : memref<8x16x72xf32, #tpu.memory_space<vmem>>, vector<8x16x8xf32>,
    %c9_263 = arith.constant 9 : index
    %c0_264 = arith.constant 0 : index
    %c0_265 = arith.constant 0 : index
    %166 = vector.load %arg14[%c9_263, %c0_264, %c0_265] : memref<18x18x8xf32, #tpu.memory_space<vmem>>, vector<8x16x8xf32>
    %c0_266 = arith.constant 0 : index
    %c0_267 = arith.constant 0 : index
    %c24_268 = arith.constant 24 : index
    %167 = vector.load %arg15[%c0_266, %c0_267, %c24_268] : memref<8x16x72xf32, #tpu.memory_space<vmem>>, vector<8x16x8xf32>
    tpu.vector_store %arg15[%c0_266, %c0_267, %c24_268], %166 {strides = array<i32>} : memref<8x16x72xf32, #tpu.memory_space<vmem>>, vector<8x16x8xf32>,
    %c9_269 = arith.constant 9 : index
    %c1_270 = arith.constant 1 : index
    %c0_271 = arith.constant 0 : index
    %168 = vector.load %arg14[%c9_269, %c1_270, %c0_271] : memref<18x18x8xf32, #tpu.memory_space<vmem>>, vector<8x16x8xf32>
    %c0_272 = arith.constant 0 : index
    %c0_273 = arith.constant 0 : index
    %c32_274 = arith.constant 32 : index
    %169 = vector.load %arg15[%c0_272, %c0_273, %c32_274] : memref<8x16x72xf32, #tpu.memory_space<vmem>>, vector<8x16x8xf32>
    tpu.vector_store %arg15[%c0_272, %c0_273, %c32_274], %168 {strides = array<i32>} : memref<8x16x72xf32, #tpu.memory_space<vmem>>, vector<8x16x8xf32>,
    %c9_275 = arith.constant 9 : index
    %c2_276 = arith.constant 2 : index
    %c0_277 = arith.constant 0 : index
    %170 = vector.load %arg14[%c9_275, %c2_276, %c0_277] : memref<18x18x8xf32, #tpu.memory_space<vmem>>, vector<8x16x8xf32>
    %c0_278 = arith.constant 0 : index
    %c0_279 = arith.constant 0 : index
    %c40_280 = arith.constant 40 : index
    %171 = vector.load %arg15[%c0_278, %c0_279, %c40_280] : memref<8x16x72xf32, #tpu.memory_space<vmem>>, vector<8x16x8xf32>
    tpu.vector_store %arg15[%c0_278, %c0_279, %c40_280], %170 {strides = array<i32>} : memref<8x16x72xf32, #tpu.memory_space<vmem>>, vector<8x16x8xf32>,
    %c10_281 = arith.constant 10 : index
    %c0_282 = arith.constant 0 : index
    %c0_283 = arith.constant 0 : index
    %172 = vector.load %arg14[%c10_281, %c0_282, %c0_283] : memref<18x18x8xf32, #tpu.memory_space<vmem>>, vector<8x16x8xf32>
    %c0_284 = arith.constant 0 : index
    %c0_285 = arith.constant 0 : index
    %c48_286 = arith.constant 48 : index
    %173 = vector.load %arg15[%c0_284, %c0_285, %c48_286] : memref<8x16x72xf32, #tpu.memory_space<vmem>>, vector<8x16x8xf32>
    tpu.vector_store %arg15[%c0_284, %c0_285, %c48_286], %172 {strides = array<i32>} : memref<8x16x72xf32, #tpu.memory_space<vmem>>, vector<8x16x8xf32>,
    %c10_287 = arith.constant 10 : index
    %c1_288 = arith.constant 1 : index
    %c0_289 = arith.constant 0 : index
    %174 = vector.load %arg14[%c10_287, %c1_288, %c0_289] : memref<18x18x8xf32, #tpu.memory_space<vmem>>, vector<8x16x8xf32>
    %c0_290 = arith.constant 0 : index
    %c0_291 = arith.constant 0 : index
    %c56_292 = arith.constant 56 : index
    %175 = vector.load %arg15[%c0_290, %c0_291, %c56_292] : memref<8x16x72xf32, #tpu.memory_space<vmem>>, vector<8x16x8xf32>
    tpu.vector_store %arg15[%c0_290, %c0_291, %c56_292], %174 {strides = array<i32>} : memref<8x16x72xf32, #tpu.memory_space<vmem>>, vector<8x16x8xf32>,
    %c10_293 = arith.constant 10 : index
    %c2_294 = arith.constant 2 : index
    %c0_295 = arith.constant 0 : index
    %176 = vector.load %arg14[%c10_293, %c2_294, %c0_295] : memref<18x18x8xf32, #tpu.memory_space<vmem>>, vector<8x16x8xf32>
    %c0_296 = arith.constant 0 : index
    %c0_297 = arith.constant 0 : index
    %c64_298 = arith.constant 64 : index
    %177 = vector.load %arg15[%c0_296, %c0_297, %c64_298] : memref<8x16x72xf32, #tpu.memory_space<vmem>>, vector<8x16x8xf32>
    tpu.vector_store %arg15[%c0_296, %c0_297, %c64_298], %176 {strides = array<i32>} : memref<8x16x72xf32, #tpu.memory_space<vmem>>, vector<8x16x8xf32>,
    %c0_299 = arith.constant 0 : index
    %c0_300 = arith.constant 0 : index
    %c0_301 = arith.constant 0 : index
    %178 = vector.load %arg15[%c0_299, %c0_300, %c0_301] : memref<8x16x72xf32, #tpu.memory_space<vmem>>, vector<8x16x72xf32>
    %179 = vector.shape_cast %178 : vector<8x16x72xf32> to vector<128x72xf32>
    %c0_302 = arith.constant 0 : index
    %c0_303 = arith.constant 0 : index
    %180 = vector.load %arg7[%c0_302, %c0_303] : memref<72x8xf32, #tpu.memory_space<vmem>>, vector<72x8xf32>
    %cst_304 = arith.constant dense<0.000000e+00> : vector<128x8xf32>
    %181 = tpu.matmul %179, %180, %cst_304 {dimension_numbers = #tpu.dot_dimension_numbers<[1], [0], [0], [1], [0, 0, 1, 1], [], []>} : vector<128x72xf32>, vector<72x8xf32>, vector<128x8xf32> -> vector<128x8xf32>
    %182 = vector.broadcast %123 : vector<1x8xf32> to vector<128x8xf32>
    %183 = arith.addf %181, %182 : vector<128x8xf32>
    %c128_305 = arith.constant 128 : index
    %c0_306 = arith.constant 0 : index
    %184 = vector.load %arg16[%c128_305, %c0_306] : memref<256x8xf32, #tpu.memory_space<vmem>>, vector<128x8xf32>
    tpu.vector_store %arg16[%c128_305, %c0_306], %183 {strides = array<i32>} : memref<256x8xf32, #tpu.memory_space<vmem>>, vector<128x8xf32>,
    %cst_307 = arith.constant dense<0.000000e+00> : vector<8xf32>
    %185 = vector.multi_reduction <add>, %183, %cst_307 [0] : vector<128x8xf32> to vector<8xf32>
    %186 = vector.shape_cast %185 : vector<8xf32> to vector<1x8xf32>
    %187 = arith.addf %155, %186 : vector<1x8xf32>
    %188 = arith.mulf %183, %183 : vector<128x8xf32>
    %cst_308 = arith.constant dense<0.000000e+00> : vector<8xf32>
    %189 = vector.multi_reduction <add>, %188, %cst_308 [0] : vector<128x8xf32> to vector<8xf32>
    %190 = vector.shape_cast %189 : vector<8xf32> to vector<1x8xf32>
    %191 = arith.addf %159, %190 : vector<1x8xf32>
    %cst_309 = arith.constant 3.906250e-03 : f32
    %192 = vector.broadcast %cst_309 : f32 to vector<1x8xf32>
    %193 = arith.mulf %187, %192 : vector<1x8xf32>
    %cst_310 = arith.constant 3.906250e-03 : f32
    %194 = vector.broadcast %cst_310 : f32 to vector<1x8xf32>
    %195 = arith.mulf %191, %194 : vector<1x8xf32>
    %196 = arith.mulf %193, %193 : vector<1x8xf32>
    %197 = arith.subf %195, %196 : vector<1x8xf32>
    %cst_311 = arith.constant 9.99999974E-6 : f32
    %198 = vector.broadcast %cst_311 : f32 to vector<1x8xf32>
    %199 = arith.addf %197, %198 : vector<1x8xf32>
    %200 = math.rsqrt %199 : vector<1x8xf32>
    %201 = arith.mulf %20, %124 : vector<1x8xf32>
    %202 = arith.mulf %201, %200 : vector<1x8xf32>
    %203 = arith.mulf %124, %193 : vector<1x8xf32>
    %204 = arith.mulf %203, %200 : vector<1x8xf32>
    %205 = arith.subf %125, %204 : vector<1x8xf32>
    %206 = arith.mulf %20, %205 : vector<1x8xf32>
    %207 = arith.addf %206, %21 : vector<1x8xf32>
    %c0_312 = arith.constant 0 : index
    %c0_313 = arith.constant 0 : index
    %208 = vector.load %arg16[%c0_312, %c0_313] : memref<256x8xf32, #tpu.memory_space<vmem>>, vector<256x8xf32>
    %209 = vector.broadcast %202 : vector<1x8xf32> to vector<256x8xf32>
    %210 = arith.mulf %208, %209 : vector<256x8xf32>
    %211 = vector.broadcast %207 : vector<1x8xf32> to vector<256x8xf32>
    %212 = arith.addf %210, %211 : vector<256x8xf32>
    %213 = arith.negf %212 : vector<256x8xf32>
    %214 = math.exp %213 : vector<256x8xf32>
    %cst_314 = arith.constant 1.000000e+00 : f32
    %215 = vector.broadcast %cst_314 : f32 to vector<256x8xf32>
    %216 = arith.addf %215, %214 : vector<256x8xf32>
    %217 = arith.divf %215, %216 : vector<256x8xf32>
    %218 = arith.mulf %212, %217 : vector<256x8xf32>
    %219 = vector.shape_cast %218 : vector<256x8xf32> to vector<16x16x8xf32>
    %c1_315 = arith.constant 1 : index
    %c1_316 = arith.constant 1 : index
    %c0_317 = arith.constant 0 : index
    %220 = vector.load %arg14[%c1_315, %c1_316, %c0_317] : memref<18x18x8xf32, #tpu.memory_space<vmem>>, vector<16x16x8xf32>
    tpu.vector_store %arg14[%c1_315, %c1_316, %c0_317], %219 {strides = array<i32>} : memref<18x18x8xf32, #tpu.memory_space<vmem>>, vector<16x16x8xf32>,
    %c0_318 = arith.constant 0 : index
    %c0_319 = arith.constant 0 : index
    %221 = vector.load %arg12[%c0_318, %c0_319] : memref<1x16xf32, #tpu.memory_space<vmem>>, vector<1x16xf32>
    %c0_320 = arith.constant 0 : index
    %c0_321 = arith.constant 0 : index
    %c0_322 = arith.constant 0 : index
    %222 = vector.load %arg14[%c0_320, %c0_321, %c0_322] : memref<18x18x8xf32, #tpu.memory_space<vmem>>, vector<8x16x8xf32>
    %c0_323 = arith.constant 0 : index
    %c0_324 = arith.constant 0 : index
    %c0_325 = arith.constant 0 : index
    %223 = vector.load %arg15[%c0_323, %c0_324, %c0_325] : memref<8x16x72xf32, #tpu.memory_space<vmem>>, vector<8x16x8xf32>
    tpu.vector_store %arg15[%c0_323, %c0_324, %c0_325], %222 {strides = array<i32>} : memref<8x16x72xf32, #tpu.memory_space<vmem>>, vector<8x16x8xf32>,
    %c0_326 = arith.constant 0 : index
    %c1_327 = arith.constant 1 : index
    %c0_328 = arith.constant 0 : index
    %224 = vector.load %arg14[%c0_326, %c1_327, %c0_328] : memref<18x18x8xf32, #tpu.memory_space<vmem>>, vector<8x16x8xf32>
    %c0_329 = arith.constant 0 : index
    %c0_330 = arith.constant 0 : index
    %c8_331 = arith.constant 8 : index
    %225 = vector.load %arg15[%c0_329, %c0_330, %c8_331] : memref<8x16x72xf32, #tpu.memory_space<vmem>>, vector<8x16x8xf32>
    tpu.vector_store %arg15[%c0_329, %c0_330, %c8_331], %224 {strides = array<i32>} : memref<8x16x72xf32, #tpu.memory_space<vmem>>, vector<8x16x8xf32>,
    %c0_332 = arith.constant 0 : index
    %c2_333 = arith.constant 2 : index
    %c0_334 = arith.constant 0 : index
    %226 = vector.load %arg14[%c0_332, %c2_333, %c0_334] : memref<18x18x8xf32, #tpu.memory_space<vmem>>, vector<8x16x8xf32>
    %c0_335 = arith.constant 0 : index
    %c0_336 = arith.constant 0 : index
    %c16_337 = arith.constant 16 : index
    %227 = vector.load %arg15[%c0_335, %c0_336, %c16_337] : memref<8x16x72xf32, #tpu.memory_space<vmem>>, vector<8x16x8xf32>
    tpu.vector_store %arg15[%c0_335, %c0_336, %c16_337], %226 {strides = array<i32>} : memref<8x16x72xf32, #tpu.memory_space<vmem>>, vector<8x16x8xf32>,
    %c1_338 = arith.constant 1 : index
    %c0_339 = arith.constant 0 : index
    %c0_340 = arith.constant 0 : index
    %228 = vector.load %arg14[%c1_338, %c0_339, %c0_340] : memref<18x18x8xf32, #tpu.memory_space<vmem>>, vector<8x16x8xf32>
    %c0_341 = arith.constant 0 : index
    %c0_342 = arith.constant 0 : index
    %c24_343 = arith.constant 24 : index
    %229 = vector.load %arg15[%c0_341, %c0_342, %c24_343] : memref<8x16x72xf32, #tpu.memory_space<vmem>>, vector<8x16x8xf32>
    tpu.vector_store %arg15[%c0_341, %c0_342, %c24_343], %228 {strides = array<i32>} : memref<8x16x72xf32, #tpu.memory_space<vmem>>, vector<8x16x8xf32>,
    %c1_344 = arith.constant 1 : index
    %c1_345 = arith.constant 1 : index
    %c0_346 = arith.constant 0 : index
    %230 = vector.load %arg14[%c1_344, %c1_345, %c0_346] : memref<18x18x8xf32, #tpu.memory_space<vmem>>, vector<8x16x8xf32>
    %c0_347 = arith.constant 0 : index
    %c0_348 = arith.constant 0 : index
    %c32_349 = arith.constant 32 : index
    %231 = vector.load %arg15[%c0_347, %c0_348, %c32_349] : memref<8x16x72xf32, #tpu.memory_space<vmem>>, vector<8x16x8xf32>
    tpu.vector_store %arg15[%c0_347, %c0_348, %c32_349], %230 {strides = array<i32>} : memref<8x16x72xf32, #tpu.memory_space<vmem>>, vector<8x16x8xf32>,
    %c1_350 = arith.constant 1 : index
    %c2_351 = arith.constant 2 : index
    %c0_352 = arith.constant 0 : index
    %232 = vector.load %arg14[%c1_350, %c2_351, %c0_352] : memref<18x18x8xf32, #tpu.memory_space<vmem>>, vector<8x16x8xf32>
    %c0_353 = arith.constant 0 : index
    %c0_354 = arith.constant 0 : index
    %c40_355 = arith.constant 40 : index
    %233 = vector.load %arg15[%c0_353, %c0_354, %c40_355] : memref<8x16x72xf32, #tpu.memory_space<vmem>>, vector<8x16x8xf32>
    tpu.vector_store %arg15[%c0_353, %c0_354, %c40_355], %232 {strides = array<i32>} : memref<8x16x72xf32, #tpu.memory_space<vmem>>, vector<8x16x8xf32>,
    %c2_356 = arith.constant 2 : index
    %c0_357 = arith.constant 0 : index
    %c0_358 = arith.constant 0 : index
    %234 = vector.load %arg14[%c2_356, %c0_357, %c0_358] : memref<18x18x8xf32, #tpu.memory_space<vmem>>, vector<8x16x8xf32>
    %c0_359 = arith.constant 0 : index
    %c0_360 = arith.constant 0 : index
    %c48_361 = arith.constant 48 : index
    %235 = vector.load %arg15[%c0_359, %c0_360, %c48_361] : memref<8x16x72xf32, #tpu.memory_space<vmem>>, vector<8x16x8xf32>
    tpu.vector_store %arg15[%c0_359, %c0_360, %c48_361], %234 {strides = array<i32>} : memref<8x16x72xf32, #tpu.memory_space<vmem>>, vector<8x16x8xf32>,
    %c2_362 = arith.constant 2 : index
    %c1_363 = arith.constant 1 : index
    %c0_364 = arith.constant 0 : index
    %236 = vector.load %arg14[%c2_362, %c1_363, %c0_364] : memref<18x18x8xf32, #tpu.memory_space<vmem>>, vector<8x16x8xf32>
    %c0_365 = arith.constant 0 : index
    %c0_366 = arith.constant 0 : index
    %c56_367 = arith.constant 56 : index
    %237 = vector.load %arg15[%c0_365, %c0_366, %c56_367] : memref<8x16x72xf32, #tpu.memory_space<vmem>>, vector<8x16x8xf32>
    tpu.vector_store %arg15[%c0_365, %c0_366, %c56_367], %236 {strides = array<i32>} : memref<8x16x72xf32, #tpu.memory_space<vmem>>, vector<8x16x8xf32>,
    %c2_368 = arith.constant 2 : index
    %c2_369 = arith.constant 2 : index
    %c0_370 = arith.constant 0 : index
    %238 = vector.load %arg14[%c2_368, %c2_369, %c0_370] : memref<18x18x8xf32, #tpu.memory_space<vmem>>, vector<8x16x8xf32>
    %c0_371 = arith.constant 0 : index
    %c0_372 = arith.constant 0 : index
    %c64_373 = arith.constant 64 : index
    %239 = vector.load %arg15[%c0_371, %c0_372, %c64_373] : memref<8x16x72xf32, #tpu.memory_space<vmem>>, vector<8x16x8xf32>
    tpu.vector_store %arg15[%c0_371, %c0_372, %c64_373], %238 {strides = array<i32>} : memref<8x16x72xf32, #tpu.memory_space<vmem>>, vector<8x16x8xf32>,
    %c0_374 = arith.constant 0 : index
    %c0_375 = arith.constant 0 : index
    %c0_376 = arith.constant 0 : index
    %240 = vector.load %arg15[%c0_374, %c0_375, %c0_376] : memref<8x16x72xf32, #tpu.memory_space<vmem>>, vector<8x16x72xf32>
    %241 = vector.shape_cast %240 : vector<8x16x72xf32> to vector<128x72xf32>
    %c0_377 = arith.constant 0 : index
    %c0_378 = arith.constant 0 : index
    %242 = vector.load %arg11[%c0_377, %c0_378] : memref<72x16xf32, #tpu.memory_space<vmem>>, vector<72x16xf32>
    %cst_379 = arith.constant dense<0.000000e+00> : vector<128x16xf32>
    %243 = tpu.matmul %241, %242, %cst_379 {dimension_numbers = #tpu.dot_dimension_numbers<[1], [0], [0], [1], [0, 0, 1, 1], [], []>} : vector<128x72xf32>, vector<72x16xf32>, vector<128x16xf32> -> vector<128x16xf32>
    %244 = vector.broadcast %221 : vector<1x16xf32> to vector<128x16xf32>
    %245 = arith.addf %243, %244 : vector<128x16xf32>
    %246 = vector.shape_cast %245 : vector<128x16xf32> to vector<8x16x16xf32>
    %247 = vector.extract_strided_slice %246 {offsets = [0, 0, 0], sizes = [1, 16, 16], strides = [1, 1, 1]} : vector<8x16x16xf32> to vector<1x16x16xf32>
    %248 = vector.shape_cast %247 : vector<1x16x16xf32> to vector<1x1x16x16xf32>
    %c0_380 = arith.constant 0 : index
    %c1_381 = arith.constant 1 : index
    %c0_382 = arith.constant 0 : index
    %c0_383 = arith.constant 0 : index
    %249 = vector.load %arg17[%c0_380, %c1_381, %c0_382, %c0_383] : memref<9x2x16x16xf32, #tpu.memory_space<vmem>>, vector<1x1x16x16xf32>
    tpu.vector_store %arg17[%c0_380, %c1_381, %c0_382, %c0_383], %248 {strides = array<i32>} : memref<9x2x16x16xf32, #tpu.memory_space<vmem>>, vector<1x1x16x16xf32>,
    %250 = vector.extract_strided_slice %246 {offsets = [1, 0, 0], sizes = [6, 16, 16], strides = [1, 1, 1]} : vector<8x16x16xf32> to vector<6x16x16xf32>
    %251 = vector.shape_cast %250 : vector<6x16x16xf32> to vector<3x2x16x16xf32>
    %c1_384 = arith.constant 1 : index
    %c0_385 = arith.constant 0 : index
    %c0_386 = arith.constant 0 : index
    %c0_387 = arith.constant 0 : index
    %252 = vector.load %arg17[%c1_384, %c0_385, %c0_386, %c0_387] : memref<9x2x16x16xf32, #tpu.memory_space<vmem>>, vector<3x2x16x16xf32>
    tpu.vector_store %arg17[%c1_384, %c0_385, %c0_386, %c0_387], %251 {strides = array<i32>} : memref<9x2x16x16xf32, #tpu.memory_space<vmem>>, vector<3x2x16x16xf32>,
    %253 = vector.extract_strided_slice %246 {offsets = [7, 0, 0], sizes = [1, 16, 16], strides = [1, 1, 1]} : vector<8x16x16xf32> to vector<1x16x16xf32>
    %254 = vector.shape_cast %253 : vector<1x16x16xf32> to vector<1x1x16x16xf32>
    %c4 = arith.constant 4 : index
    %c0_388 = arith.constant 0 : index
    %c0_389 = arith.constant 0 : index
    %c0_390 = arith.constant 0 : index
    %255 = vector.load %arg17[%c4, %c0_388, %c0_389, %c0_390] : memref<9x2x16x16xf32, #tpu.memory_space<vmem>>, vector<1x1x16x16xf32>
    tpu.vector_store %arg17[%c4, %c0_388, %c0_389, %c0_390], %254 {strides = array<i32>} : memref<9x2x16x16xf32, #tpu.memory_space<vmem>>, vector<1x1x16x16xf32>,
    %c0_391 = arith.constant 0 : index
    %c0_392 = arith.constant 0 : index
    %256 = vector.load %arg12[%c0_391, %c0_392] : memref<1x16xf32, #tpu.memory_space<vmem>>, vector<1x16xf32>
    %c8_393 = arith.constant 8 : index
    %c0_394 = arith.constant 0 : index
    %c0_395 = arith.constant 0 : index
    %257 = vector.load %arg14[%c8_393, %c0_394, %c0_395] : memref<18x18x8xf32, #tpu.memory_space<vmem>>, vector<8x16x8xf32>
    %c0_396 = arith.constant 0 : index
    %c0_397 = arith.constant 0 : index
    %c0_398 = arith.constant 0 : index
    %258 = vector.load %arg15[%c0_396, %c0_397, %c0_398] : memref<8x16x72xf32, #tpu.memory_space<vmem>>, vector<8x16x8xf32>
    tpu.vector_store %arg15[%c0_396, %c0_397, %c0_398], %257 {strides = array<i32>} : memref<8x16x72xf32, #tpu.memory_space<vmem>>, vector<8x16x8xf32>,
    %c8_399 = arith.constant 8 : index
    %c1_400 = arith.constant 1 : index
    %c0_401 = arith.constant 0 : index
    %259 = vector.load %arg14[%c8_399, %c1_400, %c0_401] : memref<18x18x8xf32, #tpu.memory_space<vmem>>, vector<8x16x8xf32>
    %c0_402 = arith.constant 0 : index
    %c0_403 = arith.constant 0 : index
    %c8_404 = arith.constant 8 : index
    %260 = vector.load %arg15[%c0_402, %c0_403, %c8_404] : memref<8x16x72xf32, #tpu.memory_space<vmem>>, vector<8x16x8xf32>
    tpu.vector_store %arg15[%c0_402, %c0_403, %c8_404], %259 {strides = array<i32>} : memref<8x16x72xf32, #tpu.memory_space<vmem>>, vector<8x16x8xf32>,
    %c8_405 = arith.constant 8 : index
    %c2_406 = arith.constant 2 : index
    %c0_407 = arith.constant 0 : index
    %261 = vector.load %arg14[%c8_405, %c2_406, %c0_407] : memref<18x18x8xf32, #tpu.memory_space<vmem>>, vector<8x16x8xf32>
    %c0_408 = arith.constant 0 : index
    %c0_409 = arith.constant 0 : index
    %c16_410 = arith.constant 16 : index
    %262 = vector.load %arg15[%c0_408, %c0_409, %c16_410] : memref<8x16x72xf32, #tpu.memory_space<vmem>>, vector<8x16x8xf32>
    tpu.vector_store %arg15[%c0_408, %c0_409, %c16_410], %261 {strides = array<i32>} : memref<8x16x72xf32, #tpu.memory_space<vmem>>, vector<8x16x8xf32>,
    %c9_411 = arith.constant 9 : index
    %c0_412 = arith.constant 0 : index
    %c0_413 = arith.constant 0 : index
    %263 = vector.load %arg14[%c9_411, %c0_412, %c0_413] : memref<18x18x8xf32, #tpu.memory_space<vmem>>, vector<8x16x8xf32>
    %c0_414 = arith.constant 0 : index
    %c0_415 = arith.constant 0 : index
    %c24_416 = arith.constant 24 : index
    %264 = vector.load %arg15[%c0_414, %c0_415, %c24_416] : memref<8x16x72xf32, #tpu.memory_space<vmem>>, vector<8x16x8xf32>
    tpu.vector_store %arg15[%c0_414, %c0_415, %c24_416], %263 {strides = array<i32>} : memref<8x16x72xf32, #tpu.memory_space<vmem>>, vector<8x16x8xf32>,
    %c9_417 = arith.constant 9 : index
    %c1_418 = arith.constant 1 : index
    %c0_419 = arith.constant 0 : index
    %265 = vector.load %arg14[%c9_417, %c1_418, %c0_419] : memref<18x18x8xf32, #tpu.memory_space<vmem>>, vector<8x16x8xf32>
    %c0_420 = arith.constant 0 : index
    %c0_421 = arith.constant 0 : index
    %c32_422 = arith.constant 32 : index
    %266 = vector.load %arg15[%c0_420, %c0_421, %c32_422] : memref<8x16x72xf32, #tpu.memory_space<vmem>>, vector<8x16x8xf32>
    tpu.vector_store %arg15[%c0_420, %c0_421, %c32_422], %265 {strides = array<i32>} : memref<8x16x72xf32, #tpu.memory_space<vmem>>, vector<8x16x8xf32>,
    %c9_423 = arith.constant 9 : index
    %c2_424 = arith.constant 2 : index
    %c0_425 = arith.constant 0 : index
    %267 = vector.load %arg14[%c9_423, %c2_424, %c0_425] : memref<18x18x8xf32, #tpu.memory_space<vmem>>, vector<8x16x8xf32>
    %c0_426 = arith.constant 0 : index
    %c0_427 = arith.constant 0 : index
    %c40_428 = arith.constant 40 : index
    %268 = vector.load %arg15[%c0_426, %c0_427, %c40_428] : memref<8x16x72xf32, #tpu.memory_space<vmem>>, vector<8x16x8xf32>
    tpu.vector_store %arg15[%c0_426, %c0_427, %c40_428], %267 {strides = array<i32>} : memref<8x16x72xf32, #tpu.memory_space<vmem>>, vector<8x16x8xf32>,
    %c10_429 = arith.constant 10 : index
    %c0_430 = arith.constant 0 : index
    %c0_431 = arith.constant 0 : index
    %269 = vector.load %arg14[%c10_429, %c0_430, %c0_431] : memref<18x18x8xf32, #tpu.memory_space<vmem>>, vector<8x16x8xf32>
    %c0_432 = arith.constant 0 : index
    %c0_433 = arith.constant 0 : index
    %c48_434 = arith.constant 48 : index
    %270 = vector.load %arg15[%c0_432, %c0_433, %c48_434] : memref<8x16x72xf32, #tpu.memory_space<vmem>>, vector<8x16x8xf32>
    tpu.vector_store %arg15[%c0_432, %c0_433, %c48_434], %269 {strides = array<i32>} : memref<8x16x72xf32, #tpu.memory_space<vmem>>, vector<8x16x8xf32>,
    %c10_435 = arith.constant 10 : index
    %c1_436 = arith.constant 1 : index
    %c0_437 = arith.constant 0 : index
    %271 = vector.load %arg14[%c10_435, %c1_436, %c0_437] : memref<18x18x8xf32, #tpu.memory_space<vmem>>, vector<8x16x8xf32>
    %c0_438 = arith.constant 0 : index
    %c0_439 = arith.constant 0 : index
    %c56_440 = arith.constant 56 : index
    %272 = vector.load %arg15[%c0_438, %c0_439, %c56_440] : memref<8x16x72xf32, #tpu.memory_space<vmem>>, vector<8x16x8xf32>
    tpu.vector_store %arg15[%c0_438, %c0_439, %c56_440], %271 {strides = array<i32>} : memref<8x16x72xf32, #tpu.memory_space<vmem>>, vector<8x16x8xf32>,
    %c10_441 = arith.constant 10 : index
    %c2_442 = arith.constant 2 : index
    %c0_443 = arith.constant 0 : index
    %273 = vector.load %arg14[%c10_441, %c2_442, %c0_443] : memref<18x18x8xf32, #tpu.memory_space<vmem>>, vector<8x16x8xf32>
    %c0_444 = arith.constant 0 : index
    %c0_445 = arith.constant 0 : index
    %c64_446 = arith.constant 64 : index
    %274 = vector.load %arg15[%c0_444, %c0_445, %c64_446] : memref<8x16x72xf32, #tpu.memory_space<vmem>>, vector<8x16x8xf32>
    tpu.vector_store %arg15[%c0_444, %c0_445, %c64_446], %273 {strides = array<i32>} : memref<8x16x72xf32, #tpu.memory_space<vmem>>, vector<8x16x8xf32>,
    %c0_447 = arith.constant 0 : index
    %c0_448 = arith.constant 0 : index
    %c0_449 = arith.constant 0 : index
    %275 = vector.load %arg15[%c0_447, %c0_448, %c0_449] : memref<8x16x72xf32, #tpu.memory_space<vmem>>, vector<8x16x72xf32>
    %276 = vector.shape_cast %275 : vector<8x16x72xf32> to vector<128x72xf32>
    %c0_450 = arith.constant 0 : index
    %c0_451 = arith.constant 0 : index
    %277 = vector.load %arg11[%c0_450, %c0_451] : memref<72x16xf32, #tpu.memory_space<vmem>>, vector<72x16xf32>
    %cst_452 = arith.constant dense<0.000000e+00> : vector<128x16xf32>
    %278 = tpu.matmul %276, %277, %cst_452 {dimension_numbers = #tpu.dot_dimension_numbers<[1], [0], [0], [1], [0, 0, 1, 1], [], []>} : vector<128x72xf32>, vector<72x16xf32>, vector<128x16xf32> -> vector<128x16xf32>
    %279 = vector.broadcast %256 : vector<1x16xf32> to vector<128x16xf32>
    %280 = arith.addf %278, %279 : vector<128x16xf32>
    %281 = vector.shape_cast %280 : vector<128x16xf32> to vector<8x16x16xf32>
    %282 = vector.extract_strided_slice %281 {offsets = [0, 0, 0], sizes = [1, 16, 16], strides = [1, 1, 1]} : vector<8x16x16xf32> to vector<1x16x16xf32>
    %283 = vector.shape_cast %282 : vector<1x16x16xf32> to vector<1x1x16x16xf32>
    %c4_453 = arith.constant 4 : index
    %c1_454 = arith.constant 1 : index
    %c0_455 = arith.constant 0 : index
    %c0_456 = arith.constant 0 : index
    %284 = vector.load %arg17[%c4_453, %c1_454, %c0_455, %c0_456] : memref<9x2x16x16xf32, #tpu.memory_space<vmem>>, vector<1x1x16x16xf32>
    tpu.vector_store %arg17[%c4_453, %c1_454, %c0_455, %c0_456], %283 {strides = array<i32>} : memref<9x2x16x16xf32, #tpu.memory_space<vmem>>, vector<1x1x16x16xf32>,
    %285 = vector.extract_strided_slice %281 {offsets = [1, 0, 0], sizes = [6, 16, 16], strides = [1, 1, 1]} : vector<8x16x16xf32> to vector<6x16x16xf32>
    %286 = vector.shape_cast %285 : vector<6x16x16xf32> to vector<3x2x16x16xf32>
    %c5 = arith.constant 5 : index
    %c0_457 = arith.constant 0 : index
    %c0_458 = arith.constant 0 : index
    %c0_459 = arith.constant 0 : index
    %287 = vector.load %arg17[%c5, %c0_457, %c0_458, %c0_459] : memref<9x2x16x16xf32, #tpu.memory_space<vmem>>, vector<3x2x16x16xf32>
    tpu.vector_store %arg17[%c5, %c0_457, %c0_458, %c0_459], %286 {strides = array<i32>} : memref<9x2x16x16xf32, #tpu.memory_space<vmem>>, vector<3x2x16x16xf32>,
    %288 = vector.extract_strided_slice %281 {offsets = [7, 0, 0], sizes = [1, 16, 16], strides = [1, 1, 1]} : vector<8x16x16xf32> to vector<1x16x16xf32>
    %289 = vector.shape_cast %288 : vector<1x16x16xf32> to vector<1x1x16x16xf32>
    %c8_460 = arith.constant 8 : index
    %c0_461 = arith.constant 0 : index
    %c0_462 = arith.constant 0 : index
    %c0_463 = arith.constant 0 : index
    %290 = vector.load %arg17[%c8_460, %c0_461, %c0_462, %c0_463] : memref<9x2x16x16xf32, #tpu.memory_space<vmem>>, vector<1x1x16x16xf32>
    tpu.vector_store %arg17[%c8_460, %c0_461, %c0_462, %c0_463], %289 {strides = array<i32>} : memref<9x2x16x16xf32, #tpu.memory_space<vmem>>, vector<1x1x16x16xf32>,
    %c0_464 = arith.constant 0 : index
    %c0_465 = arith.constant 0 : index
    %c0_466 = arith.constant 0 : index
    %c0_467 = arith.constant 0 : index
    %291 = vector.load %arg17[%c0_464, %c0_465, %c0_466, %c0_467] : memref<9x2x16x16xf32, #tpu.memory_space<vmem>>, vector<8x1x16x16xf32>
    %c0_468 = arith.constant 0 : index
    %c1_469 = arith.constant 1 : index
    %c0_470 = arith.constant 0 : index
    %c0_471 = arith.constant 0 : index
    %292 = vector.load %arg17[%c0_468, %c1_469, %c0_470, %c0_471] : memref<9x2x16x16xf32, #tpu.memory_space<vmem>>, vector<8x1x16x16xf32>
    %293 = arith.addf %291, %292 : vector<8x1x16x16xf32>
    %c1_472 = arith.constant 1 : index
    %c0_473 = arith.constant 0 : index
    %c0_474 = arith.constant 0 : index
    %c0_475 = arith.constant 0 : index
    %294 = vector.load %arg17[%c1_472, %c0_473, %c0_474, %c0_475] : memref<9x2x16x16xf32, #tpu.memory_space<vmem>>, vector<8x1x16x16xf32>
    %295 = arith.addf %293, %294 : vector<8x1x16x16xf32>
    %296 = vector.shape_cast %295 : vector<8x1x16x16xf32> to vector<8x16x16xf32>
    %c0_476 = arith.constant 0 : index
    %c1_477 = arith.constant 1 : index
    %c0_478 = arith.constant 0 : index
    %297 = vector.load %arg18[%c0_476, %c1_477, %c0_478] : memref<8x18x16xf32, #tpu.memory_space<vmem>>, vector<8x16x16xf32>
    tpu.vector_store %arg18[%c0_476, %c1_477, %c0_478], %296 {strides = array<i32>} : memref<8x18x16xf32, #tpu.memory_space<vmem>>, vector<8x16x16xf32>,
    %c0_479 = arith.constant 0 : index
    %c0_480 = arith.constant 0 : index
    %c0_481 = arith.constant 0 : index
    %298 = vector.load %arg18[%c0_479, %c0_480, %c0_481] : memref<8x18x16xf32, #tpu.memory_space<vmem>>, vector<8x16x16xf32>
    %c0_482 = arith.constant 0 : index
    %c1_483 = arith.constant 1 : index
    %c0_484 = arith.constant 0 : index
    %299 = vector.load %arg18[%c0_482, %c1_483, %c0_484] : memref<8x18x16xf32, #tpu.memory_space<vmem>>, vector<8x16x16xf32>
    %300 = arith.addf %298, %299 : vector<8x16x16xf32>
    %c0_485 = arith.constant 0 : index
    %c2_486 = arith.constant 2 : index
    %c0_487 = arith.constant 0 : index
    %301 = vector.load %arg18[%c0_485, %c2_486, %c0_487] : memref<8x18x16xf32, #tpu.memory_space<vmem>>, vector<8x16x16xf32>
    %302 = arith.addf %300, %301 : vector<8x16x16xf32>
    %303 = vector.shape_cast %302 : vector<8x16x16xf32> to vector<8x8x2x16xf32>
    %304 = vector.extract_strided_slice %303 {offsets = [0, 0, 0, 0], sizes = [8, 8, 1, 16], strides = [1, 1, 1, 1]} : vector<8x8x2x16xf32> to vector<8x8x1x16xf32>
    %305 = vector.shape_cast %304 : vector<8x8x1x16xf32> to vector<8x8x16xf32>
    %cst_488 = arith.constant 0.111111112 : f32
    %306 = vector.broadcast %cst_488 : f32 to vector<8x8x16xf32>
    %307 = arith.mulf %305, %306 : vector<8x8x16xf32>
    %308 = arith.negf %307 : vector<8x8x16xf32>
    %309 = math.exp %308 : vector<8x8x16xf32>
    %cst_489 = arith.constant 1.000000e+00 : f32
    %310 = vector.broadcast %cst_489 : f32 to vector<8x8x16xf32>
    %311 = arith.addf %310, %309 : vector<8x8x16xf32>
    %312 = arith.divf %310, %311 : vector<8x8x16xf32>
    %313 = arith.mulf %307, %312 : vector<8x8x16xf32>
    %314 = vector.shape_cast %313 : vector<8x8x16xf32> to vector<1x8x8x16xf32>
    %c0_490 = arith.constant 0 : index
    %c0_491 = arith.constant 0 : index
    %c0_492 = arith.constant 0 : index
    %c0_493 = arith.constant 0 : index
    %315 = vector.load %arg13[%c0_490, %c0_491, %c0_492, %c0_493] : memref<1x8x8x16xf32, #tpu.memory_space<vmem>>, vector<1x8x8x16xf32>
    tpu.vector_store %arg13[%c0_490, %c0_491, %c0_492, %c0_493], %314 {strides = array<i32>} : memref<1x8x8x16xf32, #tpu.memory_space<vmem>>, vector<1x8x8x16xf32>,
    return
  }
  func.func @transform_0(%arg0: i32) -> (i32, i32, i32, i32) {
    %c0_i32 = arith.constant 0 : i32
    %c0_i32_0 = arith.constant 0 : i32
    %c0_i32_1 = arith.constant 0 : i32
    %c0_i32_2 = arith.constant 0 : i32
    return %arg0, %c0_i32, %c0_i32_0, %c0_i32_1 : i32, i32, i32, i32
  }
  func.func @transform_1(%arg0: i32) -> (i32, i32, i32) {
    %c0_i32 = arith.constant 0 : i32
    %c0_i32_0 = arith.constant 0 : i32
    %c0_i32_1 = arith.constant 0 : i32
    return %arg0, %c0_i32, %c0_i32_0 : i32, i32, i32
  }
  func.func @transform_2(%arg0: i32) -> (i32, i32) {
    %c0_i32 = arith.constant 0 : i32
    %c0_i32_0 = arith.constant 0 : i32
    %c0_i32_1 = arith.constant 0 : i32
    return %c0_i32, %c0_i32_0 : i32, i32
  }
  func.func @transform_3(%arg0: i32) -> (i32, i32) {
    %c0_i32 = arith.constant 0 : i32
    %c0_i32_0 = arith.constant 0 : i32
    %c0_i32_1 = arith.constant 0 : i32
    return %c0_i32, %c0_i32_0 : i32, i32
  }
  func.func @transform_4(%arg0: i32) -> (i32, i32) {
    %c0_i32 = arith.constant 0 : i32
    %c0_i32_0 = arith.constant 0 : i32
    %c0_i32_1 = arith.constant 0 : i32
    return %c0_i32, %c0_i32_0 : i32, i32
  }
  func.func @transform_5(%arg0: i32) -> (i32, i32) {
    %c0_i32 = arith.constant 0 : i32
    %c0_i32_0 = arith.constant 0 : i32
    %c0_i32_1 = arith.constant 0 : i32
    return %c0_i32, %c0_i32_0 : i32, i32
  }
  func.func @transform_6(%arg0: i32) -> (i32, i32) {
    %c0_i32 = arith.constant 0 : i32
    %c0_i32_0 = arith.constant 0 : i32
    %c0_i32_1 = arith.constant 0 : i32
    return %c0_i32, %c0_i32_0 : i32, i32
  }
  func.func @transform_7(%arg0: i32) -> (i32, i32) {
    %c0_i32 = arith.constant 0 : i32
    %c0_i32_0 = arith.constant 0 : i32
    %c0_i32_1 = arith.constant 0 : i32
    return %c0_i32, %c0_i32_0 : i32, i32
  }
  func.func @transform_8(%arg0: i32) -> (i32, i32) {
    %c0_i32 = arith.constant 0 : i32
    %c0_i32_0 = arith.constant 0 : i32
    %c0_i32_1 = arith.constant 0 : i32
    return %c0_i32, %c0_i32_0 : i32, i32
  }
  func.func @transform_9(%arg0: i32) -> (i32, i32) {
    %c0_i32 = arith.constant 0 : i32
    %c0_i32_0 = arith.constant 0 : i32
    %c0_i32_1 = arith.constant 0 : i32
    return %c0_i32, %c0_i32_0 : i32, i32
  }
  func.func @transform_10(%arg0: i32) -> (i32, i32) {
    %c0_i32 = arith.constant 0 : i32
    %c0_i32_0 = arith.constant 0 : i32
    %c0_i32_1 = arith.constant 0 : i32
    return %c0_i32, %c0_i32_0 : i32, i32
  }
  func.func @transform_11(%arg0: i32) -> (i32, i32) {
    %c0_i32 = arith.constant 0 : i32
    %c0_i32_0 = arith.constant 0 : i32
    %c0_i32_1 = arith.constant 0 : i32
    return %c0_i32, %c0_i32_0 : i32, i32
  }
  func.func @transform_12(%arg0: i32) -> (i32, i32, i32, i32) {
    %c0_i32 = arith.constant 0 : i32
    %c0_i32_0 = arith.constant 0 : i32
    %c0_i32_1 = arith.constant 0 : i32
    %c0_i32_2 = arith.constant 0 : i32
    return %arg0, %c0_i32, %c0_i32_0, %c0_i32_1 : i32, i32, i32, i32
  }
}

</mosaic_0001>

<llo_original>
// kernel: tpu_custom_call.1
$region0: #{tpu_custom_call.1}
  #allocation0 [shape = 'u32[]', space=smem, size = 0x4, offset = 0x4, fixed_abs, tag = 'smem constant byte address 0x4 - core index']
  #allocation1 [shape = 'u32[72,128]{1,0:T(1,128)}', space=vmem, size = 0x9000, scoped, tag = 'internal scratch']
  #allocation2 [shape = 'f32[18,18,8]{2,1,0:T(8,128)}', space=vmem, size = 0x36000, scoped, tag = 'scratch operand']
  #allocation3 [shape = 'f32[8,16,72]{2,1,0:T(8,128)}', space=vmem, size = 0x10000, scoped, tag = 'scratch operand']
  #allocation4 [shape = 'f32[256,8]{1,0:T(8,128)}', space=vmem, size = 0x20000, scoped, tag = 'scratch operand']
  #allocation5 [shape = 'f32[9,2,16,16]{3,2,1,0:T(8,128)}', space=vmem, size = 0x24000, scoped, tag = 'scratch operand']
  #allocation6 [shape = 'f32[8,18,16]{2,1,0:T(8,128)}', space=vmem, size = 0x18000, scoped, tag = 'scratch operand']
  %s0 = inlined_call_operand.vmem [shape: f32[2,16,16,8], index: 0, kind: input, shape index: {}]
  %s1 = inlined_call_operand.vmem [shape: f32[2,1,32], index: 1, kind: input, shape index: {}]
  %s2 = inlined_call_operand.vmem [shape: f32[72,8], index: 2, kind: input, shape index: {}]
  %s3 = inlined_call_operand.vmem [shape: f32[1,8], index: 3, kind: input, shape index: {}]
  %s4 = inlined_call_operand.vmem [shape: f32[1,8], index: 4, kind: input, shape index: {}]
  %s5 = inlined_call_operand.vmem [shape: f32[1,8], index: 5, kind: input, shape index: {}]
  %s6 = inlined_call_operand.vmem [shape: f32[72,8], index: 6, kind: input, shape index: {}]
  %s7 = inlined_call_operand.vmem [shape: f32[1,8], index: 7, kind: input, shape index: {}]
  %s8 = inlined_call_operand.vmem [shape: f32[1,8], index: 8, kind: input, shape index: {}]
  %s9 = inlined_call_operand.vmem [shape: f32[1,8], index: 9, kind: input, shape index: {}]
  %s10 = inlined_call_operand.vmem [shape: f32[72,16], index: 10, kind: input, shape index: {}]
  %s11 = inlined_call_operand.vmem [shape: f32[1,16], index: 11, kind: input, shape index: {}]
  %s12 = inlined_call_operand.hbm [shape: f32[2,8,8,16], index: 12, kind: output, shape index: {}]
  %s13 = sld [smem:[#allocation0]]
  $region81: #{tpu_custom_call.1} parent=0
    _
  %s15 = ssub.s32 1, %s13
  %s16 = scalar_select 0, %s15, %s13
  $region1: #{tpu_custom_call.1} parent=0
    #allocation7 [shape = 'u8[65536]{0}', space=vmem, size = 0x10000, scoped, tag = 'output window, operand 0']
    #allocation8 [shape = 's32[2]{0}', space=sflag, size = 0x8, scoped, tag = 'scoped memory for tpu_custom_call.1']
    %17 = vsyncpa [#allocation8], 0
    %s18 = scalar_lea.sflag [#allocation8], 1
    %19 = vsyncpa %s18, 0
    loop: start=0, step=1, limit=4
    $region2: #{tpu_custom_call.1} parent=1 // loop_pre_header
      _
    $region3: #{tpu_custom_call.1} parent=1 // loop_header
      %s21 = sphi 0, %s25
      %p22 = scmp.ge.s32.totalorder %s21, 4
      %s31 = sphi 0, %s33
      %s34 = sphi 0, %s31
      %s35 = sphi 0, %s34
      %s51 = sphi 0, %s35
      %s57 = sphi 0, %s59
      %s60 = sphi 0, %s57
      %s61 = sphi 0, %s60
      %s77 = sphi 0, %s61
      %s81 = sphi 0, %s81
      %s83 = sphi 0, %s81
      %s84 = sphi 0, %s83
      %s98 = sphi 0, %s84
      %s102 = sphi 0, %s102
      %s104 = sphi 0, %s102
      %s105 = sphi 0, %s104
      %s119 = sphi 0, %s105
      %s123 = sphi 0, %s123
      %s125 = sphi 0, %s123
      %s126 = sphi 0, %s125
      %s140 = sphi 0, %s126
      %s144 = sphi 0, %s144
      %s146 = sphi 0, %s144
      %s147 = sphi 0, %s146
      %s161 = sphi 0, %s147
      %s165 = sphi 0, %s165
      %s167 = sphi 0, %s165
      %s168 = sphi 0, %s167
      %s182 = sphi 0, %s168
      %s186 = sphi 0, %s186
      %s188 = sphi 0, %s186
      %s189 = sphi 0, %s188
      %s203 = sphi 0, %s189
      %s207 = sphi 0, %s207
      %s209 = sphi 0, %s207
      %s210 = sphi 0, %s209
      %s224 = sphi 0, %s210
      %s228 = sphi 0, %s228
      %s230 = sphi 0, %s228
      %s231 = sphi 0, %s230
      %s245 = sphi 0, %s231
      %s249 = sphi 0, %s249
      %s251 = sphi 0, %s249
      %s252 = sphi 0, %s251
      %s266 = sphi 0, %s252
      %s270 = sphi 0, %s270
      %s272 = sphi 0, %s270
      %s273 = sphi 0, %s272
      %s287 = sphi 0, %s273
      %s293 = sphi 0, %s295
      %s296 = sphi 0, %s293
      %s297 = sphi 0, %s296
      %s313 = sphi 0, %s297
    $region4: #{tpu_custom_call.1} parent=1 // loop_header_branch
      %24 = sbr.rel (%p22) target = $region8
    $region5: #{tpu_custom_call.1} parent=1 // loop_body
      %s26 = ssub.s32 %s21, 1
      %s27 = ssub.s32 %s21, 2
      %s28 = sadd.s32 %s21, 1
      %s29 = ssub.s32 %s21, %s28
      %p30 = scmp.eq.s32.totalorder %s29, 0
      %s32 = sadd.s32 %s31, 1
      %s33 = scalar_select %p30, %s31, %s32
      %p36 = pneg %p30
      %p37 = scmp.eq.s32.totalorder %s21, 1
      %p38 = por %p36, %p37
      %p39 = scmp.ne.s32.totalorder %s31, %s34
      %p40 = scmp.eq.s32.totalorder %s21, 0
      %p41 = por %p39, %p40
      %p42 = scmp.ne.s32.totalorder %s31, %s34
      %p43 = scmp.eq.s32.totalorder %s26, 1
      %p44 = por %p42, %p43
      %p45 = scmp.ne.s32.totalorder %s34, %s35
      %p46 = scmp.eq.s32.totalorder %s26, 0
      %p47 = por %p45, %p46
      %p48 = scmp.ne.s32.totalorder %s34, %s35
      %p49 = scmp.eq.s32.totalorder %s27, 1
      %p50 = por %p48, %p49
      %p52 = scmp.ne.s32.totalorder %s35, %s51
      %p53 = scmp.eq.s32.totalorder %s27, 0
      %p54 = por %p52, %p53
      %s55 = ssub.s32 %s21, %s28
      %p56 = scmp.eq.s32.totalorder %s55, 0
      %s58 = sadd.s32 %s57, 1
      %s59 = scalar_select %p56, %s57, %s58
      %p62 = pneg %p56
      %p63 = scmp.eq.s32.totalorder %s21, 1
      %p64 = por %p62, %p63
      %p65 = scmp.ne.s32.totalorder %s57, %s60
      %p66 = scmp.eq.s32.totalorder %s21, 0
      %p67 = por %p65, %p66
      %p68 = scmp.ne.s32.totalorder %s57, %s60
      %p69 = scmp.eq.s32.totalorder %s26, 1
      %p70 = por %p68, %p69
      %p71 = scmp.ne.s32.totalorder %s60, %s61
      %p72 = scmp.eq.s32.totalorder %s26, 0
      %p73 = por %p71, %p72
      %p74 = scmp.ne.s32.totalorder %s60, %s61
      %p75 = scmp.eq.s32.totalorder %s27, 1
      %p76 = por %p74, %p75
      %p78 = scmp.ne.s32.totalorder %s61, %s77
      %p79 = scmp.eq.s32.totalorder %s27, 0
      %p80 = por %p78, %p79
      %s82 = sadd.s32 %s81, 1
      %p85 = scmp.eq.s32.totalorder %s21, 1
      %p86 = scmp.ne.s32.totalorder %s81, %s83
      %p87 = scmp.eq.s32.totalorder %s21, 0
      %p88 = por %p86, %p87
      %p89 = scmp.ne.s32.totalorder %s81, %s83
      %p90 = scmp.eq.s32.totalorder %s26, 1
      %p91 = por %p89, %p90
      %p92 = scmp.ne.s32.totalorder %s83, %s84
      %p93 = scmp.eq.s32.totalorder %s26, 0
      %p94 = por %p92, %p93
      %p95 = scmp.ne.s32.totalorder %s83, %s84
      %p96 = scmp.eq.s32.totalorder %s27, 1
      %p97 = por %p95, %p96
      %p99 = scmp.ne.s32.totalorder %s84, %s98
      %p100 = scmp.eq.s32.totalorder %s27, 0
      %p101 = por %p99, %p100
      %s103 = sadd.s32 %s102, 1
      %p106 = scmp.eq.s32.totalorder %s21, 1
      %p107 = scmp.ne.s32.totalorder %s102, %s104
      %p108 = scmp.eq.s32.totalorder %s21, 0
      %p109 = por %p107, %p108
      %p110 = scmp.ne.s32.totalorder %s102, %s104
      %p111 = scmp.eq.s32.totalorder %s26, 1
      %p112 = por %p110, %p111
      %p113 = scmp.ne.s32.totalorder %s104, %s105
      %p114 = scmp.eq.s32.totalorder %s26, 0
      %p115 = por %p113, %p114
      %p116 = scmp.ne.s32.totalorder %s104, %s105
      %p117 = scmp.eq.s32.totalorder %s27, 1
      %p118 = por %p116, %p117
      %p120 = scmp.ne.s32.totalorder %s105, %s119
      %p121 = scmp.eq.s32.totalorder %s27, 0
      %p122 = por %p120, %p121
      %s124 = sadd.s32 %s123, 1
      %p127 = scmp.eq.s32.totalorder %s21, 1
      %p128 = scmp.ne.s32.totalorder %s123, %s125
      %p129 = scmp.eq.s32.totalorder %s21, 0
      %p130 = por %p128, %p129
      %p131 = scmp.ne.s32.totalorder %s123, %s125
      %p132 = scmp.eq.s32.totalorder %s26, 1
      %p133 = por %p131, %p132
      %p134 = scmp.ne.s32.totalorder %s125, %s126
      %p135 = scmp.eq.s32.totalorder %s26, 0
      %p136 = por %p134, %p135
      %p137 = scmp.ne.s32.totalorder %s125, %s126
      %p138 = scmp.eq.s32.totalorder %s27, 1
      %p139 = por %p137, %p138
      %p141 = scmp.ne.s32.totalorder %s126, %s140
      %p142 = scmp.eq.s32.totalorder %s27, 0
      %p143 = por %p141, %p142
      %s145 = sadd.s32 %s144, 1
      %p148 = scmp.eq.s32.totalorder %s21, 1
      %p149 = scmp.ne.s32.totalorder %s144, %s146
      %p150 = scmp.eq.s32.totalorder %s21, 0
      %p151 = por %p149, %p150
      %p152 = scmp.ne.s32.totalorder %s144, %s146
      %p153 = scmp.eq.s32.totalorder %s26, 1
      %p154 = por %p152, %p153
      %p155 = scmp.ne.s32.totalorder %s146, %s147
      %p156 = scmp.eq.s32.totalorder %s26, 0
      %p157 = por %p155, %p156
      %p158 = scmp.ne.s32.totalorder %s146, %s147
      %p159 = scmp.eq.s32.totalorder %s27, 1
      %p160 = por %p158, %p159
      %p162 = scmp.ne.s32.totalorder %s147, %s161
      %p163 = scmp.eq.s32.totalorder %s27, 0
      %p164 = por %p162, %p163
      %s166 = sadd.s32 %s165, 1
      %p169 = scmp.eq.s32.totalorder %s21, 1
      %p170 = scmp.ne.s32.totalorder %s165, %s167
      %p171 = scmp.eq.s32.totalorder %s21, 0
      %p172 = por %p170, %p171
      %p173 = scmp.ne.s32.totalorder %s165, %s167
      %p174 = scmp.eq.s32.totalorder %s26, 1
      %p175 = por %p173, %p174
      %p176 = scmp.ne.s32.totalorder %s167, %s168
      %p177 = scmp.eq.s32.totalorder %s26, 0
      %p178 = por %p176, %p177
      %p179 = scmp.ne.s32.totalorder %s167, %s168
      %p180 = scmp.eq.s32.totalorder %s27, 1
      %p181 = por %p179, %p180
      %p183 = scmp.ne.s32.totalorder %s168, %s182
      %p184 = scmp.eq.s32.totalorder %s27, 0
      %p185 = por %p183, %p184
      %s187 = sadd.s32 %s186, 1
      %p190 = scmp.eq.s32.totalorder %s21, 1
      %p191 = scmp.ne.s32.totalorder %s186, %s188
      %p192 = scmp.eq.s32.totalorder %s21, 0
      %p193 = por %p191, %p192
      %p194 = scmp.ne.s32.totalorder %s186, %s188
      %p195 = scmp.eq.s32.totalorder %s26, 1
      %p196 = por %p194, %p195
      %p197 = scmp.ne.s32.totalorder %s188, %s189
      %p198 = scmp.eq.s32.totalorder %s26, 0
      %p199 = por %p197, %p198
      %p200 = scmp.ne.s32.totalorder %s188, %s189
      %p201 = scmp.eq.s32.totalorder %s27, 1
      %p202 = por %p200, %p201
      %p204 = scmp.ne.s32.totalorder %s189, %s203
      %p205 = scmp.eq.s32.totalorder %s27, 0
      %p206 = por %p204, %p205
      %s208 = sadd.s32 %s207, 1
      %p211 = scmp.eq.s32.totalorder %s21, 1
      %p212 = scmp.ne.s32.totalorder %s207, %s209
      %p213 = scmp.eq.s32.totalorder %s21, 0
      %p214 = por %p212, %p213
      %p215 = scmp.ne.s32.totalorder %s207, %s209
      %p216 = scmp.eq.s32.totalorder %s26, 1
      %p217 = por %p215, %p216
      %p218 = scmp.ne.s32.totalorder %s209, %s210
      %p219 = scmp.eq.s32.totalorder %s26, 0
      %p220 = por %p218, %p219
      %p221 = scmp.ne.s32.totalorder %s209, %s210
      %p222 = scmp.eq.s32.totalorder %s27, 1
      %p223 = por %p221, %p222
      %p225 = scmp.ne.s32.totalorder %s210, %s224
      %p226 = scmp.eq.s32.totalorder %s27, 0
      %p227 = por %p225, %p226
      %s229 = sadd.s32 %s228, 1
      %p232 = scmp.eq.s32.totalorder %s21, 1
      %p233 = scmp.ne.s32.totalorder %s228, %s230
      %p234 = scmp.eq.s32.totalorder %s21, 0
      %p235 = por %p233, %p234
      %p236 = scmp.ne.s32.totalorder %s228, %s230
      %p237 = scmp.eq.s32.totalorder %s26, 1
      %p238 = por %p236, %p237
      %p239 = scmp.ne.s32.totalorder %s230, %s231
      %p240 = scmp.eq.s32.totalorder %s26, 0
      %p241 = por %p239, %p240
      %p242 = scmp.ne.s32.totalorder %s230, %s231
      %p243 = scmp.eq.s32.totalorder %s27, 1
      %p244 = por %p242, %p243
      %p246 = scmp.ne.s32.totalorder %s231, %s245
      %p247 = scmp.eq.s32.totalorder %s27, 0
      %p248 = por %p246, %p247
      %s250 = sadd.s32 %s249, 1
      %p253 = scmp.eq.s32.totalorder %s21, 1
      %p254 = scmp.ne.s32.totalorder %s249, %s251
      %p255 = scmp.eq.s32.totalorder %s21, 0
      %p256 = por %p254, %p255
      %p257 = scmp.ne.s32.totalorder %s249, %s251
      %p258 = scmp.eq.s32.totalorder %s26, 1
      %p259 = por %p257, %p258
      %p260 = scmp.ne.s32.totalorder %s251, %s252
      %p261 = scmp.eq.s32.totalorder %s26, 0
      %p262 = por %p260, %p261
      %p263 = scmp.ne.s32.totalorder %s251, %s252
      %p264 = scmp.eq.s32.totalorder %s27, 1
      %p265 = por %p263, %p264
      %p267 = scmp.ne.s32.totalorder %s252, %s266
      %p268 = scmp.eq.s32.totalorder %s27, 0
      %p269 = por %p267, %p268
      %s271 = sadd.s32 %s270, 1
      %p274 = scmp.eq.s32.totalorder %s21, 1
      %p275 = scmp.ne.s32.totalorder %s270, %s272
      %p276 = scmp.eq.s32.totalorder %s21, 0
      %p277 = por %p275, %p276
      %p278 = scmp.ne.s32.totalorder %s270, %s272
      %p279 = scmp.eq.s32.totalorder %s26, 1
      %p280 = por %p278, %p279
      %p281 = scmp.ne.s32.totalorder %s272, %s273
      %p282 = scmp.eq.s32.totalorder %s26, 0
      %p283 = por %p281, %p282
      %p284 = scmp.ne.s32.totalorder %s272, %s273
      %p285 = scmp.eq.s32.totalorder %s27, 1
      %p286 = por %p284, %p285
      %p288 = scmp.ne.s32.totalorder %s273, %s287
      %p289 = scmp.eq.s32.totalorder %s27, 0
      %p290 = por %p288, %p289
      %s291 = ssub.s32 %s21, %s28
      %p292 = scmp.eq.s32.totalorder %s291, 0
      %s294 = sadd.s32 %s293, 1
      %s295 = scalar_select %p292, %s293, %s294
      %p298 = pneg %p292
      %p299 = scmp.eq.s32.totalorder %s21, 1
      %p300 = por %p298, %p299
      %p301 = scmp.ne.s32.totalorder %s293, %s296
      %p302 = scmp.eq.s32.totalorder %s21, 0
      %p303 = por %p301, %p302
      %p304 = scmp.ne.s32.totalorder %s293, %s296
      %p305 = scmp.eq.s32.totalorder %s26, 1
      %p306 = por %p304, %p305
      %p307 = scmp.ne.s32.totalorder %s296, %s297
      %p308 = scmp.eq.s32.totalorder %s26, 0
      %p309 = por %p307, %p308
      %p310 = scmp.ne.s32.totalorder %s296, %s297
      %p311 = scmp.eq.s32.totalorder %s27, 1
      %p312 = por %p310, %p311
      %p314 = scmp.ne.s32.totalorder %s297, %s313
      %p315 = scmp.eq.s32.totalorder %s27, 0
      %p316 = por %p314, %p315
      %p317 = scmp.le.s32.totalorder 1, %s21
      %p318 = scmp.lt.s32.totalorder %s21, 3
      %p319 = pnand %p317, %p318
      %p320 = pneg %p319
      // Predicated region
      $region9: #{tpu_custom_call.1} parent=5 // pred_check
        _
      $region10: #{tpu_custom_call.1} parent=5 // pred_check_branch
        %322 = sbr.rel (%p319) target = $region12
      $region11: #{tpu_custom_call.1} parent=5 // pred_region
        %s323 = ssub.s32 %s21, 1
        // Predicated region
        $region13: #{tpu_custom_call.1} parent=11 // pred_check
          %p324 = pneg %p94
        $region14: #{tpu_custom_call.1} parent=11 // pred_check_branch
          %326 = sbr.rel (%p324) target = $region16
        $region15: #{tpu_custom_call.1} parent=11 // pred_region
          _
        $region16: #{tpu_custom_call.1} parent=11 // pred_fallthru
          _
        // Predicated region
        $region17: #{tpu_custom_call.1} parent=11 // pred_check
          %p327 = pneg %p115
        $region18: #{tpu_custom_call.1} parent=11 // pred_check_branch
          %329 = sbr.rel (%p327) target = $region20
        $region19: #{tpu_custom_call.1} parent=11 // pred_region
          _
        $region20: #{tpu_custom_call.1} parent=11 // pred_fallthru
          _
        // Predicated region
        $region21: #{tpu_custom_call.1} parent=11 // pred_check
          %p330 = pneg %p136
        $region22: #{tpu_custom_call.1} parent=11 // pred_check_branch
          %332 = sbr.rel (%p330) target = $region24
        $region23: #{tpu_custom_call.1} parent=11 // pred_region
          _
        $region24: #{tpu_custom_call.1} parent=11 // pred_fallthru
          _
        // Predicated region
        $region25: #{tpu_custom_call.1} parent=11 // pred_check
          %p333 = pneg %p157
        $region26: #{tpu_custom_call.1} parent=11 // pred_check_branch
          %335 = sbr.rel (%p333) target = $region28
        $region27: #{tpu_custom_call.1} parent=11 // pred_region
          _
        $region28: #{tpu_custom_call.1} parent=11 // pred_fallthru
          _
        // Predicated region
        $region29: #{tpu_custom_call.1} parent=11 // pred_check
          %p336 = pneg %p178
        $region30: #{tpu_custom_call.1} parent=11 // pred_check_branch
          %338 = sbr.rel (%p336) target = $region32
        $region31: #{tpu_custom_call.1} parent=11 // pred_region
          _
        $region32: #{tpu_custom_call.1} parent=11 // pred_fallthru
          _
        // Predicated region
        $region33: #{tpu_custom_call.1} parent=11 // pred_check
          %p339 = pneg %p199
        $region34: #{tpu_custom_call.1} parent=11 // pred_check_branch
          %341 = sbr.rel (%p339) target = $region36
        $region35: #{tpu_custom_call.1} parent=11 // pred_region
          _
        $region36: #{tpu_custom_call.1} parent=11 // pred_fallthru
          _
        // Predicated region
        $region37: #{tpu_custom_call.1} parent=11 // pred_check
          %p342 = pneg %p220
        $region38: #{tpu_custom_call.1} parent=11 // pred_check_branch
          %344 = sbr.rel (%p342) target = $region40
        $region39: #{tpu_custom_call.1} parent=11 // pred_region
          _
        $region40: #{tpu_custom_call.1} parent=11 // pred_fallthru
          _
        // Predicated region
        $region41: #{tpu_custom_call.1} parent=11 // pred_check
          %p345 = pneg %p241
        $region42: #{tpu_custom_call.1} parent=11 // pred_check_branch
          %347 = sbr.rel (%p345) target = $region44
        $region43: #{tpu_custom_call.1} parent=11 // pred_region
          _
        $region44: #{tpu_custom_call.1} parent=11 // pred_fallthru
          _
        // Predicated region
        $region45: #{tpu_custom_call.1} parent=11 // pred_check
          %p348 = pneg %p262
        $region46: #{tpu_custom_call.1} parent=11 // pred_check_branch
          %350 = sbr.rel (%p348) target = $region48
        $region47: #{tpu_custom_call.1} parent=11 // pred_region
          _
        $region48: #{tpu_custom_call.1} parent=11 // pred_fallthru
          _
        // Predicated region
        $region49: #{tpu_custom_call.1} parent=11 // pred_check
          %p351 = pneg %p283
        $region50: #{tpu_custom_call.1} parent=11 // pred_check_branch
          %353 = sbr.rel (%p351) target = $region52
        $region51: #{tpu_custom_call.1} parent=11 // pred_region
          _
        $region52: #{tpu_custom_call.1} parent=11 // pred_fallthru
          _
      $region12: #{tpu_custom_call.1} parent=5 // pred_fallthru
        _
      %p354 = scmp.lt.s32.totalorder %s21, 2
      // Predicated region
      $region53: #{tpu_custom_call.1} parent=5 // pred_check
        %p355 = pneg %p354
      $region54: #{tpu_custom_call.1} parent=5 // pred_check_branch
        %357 = sbr.rel (%p355) target = $region56
      $region55: #{tpu_custom_call.1} parent=5 // pred_region
        // Predicated region
        $region57: #{tpu_custom_call.1} parent=55 // pred_check
          %p358 = pneg %p41
        $region58: #{tpu_custom_call.1} parent=55 // pred_check_branch
          %360 = sbr.rel (%p358) target = $region60
        $region59: #{tpu_custom_call.1} parent=55 // pred_region
          %p361 = scmp.lt.s32.totalorder %s21, 1
          %s362 = scalar_select %p361, %s21, 1
          %s363 = smul.addr %s362, 32
          %s364 = smul.addr %s363, 8
          %s365 = scalar_lea.vmem %s0, %s364
        $region60: #{tpu_custom_call.1} parent=55 // pred_fallthru
          _
        // Predicated region
        $region61: #{tpu_custom_call.1} parent=55 // pred_check
          %p366 = pneg %p67
        $region62: #{tpu_custom_call.1} parent=55 // pred_check_branch
          %368 = sbr.rel (%p366) target = $region64
        $region63: #{tpu_custom_call.1} parent=55 // pred_region
          %p369 = scmp.lt.s32.totalorder %s21, 1
          %s370 = scalar_select %p369, %s21, 1
          %s371 = scalar_lea.vmem %s1, %s370
        $region64: #{tpu_custom_call.1} parent=55 // pred_fallthru
          _
      $region56: #{tpu_custom_call.1} parent=5 // pred_fallthru
        _
      %p372 = scmp.le.s32.totalorder 1, %s21
      %p373 = scmp.lt.s32.totalorder %s21, 3
      %p374 = pnand %p372, %p373
      %p375 = pneg %p374
      // Predicated region
      $region65: #{tpu_custom_call.1} parent=5 // pred_check
        _
      $region66: #{tpu_custom_call.1} parent=5 // pred_check_branch
        %377 = sbr.rel (%p374) target = $region68
      $region67: #{tpu_custom_call.1} parent=5 // pred_region
        %s378 = ssub.s32 %s21, 1
        %p379 = scmp.lt.s32.totalorder %s26, 1
        %s380 = scalar_select %p379, %s26, 1
        %s381 = smul.addr %s380, 32
        %s382 = smul.addr %s381, 8
        %s383 = scalar_lea.vmem %s0, %s382
        %p384 = pneg %p47
        %p385 = pneg %p44
        %p386 = scmp.lt.s32.totalorder %s26, 1
        %s387 = scalar_select %p386, %s26, 1
        %s388 = scalar_lea.vmem %s1, %s387
        %p389 = pneg %p73
        %p390 = pneg %p70
        %p391 = pneg %p94
        %p392 = pneg %p91
        %p393 = pneg %p115
        %p394 = pneg %p112
        %p395 = pneg %p136
        %p396 = pneg %p133
        %p397 = pneg %p157
        %p398 = pneg %p154
        %p399 = pneg %p178
        %p400 = pneg %p175
        %p401 = pneg %p199
        %p402 = pneg %p196
        %p403 = pneg %p220
        %p404 = pneg %p217
        %p405 = pneg %p241
        %p406 = pneg %p238
        %p407 = pneg %p262
        %p408 = pneg %p259
        %p409 = pneg %p283
        %p410 = pneg %p280
        %p411 = pneg %p309
        %p412 = pneg %p306
        %s413 = sand.u32 %s296, 1
        %s414 = scalar_lea.sflag [#allocation8], %s413
        %s415 = sand.u32 %s296, 1
        %s416 = smul.addr %s415, 64
        %s417 = scalar_lea.vmem [#allocation7], %s416
        %p418 = scmp.lt.s32.totalorder %s26, 1
        %s419 = scalar_select %p418, %s26, 1
        %s420 = smul.addr %s419, 32
        %s421 = smul.addr %s420, 8
        %s422 = scalar_lea.vmem %s0, %s421
        %p423 = scmp.lt.s32.totalorder %s26, 1
        %s424 = scalar_select %p423, %s26, 1
        %s425 = scalar_lea.vmem %s1, %s424
        %vm426 = vcmask 64512
        %427 = vst.msk [vmem:[#allocation2] sm:$0xff] %vm426, 0.0
        %428 = vst.msk [vmem:[#allocation2 + $0x8] sm:$0xff] %vm426, 0.0
        %vm429 = vcmask 58368
        %430 = vst.msk [vmem:[#allocation2 + $0x10] sm:$0x3] %vm429, 0.0
        %s431 = scalar_lea.vmem [#allocation2], 408
        %432 = vst.msk [vmem:[%s431] sm:$0xff] %vm426, 0.0
        %433 = vst.msk [vmem:[%s431 + $0x8] sm:$0xff] %vm426, 0.0
        %434 = vst.msk [vmem:[%s431 + $0x10] sm:$0x3] %vm429, 0.0
        %vm435 = vcmask 57344
        %436 = vst.msk [vmem:[#allocation2] sm:$0x1] %vm435, 0.0
        %437 = vst.msk [vmem:[#allocation2 + $0x18] sm:$0x1] %vm435, 0.0
        %438 = vst.msk [vmem:[#allocation2 + $0x30] sm:$0x1] %vm435, 0.0
        %439 = vst.msk [vmem:[#allocation2 + $0x48] sm:$0x1] %vm435, 0.0
        %440 = vst.msk [vmem:[#allocation2 + $0x60] sm:$0x1] %vm435, 0.0
        %441 = vst.msk [vmem:[#allocation2 + $0x78] sm:$0x1] %vm435, 0.0
        %442 = vst.msk [vmem:[#allocation2 + $0x90] sm:$0x1] %vm435, 0.0
        %443 = vst.msk [vmem:[#allocation2 + $0xa8] sm:$0x1] %vm435, 0.0
        %444 = vst.msk [vmem:[#allocation2 + $0xc0] sm:$0x1] %vm435, 0.0
        %445 = vst.msk [vmem:[#allocation2 + $0xd8] sm:$0x1] %vm435, 0.0
        %446 = vst.msk [vmem:[#allocation2 + $0xf0] sm:$0x1] %vm435, 0.0
        %447 = vst.msk [vmem:[#allocation2 + $0x108] sm:$0x1] %vm435, 0.0
        %448 = vst.msk [vmem:[#allocation2 + $0x120] sm:$0x1] %vm435, 0.0
        %449 = vst.msk [vmem:[#allocation2 + $0x138] sm:$0x1] %vm435, 0.0
        %450 = vst.msk [vmem:[#allocation2 + $0x150] sm:$0x1] %vm435, 0.0
        %451 = vst.msk [vmem:[#allocation2 + $0x168] sm:$0x1] %vm435, 0.0
        %452 = vst.msk [vmem:[#allocation2 + $0x180] sm:$0x1] %vm435, 0.0
        %453 = vst.msk [vmem:[#allocation2 + $0x198] sm:$0x1] %vm435, 0.0
        %454 = vst.msk [vmem:[#allocation2 + $0x11] sm:$0x1] %vm435, 0.0
        %455 = vst.msk [vmem:[#allocation2 + $0x29] sm:$0x1] %vm435, 0.0
        %456 = vst.msk [vmem:[#allocation2 + $0x41] sm:$0x1] %vm435, 0.0
        %457 = vst.msk [vmem:[#allocation2 + $0x59] sm:$0x1] %vm435, 0.0
        %458 = vst.msk [vmem:[#allocation2 + $0x71] sm:$0x1] %vm435, 0.0
        %459 = vst.msk [vmem:[#allocation2 + $0x89] sm:$0x1] %vm435, 0.0
        %460 = vst.msk [vmem:[#allocation2 + $0xa1] sm:$0x1] %vm435, 0.0
        %461 = vst.msk [vmem:[#allocation2 + $0xb9] sm:$0x1] %vm435, 0.0
        %462 = vst.msk [vmem:[#allocation2 + $0xd1] sm:$0x1] %vm435, 0.0
        %463 = vst.msk [vmem:[#allocation2 + $0xe9] sm:$0x1] %vm435, 0.0
        %464 = vst.msk [vmem:[#allocation2 + $0x101] sm:$0x1] %vm435, 0.0
        %465 = vst.msk [vmem:[#allocation2 + $0x119] sm:$0x1] %vm435, 0.0
        %466 = vst.msk [vmem:[#allocation2 + $0x131] sm:$0x1] %vm435, 0.0
        %467 = vst.msk [vmem:[#allocation2 + $0x149] sm:$0x1] %vm435, 0.0
        %468 = vst.msk [vmem:[#allocation2 + $0x161] sm:$0x1] %vm435, 0.0
        %469 = vst.msk [vmem:[#allocation2 + $0x179] sm:$0x1] %vm435, 0.0
        %470 = vst.msk [vmem:[#allocation2 + $0x191] sm:$0x1] %vm435, 0.0
        %471 = vst.msk [vmem:[#allocation2 + $0x1a9] sm:$0x1] %vm435, 0.0
        %vm472 = vcmask 130048
        %473 = vst.msk [vmem:[#allocation5] sm:$0xff] %vm472, 0.0
        %474 = vst.msk [vmem:[#allocation5 + $0x8] sm:$0xff] %vm472, 0.0
        %s475 = scalar_lea.vmem [#allocation5], 272
        %476 = vst.msk [vmem:[%s475] sm:$0xff] %vm472, 0.0
        %477 = vst.msk [vmem:[%s475 + $0x8] sm:$0xff] %vm472, 0.0
        %vm478 = vcmask 122880
        %479 = vst.msk [vmem:[#allocation6] sm:$0x1] %vm478, 0.0
        %480 = vst.msk [vmem:[#allocation6 + $0x18] sm:$0x1] %vm478, 0.0
        %481 = vst.msk [vmem:[#allocation6 + $0x30] sm:$0x1] %vm478, 0.0
        %482 = vst.msk [vmem:[#allocation6 + $0x48] sm:$0x1] %vm478, 0.0
        %483 = vst.msk [vmem:[#allocation6 + $0x60] sm:$0x1] %vm478, 0.0
        %484 = vst.msk [vmem:[#allocation6 + $0x78] sm:$0x1] %vm478, 0.0
        %485 = vst.msk [vmem:[#allocation6 + $0x90] sm:$0x1] %vm478, 0.0
        %486 = vst.msk [vmem:[#allocation6 + $0xa8] sm:$0x1] %vm478, 0.0
        %487 = vst.msk [vmem:[#allocation6 + $0x11] sm:$0x1] %vm478, 0.0
        %488 = vst.msk [vmem:[#allocation6 + $0x29] sm:$0x1] %vm478, 0.0
        %489 = vst.msk [vmem:[#allocation6 + $0x41] sm:$0x1] %vm478, 0.0
        %490 = vst.msk [vmem:[#allocation6 + $0x59] sm:$0x1] %vm478, 0.0
        %491 = vst.msk [vmem:[#allocation6 + $0x71] sm:$0x1] %vm478, 0.0
        %492 = vst.msk [vmem:[#allocation6 + $0x89] sm:$0x1] %vm478, 0.0
        %493 = vst.msk [vmem:[#allocation6 + $0xa1] sm:$0x1] %vm478, 0.0
        %494 = vst.msk [vmem:[#allocation6 + $0xb9] sm:$0x1] %vm478, 0.0
        %v495 = vld [vmem:[%s425] sm:$0x1]
        %v496 = vld [vmem:[%s422] sm:$0xff]
        %v497 = vld [vmem:[%s422 + $0x8] sm:$0xff]
        %v498 = vld [vmem:[%s422 + $0x10] sm:$0xff]
        %v499 = vld [vmem:[%s422 + $0x18] sm:$0xff]
        %v500 = vld [vmem:[%s422 + $0x20] sm:$0xff]
        %v501 = vld [vmem:[%s422 + $0x28] sm:$0xff]
        %v502 = vld [vmem:[%s422 + $0x30] sm:$0xff]
        %v503 = vld [vmem:[%s422 + $0x38] sm:$0xff]
        %v504 = vld [vmem:[%s422 + $0x40] sm:$0xff]
        %v505 = vld [vmem:[%s422 + $0x48] sm:$0xff]
        %v506 = vld [vmem:[%s422 + $0x50] sm:$0xff]
        %v507 = vld [vmem:[%s422 + $0x58] sm:$0xff]
        %v508 = vld [vmem:[%s422 + $0x60] sm:$0xff]
        %v509 = vld [vmem:[%s422 + $0x68] sm:$0xff]
        %v510 = vld [vmem:[%s422 + $0x70] sm:$0xff]
        %v511 = vld [vmem:[%s422 + $0x78] sm:$0xff]
        %v512 = vld [vmem:[%s422 + $0x80] sm:$0xff]
        %v513 = vld [vmem:[%s422 + $0x88] sm:$0xff]
        %v514 = vld [vmem:[%s422 + $0x90] sm:$0xff]
        %v515 = vld [vmem:[%s422 + $0x98] sm:$0xff]
        %v516 = vld [vmem:[%s422 + $0xa0] sm:$0xff]
        %v517 = vld [vmem:[%s422 + $0xa8] sm:$0xff]
        %v518 = vld [vmem:[%s422 + $0xb0] sm:$0xff]
        %v519 = vld [vmem:[%s422 + $0xb8] sm:$0xff]
        %v520 = vld [vmem:[%s422 + $0xc0] sm:$0xff]
        %v521 = vld [vmem:[%s422 + $0xc8] sm:$0xff]
        %v522 = vld [vmem:[%s422 + $0xd0] sm:$0xff]
        %v523 = vld [vmem:[%s422 + $0xd8] sm:$0xff]
        %v524 = vld [vmem:[%s422 + $0xe0] sm:$0xff]
        %v525 = vld [vmem:[%s422 + $0xe8] sm:$0xff]
        %v526 = vld [vmem:[%s422 + $0xf0] sm:$0xff]
        %v527 = vld [vmem:[%s422 + $0xf8] sm:$0xff]
        %s528 = scalar_lea.vmem [#allocation2], 24
        %529 = vst.msk [vmem:[%s528 + $0x1] sm:$0xff] %vm426, %v496
        %530 = vst.msk [vmem:[%s528 + $0x9] sm:$0xff] %vm426, %v497
        %531 = vst.msk [vmem:[%s528 + $0x19] sm:$0xff] %vm426, %v498
        %532 = vst.msk [vmem:[%s528 + $0x21] sm:$0xff] %vm426, %v499
        %533 = vst.msk [vmem:[%s528 + $0x31] sm:$0xff] %vm426, %v500
        %534 = vst.msk [vmem:[%s528 + $0x39] sm:$0xff] %vm426, %v501
        %535 = vst.msk [vmem:[%s528 + $0x49] sm:$0xff] %vm426, %v502
        %536 = vst.msk [vmem:[%s528 + $0x51] sm:$0xff] %vm426, %v503
        %537 = vst.msk [vmem:[%s528 + $0x61] sm:$0xff] %vm426, %v504
        %538 = vst.msk [vmem:[%s528 + $0x69] sm:$0xff] %vm426, %v505
        %539 = vst.msk [vmem:[%s528 + $0x79] sm:$0xff] %vm426, %v506
        %540 = vst.msk [vmem:[%s528 + $0x81] sm:$0xff] %vm426, %v507
        %541 = vst.msk [vmem:[%s528 + $0x91] sm:$0xff] %vm426, %v508
        %542 = vst.msk [vmem:[%s528 + $0x99] sm:$0xff] %vm426, %v509
        %543 = vst.msk [vmem:[%s528 + $0xa9] sm:$0xff] %vm426, %v510
        %544 = vst.msk [vmem:[%s528 + $0xb1] sm:$0xff] %vm426, %v511
        %545 = vst.msk [vmem:[%s528 + $0xc1] sm:$0xff] %vm426, %v512
        %546 = vst.msk [vmem:[%s528 + $0xc9] sm:$0xff] %vm426, %v513
        %547 = vst.msk [vmem:[%s528 + $0xd9] sm:$0xff] %vm426, %v514
        %548 = vst.msk [vmem:[%s528 + $0xe1] sm:$0xff] %vm426, %v515
        %549 = vst.msk [vmem:[%s528 + $0xf1] sm:$0xff] %vm426, %v516
        %550 = vst.msk [vmem:[%s528 + $0xf9] sm:$0xff] %vm426, %v517
        %551 = vst.msk [vmem:[%s528 + $0x109] sm:$0xff] %vm426, %v518
        %552 = vst.msk [vmem:[%s528 + $0x111] sm:$0xff] %vm426, %v519
        %553 = vst.msk [vmem:[%s528 + $0x121] sm:$0xff] %vm426, %v520
        %554 = vst.msk [vmem:[%s528 + $0x129] sm:$0xff] %vm426, %v521
        %555 = vst.msk [vmem:[%s528 + $0x139] sm:$0xff] %vm426, %v522
        %556 = vst.msk [vmem:[%s528 + $0x141] sm:$0xff] %vm426, %v523
        %557 = vst.msk [vmem:[%s528 + $0x151] sm:$0xff] %vm426, %v524
        %558 = vst.msk [vmem:[%s528 + $0x159] sm:$0xff] %vm426, %v525
        %559 = vst.msk [vmem:[%s528 + $0x169] sm:$0xff] %vm426, %v526
        %560 = vst.msk [vmem:[%s528 + $0x171] sm:$0xff] %vm426, %v527
        %v561 = vld [vmem:[%s3] sm:$0x1]
        %v562 = vld [vmem:[%s4] sm:$0x1]
        %v563 = vld [vmem:[%s5] sm:$0x1]
        %v564 = vld [vmem:[#allocation2] sm:$0xff]
        %v565 = vld [vmem:[#allocation2 + $0x8] sm:$0xff]
        %v566 = vld [vmem:[#allocation2 + $0x18] sm:$0xff]
        %v567 = vld [vmem:[#allocation2 + $0x20] sm:$0xff]
        %v568 = vld [vmem:[#allocation2 + $0x30] sm:$0xff]
        %v569 = vld [vmem:[#allocation2 + $0x38] sm:$0xff]
        %v570 = vld [vmem:[#allocation2 + $0x48] sm:$0xff]
        %v571 = vld [vmem:[#allocation2 + $0x50] sm:$0xff]
        %v572 = vld [vmem:[#allocation2 + $0x60] sm:$0xff]
        %v573 = vld [vmem:[#allocation2 + $0x68] sm:$0xff]
        %v574 = vld [vmem:[#allocation2 + $0x78] sm:$0xff]
        %v575 = vld [vmem:[#allocation2 + $0x80] sm:$0xff]
        %v576 = vld [vmem:[#allocation2 + $0x90] sm:$0xff]
        %v577 = vld [vmem:[#allocation2 + $0x98] sm:$0xff]
        %v578 = vld [vmem:[#allocation2 + $0xa8] sm:$0xff]
        %v579 = vld [vmem:[#allocation2 + $0xb0] sm:$0xff]
        %580 = vst.msk [vmem:[#allocation3] sm:$0xff] %vm426, %v564
        %581 = vst.msk [vmem:[#allocation3 + $0x8] sm:$0xff] %vm426, %v565
        %582 = vst.msk [vmem:[#allocation3 + $0x10] sm:$0xff] %vm426, %v566
        %583 = vst.msk [vmem:[#allocation3 + $0x18] sm:$0xff] %vm426, %v567
        %584 = vst.msk [vmem:[#allocation3 + $0x20] sm:$0xff] %vm426, %v568
        %585 = vst.msk [vmem:[#allocation3 + $0x28] sm:$0xff] %vm426, %v569
        %586 = vst.msk [vmem:[#allocation3 + $0x30] sm:$0xff] %vm426, %v570
        %587 = vst.msk [vmem:[#allocation3 + $0x38] sm:$0xff] %vm426, %v571
        %588 = vst.msk [vmem:[#allocation3 + $0x40] sm:$0xff] %vm426, %v572
        %589 = vst.msk [vmem:[#allocation3 + $0x48] sm:$0xff] %vm426, %v573
        %590 = vst.msk [vmem:[#allocation3 + $0x50] sm:$0xff] %vm426, %v574
        %591 = vst.msk [vmem:[#allocation3 + $0x58] sm:$0xff] %vm426, %v575
        %592 = vst.msk [vmem:[#allocation3 + $0x60] sm:$0xff] %vm426, %v576
        %593 = vst.msk [vmem:[#allocation3 + $0x68] sm:$0xff] %vm426, %v577
        %594 = vst.msk [vmem:[#allocation3 + $0x70] sm:$0xff] %vm426, %v578
        %595 = vst.msk [vmem:[#allocation3 + $0x78] sm:$0xff] %vm426, %v579
        %v596 = vld [vmem:[#allocation2 + $0x1] sm:$0xff]
        %v597 = vld [vmem:[#allocation2 + $0x9] sm:$0xff]
        %v598 = vld [vmem:[#allocation2 + $0x19] sm:$0xff]
        %v599 = vld [vmem:[#allocation2 + $0x21] sm:$0xff]
        %v600 = vld [vmem:[#allocation2 + $0x31] sm:$0xff]
        %v601 = vld [vmem:[#allocation2 + $0x39] sm:$0xff]
        %v602 = vld [vmem:[#allocation2 + $0x49] sm:$0xff]
        %v603 = vld [vmem:[#allocation2 + $0x51] sm:$0xff]
        %v604 = vld [vmem:[#allocation2 + $0x61] sm:$0xff]
        %v605 = vld [vmem:[#allocation2 + $0x69] sm:$0xff]
        %v606 = vld [vmem:[#allocation2 + $0x79] sm:$0xff]
        %v607 = vld [vmem:[#allocation2 + $0x81] sm:$0xff]
        %v608 = vld [vmem:[#allocation2 + $0x91] sm:$0xff]
        %v609 = vld [vmem:[#allocation2 + $0x99] sm:$0xff]
        %v610 = vld [vmem:[#allocation2 + $0xa9] sm:$0xff]
        %v611 = vld [vmem:[#allocation2 + $0xb1] sm:$0xff]
        %628 = vrot.lane.b32.xlu0 %v596, 8
        %v629 = vpop.permute.xlu0 %628
        %630 = vrot.lane.b32.xlu0 %v597, 8
        %v631 = vpop.permute.xlu0 %630
        %632 = vrot.lane.b32.xlu0 %v598, 8
        %v633 = vpop.permute.xlu0 %632
        %634 = vrot.lane.b32.xlu0 %v599, 8
        %v635 = vpop.permute.xlu0 %634
        %636 = vrot.lane.b32.xlu0 %v600, 8
        %v637 = vpop.permute.xlu0 %636
        %638 = vrot.lane.b32.xlu0 %v601, 8
        %v639 = vpop.permute.xlu0 %638
        %640 = vrot.lane.b32.xlu0 %v602, 8
        %v641 = vpop.permute.xlu0 %640
        %642 = vrot.lane.b32.xlu0 %v603, 8
        %v643 = vpop.permute.xlu0 %642
        %644 = vrot.lane.b32.xlu0 %v604, 8
        %v645 = vpop.permute.xlu0 %644
        %646 = vrot.lane.b32.xlu0 %v605, 8
        %v647 = vpop.permute.xlu0 %646
        %648 = vrot.lane.b32.xlu0 %v606, 8
        %v649 = vpop.permute.xlu0 %648
        %650 = vrot.lane.b32.xlu0 %v607, 8
        %v651 = vpop.permute.xlu0 %650
        %652 = vrot.lane.b32.xlu0 %v608, 8
        %v653 = vpop.permute.xlu0 %652
        %654 = vrot.lane.b32.xlu0 %v609, 8
        %v655 = vpop.permute.xlu0 %654
        %656 = vrot.lane.b32.xlu0 %v610, 8
        %v657 = vpop.permute.xlu0 %656
        %658 = vrot.lane.b32.xlu0 %v611, 8
        %v659 = vpop.permute.xlu0 %658
        %vm676 = vcmask 130112
        %677 = vst.msk [vmem:[#allocation3] sm:$0xff] %vm676, %v629
        %678 = vst.msk [vmem:[#allocation3 + $0x8] sm:$0xff] %vm676, %v631
        %679 = vst.msk [vmem:[#allocation3 + $0x10] sm:$0xff] %vm676, %v633
        %680 = vst.msk [vmem:[#allocation3 + $0x18] sm:$0xff] %vm676, %v635
        %681 = vst.msk [vmem:[#allocation3 + $0x20] sm:$0xff] %vm676, %v637
        %682 = vst.msk [vmem:[#allocation3 + $0x28] sm:$0xff] %vm676, %v639
        %683 = vst.msk [vmem:[#allocation3 + $0x30] sm:$0xff] %vm676, %v641
        %684 = vst.msk [vmem:[#allocation3 + $0x38] sm:$0xff] %vm676, %v643
        %685 = vst.msk [vmem:[#allocation3 + $0x40] sm:$0xff] %vm676, %v645
        %686 = vst.msk [vmem:[#allocation3 + $0x48] sm:$0xff] %vm676, %v647
        %687 = vst.msk [vmem:[#allocation3 + $0x50] sm:$0xff] %vm676, %v649
        %688 = vst.msk [vmem:[#allocation3 + $0x58] sm:$0xff] %vm676, %v651
        %689 = vst.msk [vmem:[#allocation3 + $0x60] sm:$0xff] %vm676, %v653
        %690 = vst.msk [vmem:[#allocation3 + $0x68] sm:$0xff] %vm676, %v655
        %691 = vst.msk [vmem:[#allocation3 + $0x70] sm:$0xff] %vm676, %v657
        %692 = vst.msk [vmem:[#allocation3 + $0x78] sm:$0xff] %vm676, %v659
        %v693 = vld [vmem:[#allocation2 + $0x2] sm:$0xff]
        %v694 = vld [vmem:[#allocation2 + $0xa] sm:$0xff]
        %v695 = vld [vmem:[#allocation2 + $0x1a] sm:$0xff]
        %v696 = vld [vmem:[#allocation2 + $0x22] sm:$0xff]
        %v697 = vld [vmem:[#allocation2 + $0x32] sm:$0xff]
        %v698 = vld [vmem:[#allocation2 + $0x3a] sm:$0xff]
        %v699 = vld [vmem:[#allocation2 + $0x4a] sm:$0xff]
        %v700 = vld [vmem:[#allocation2 + $0x52] sm:$0xff]
        %v701 = vld [vmem:[#allocation2 + $0x62] sm:$0xff]
        %v702 = vld [vmem:[#allocation2 + $0x6a] sm:$0xff]
        %v703 = vld [vmem:[#allocation2 + $0x7a] sm:$0xff]
        %v704 = vld [vmem:[#allocation2 + $0x82] sm:$0xff]
        %v705 = vld [vmem:[#allocation2 + $0x92] sm:$0xff]
        %v706 = vld [vmem:[#allocation2 + $0x9a] sm:$0xff]
        %v707 = vld [vmem:[#allocation2 + $0xaa] sm:$0xff]
        %v708 = vld [vmem:[#allocation2 + $0xb2] sm:$0xff]
        %725 = vrot.lane.b32.xlu0 %v693, 16
        %v726 = vpop.permute.xlu0 %725
        %727 = vrot.lane.b32.xlu0 %v694, 16
        %v728 = vpop.permute.xlu0 %727
        %729 = vrot.lane.b32.xlu0 %v695, 16
        %v730 = vpop.permute.xlu0 %729
        %731 = vrot.lane.b32.xlu0 %v696, 16
        %v732 = vpop.permute.xlu0 %731
        %733 = vrot.lane.b32.xlu0 %v697, 16
        %v734 = vpop.permute.xlu0 %733
        %735 = vrot.lane.b32.xlu0 %v698, 16
        %v736 = vpop.permute.xlu0 %735
        %737 = vrot.lane.b32.xlu0 %v699, 16
        %v738 = vpop.permute.xlu0 %737
        %739 = vrot.lane.b32.xlu0 %v700, 16
        %v740 = vpop.permute.xlu0 %739
        %741 = vrot.lane.b32.xlu0 %v701, 16
        %v742 = vpop.permute.xlu0 %741
        %743 = vrot.lane.b32.xlu0 %v702, 16
        %v744 = vpop.permute.xlu0 %743
        %745 = vrot.lane.b32.xlu0 %v703, 16
        %v746 = vpop.permute.xlu0 %745
        %747 = vrot.lane.b32.xlu0 %v704, 16
        %v748 = vpop.permute.xlu0 %747
        %749 = vrot.lane.b32.xlu0 %v705, 16
        %v750 = vpop.permute.xlu0 %749
        %751 = vrot.lane.b32.xlu0 %v706, 16
        %v752 = vpop.permute.xlu0 %751
        %753 = vrot.lane.b32.xlu0 %v707, 16
        %v754 = vpop.permute.xlu0 %753
        %755 = vrot.lane.b32.xlu0 %v708, 16
        %v756 = vpop.permute.xlu0 %755
        %vm773 = vcmask 195712
        %774 = vst.msk [vmem:[#allocation3] sm:$0xff] %vm773, %v726
        %775 = vst.msk [vmem:[#allocation3 + $0x8] sm:$0xff] %vm773, %v728
        %776 = vst.msk [vmem:[#allocation3 + $0x10] sm:$0xff] %vm773, %v730
        %777 = vst.msk [vmem:[#allocation3 + $0x18] sm:$0xff] %vm773, %v732
        %778 = vst.msk [vmem:[#allocation3 + $0x20] sm:$0xff] %vm773, %v734
        %779 = vst.msk [vmem:[#allocation3 + $0x28] sm:$0xff] %vm773, %v736
        %780 = vst.msk [vmem:[#allocation3 + $0x30] sm:$0xff] %vm773, %v738
        %781 = vst.msk [vmem:[#allocation3 + $0x38] sm:$0xff] %vm773, %v740
        %782 = vst.msk [vmem:[#allocation3 + $0x40] sm:$0xff] %vm773, %v742
        %783 = vst.msk [vmem:[#allocation3 + $0x48] sm:$0xff] %vm773, %v744
        %784 = vst.msk [vmem:[#allocation3 + $0x50] sm:$0xff] %vm773, %v746
        %785 = vst.msk [vmem:[#allocation3 + $0x58] sm:$0xff] %vm773, %v748
        %786 = vst.msk [vmem:[#allocation3 + $0x60] sm:$0xff] %vm773, %v750
        %787 = vst.msk [vmem:[#allocation3 + $0x68] sm:$0xff] %vm773, %v752
        %788 = vst.msk [vmem:[#allocation3 + $0x70] sm:$0xff] %vm773, %v754
        %789 = vst.msk [vmem:[#allocation3 + $0x78] sm:$0xff] %vm773, %v756
        %v790 = vld [vmem:[%s528] sm:$0xff]
        %v791 = vld [vmem:[%s528 + $0x8] sm:$0xff]
        %v792 = vld [vmem:[%s528 + $0x18] sm:$0xff]
        %v793 = vld [vmem:[%s528 + $0x20] sm:$0xff]
        %v794 = vld [vmem:[%s528 + $0x30] sm:$0xff]
        %v795 = vld [vmem:[%s528 + $0x38] sm:$0xff]
        %v796 = vld [vmem:[%s528 + $0x48] sm:$0xff]
        %v797 = vld [vmem:[%s528 + $0x50] sm:$0xff]
        %v798 = vld [vmem:[%s528 + $0x60] sm:$0xff]
        %v799 = vld [vmem:[%s528 + $0x68] sm:$0xff]
        %v800 = vld [vmem:[%s528 + $0x78] sm:$0xff]
        %v801 = vld [vmem:[%s528 + $0x80] sm:$0xff]
        %v802 = vld [vmem:[%s528 + $0x90] sm:$0xff]
        %v803 = vld [vmem:[%s528 + $0x98] sm:$0xff]
        %v804 = vld [vmem:[%s528 + $0xa8] sm:$0xff]
        %v805 = vld [vmem:[%s528 + $0xb0] sm:$0xff]
        %822 = vrot.lane.b32.xlu0 %v790, 24
        %v823 = vpop.permute.xlu0 %822
        %824 = vrot.lane.b32.xlu0 %v791, 24
        %v825 = vpop.permute.xlu0 %824
        %826 = vrot.lane.b32.xlu0 %v792, 24
        %v827 = vpop.permute.xlu0 %826
        %828 = vrot.lane.b32.xlu0 %v793, 24
        %v829 = vpop.permute.xlu0 %828
        %830 = vrot.lane.b32.xlu0 %v794, 24
        %v831 = vpop.permute.xlu0 %830
        %832 = vrot.lane.b32.xlu0 %v795, 24
        %v833 = vpop.permute.xlu0 %832
        %834 = vrot.lane.b32.xlu0 %v796, 24
        %v835 = vpop.permute.xlu0 %834
        %836 = vrot.lane.b32.xlu0 %v797, 24
        %v837 = vpop.permute.xlu0 %836
        %838 = vrot.lane.b32.xlu0 %v798, 24
        %v839 = vpop.permute.xlu0 %838
        %840 = vrot.lane.b32.xlu0 %v799, 24
        %v841 = vpop.permute.xlu0 %840
        %842 = vrot.lane.b32.xlu0 %v800, 24
        %v843 = vpop.permute.xlu0 %842
        %844 = vrot.lane.b32.xlu0 %v801, 24
        %v845 = vpop.permute.xlu0 %844
        %846 = vrot.lane.b32.xlu0 %v802, 24
        %v847 = vpop.permute.xlu0 %846
        %848 = vrot.lane.b32.xlu0 %v803, 24
        %v849 = vpop.permute.xlu0 %848
        %850 = vrot.lane.b32.xlu0 %v804, 24
        %v851 = vpop.permute.xlu0 %850
        %852 = vrot.lane.b32.xlu0 %v805, 24
        %v853 = vpop.permute.xlu0 %852
        %vm870 = vcmask 261312
        %871 = vst.msk [vmem:[#allocation3] sm:$0xff] %vm870, %v823
        %872 = vst.msk [vmem:[#allocation3 + $0x8] sm:$0xff] %vm870, %v825
        %873 = vst.msk [vmem:[#allocation3 + $0x10] sm:$0xff] %vm870, %v827
        %874 = vst.msk [vmem:[#allocation3 + $0x18] sm:$0xff] %vm870, %v829
        %875 = vst.msk [vmem:[#allocation3 + $0x20] sm:$0xff] %vm870, %v831
        %876 = vst.msk [vmem:[#allocation3 + $0x28] sm:$0xff] %vm870, %v833
        %877 = vst.msk [vmem:[#allocation3 + $0x30] sm:$0xff] %vm870, %v835
        %878 = vst.msk [vmem:[#allocation3 + $0x38] sm:$0xff] %vm870, %v837
        %879 = vst.msk [vmem:[#allocation3 + $0x40] sm:$0xff] %vm870, %v839
        %880 = vst.msk [vmem:[#allocation3 + $0x48] sm:$0xff] %vm870, %v841
        %881 = vst.msk [vmem:[#allocation3 + $0x50] sm:$0xff] %vm870, %v843
        %882 = vst.msk [vmem:[#allocation3 + $0x58] sm:$0xff] %vm870, %v845
        %883 = vst.msk [vmem:[#allocation3 + $0x60] sm:$0xff] %vm870, %v847
        %884 = vst.msk [vmem:[#allocation3 + $0x68] sm:$0xff] %vm870, %v849
        %885 = vst.msk [vmem:[#allocation3 + $0x70] sm:$0xff] %vm870, %v851
        %886 = vst.msk [vmem:[#allocation3 + $0x78] sm:$0xff] %vm870, %v853
        %v887 = vld [vmem:[%s528 + $0x1] sm:$0xff]
        %v888 = vld [vmem:[%s528 + $0x9] sm:$0xff]
        %v889 = vld [vmem:[%s528 + $0x19] sm:$0xff]
        %v890 = vld [vmem:[%s528 + $0x21] sm:$0xff]
        %v891 = vld [vmem:[%s528 + $0x31] sm:$0xff]
        %v892 = vld [vmem:[%s528 + $0x39] sm:$0xff]
        %v893 = vld [vmem:[%s528 + $0x49] sm:$0xff]
        %v894 = vld [vmem:[%s528 + $0x51] sm:$0xff]
        %v895 = vld [vmem:[%s528 + $0x61] sm:$0xff]
        %v896 = vld [vmem:[%s528 + $0x69] sm:$0xff]
        %v897 = vld [vmem:[%s528 + $0x79] sm:$0xff]
        %v898 = vld [vmem:[%s528 + $0x81] sm:$0xff]
        %v899 = vld [vmem:[%s528 + $0x91] sm:$0xff]
        %v900 = vld [vmem:[%s528 + $0x99] sm:$0xff]
        %v901 = vld [vmem:[%s528 + $0xa9] sm:$0xff]
        %v902 = vld [vmem:[%s528 + $0xb1] sm:$0xff]
        %919 = vrot.lane.b32.xlu0 %v887, 32
        %v920 = vpop.permute.xlu0 %919
        %921 = vrot.lane.b32.xlu0 %v888, 32
        %v922 = vpop.permute.xlu0 %921
        %923 = vrot.lane.b32.xlu0 %v889, 32
        %v924 = vpop.permute.xlu0 %923
        %925 = vrot.lane.b32.xlu0 %v890, 32
        %v926 = vpop.permute.xlu0 %925
        %927 = vrot.lane.b32.xlu0 %v891, 32
        %v928 = vpop.permute.xlu0 %927
        %929 = vrot.lane.b32.xlu0 %v892, 32
        %v930 = vpop.permute.xlu0 %929
        %931 = vrot.lane.b32.xlu0 %v893, 32
        %v932 = vpop.permute.xlu0 %931
        %933 = vrot.lane.b32.xlu0 %v894, 32
        %v934 = vpop.permute.xlu0 %933
        %935 = vrot.lane.b32.xlu0 %v895, 32
        %v936 = vpop.permute.xlu0 %935
        %937 = vrot.lane.b32.xlu0 %v896, 32
        %v938 = vpop.permute.xlu0 %937
        %939 = vrot.lane.b32.xlu0 %v897, 32
        %v940 = vpop.permute.xlu0 %939
        %941 = vrot.lane.b32.xlu0 %v898, 32
        %v942 = vpop.permute.xlu0 %941
        %943 = vrot.lane.b32.xlu0 %v899, 32
        %v944 = vpop.permute.xlu0 %943
        %945 = vrot.lane.b32.xlu0 %v900, 32
        %v946 = vpop.permute.xlu0 %945
        %947 = vrot.lane.b32.xlu0 %v901, 32
        %v948 = vpop.permute.xlu0 %947
        %949 = vrot.lane.b32.xlu0 %v902, 32
        %v950 = vpop.permute.xlu0 %949
        %vm967 = vcmask 326912
        %968 = vst.msk [vmem:[#allocation3] sm:$0xff] %vm967, %v920
        %969 = vst.msk [vmem:[#allocation3 + $0x8] sm:$0xff] %vm967, %v922
        %970 = vst.msk [vmem:[#allocation3 + $0x10] sm:$0xff] %vm967, %v924
        %971 = vst.msk [vmem:[#allocation3 + $0x18] sm:$0xff] %vm967, %v926
        %972 = vst.msk [vmem:[#allocation3 + $0x20] sm:$0xff] %vm967, %v928
        %973 = vst.msk [vmem:[#allocation3 + $0x28] sm:$0xff] %vm967, %v930
        %974 = vst.msk [vmem:[#allocation3 + $0x30] sm:$0xff] %vm967, %v932
        %975 = vst.msk [vmem:[#allocation3 + $0x38] sm:$0xff] %vm967, %v934
        %976 = vst.msk [vmem:[#allocation3 + $0x40] sm:$0xff] %vm967, %v936
        %977 = vst.msk [vmem:[#allocation3 + $0x48] sm:$0xff] %vm967, %v938
        %978 = vst.msk [vmem:[#allocation3 + $0x50] sm:$0xff] %vm967, %v940
        %979 = vst.msk [vmem:[#allocation3 + $0x58] sm:$0xff] %vm967, %v942
        %980 = vst.msk [vmem:[#allocation3 + $0x60] sm:$0xff] %vm967, %v944
        %981 = vst.msk [vmem:[#allocation3 + $0x68] sm:$0xff] %vm967, %v946
        %982 = vst.msk [vmem:[#allocation3 + $0x70] sm:$0xff] %vm967, %v948
        %983 = vst.msk [vmem:[#allocation3 + $0x78] sm:$0xff] %vm967, %v950
        %v984 = vld [vmem:[%s528 + $0x2] sm:$0xff]
        %v985 = vld [vmem:[%s528 + $0xa] sm:$0xff]
        %v986 = vld [vmem:[%s528 + $0x1a] sm:$0xff]
        %v987 = vld [vmem:[%s528 + $0x22] sm:$0xff]
        %v988 = vld [vmem:[%s528 + $0x32] sm:$0xff]
        %v989 = vld [vmem:[%s528 + $0x3a] sm:$0xff]
        %v990 = vld [vmem:[%s528 + $0x4a] sm:$0xff]
        %v991 = vld [vmem:[%s528 + $0x52] sm:$0xff]
        %v992 = vld [vmem:[%s528 + $0x62] sm:$0xff]
        %v993 = vld [vmem:[%s528 + $0x6a] sm:$0xff]
        %v994 = vld [vmem:[%s528 + $0x7a] sm:$0xff]
        %v995 = vld [vmem:[%s528 + $0x82] sm:$0xff]
        %v996 = vld [vmem:[%s528 + $0x92] sm:$0xff]
        %v997 = vld [vmem:[%s528 + $0x9a] sm:$0xff]
        %v998 = vld [vmem:[%s528 + $0xaa] sm:$0xff]
        %v999 = vld [vmem:[%s528 + $0xb2] sm:$0xff]
        %1016 = vrot.lane.b32.xlu0 %v984, 40
        %v1017 = vpop.permute.xlu0 %1016
        %1018 = vrot.lane.b32.xlu0 %v985, 40
        %v1019 = vpop.permute.xlu0 %1018
        %1020 = vrot.lane.b32.xlu0 %v986, 40
        %v1021 = vpop.permute.xlu0 %1020
        %1022 = vrot.lane.b32.xlu0 %v987, 40
        %v1023 = vpop.permute.xlu0 %1022
        %1024 = vrot.lane.b32.xlu0 %v988, 40
        %v1025 = vpop.permute.xlu0 %1024
        %1026 = vrot.lane.b32.xlu0 %v989, 40
        %v1027 = vpop.permute.xlu0 %1026
        %1028 = vrot.lane.b32.xlu0 %v990, 40
        %v1029 = vpop.permute.xlu0 %1028
        %1030 = vrot.lane.b32.xlu0 %v991, 40
        %v1031 = vpop.permute.xlu0 %1030
        %1032 = vrot.lane.b32.xlu0 %v992, 40
        %v1033 = vpop.permute.xlu0 %1032
        %1034 = vrot.lane.b32.xlu0 %v993, 40
        %v1035 = vpop.permute.xlu0 %1034
        %1036 = vrot.lane.b32.xlu0 %v994, 40
        %v1037 = vpop.permute.xlu0 %1036
        %1038 = vrot.lane.b32.xlu0 %v995, 40
        %v1039 = vpop.permute.xlu0 %1038
        %1040 = vrot.lane.b32.xlu0 %v996, 40
        %v1041 = vpop.permute.xlu0 %1040
        %1042 = vrot.lane.b32.xlu0 %v997, 40
        %v1043 = vpop.permute.xlu0 %1042
        %1044 = vrot.lane.b32.xlu0 %v998, 40
        %v1045 = vpop.permute.xlu0 %1044
        %1046 = vrot.lane.b32.xlu0 %v999, 40
        %v1047 = vpop.permute.xlu0 %1046
        %vm1064 = vcmask 392512
        %1065 = vst.msk [vmem:[#allocation3] sm:$0xff] %vm1064, %v1017
        %1066 = vst.msk [vmem:[#allocation3 + $0x8] sm:$0xff] %vm1064, %v1019
        %1067 = vst.msk [vmem:[#allocation3 + $0x10] sm:$0xff] %vm1064, %v1021
        %1068 = vst.msk [vmem:[#allocation3 + $0x18] sm:$0xff] %vm1064, %v1023
        %1069 = vst.msk [vmem:[#allocation3 + $0x20] sm:$0xff] %vm1064, %v1025
        %1070 = vst.msk [vmem:[#allocation3 + $0x28] sm:$0xff] %vm1064, %v1027
        %1071 = vst.msk [vmem:[#allocation3 + $0x30] sm:$0xff] %vm1064, %v1029
        %1072 = vst.msk [vmem:[#allocation3 + $0x38] sm:$0xff] %vm1064, %v1031
        %1073 = vst.msk [vmem:[#allocation3 + $0x40] sm:$0xff] %vm1064, %v1033
        %1074 = vst.msk [vmem:[#allocation3 + $0x48] sm:$0xff] %vm1064, %v1035
        %1075 = vst.msk [vmem:[#allocation3 + $0x50] sm:$0xff] %vm1064, %v1037
        %1076 = vst.msk [vmem:[#allocation3 + $0x58] sm:$0xff] %vm1064, %v1039
        %1077 = vst.msk [vmem:[#allocation3 + $0x60] sm:$0xff] %vm1064, %v1041
        %1078 = vst.msk [vmem:[#allocation3 + $0x68] sm:$0xff] %vm1064, %v1043
        %1079 = vst.msk [vmem:[#allocation3 + $0x70] sm:$0xff] %vm1064, %v1045
        %1080 = vst.msk [vmem:[#allocation3 + $0x78] sm:$0xff] %vm1064, %v1047
        %s1081 = scalar_lea.vmem [#allocation2], 48
        %v1082 = vld [vmem:[%s1081] sm:$0xff]
        %v1083 = vld [vmem:[%s1081 + $0x8] sm:$0xff]
        %v1084 = vld [vmem:[%s1081 + $0x18] sm:$0xff]
        %v1085 = vld [vmem:[%s1081 + $0x20] sm:$0xff]
        %v1086 = vld [vmem:[%s1081 + $0x30] sm:$0xff]
        %v1087 = vld [vmem:[%s1081 + $0x38] sm:$0xff]
        %v1088 = vld [vmem:[%s1081 + $0x48] sm:$0xff]
        %v1089 = vld [vmem:[%s1081 + $0x50] sm:$0xff]
        %v1090 = vld [vmem:[%s1081 + $0x60] sm:$0xff]
        %v1091 = vld [vmem:[%s1081 + $0x68] sm:$0xff]
        %v1092 = vld [vmem:[%s1081 + $0x78] sm:$0xff]
        %v1093 = vld [vmem:[%s1081 + $0x80] sm:$0xff]
        %v1094 = vld [vmem:[%s1081 + $0x90] sm:$0xff]
        %v1095 = vld [vmem:[%s1081 + $0x98] sm:$0xff]
        %v1096 = vld [vmem:[%s1081 + $0xa8] sm:$0xff]
        %v1097 = vld [vmem:[%s1081 + $0xb0] sm:$0xff]
        %1114 = vrot.lane.b32.xlu0 %v1082, 48
        %v1115 = vpop.permute.xlu0 %1114
        %1116 = vrot.lane.b32.xlu0 %v1083, 48
        %v1117 = vpop.permute.xlu0 %1116
        %1118 = vrot.lane.b32.xlu0 %v1084, 48
        %v1119 = vpop.permute.xlu0 %1118
        %1120 = vrot.lane.b32.xlu0 %v1085, 48
        %v1121 = vpop.permute.xlu0 %1120
        %1122 = vrot.lane.b32.xlu0 %v1086, 48
        %v1123 = vpop.permute.xlu0 %1122
        %1124 = vrot.lane.b32.xlu0 %v1087, 48
        %v1125 = vpop.permute.xlu0 %1124
        %1126 = vrot.lane.b32.xlu0 %v1088, 48
        %v1127 = vpop.permute.xlu0 %1126
        %1128 = vrot.lane.b32.xlu0 %v1089, 48
        %v1129 = vpop.permute.xlu0 %1128
        %1130 = vrot.lane.b32.xlu0 %v1090, 48
        %v1131 = vpop.permute.xlu0 %1130
        %1132 = vrot.lane.b32.xlu0 %v1091, 48
        %v1133 = vpop.permute.xlu0 %1132
        %1134 = vrot.lane.b32.xlu0 %v1092, 48
        %v1135 = vpop.permute.xlu0 %1134
        %1136 = vrot.lane.b32.xlu0 %v1093, 48
        %v1137 = vpop.permute.xlu0 %1136
        %1138 = vrot.lane.b32.xlu0 %v1094, 48
        %v1139 = vpop.permute.xlu0 %1138
        %1140 = vrot.lane.b32.xlu0 %v1095, 48
        %v1141 = vpop.permute.xlu0 %1140
        %1142 = vrot.lane.b32.xlu0 %v1096, 48
        %v1143 = vpop.permute.xlu0 %1142
        %1144 = vrot.lane.b32.xlu0 %v1097, 48
        %v1145 = vpop.permute.xlu0 %1144
        %vm1162 = vcmask 458112
        %1163 = vst.msk [vmem:[#allocation3] sm:$0xff] %vm1162, %v1115
        %1164 = vst.msk [vmem:[#allocation3 + $0x8] sm:$0xff] %vm1162, %v1117
        %1165 = vst.msk [vmem:[#allocation3 + $0x10] sm:$0xff] %vm1162, %v1119
        %1166 = vst.msk [vmem:[#allocation3 + $0x18] sm:$0xff] %vm1162, %v1121
        %1167 = vst.msk [vmem:[#allocation3 + $0x20] sm:$0xff] %vm1162, %v1123
        %1168 = vst.msk [vmem:[#allocation3 + $0x28] sm:$0xff] %vm1162, %v1125
        %1169 = vst.msk [vmem:[#allocation3 + $0x30] sm:$0xff] %vm1162, %v1127
        %1170 = vst.msk [vmem:[#allocation3 + $0x38] sm:$0xff] %vm1162, %v1129
        %1171 = vst.msk [vmem:[#allocation3 + $0x40] sm:$0xff] %vm1162, %v1131
        %1172 = vst.msk [vmem:[#allocation3 + $0x48] sm:$0xff] %vm1162, %v1133
        %1173 = vst.msk [vmem:[#allocation3 + $0x50] sm:$0xff] %vm1162, %v1135
        %1174 = vst.msk [vmem:[#allocation3 + $0x58] sm:$0xff] %vm1162, %v1137
        %1175 = vst.msk [vmem:[#allocation3 + $0x60] sm:$0xff] %vm1162, %v1139
        %1176 = vst.msk [vmem:[#allocation3 + $0x68] sm:$0xff] %vm1162, %v1141
        %1177 = vst.msk [vmem:[#allocation3 + $0x70] sm:$0xff] %vm1162, %v1143
        %1178 = vst.msk [vmem:[#allocation3 + $0x78] sm:$0xff] %vm1162, %v1145
        %v1179 = vld [vmem:[%s1081 + $0x1] sm:$0xff]
        %v1180 = vld [vmem:[%s1081 + $0x9] sm:$0xff]
        %v1181 = vld [vmem:[%s1081 + $0x19] sm:$0xff]
        %v1182 = vld [vmem:[%s1081 + $0x21] sm:$0xff]
        %v1183 = vld [vmem:[%s1081 + $0x31] sm:$0xff]
        %v1184 = vld [vmem:[%s1081 + $0x39] sm:$0xff]
        %v1185 = vld [vmem:[%s1081 + $0x49] sm:$0xff]
        %v1186 = vld [vmem:[%s1081 + $0x51] sm:$0xff]
        %v1187 = vld [vmem:[%s1081 + $0x61] sm:$0xff]
        %v1188 = vld [vmem:[%s1081 + $0x69] sm:$0xff]
        %v1189 = vld [vmem:[%s1081 + $0x79] sm:$0xff]
        %v1190 = vld [vmem:[%s1081 + $0x81] sm:$0xff]
        %v1191 = vld [vmem:[%s1081 + $0x91] sm:$0xff]
        %v1192 = vld [vmem:[%s1081 + $0x99] sm:$0xff]
        %v1193 = vld [vmem:[%s1081 + $0xa9] sm:$0xff]
        %v1194 = vld [vmem:[%s1081 + $0xb1] sm:$0xff]
        %1211 = vrot.lane.b32.xlu0 %v1179, 56
        %v1212 = vpop.permute.xlu0 %1211
        %1213 = vrot.lane.b32.xlu0 %v1180, 56
        %v1214 = vpop.permute.xlu0 %1213
        %1215 = vrot.lane.b32.xlu0 %v1181, 56
        %v1216 = vpop.permute.xlu0 %1215
        %1217 = vrot.lane.b32.xlu0 %v1182, 56
        %v1218 = vpop.permute.xlu0 %1217
        %1219 = vrot.lane.b32.xlu0 %v1183, 56
        %v1220 = vpop.permute.xlu0 %1219
        %1221 = vrot.lane.b32.xlu0 %v1184, 56
        %v1222 = vpop.permute.xlu0 %1221
        %1223 = vrot.lane.b32.xlu0 %v1185, 56
        %v1224 = vpop.permute.xlu0 %1223
        %1225 = vrot.lane.b32.xlu0 %v1186, 56
        %v1226 = vpop.permute.xlu0 %1225
        %1227 = vrot.lane.b32.xlu0 %v1187, 56
        %v1228 = vpop.permute.xlu0 %1227
        %1229 = vrot.lane.b32.xlu0 %v1188, 56
        %v1230 = vpop.permute.xlu0 %1229
        %1231 = vrot.lane.b32.xlu0 %v1189, 56
        %v1232 = vpop.permute.xlu0 %1231
        %1233 = vrot.lane.b32.xlu0 %v1190, 56
        %v1234 = vpop.permute.xlu0 %1233
        %1235 = vrot.lane.b32.xlu0 %v1191, 56
        %v1236 = vpop.permute.xlu0 %1235
        %1237 = vrot.lane.b32.xlu0 %v1192, 56
        %v1238 = vpop.permute.xlu0 %1237
        %1239 = vrot.lane.b32.xlu0 %v1193, 56
        %v1240 = vpop.permute.xlu0 %1239
        %1241 = vrot.lane.b32.xlu0 %v1194, 56
        %v1242 = vpop.permute.xlu0 %1241
        %vm1259 = vcmask 523712
        %1260 = vst.msk [vmem:[#allocation3] sm:$0xff] %vm1259, %v1212
        %1261 = vst.msk [vmem:[#allocation3 + $0x8] sm:$0xff] %vm1259, %v1214
        %1262 = vst.msk [vmem:[#allocation3 + $0x10] sm:$0xff] %vm1259, %v1216
        %1263 = vst.msk [vmem:[#allocation3 + $0x18] sm:$0xff] %vm1259, %v1218
        %1264 = vst.msk [vmem:[#allocation3 + $0x20] sm:$0xff] %vm1259, %v1220
        %1265 = vst.msk [vmem:[#allocation3 + $0x28] sm:$0xff] %vm1259, %v1222
        %1266 = vst.msk [vmem:[#allocation3 + $0x30] sm:$0xff] %vm1259, %v1224
        %1267 = vst.msk [vmem:[#allocation3 + $0x38] sm:$0xff] %vm1259, %v1226
        %1268 = vst.msk [vmem:[#allocation3 + $0x40] sm:$0xff] %vm1259, %v1228
        %1269 = vst.msk [vmem:[#allocation3 + $0x48] sm:$0xff] %vm1259, %v1230
        %1270 = vst.msk [vmem:[#allocation3 + $0x50] sm:$0xff] %vm1259, %v1232
        %1271 = vst.msk [vmem:[#allocation3 + $0x58] sm:$0xff] %vm1259, %v1234
        %1272 = vst.msk [vmem:[#allocation3 + $0x60] sm:$0xff] %vm1259, %v1236
        %1273 = vst.msk [vmem:[#allocation3 + $0x68] sm:$0xff] %vm1259, %v1238
        %1274 = vst.msk [vmem:[#allocation3 + $0x70] sm:$0xff] %vm1259, %v1240
        %1275 = vst.msk [vmem:[#allocation3 + $0x78] sm:$0xff] %vm1259, %v1242
        %v1276 = vld [vmem:[%s1081 + $0x2] sm:$0xff]
        %v1277 = vld [vmem:[%s1081 + $0xa] sm:$0xff]
        %v1278 = vld [vmem:[%s1081 + $0x1a] sm:$0xff]
        %v1279 = vld [vmem:[%s1081 + $0x22] sm:$0xff]
        %v1280 = vld [vmem:[%s1081 + $0x32] sm:$0xff]
        %v1281 = vld [vmem:[%s1081 + $0x3a] sm:$0xff]
        %v1282 = vld [vmem:[%s1081 + $0x4a] sm:$0xff]
        %v1283 = vld [vmem:[%s1081 + $0x52] sm:$0xff]
        %v1284 = vld [vmem:[%s1081 + $0x62] sm:$0xff]
        %v1285 = vld [vmem:[%s1081 + $0x6a] sm:$0xff]
        %v1286 = vld [vmem:[%s1081 + $0x7a] sm:$0xff]
        %v1287 = vld [vmem:[%s1081 + $0x82] sm:$0xff]
        %v1288 = vld [vmem:[%s1081 + $0x92] sm:$0xff]
        %v1289 = vld [vmem:[%s1081 + $0x9a] sm:$0xff]
        %v1290 = vld [vmem:[%s1081 + $0xaa] sm:$0xff]
        %v1291 = vld [vmem:[%s1081 + $0xb2] sm:$0xff]
        %1308 = vrot.lane.b32.xlu0 %v1276, 64
        %v1309 = vpop.permute.xlu0 %1308
        %1310 = vrot.lane.b32.xlu0 %v1277, 64
        %v1311 = vpop.permute.xlu0 %1310
        %1312 = vrot.lane.b32.xlu0 %v1278, 64
        %v1313 = vpop.permute.xlu0 %1312
        %1314 = vrot.lane.b32.xlu0 %v1279, 64
        %v1315 = vpop.permute.xlu0 %1314
        %1316 = vrot.lane.b32.xlu0 %v1280, 64
        %v1317 = vpop.permute.xlu0 %1316
        %1318 = vrot.lane.b32.xlu0 %v1281, 64
        %v1319 = vpop.permute.xlu0 %1318
        %1320 = vrot.lane.b32.xlu0 %v1282, 64
        %v1321 = vpop.permute.xlu0 %1320
        %1322 = vrot.lane.b32.xlu0 %v1283, 64
        %v1323 = vpop.permute.xlu0 %1322
        %1324 = vrot.lane.b32.xlu0 %v1284, 64
        %v1325 = vpop.permute.xlu0 %1324
        %1326 = vrot.lane.b32.xlu0 %v1285, 64
        %v1327 = vpop.permute.xlu0 %1326
        %1328 = vrot.lane.b32.xlu0 %v1286, 64
        %v1329 = vpop.permute.xlu0 %1328
        %1330 = vrot.lane.b32.xlu0 %v1287, 64
        %v1331 = vpop.permute.xlu0 %1330
        %1332 = vrot.lane.b32.xlu0 %v1288, 64
        %v1333 = vpop.permute.xlu0 %1332
        %1334 = vrot.lane.b32.xlu0 %v1289, 64
        %v1335 = vpop.permute.xlu0 %1334
        %1336 = vrot.lane.b32.xlu0 %v1290, 64
        %v1337 = vpop.permute.xlu0 %1336
        %1338 = vrot.lane.b32.xlu0 %v1291, 64
        %v1339 = vpop.permute.xlu0 %1338
        %vm1356 = vcmask 589312
        %1357 = vst.msk [vmem:[#allocation3] sm:$0xff] %vm1356, %v1309
        %1358 = vst.msk [vmem:[#allocation3 + $0x8] sm:$0xff] %vm1356, %v1311
        %1359 = vst.msk [vmem:[#allocation3 + $0x10] sm:$0xff] %vm1356, %v1313
        %1360 = vst.msk [vmem:[#allocation3 + $0x18] sm:$0xff] %vm1356, %v1315
        %1361 = vst.msk [vmem:[#allocation3 + $0x20] sm:$0xff] %vm1356, %v1317
        %1362 = vst.msk [vmem:[#allocation3 + $0x28] sm:$0xff] %vm1356, %v1319
        %1363 = vst.msk [vmem:[#allocation3 + $0x30] sm:$0xff] %vm1356, %v1321
        %1364 = vst.msk [vmem:[#allocation3 + $0x38] sm:$0xff] %vm1356, %v1323
        %1365 = vst.msk [vmem:[#allocation3 + $0x40] sm:$0xff] %vm1356, %v1325
        %1366 = vst.msk [vmem:[#allocation3 + $0x48] sm:$0xff] %vm1356, %v1327
        %1367 = vst.msk [vmem:[#allocation3 + $0x50] sm:$0xff] %vm1356, %v1329
        %1368 = vst.msk [vmem:[#allocation3 + $0x58] sm:$0xff] %vm1356, %v1331
        %1369 = vst.msk [vmem:[#allocation3 + $0x60] sm:$0xff] %vm1356, %v1333
        %1370 = vst.msk [vmem:[#allocation3 + $0x68] sm:$0xff] %vm1356, %v1335
        %1371 = vst.msk [vmem:[#allocation3 + $0x70] sm:$0xff] %vm1356, %v1337
        %1372 = vst.msk [vmem:[#allocation3 + $0x78] sm:$0xff] %vm1356, %v1339
        %v1373 = vld [vmem:[#allocation3] sm:$0xff]
        %v1374 = vld [vmem:[#allocation3 + $0x8] sm:$0xff]
        %v1375 = vld [vmem:[#allocation3 + $0x10] sm:$0xff]
        %v1376 = vld [vmem:[#allocation3 + $0x18] sm:$0xff]
        %v1377 = vld [vmem:[#allocation3 + $0x20] sm:$0xff]
        %v1378 = vld [vmem:[#allocation3 + $0x28] sm:$0xff]
        %v1379 = vld [vmem:[#allocation3 + $0x30] sm:$0xff]
        %v1380 = vld [vmem:[#allocation3 + $0x38] sm:$0xff]
        %v1381 = vld [vmem:[#allocation3 + $0x40] sm:$0xff]
        %v1382 = vld [vmem:[#allocation3 + $0x48] sm:$0xff]
        %v1383 = vld [vmem:[#allocation3 + $0x50] sm:$0xff]
        %v1384 = vld [vmem:[#allocation3 + $0x58] sm:$0xff]
        %v1385 = vld [vmem:[#allocation3 + $0x60] sm:$0xff]
        %v1386 = vld [vmem:[#allocation3 + $0x68] sm:$0xff]
        %v1387 = vld [vmem:[#allocation3 + $0x70] sm:$0xff]
        %v1388 = vld [vmem:[#allocation3 + $0x78] sm:$0xff]
        %v1389 = vld [vmem:[%s2] sm:$0xff]
        %v1390 = vld [vmem:[%s2 + $0x8] sm:$0xff]
        %v1391 = vld [vmem:[%s2 + $0x10] sm:$0xff]
        %v1392 = vld [vmem:[%s2 + $0x18] sm:$0xff]
        %v1393 = vld [vmem:[%s2 + $0x20] sm:$0xff]
        %v1394 = vld [vmem:[%s2 + $0x28] sm:$0xff]
        %v1395 = vld [vmem:[%s2 + $0x30] sm:$0xff]
        %v1396 = vld [vmem:[%s2 + $0x38] sm:$0xff]
        %v1397 = vld [vmem:[%s2 + $0x40] sm:$0xff]
        %v1399 = vperm.slane %v561, 0
        %vm1401 = vcmask 588800
        %v1403 = vsel %vm1401, %v1373, 0
        %v1406 = vsel %vm1401, %v1374, 0
        %v1409 = vsel %vm1401, %v1375, 0
        %v1412 = vsel %vm1401, %v1376, 0
        %v1415 = vsel %vm1401, %v1377, 0
        %v1418 = vsel %vm1401, %v1378, 0
        %v1421 = vsel %vm1401, %v1379, 0
        %v1424 = vsel %vm1401, %v1380, 0
        %v1427 = vsel %vm1401, %v1381, 0
        %v1430 = vsel %vm1401, %v1382, 0
        %v1433 = vsel %vm1401, %v1383, 0
        %v1436 = vsel %vm1401, %v1384, 0
        %v1439 = vsel %vm1401, %v1385, 0
        %v1442 = vsel %vm1401, %v1386, 0
        %v1445 = vsel %vm1401, %v1387, 0
        %v1448 = vsel %vm1401, %v1388, 0
        %1450 = vmatpush.msra.mxu0 0.0
        %1451 = vmatpush.msra.mxu0 0.0
        %1452 = vmatpush.msra.mxu0 0.0
        %1453 = vmatpush.msra.mxu0 0.0
        %1454 = vmatpush.msra.mxu0 0.0
        %1455 = vmatpush.msra.mxu0 0.0
        %1456 = vmatpush.msra.mxu0 0.0
        %1457 = vmatpush.msra.mxu0 %v1397
        %1458 = vmatpush.msra.mxu0 %v1396
        %1459 = vmatpush.msra.mxu0 %v1395
        %1460 = vmatpush.msra.mxu0 %v1394
        %1461 = vmatpush.msra.mxu0 %v1393
        %1462 = vmatpush.msra.mxu0 %v1392
        %1463 = vmatpush.msra.mxu0 %v1391
        %1464 = vmatpush.msra.mxu0 %v1390
        %1465 = vmatpush.msra.mxu0 %v1389
        %1466 = vmatmul.f32.gmra.mxu0 %v1403
        %v1467 = vpop.f32.mrf.mxu0
        %v1468 = vadd.f32 %v1399, %v1467
        %1469 = vmatmul.f32.gmra.mxu0 %v1406
        %v1470 = vpop.f32.mrf.mxu0
        %v1471 = vadd.f32 %v1399, %v1470
        %1472 = vmatmul.f32.gmra.mxu0 %v1409
        %v1473 = vpop.f32.mrf.mxu0
        %v1474 = vadd.f32 %v1399, %v1473
        %1475 = vmatmul.f32.gmra.mxu0 %v1412
        %v1476 = vpop.f32.mrf.mxu0
        %v1477 = vadd.f32 %v1399, %v1476
        %1478 = vmatmul.f32.gmra.mxu0 %v1415
        %v1479 = vpop.f32.mrf.mxu0
        %v1480 = vadd.f32 %v1399, %v1479
        %1481 = vmatmul.f32.gmra.mxu0 %v1418
        %v1482 = vpop.f32.mrf.mxu0
        %v1483 = vadd.f32 %v1399, %v1482
        %1484 = vmatmul.f32.gmra.mxu0 %v1421
        %v1485 = vpop.f32.mrf.mxu0
        %v1486 = vadd.f32 %v1399, %v1485
        %1487 = vmatmul.f32.gmra.mxu0 %v1424
        %v1488 = vpop.f32.mrf.mxu0
        %v1489 = vadd.f32 %v1399, %v1488
        %1490 = vmatmul.f32.gmra.mxu0 %v1427
        %v1491 = vpop.f32.mrf.mxu0
        %v1492 = vadd.f32 %v1399, %v1491
        %1493 = vmatmul.f32.gmra.mxu0 %v1430
        %v1494 = vpop.f32.mrf.mxu0
        %v1495 = vadd.f32 %v1399, %v1494
        %1496 = vmatmul.f32.gmra.mxu0 %v1433
        %v1497 = vpop.f32.mrf.mxu0
        %v1498 = vadd.f32 %v1399, %v1497
        %1499 = vmatmul.f32.gmra.mxu0 %v1436
        %v1500 = vpop.f32.mrf.mxu0
        %v1501 = vadd.f32 %v1399, %v1500
        %1502 = vmatmul.f32.gmra.mxu0 %v1439
        %v1503 = vpop.f32.mrf.mxu0
        %v1504 = vadd.f32 %v1399, %v1503
        %1505 = vmatmul.f32.gmra.mxu0 %v1442
        %v1506 = vpop.f32.mrf.mxu0
        %v1507 = vadd.f32 %v1399, %v1506
        %1508 = vmatmul.f32.gmra.mxu0 %v1445
        %v1509 = vpop.f32.mrf.mxu0
        %v1510 = vadd.f32 %v1399, %v1509
        %1511 = vmatmul.f32.gmra.mxu0 %v1448
        %v1512 = vpop.f32.mrf.mxu0
        %v1513 = vadd.f32 %v1399, %v1512
        %1514 = vdwg.mxu0
        %1515 = vst.msk [vmem:[#allocation4] sm:$0xff] %vm426, %v1468
        %1516 = vst.msk [vmem:[#allocation4 + $0x8] sm:$0xff] %vm426, %v1471
        %1517 = vst.msk [vmem:[#allocation4 + $0x10] sm:$0xff] %vm426, %v1474
        %1518 = vst.msk [vmem:[#allocation4 + $0x18] sm:$0xff] %vm426, %v1477
        %1519 = vst.msk [vmem:[#allocation4 + $0x20] sm:$0xff] %vm426, %v1480
        %1520 = vst.msk [vmem:[#allocation4 + $0x28] sm:$0xff] %vm426, %v1483
        %1521 = vst.msk [vmem:[#allocation4 + $0x30] sm:$0xff] %vm426, %v1486
        %1522 = vst.msk [vmem:[#allocation4 + $0x38] sm:$0xff] %vm426, %v1489
        %1523 = vst.msk [vmem:[#allocation4 + $0x40] sm:$0xff] %vm426, %v1492
        %1524 = vst.msk [vmem:[#allocation4 + $0x48] sm:$0xff] %vm426, %v1495
        %1525 = vst.msk [vmem:[#allocation4 + $0x50] sm:$0xff] %vm426, %v1498
        %1526 = vst.msk [vmem:[#allocation4 + $0x58] sm:$0xff] %vm426, %v1501
        %1527 = vst.msk [vmem:[#allocation4 + $0x60] sm:$0xff] %vm426, %v1504
        %1528 = vst.msk [vmem:[#allocation4 + $0x68] sm:$0xff] %vm426, %v1507
        %1529 = vst.msk [vmem:[#allocation4 + $0x70] sm:$0xff] %vm426, %v1510
        %1530 = vst.msk [vmem:[#allocation4 + $0x78] sm:$0xff] %vm426, %v1513
        %v1531 = vsel %vm426, %v1468, 0.0
        %v1532 = vsel %vm426, %v1471, 0.0
        %v1533 = vadd.f32 %v1531, %v1532
        %v1534 = vsel %vm426, %v1474, 0.0
        %v1535 = vadd.f32 %v1533, %v1534
        %v1536 = vsel %vm426, %v1477, 0.0
        %v1537 = vadd.f32 %v1535, %v1536
        %v1538 = vsel %vm426, %v1480, 0.0
        %v1539 = vadd.f32 %v1537, %v1538
        %v1540 = vsel %vm426, %v1483, 0.0
        %v1541 = vadd.f32 %v1539, %v1540
        %v1542 = vsel %vm426, %v1486, 0.0
        %v1543 = vadd.f32 %v1541, %v1542
        %v1544 = vsel %vm426, %v1489, 0.0
        %v1545 = vadd.f32 %v1543, %v1544
        %v1546 = vsel %vm426, %v1492, 0.0
        %v1547 = vadd.f32 %v1545, %v1546
        %v1548 = vsel %vm426, %v1495, 0.0
        %v1549 = vadd.f32 %v1547, %v1548
        %v1550 = vsel %vm426, %v1498, 0.0
        %v1551 = vadd.f32 %v1549, %v1550
        %v1552 = vsel %vm426, %v1501, 0.0
        %v1553 = vadd.f32 %v1551, %v1552
        %v1554 = vsel %vm426, %v1504, 0.0
        %v1555 = vadd.f32 %v1553, %v1554
        %v1556 = vsel %vm426, %v1507, 0.0
        %v1557 = vadd.f32 %v1555, %v1556
        %v1558 = vsel %vm426, %v1510, 0.0
        %v1559 = vadd.f32 %v1557, %v1558
        %v1560 = vsel %vm426, %v1513, 0.0
        %v1561 = vadd.f32 %v1559, %v1560
        %v1562 = vrot.slane %v1561, 4
        %v1563 = vadd.f32 %v1561, %v1562
        %v1564 = vrot.slane %v1563, 2
        %v1565 = vadd.f32 %v1563, %v1564
        %v1566 = vrot.slane %v1565, 1
        %v1567 = vadd.f32 %v1565, %v1566
        %v1568 = vadd.f32 %v1567, 0.0
        %v1569 = vmul.f32 %v1468, %v1468
        %v1570 = vmul.f32 %v1471, %v1471
        %v1571 = vmul.f32 %v1474, %v1474
        %v1572 = vmul.f32 %v1477, %v1477
        %v1573 = vmul.f32 %v1480, %v1480
        %v1574 = vmul.f32 %v1483, %v1483
        %v1575 = vmul.f32 %v1486, %v1486
        %v1576 = vmul.f32 %v1489, %v1489
        %v1577 = vmul.f32 %v1492, %v1492
        %v1578 = vmul.f32 %v1495, %v1495
        %v1579 = vmul.f32 %v1498, %v1498
        %v1580 = vmul.f32 %v1501, %v1501
        %v1581 = vmul.f32 %v1504, %v1504
        %v1582 = vmul.f32 %v1507, %v1507
        %v1583 = vmul.f32 %v1510, %v1510
        %v1584 = vmul.f32 %v1513, %v1513
        %v1585 = vsel %vm426, %v1569, 0.0
        %v1586 = vsel %vm426, %v1570, 0.0
        %v1587 = vadd.f32 %v1585, %v1586
        %v1588 = vsel %vm426, %v1571, 0.0
        %v1589 = vadd.f32 %v1587, %v1588
        %v1590 = vsel %vm426, %v1572, 0.0
        %v1591 = vadd.f32 %v1589, %v1590
        %v1592 = vsel %vm426, %v1573, 0.0
        %v1593 = vadd.f32 %v1591, %v1592
        %v1594 = vsel %vm426, %v1574, 0.0
        %v1595 = vadd.f32 %v1593, %v1594
        %v1596 = vsel %vm426, %v1575, 0.0
        %v1597 = vadd.f32 %v1595, %v1596
        %v1598 = vsel %vm426, %v1576, 0.0
        %v1599 = vadd.f32 %v1597, %v1598
        %v1600 = vsel %vm426, %v1577, 0.0
        %v1601 = vadd.f32 %v1599, %v1600
        %v1602 = vsel %vm426, %v1578, 0.0
        %v1603 = vadd.f32 %v1601, %v1602
        %v1604 = vsel %vm426, %v1579, 0.0
        %v1605 = vadd.f32 %v1603, %v1604
        %v1606 = vsel %vm426, %v1580, 0.0
        %v1607 = vadd.f32 %v1605, %v1606
        %v1608 = vsel %vm426, %v1581, 0.0
        %v1609 = vadd.f32 %v1607, %v1608
        %v1610 = vsel %vm426, %v1582, 0.0
        %v1611 = vadd.f32 %v1609, %v1610
        %v1612 = vsel %vm426, %v1583, 0.0
        %v1613 = vadd.f32 %v1611, %v1612
        %v1614 = vsel %vm426, %v1584, 0.0
        %v1615 = vadd.f32 %v1613, %v1614
        %v1616 = vrot.slane %v1615, 4
        %v1617 = vadd.f32 %v1615, %v1616
        %v1618 = vrot.slane %v1617, 2
        %v1619 = vadd.f32 %v1617, %v1618
        %v1620 = vrot.slane %v1619, 1
        %v1621 = vadd.f32 %v1619, %v1620
        %v1622 = vadd.f32 %v1621, 0.0
        %s1623 = scalar_lea.vmem [#allocation2], 192
        %v1624 = vld [vmem:[%s1623] sm:$0xff]
        %v1625 = vld [vmem:[%s1623 + $0x8] sm:$0xff]
        %v1626 = vld [vmem:[%s1623 + $0x18] sm:$0xff]
        %v1627 = vld [vmem:[%s1623 + $0x20] sm:$0xff]
        %v1628 = vld [vmem:[%s1623 + $0x30] sm:$0xff]
        %v1629 = vld [vmem:[%s1623 + $0x38] sm:$0xff]
        %v1630 = vld [vmem:[%s1623 + $0x48] sm:$0xff]
        %v1631 = vld [vmem:[%s1623 + $0x50] sm:$0xff]
        %v1632 = vld [vmem:[%s1623 + $0x60] sm:$0xff]
        %v1633 = vld [vmem:[%s1623 + $0x68] sm:$0xff]
        %v1634 = vld [vmem:[%s1623 + $0x78] sm:$0xff]
        %v1635 = vld [vmem:[%s1623 + $0x80] sm:$0xff]
        %v1636 = vld [vmem:[%s1623 + $0x90] sm:$0xff]
        %v1637 = vld [vmem:[%s1623 + $0x98] sm:$0xff]
        %v1638 = vld [vmem:[%s1623 + $0xa8] sm:$0xff]
        %v1639 = vld [vmem:[%s1623 + $0xb0] sm:$0xff]
        %1640 = vst.msk [vmem:[#allocation3] sm:$0xff] %vm426, %v1624
        %1641 = vst.msk [vmem:[#allocation3 + $0x8] sm:$0xff] %vm426, %v1625
        %1642 = vst.msk [vmem:[#allocation3 + $0x10] sm:$0xff] %vm426, %v1626
        %1643 = vst.msk [vmem:[#allocation3 + $0x18] sm:$0xff] %vm426, %v1627
        %1644 = vst.msk [vmem:[#allocation3 + $0x20] sm:$0xff] %vm426, %v1628
        %1645 = vst.msk [vmem:[#allocation3 + $0x28] sm:$0xff] %vm426, %v1629
        %1646 = vst.msk [vmem:[#allocation3 + $0x30] sm:$0xff] %vm426, %v1630
        %1647 = vst.msk [vmem:[#allocation3 + $0x38] sm:$0xff] %vm426, %v1631
        %1648 = vst.msk [vmem:[#allocation3 + $0x40] sm:$0xff] %vm426, %v1632
        %1649 = vst.msk [vmem:[#allocation3 + $0x48] sm:$0xff] %vm426, %v1633
        %1650 = vst.msk [vmem:[#allocation3 + $0x50] sm:$0xff] %vm426, %v1634
        %1651 = vst.msk [vmem:[#allocation3 + $0x58] sm:$0xff] %vm426, %v1635
        %1652 = vst.msk [vmem:[#allocation3 + $0x60] sm:$0xff] %vm426, %v1636
        %1653 = vst.msk [vmem:[#allocation3 + $0x68] sm:$0xff] %vm426, %v1637
        %1654 = vst.msk [vmem:[#allocation3 + $0x70] sm:$0xff] %vm426, %v1638
        %1655 = vst.msk [vmem:[#allocation3 + $0x78] sm:$0xff] %vm426, %v1639
        %v1656 = vld [vmem:[%s1623 + $0x1] sm:$0xff]
        %v1657 = vld [vmem:[%s1623 + $0x9] sm:$0xff]
        %v1658 = vld [vmem:[%s1623 + $0x19] sm:$0xff]
        %v1659 = vld [vmem:[%s1623 + $0x21] sm:$0xff]
        %v1660 = vld [vmem:[%s1623 + $0x31] sm:$0xff]
        %v1661 = vld [vmem:[%s1623 + $0x39] sm:$0xff]
        %v1662 = vld [vmem:[%s1623 + $0x49] sm:$0xff]
        %v1663 = vld [vmem:[%s1623 + $0x51] sm:$0xff]
        %v1664 = vld [vmem:[%s1623 + $0x61] sm:$0xff]
        %v1665 = vld [vmem:[%s1623 + $0x69] sm:$0xff]
        %v1666 = vld [vmem:[%s1623 + $0x79] sm:$0xff]
        %v1667 = vld [vmem:[%s1623 + $0x81] sm:$0xff]
        %v1668 = vld [vmem:[%s1623 + $0x91] sm:$0xff]
        %v1669 = vld [vmem:[%s1623 + $0x99] sm:$0xff]
        %v1670 = vld [vmem:[%s1623 + $0xa9] sm:$0xff]
        %v1671 = vld [vmem:[%s1623 + $0xb1] sm:$0xff]
        %1688 = vrot.lane.b32.xlu0 %v1656, 8
        %v1689 = vpop.permute.xlu0 %1688
        %1690 = vrot.lane.b32.xlu0 %v1657, 8
        %v1691 = vpop.permute.xlu0 %1690
        %1692 = vrot.lane.b32.xlu0 %v1658, 8
        %v1693 = vpop.permute.xlu0 %1692
        %1694 = vrot.lane.b32.xlu0 %v1659, 8
        %v1695 = vpop.permute.xlu0 %1694
        %1696 = vrot.lane.b32.xlu0 %v1660, 8
        %v1697 = vpop.permute.xlu0 %1696
        %1698 = vrot.lane.b32.xlu0 %v1661, 8
        %v1699 = vpop.permute.xlu0 %1698
        %1700 = vrot.lane.b32.xlu0 %v1662, 8
        %v1701 = vpop.permute.xlu0 %1700
        %1702 = vrot.lane.b32.xlu0 %v1663, 8
        %v1703 = vpop.permute.xlu0 %1702
        %1704 = vrot.lane.b32.xlu0 %v1664, 8
        %v1705 = vpop.permute.xlu0 %1704
        %1706 = vrot.lane.b32.xlu0 %v1665, 8
        %v1707 = vpop.permute.xlu0 %1706
        %1708 = vrot.lane.b32.xlu0 %v1666, 8
        %v1709 = vpop.permute.xlu0 %1708
        %1710 = vrot.lane.b32.xlu0 %v1667, 8
        %v1711 = vpop.permute.xlu0 %1710
        %1712 = vrot.lane.b32.xlu0 %v1668, 8
        %v1713 = vpop.permute.xlu0 %1712
        %1714 = vrot.lane.b32.xlu0 %v1669, 8
        %v1715 = vpop.permute.xlu0 %1714
        %1716 = vrot.lane.b32.xlu0 %v1670, 8
        %v1717 = vpop.permute.xlu0 %1716
        %1718 = vrot.lane.b32.xlu0 %v1671, 8
        %v1719 = vpop.permute.xlu0 %1718
        %1736 = vst.msk [vmem:[#allocation3] sm:$0xff] %vm676, %v1689
        %1737 = vst.msk [vmem:[#allocation3 + $0x8] sm:$0xff] %vm676, %v1691
        %1738 = vst.msk [vmem:[#allocation3 + $0x10] sm:$0xff] %vm676, %v1693
        %1739 = vst.msk [vmem:[#allocation3 + $0x18] sm:$0xff] %vm676, %v1695
        %1740 = vst.msk [vmem:[#allocation3 + $0x20] sm:$0xff] %vm676, %v1697
        %1741 = vst.msk [vmem:[#allocation3 + $0x28] sm:$0xff] %vm676, %v1699
        %1742 = vst.msk [vmem:[#allocation3 + $0x30] sm:$0xff] %vm676, %v1701
        %1743 = vst.msk [vmem:[#allocation3 + $0x38] sm:$0xff] %vm676, %v1703
        %1744 = vst.msk [vmem:[#allocation3 + $0x40] sm:$0xff] %vm676, %v1705
        %1745 = vst.msk [vmem:[#allocation3 + $0x48] sm:$0xff] %vm676, %v1707
        %1746 = vst.msk [vmem:[#allocation3 + $0x50] sm:$0xff] %vm676, %v1709
        %1747 = vst.msk [vmem:[#allocation3 + $0x58] sm:$0xff] %vm676, %v1711
        %1748 = vst.msk [vmem:[#allocation3 + $0x60] sm:$0xff] %vm676, %v1713
        %1749 = vst.msk [vmem:[#allocation3 + $0x68] sm:$0xff] %vm676, %v1715
        %1750 = vst.msk [vmem:[#allocation3 + $0x70] sm:$0xff] %vm676, %v1717
        %1751 = vst.msk [vmem:[#allocation3 + $0x78] sm:$0xff] %vm676, %v1719
        %v1752 = vld [vmem:[%s1623 + $0x2] sm:$0xff]
        %v1753 = vld [vmem:[%s1623 + $0xa] sm:$0xff]
        %v1754 = vld [vmem:[%s1623 + $0x1a] sm:$0xff]
        %v1755 = vld [vmem:[%s1623 + $0x22] sm:$0xff]
        %v1756 = vld [vmem:[%s1623 + $0x32] sm:$0xff]
        %v1757 = vld [vmem:[%s1623 + $0x3a] sm:$0xff]
        %v1758 = vld [vmem:[%s1623 + $0x4a] sm:$0xff]
        %v1759 = vld [vmem:[%s1623 + $0x52] sm:$0xff]
        %v1760 = vld [vmem:[%s1623 + $0x62] sm:$0xff]
        %v1761 = vld [vmem:[%s1623 + $0x6a] sm:$0xff]
        %v1762 = vld [vmem:[%s1623 + $0x7a] sm:$0xff]
        %v1763 = vld [vmem:[%s1623 + $0x82] sm:$0xff]
        %v1764 = vld [vmem:[%s1623 + $0x92] sm:$0xff]
        %v1765 = vld [vmem:[%s1623 + $0x9a] sm:$0xff]
        %v1766 = vld [vmem:[%s1623 + $0xaa] sm:$0xff]
        %v1767 = vld [vmem:[%s1623 + $0xb2] sm:$0xff]
        %1784 = vrot.lane.b32.xlu0 %v1752, 16
        %v1785 = vpop.permute.xlu0 %1784
        %1786 = vrot.lane.b32.xlu0 %v1753, 16
        %v1787 = vpop.permute.xlu0 %1786
        %1788 = vrot.lane.b32.xlu0 %v1754, 16
        %v1789 = vpop.permute.xlu0 %1788
        %1790 = vrot.lane.b32.xlu0 %v1755, 16
        %v1791 = vpop.permute.xlu0 %1790
        %1792 = vrot.lane.b32.xlu0 %v1756, 16
        %v1793 = vpop.permute.xlu0 %1792
        %1794 = vrot.lane.b32.xlu0 %v1757, 16
        %v1795 = vpop.permute.xlu0 %1794
        %1796 = vrot.lane.b32.xlu0 %v1758, 16
        %v1797 = vpop.permute.xlu0 %1796
        %1798 = vrot.lane.b32.xlu0 %v1759, 16
        %v1799 = vpop.permute.xlu0 %1798
        %1800 = vrot.lane.b32.xlu0 %v1760, 16
        %v1801 = vpop.permute.xlu0 %1800
        %1802 = vrot.lane.b32.xlu0 %v1761, 16
        %v1803 = vpop.permute.xlu0 %1802
        %1804 = vrot.lane.b32.xlu0 %v1762, 16
        %v1805 = vpop.permute.xlu0 %1804
        %1806 = vrot.lane.b32.xlu0 %v1763, 16
        %v1807 = vpop.permute.xlu0 %1806
        %1808 = vrot.lane.b32.xlu0 %v1764, 16
        %v1809 = vpop.permute.xlu0 %1808
        %1810 = vrot.lane.b32.xlu0 %v1765, 16
        %v1811 = vpop.permute.xlu0 %1810
        %1812 = vrot.lane.b32.xlu0 %v1766, 16
        %v1813 = vpop.permute.xlu0 %1812
        %1814 = vrot.lane.b32.xlu0 %v1767, 16
        %v1815 = vpop.permute.xlu0 %1814
        %1832 = vst.msk [vmem:[#allocation3] sm:$0xff] %vm773, %v1785
        %1833 = vst.msk [vmem:[#allocation3 + $0x8] sm:$0xff] %vm773, %v1787
        %1834 = vst.msk [vmem:[#allocation3 + $0x10] sm:$0xff] %vm773, %v1789
        %1835 = vst.msk [vmem:[#allocation3 + $0x18] sm:$0xff] %vm773, %v1791
        %1836 = vst.msk [vmem:[#allocation3 + $0x20] sm:$0xff] %vm773, %v1793
        %1837 = vst.msk [vmem:[#allocation3 + $0x28] sm:$0xff] %vm773, %v1795
        %1838 = vst.msk [vmem:[#allocation3 + $0x30] sm:$0xff] %vm773, %v1797
        %1839 = vst.msk [vmem:[#allocation3 + $0x38] sm:$0xff] %vm773, %v1799
        %1840 = vst.msk [vmem:[#allocation3 + $0x40] sm:$0xff] %vm773, %v1801
        %1841 = vst.msk [vmem:[#allocation3 + $0x48] sm:$0xff] %vm773, %v1803
        %1842 = vst.msk [vmem:[#allocation3 + $0x50] sm:$0xff] %vm773, %v1805
        %1843 = vst.msk [vmem:[#allocation3 + $0x58] sm:$0xff] %vm773, %v1807
        %1844 = vst.msk [vmem:[#allocation3 + $0x60] sm:$0xff] %vm773, %v1809
        %1845 = vst.msk [vmem:[#allocation3 + $0x68] sm:$0xff] %vm773, %v1811
        %1846 = vst.msk [vmem:[#allocation3 + $0x70] sm:$0xff] %vm773, %v1813
        %1847 = vst.msk [vmem:[#allocation3 + $0x78] sm:$0xff] %vm773, %v1815
        %s1848 = scalar_lea.vmem [#allocation2], 216
        %v1849 = vld [vmem:[%s1848] sm:$0xff]
        %v1850 = vld [vmem:[%s1848 + $0x8] sm:$0xff]
        %v1851 = vld [vmem:[%s1848 + $0x18] sm:$0xff]
        %v1852 = vld [vmem:[%s1848 + $0x20] sm:$0xff]
        %v1853 = vld [vmem:[%s1848 + $0x30] sm:$0xff]
        %v1854 = vld [vmem:[%s1848 + $0x38] sm:$0xff]
        %v1855 = vld [vmem:[%s1848 + $0x48] sm:$0xff]
        %v1856 = vld [vmem:[%s1848 + $0x50] sm:$0xff]
        %v1857 = vld [vmem:[%s1848 + $0x60] sm:$0xff]
        %v1858 = vld [vmem:[%s1848 + $0x68] sm:$0xff]
        %v1859 = vld [vmem:[%s1848 + $0x78] sm:$0xff]
        %v1860 = vld [vmem:[%s1848 + $0x80] sm:$0xff]
        %v1861 = vld [vmem:[%s1848 + $0x90] sm:$0xff]
        %v1862 = vld [vmem:[%s1848 + $0x98] sm:$0xff]
        %v1863 = vld [vmem:[%s1848 + $0xa8] sm:$0xff]
        %v1864 = vld [vmem:[%s1848 + $0xb0] sm:$0xff]
        %1881 = vrot.lane.b32.xlu0 %v1849, 24
        %v1882 = vpop.permute.xlu0 %1881
        %1883 = vrot.lane.b32.xlu0 %v1850, 24
        %v1884 = vpop.permute.xlu0 %1883
        %1885 = vrot.lane.b32.xlu0 %v1851, 24
        %v1886 = vpop.permute.xlu0 %1885
        %1887 = vrot.lane.b32.xlu0 %v1852, 24
        %v1888 = vpop.permute.xlu0 %1887
        %1889 = vrot.lane.b32.xlu0 %v1853, 24
        %v1890 = vpop.permute.xlu0 %1889
        %1891 = vrot.lane.b32.xlu0 %v1854, 24
        %v1892 = vpop.permute.xlu0 %1891
        %1893 = vrot.lane.b32.xlu0 %v1855, 24
        %v1894 = vpop.permute.xlu0 %1893
        %1895 = vrot.lane.b32.xlu0 %v1856, 24
        %v1896 = vpop.permute.xlu0 %1895
        %1897 = vrot.lane.b32.xlu0 %v1857, 24
        %v1898 = vpop.permute.xlu0 %1897
        %1899 = vrot.lane.b32.xlu0 %v1858, 24
        %v1900 = vpop.permute.xlu0 %1899
        %1901 = vrot.lane.b32.xlu0 %v1859, 24
        %v1902 = vpop.permute.xlu0 %1901
        %1903 = vrot.lane.b32.xlu0 %v1860, 24
        %v1904 = vpop.permute.xlu0 %1903
        %1905 = vrot.lane.b32.xlu0 %v1861, 24
        %v1906 = vpop.permute.xlu0 %1905
        %1907 = vrot.lane.b32.xlu0 %v1862, 24
        %v1908 = vpop.permute.xlu0 %1907
        %1909 = vrot.lane.b32.xlu0 %v1863, 24
        %v1910 = vpop.permute.xlu0 %1909
        %1911 = vrot.lane.b32.xlu0 %v1864, 24
        %v1912 = vpop.permute.xlu0 %1911
        %1929 = vst.msk [vmem:[#allocation3] sm:$0xff] %vm870, %v1882
        %1930 = vst.msk [vmem:[#allocation3 + $0x8] sm:$0xff] %vm870, %v1884
        %1931 = vst.msk [vmem:[#allocation3 + $0x10] sm:$0xff] %vm870, %v1886
        %1932 = vst.msk [vmem:[#allocation3 + $0x18] sm:$0xff] %vm870, %v1888
        %1933 = vst.msk [vmem:[#allocation3 + $0x20] sm:$0xff] %vm870, %v1890
        %1934 = vst.msk [vmem:[#allocation3 + $0x28] sm:$0xff] %vm870, %v1892
        %1935 = vst.msk [vmem:[#allocation3 + $0x30] sm:$0xff] %vm870, %v1894
        %1936 = vst.msk [vmem:[#allocation3 + $0x38] sm:$0xff] %vm870, %v1896
        %1937 = vst.msk [vmem:[#allocation3 + $0x40] sm:$0xff] %vm870, %v1898
        %1938 = vst.msk [vmem:[#allocation3 + $0x48] sm:$0xff] %vm870, %v1900
        %1939 = vst.msk [vmem:[#allocation3 + $0x50] sm:$0xff] %vm870, %v1902
        %1940 = vst.msk [vmem:[#allocation3 + $0x58] sm:$0xff] %vm870, %v1904
        %1941 = vst.msk [vmem:[#allocation3 + $0x60] sm:$0xff] %vm870, %v1906
        %1942 = vst.msk [vmem:[#allocation3 + $0x68] sm:$0xff] %vm870, %v1908
        %1943 = vst.msk [vmem:[#allocation3 + $0x70] sm:$0xff] %vm870, %v1910
        %1944 = vst.msk [vmem:[#allocation3 + $0x78] sm:$0xff] %vm870, %v1912
        %v1945 = vld [vmem:[%s1848 + $0x1] sm:$0xff]
        %v1946 = vld [vmem:[%s1848 + $0x9] sm:$0xff]
        %v1947 = vld [vmem:[%s1848 + $0x19] sm:$0xff]
        %v1948 = vld [vmem:[%s1848 + $0x21] sm:$0xff]
        %v1949 = vld [vmem:[%s1848 + $0x31] sm:$0xff]
        %v1950 = vld [vmem:[%s1848 + $0x39] sm:$0xff]
        %v1951 = vld [vmem:[%s1848 + $0x49] sm:$0xff]
        %v1952 = vld [vmem:[%s1848 + $0x51] sm:$0xff]
        %v1953 = vld [vmem:[%s1848 + $0x61] sm:$0xff]
        %v1954 = vld [vmem:[%s1848 + $0x69] sm:$0xff]
        %v1955 = vld [vmem:[%s1848 + $0x79] sm:$0xff]
        %v1956 = vld [vmem:[%s1848 + $0x81] sm:$0xff]
        %v1957 = vld [vmem:[%s1848 + $0x91] sm:$0xff]
        %v1958 = vld [vmem:[%s1848 + $0x99] sm:$0xff]
        %v1959 = vld [vmem:[%s1848 + $0xa9] sm:$0xff]
        %v1960 = vld [vmem:[%s1848 + $0xb1] sm:$0xff]
        %1977 = vrot.lane.b32.xlu0 %v1945, 32
        %v1978 = vpop.permute.xlu0 %1977
        %1979 = vrot.lane.b32.xlu0 %v1946, 32
        %v1980 = vpop.permute.xlu0 %1979
        %1981 = vrot.lane.b32.xlu0 %v1947, 32
        %v1982 = vpop.permute.xlu0 %1981
        %1983 = vrot.lane.b32.xlu0 %v1948, 32
        %v1984 = vpop.permute.xlu0 %1983
        %1985 = vrot.lane.b32.xlu0 %v1949, 32
        %v1986 = vpop.permute.xlu0 %1985
        %1987 = vrot.lane.b32.xlu0 %v1950, 32
        %v1988 = vpop.permute.xlu0 %1987
        %1989 = vrot.lane.b32.xlu0 %v1951, 32
        %v1990 = vpop.permute.xlu0 %1989
        %1991 = vrot.lane.b32.xlu0 %v1952, 32
        %v1992 = vpop.permute.xlu0 %1991
        %1993 = vrot.lane.b32.xlu0 %v1953, 32
        %v1994 = vpop.permute.xlu0 %1993
        %1995 = vrot.lane.b32.xlu0 %v1954, 32
        %v1996 = vpop.permute.xlu0 %1995
        %1997 = vrot.lane.b32.xlu0 %v1955, 32
        %v1998 = vpop.permute.xlu0 %1997
        %1999 = vrot.lane.b32.xlu0 %v1956, 32
        %v2000 = vpop.permute.xlu0 %1999
        %2001 = vrot.lane.b32.xlu0 %v1957, 32
        %v2002 = vpop.permute.xlu0 %2001
        %2003 = vrot.lane.b32.xlu0 %v1958, 32
        %v2004 = vpop.permute.xlu0 %2003
        %2005 = vrot.lane.b32.xlu0 %v1959, 32
        %v2006 = vpop.permute.xlu0 %2005
        %2007 = vrot.lane.b32.xlu0 %v1960, 32
        %v2008 = vpop.permute.xlu0 %2007
        %2025 = vst.msk [vmem:[#allocation3] sm:$0xff] %vm967, %v1978
        %2026 = vst.msk [vmem:[#allocation3 + $0x8] sm:$0xff] %vm967, %v1980
        %2027 = vst.msk [vmem:[#allocation3 + $0x10] sm:$0xff] %vm967, %v1982
        %2028 = vst.msk [vmem:[#allocation3 + $0x18] sm:$0xff] %vm967, %v1984
        %2029 = vst.msk [vmem:[#allocation3 + $0x20] sm:$0xff] %vm967, %v1986
        %2030 = vst.msk [vmem:[#allocation3 + $0x28] sm:$0xff] %vm967, %v1988
        %2031 = vst.msk [vmem:[#allocation3 + $0x30] sm:$0xff] %vm967, %v1990
        %2032 = vst.msk [vmem:[#allocation3 + $0x38] sm:$0xff] %vm967, %v1992
        %2033 = vst.msk [vmem:[#allocation3 + $0x40] sm:$0xff] %vm967, %v1994
        %2034 = vst.msk [vmem:[#allocation3 + $0x48] sm:$0xff] %vm967, %v1996
        %2035 = vst.msk [vmem:[#allocation3 + $0x50] sm:$0xff] %vm967, %v1998
        %2036 = vst.msk [vmem:[#allocation3 + $0x58] sm:$0xff] %vm967, %v2000
        %2037 = vst.msk [vmem:[#allocation3 + $0x60] sm:$0xff] %vm967, %v2002
        %2038 = vst.msk [vmem:[#allocation3 + $0x68] sm:$0xff] %vm967, %v2004
        %2039 = vst.msk [vmem:[#allocation3 + $0x70] sm:$0xff] %vm967, %v2006
        %2040 = vst.msk [vmem:[#allocation3 + $0x78] sm:$0xff] %vm967, %v2008
        %v2041 = vld [vmem:[%s1848 + $0x2] sm:$0xff]
        %v2042 = vld [vmem:[%s1848 + $0xa] sm:$0xff]
        %v2043 = vld [vmem:[%s1848 + $0x1a] sm:$0xff]
        %v2044 = vld [vmem:[%s1848 + $0x22] sm:$0xff]
        %v2045 = vld [vmem:[%s1848 + $0x32] sm:$0xff]
        %v2046 = vld [vmem:[%s1848 + $0x3a] sm:$0xff]
        %v2047 = vld [vmem:[%s1848 + $0x4a] sm:$0xff]
        %v2048 = vld [vmem:[%s1848 + $0x52] sm:$0xff]
        %v2049 = vld [vmem:[%s1848 + $0x62] sm:$0xff]
        %v2050 = vld [vmem:[%s1848 + $0x6a] sm:$0xff]
        %v2051 = vld [vmem:[%s1848 + $0x7a] sm:$0xff]
        %v2052 = vld [vmem:[%s1848 + $0x82] sm:$0xff]
        %v2053 = vld [vmem:[%s1848 + $0x92] sm:$0xff]
        %v2054 = vld [vmem:[%s1848 + $0x9a] sm:$0xff]
        %v2055 = vld [vmem:[%s1848 + $0xaa] sm:$0xff]
        %v2056 = vld [vmem:[%s1848 + $0xb2] sm:$0xff]
        %2073 = vrot.lane.b32.xlu0 %v2041, 40
        %v2074 = vpop.permute.xlu0 %2073
        %2075 = vrot.lane.b32.xlu0 %v2042, 40
        %v2076 = vpop.permute.xlu0 %2075
        %2077 = vrot.lane.b32.xlu0 %v2043, 40
        %v2078 = vpop.permute.xlu0 %2077
        %2079 = vrot.lane.b32.xlu0 %v2044, 40
        %v2080 = vpop.permute.xlu0 %2079
        %2081 = vrot.lane.b32.xlu0 %v2045, 40
        %v2082 = vpop.permute.xlu0 %2081
        %2083 = vrot.lane.b32.xlu0 %v2046, 40
        %v2084 = vpop.permute.xlu0 %2083
        %2085 = vrot.lane.b32.xlu0 %v2047, 40
        %v2086 = vpop.permute.xlu0 %2085
        %2087 = vrot.lane.b32.xlu0 %v2048, 40
        %v2088 = vpop.permute.xlu0 %2087
        %2089 = vrot.lane.b32.xlu0 %v2049, 40
        %v2090 = vpop.permute.xlu0 %2089
        %2091 = vrot.lane.b32.xlu0 %v2050, 40
        %v2092 = vpop.permute.xlu0 %2091
        %2093 = vrot.lane.b32.xlu0 %v2051, 40
        %v2094 = vpop.permute.xlu0 %2093
        %2095 = vrot.lane.b32.xlu0 %v2052, 40
        %v2096 = vpop.permute.xlu0 %2095
        %2097 = vrot.lane.b32.xlu0 %v2053, 40
        %v2098 = vpop.permute.xlu0 %2097
        %2099 = vrot.lane.b32.xlu0 %v2054, 40
        %v2100 = vpop.permute.xlu0 %2099
        %2101 = vrot.lane.b32.xlu0 %v2055, 40
        %v2102 = vpop.permute.xlu0 %2101
        %2103 = vrot.lane.b32.xlu0 %v2056, 40
        %v2104 = vpop.permute.xlu0 %2103
        %2121 = vst.msk [vmem:[#allocation3] sm:$0xff] %vm1064, %v2074
        %2122 = vst.msk [vmem:[#allocation3 + $0x8] sm:$0xff] %vm1064, %v2076
        %2123 = vst.msk [vmem:[#allocation3 + $0x10] sm:$0xff] %vm1064, %v2078
        %2124 = vst.msk [vmem:[#allocation3 + $0x18] sm:$0xff] %vm1064, %v2080
        %2125 = vst.msk [vmem:[#allocation3 + $0x20] sm:$0xff] %vm1064, %v2082
        %2126 = vst.msk [vmem:[#allocation3 + $0x28] sm:$0xff] %vm1064, %v2084
        %2127 = vst.msk [vmem:[#allocation3 + $0x30] sm:$0xff] %vm1064, %v2086
        %2128 = vst.msk [vmem:[#allocation3 + $0x38] sm:$0xff] %vm1064, %v2088
        %2129 = vst.msk [vmem:[#allocation3 + $0x40] sm:$0xff] %vm1064, %v2090
        %2130 = vst.msk [vmem:[#allocation3 + $0x48] sm:$0xff] %vm1064, %v2092
        %2131 = vst.msk [vmem:[#allocation3 + $0x50] sm:$0xff] %vm1064, %v2094
        %2132 = vst.msk [vmem:[#allocation3 + $0x58] sm:$0xff] %vm1064, %v2096
        %2133 = vst.msk [vmem:[#allocation3 + $0x60] sm:$0xff] %vm1064, %v2098
        %2134 = vst.msk [vmem:[#allocation3 + $0x68] sm:$0xff] %vm1064, %v2100
        %2135 = vst.msk [vmem:[#allocation3 + $0x70] sm:$0xff] %vm1064, %v2102
        %2136 = vst.msk [vmem:[#allocation3 + $0x78] sm:$0xff] %vm1064, %v2104
        %s2137 = scalar_lea.vmem [#allocation2], 240
        %v2138 = vld [vmem:[%s2137] sm:$0xff]
        %v2139 = vld [vmem:[%s2137 + $0x8] sm:$0xff]
        %v2140 = vld [vmem:[%s2137 + $0x18] sm:$0xff]
        %v2141 = vld [vmem:[%s2137 + $0x20] sm:$0xff]
        %v2142 = vld [vmem:[%s2137 + $0x30] sm:$0xff]
        %v2143 = vld [vmem:[%s2137 + $0x38] sm:$0xff]
        %v2144 = vld [vmem:[%s2137 + $0x48] sm:$0xff]
        %v2145 = vld [vmem:[%s2137 + $0x50] sm:$0xff]
        %v2146 = vld [vmem:[%s2137 + $0x60] sm:$0xff]
        %v2147 = vld [vmem:[%s2137 + $0x68] sm:$0xff]
        %v2148 = vld [vmem:[%s2137 + $0x78] sm:$0xff]
        %v2149 = vld [vmem:[%s2137 + $0x80] sm:$0xff]
        %v2150 = vld [vmem:[%s2137 + $0x90] sm:$0xff]
        %v2151 = vld [vmem:[%s2137 + $0x98] sm:$0xff]
        %v2152 = vld [vmem:[%s2137 + $0xa8] sm:$0xff]
        %v2153 = vld [vmem:[%s2137 + $0xb0] sm:$0xff]
        %2170 = vrot.lane.b32.xlu0 %v2138, 48
        %v2171 = vpop.permute.xlu0 %2170
        %2172 = vrot.lane.b32.xlu0 %v2139, 48
        %v2173 = vpop.permute.xlu0 %2172
        %2174 = vrot.lane.b32.xlu0 %v2140, 48
        %v2175 = vpop.permute.xlu0 %2174
        %2176 = vrot.lane.b32.xlu0 %v2141, 48
        %v2177 = vpop.permute.xlu0 %2176
        %2178 = vrot.lane.b32.xlu0 %v2142, 48
        %v2179 = vpop.permute.xlu0 %2178
        %2180 = vrot.lane.b32.xlu0 %v2143, 48
        %v2181 = vpop.permute.xlu0 %2180
        %2182 = vrot.lane.b32.xlu0 %v2144, 48
        %v2183 = vpop.permute.xlu0 %2182
        %2184 = vrot.lane.b32.xlu0 %v2145, 48
        %v2185 = vpop.permute.xlu0 %2184
        %2186 = vrot.lane.b32.xlu0 %v2146, 48
        %v2187 = vpop.permute.xlu0 %2186
        %2188 = vrot.lane.b32.xlu0 %v2147, 48
        %v2189 = vpop.permute.xlu0 %2188
        %2190 = vrot.lane.b32.xlu0 %v2148, 48
        %v2191 = vpop.permute.xlu0 %2190
        %2192 = vrot.lane.b32.xlu0 %v2149, 48
        %v2193 = vpop.permute.xlu0 %2192
        %2194 = vrot.lane.b32.xlu0 %v2150, 48
        %v2195 = vpop.permute.xlu0 %2194
        %2196 = vrot.lane.b32.xlu0 %v2151, 48
        %v2197 = vpop.permute.xlu0 %2196
        %2198 = vrot.lane.b32.xlu0 %v2152, 48
        %v2199 = vpop.permute.xlu0 %2198
        %2200 = vrot.lane.b32.xlu0 %v2153, 48
        %v2201 = vpop.permute.xlu0 %2200
        %2218 = vst.msk [vmem:[#allocation3] sm:$0xff] %vm1162, %v2171
        %2219 = vst.msk [vmem:[#allocation3 + $0x8] sm:$0xff] %vm1162, %v2173
        %2220 = vst.msk [vmem:[#allocation3 + $0x10] sm:$0xff] %vm1162, %v2175
        %2221 = vst.msk [vmem:[#allocation3 + $0x18] sm:$0xff] %vm1162, %v2177
        %2222 = vst.msk [vmem:[#allocation3 + $0x20] sm:$0xff] %vm1162, %v2179
        %2223 = vst.msk [vmem:[#allocation3 + $0x28] sm:$0xff] %vm1162, %v2181
        %2224 = vst.msk [vmem:[#allocation3 + $0x30] sm:$0xff] %vm1162, %v2183
        %2225 = vst.msk [vmem:[#allocation3 + $0x38] sm:$0xff] %vm1162, %v2185
        %2226 = vst.msk [vmem:[#allocation3 + $0x40] sm:$0xff] %vm1162, %v2187
        %2227 = vst.msk [vmem:[#allocation3 + $0x48] sm:$0xff] %vm1162, %v2189
        %2228 = vst.msk [vmem:[#allocation3 + $0x50] sm:$0xff] %vm1162, %v2191
        %2229 = vst.msk [vmem:[#allocation3 + $0x58] sm:$0xff] %vm1162, %v2193
        %2230 = vst.msk [vmem:[#allocation3 + $0x60] sm:$0xff] %vm1162, %v2195
        %2231 = vst.msk [vmem:[#allocation3 + $0x68] sm:$0xff] %vm1162, %v2197
        %2232 = vst.msk [vmem:[#allocation3 + $0x70] sm:$0xff] %vm1162, %v2199
        %2233 = vst.msk [vmem:[#allocation3 + $0x78] sm:$0xff] %vm1162, %v2201
        %v2234 = vld [vmem:[%s2137 + $0x1] sm:$0xff]
        %v2235 = vld [vmem:[%s2137 + $0x9] sm:$0xff]
        %v2236 = vld [vmem:[%s2137 + $0x19] sm:$0xff]
        %v2237 = vld [vmem:[%s2137 + $0x21] sm:$0xff]
        %v2238 = vld [vmem:[%s2137 + $0x31] sm:$0xff]
        %v2239 = vld [vmem:[%s2137 + $0x39] sm:$0xff]
        %v2240 = vld [vmem:[%s2137 + $0x49] sm:$0xff]
        %v2241 = vld [vmem:[%s2137 + $0x51] sm:$0xff]
        %v2242 = vld [vmem:[%s2137 + $0x61] sm:$0xff]
        %v2243 = vld [vmem:[%s2137 + $0x69] sm:$0xff]
        %v2244 = vld [vmem:[%s2137 + $0x79] sm:$0xff]
        %v2245 = vld [vmem:[%s2137 + $0x81] sm:$0xff]
        %v2246 = vld [vmem:[%s2137 + $0x91] sm:$0xff]
        %v2247 = vld [vmem:[%s2137 + $0x99] sm:$0xff]
        %v2248 = vld [vmem:[%s2137 + $0xa9] sm:$0xff]
        %v2249 = vld [vmem:[%s2137 + $0xb1] sm:$0xff]
        %2266 = vrot.lane.b32.xlu0 %v2234, 56
        %v2267 = vpop.permute.xlu0 %2266
        %2268 = vrot.lane.b32.xlu0 %v2235, 56
        %v2269 = vpop.permute.xlu0 %2268
        %2270 = vrot.lane.b32.xlu0 %v2236, 56
        %v2271 = vpop.permute.xlu0 %2270
        %2272 = vrot.lane.b32.xlu0 %v2237, 56
        %v2273 = vpop.permute.xlu0 %2272
        %2274 = vrot.lane.b32.xlu0 %v2238, 56
        %v2275 = vpop.permute.xlu0 %2274
        %2276 = vrot.lane.b32.xlu0 %v2239, 56
        %v2277 = vpop.permute.xlu0 %2276
        %2278 = vrot.lane.b32.xlu0 %v2240, 56
        %v2279 = vpop.permute.xlu0 %2278
        %2280 = vrot.lane.b32.xlu0 %v2241, 56
        %v2281 = vpop.permute.xlu0 %2280
        %2282 = vrot.lane.b32.xlu0 %v2242, 56
        %v2283 = vpop.permute.xlu0 %2282
        %2284 = vrot.lane.b32.xlu0 %v2243, 56
        %v2285 = vpop.permute.xlu0 %2284
        %2286 = vrot.lane.b32.xlu0 %v2244, 56
        %v2287 = vpop.permute.xlu0 %2286
        %2288 = vrot.lane.b32.xlu0 %v2245, 56
        %v2289 = vpop.permute.xlu0 %2288
        %2290 = vrot.lane.b32.xlu0 %v2246, 56
        %v2291 = vpop.permute.xlu0 %2290
        %2292 = vrot.lane.b32.xlu0 %v2247, 56
        %v2293 = vpop.permute.xlu0 %2292
        %2294 = vrot.lane.b32.xlu0 %v2248, 56
        %v2295 = vpop.permute.xlu0 %2294
        %2296 = vrot.lane.b32.xlu0 %v2249, 56
        %v2297 = vpop.permute.xlu0 %2296
        %2314 = vst.msk [vmem:[#allocation3] sm:$0xff] %vm1259, %v2267
        %2315 = vst.msk [vmem:[#allocation3 + $0x8] sm:$0xff] %vm1259, %v2269
        %2316 = vst.msk [vmem:[#allocation3 + $0x10] sm:$0xff] %vm1259, %v2271
        %2317 = vst.msk [vmem:[#allocation3 + $0x18] sm:$0xff] %vm1259, %v2273
        %2318 = vst.msk [vmem:[#allocation3 + $0x20] sm:$0xff] %vm1259, %v2275
        %2319 = vst.msk [vmem:[#allocation3 + $0x28] sm:$0xff] %vm1259, %v2277
        %2320 = vst.msk [vmem:[#allocation3 + $0x30] sm:$0xff] %vm1259, %v2279
        %2321 = vst.msk [vmem:[#allocation3 + $0x38] sm:$0xff] %vm1259, %v2281
        %2322 = vst.msk [vmem:[#allocation3 + $0x40] sm:$0xff] %vm1259, %v2283
        %2323 = vst.msk [vmem:[#allocation3 + $0x48] sm:$0xff] %vm1259, %v2285
        %2324 = vst.msk [vmem:[#allocation3 + $0x50] sm:$0xff] %vm1259, %v2287
        %2325 = vst.msk [vmem:[#allocation3 + $0x58] sm:$0xff] %vm1259, %v2289
        %2326 = vst.msk [vmem:[#allocation3 + $0x60] sm:$0xff] %vm1259, %v2291
        %2327 = vst.msk [vmem:[#allocation3 + $0x68] sm:$0xff] %vm1259, %v2293
        %2328 = vst.msk [vmem:[#allocation3 + $0x70] sm:$0xff] %vm1259, %v2295
        %2329 = vst.msk [vmem:[#allocation3 + $0x78] sm:$0xff] %vm1259, %v2297
        %v2330 = vld [vmem:[%s2137 + $0x2] sm:$0xff]
        %v2331 = vld [vmem:[%s2137 + $0xa] sm:$0xff]
        %v2332 = vld [vmem:[%s2137 + $0x1a] sm:$0xff]
        %v2333 = vld [vmem:[%s2137 + $0x22] sm:$0xff]
        %v2334 = vld [vmem:[%s2137 + $0x32] sm:$0xff]
        %v2335 = vld [vmem:[%s2137 + $0x3a] sm:$0xff]
        %v2336 = vld [vmem:[%s2137 + $0x4a] sm:$0xff]
        %v2337 = vld [vmem:[%s2137 + $0x52] sm:$0xff]
        %v2338 = vld [vmem:[%s2137 + $0x62] sm:$0xff]
        %v2339 = vld [vmem:[%s2137 + $0x6a] sm:$0xff]
        %v2340 = vld [vmem:[%s2137 + $0x7a] sm:$0xff]
        %v2341 = vld [vmem:[%s2137 + $0x82] sm:$0xff]
        %v2342 = vld [vmem:[%s2137 + $0x92] sm:$0xff]
        %v2343 = vld [vmem:[%s2137 + $0x9a] sm:$0xff]
        %v2344 = vld [vmem:[%s2137 + $0xaa] sm:$0xff]
        %v2345 = vld [vmem:[%s2137 + $0xb2] sm:$0xff]
        %2362 = vrot.lane.b32.xlu0 %v2330, 64
        %v2363 = vpop.permute.xlu0 %2362
        %2364 = vrot.lane.b32.xlu0 %v2331, 64
        %v2365 = vpop.permute.xlu0 %2364
        %2366 = vrot.lane.b32.xlu0 %v2332, 64
        %v2367 = vpop.permute.xlu0 %2366
        %2368 = vrot.lane.b32.xlu0 %v2333, 64
        %v2369 = vpop.permute.xlu0 %2368
        %2370 = vrot.lane.b32.xlu0 %v2334, 64
        %v2371 = vpop.permute.xlu0 %2370
        %2372 = vrot.lane.b32.xlu0 %v2335, 64
        %v2373 = vpop.permute.xlu0 %2372
        %2374 = vrot.lane.b32.xlu0 %v2336, 64
        %v2375 = vpop.permute.xlu0 %2374
        %2376 = vrot.lane.b32.xlu0 %v2337, 64
        %v2377 = vpop.permute.xlu0 %2376
        %2378 = vrot.lane.b32.xlu0 %v2338, 64
        %v2379 = vpop.permute.xlu0 %2378
        %2380 = vrot.lane.b32.xlu0 %v2339, 64
        %v2381 = vpop.permute.xlu0 %2380
        %2382 = vrot.lane.b32.xlu0 %v2340, 64
        %v2383 = vpop.permute.xlu0 %2382
        %2384 = vrot.lane.b32.xlu0 %v2341, 64
        %v2385 = vpop.permute.xlu0 %2384
        %2386 = vrot.lane.b32.xlu0 %v2342, 64
        %v2387 = vpop.permute.xlu0 %2386
        %2388 = vrot.lane.b32.xlu0 %v2343, 64
        %v2389 = vpop.permute.xlu0 %2388
        %2390 = vrot.lane.b32.xlu0 %v2344, 64
        %v2391 = vpop.permute.xlu0 %2390
        %2392 = vrot.lane.b32.xlu0 %v2345, 64
        %v2393 = vpop.permute.xlu0 %2392
        %2410 = vst.msk [vmem:[#allocation3] sm:$0xff] %vm1356, %v2363
        %2411 = vst.msk [vmem:[#allocation3 + $0x8] sm:$0xff] %vm1356, %v2365
        %2412 = vst.msk [vmem:[#allocation3 + $0x10] sm:$0xff] %vm1356, %v2367
        %2413 = vst.msk [vmem:[#allocation3 + $0x18] sm:$0xff] %vm1356, %v2369
        %2414 = vst.msk [vmem:[#allocation3 + $0x20] sm:$0xff] %vm1356, %v2371
        %2415 = vst.msk [vmem:[#allocation3 + $0x28] sm:$0xff] %vm1356, %v2373
        %2416 = vst.msk [vmem:[#allocation3 + $0x30] sm:$0xff] %vm1356, %v2375
        %2417 = vst.msk [vmem:[#allocation3 + $0x38] sm:$0xff] %vm1356, %v2377
        %2418 = vst.msk [vmem:[#allocation3 + $0x40] sm:$0xff] %vm1356, %v2379
        %2419 = vst.msk [vmem:[#allocation3 + $0x48] sm:$0xff] %vm1356, %v2381
        %2420 = vst.msk [vmem:[#allocation3 + $0x50] sm:$0xff] %vm1356, %v2383
        %2421 = vst.msk [vmem:[#allocation3 + $0x58] sm:$0xff] %vm1356, %v2385
        %2422 = vst.msk [vmem:[#allocation3 + $0x60] sm:$0xff] %vm1356, %v2387
        %2423 = vst.msk [vmem:[#allocation3 + $0x68] sm:$0xff] %vm1356, %v2389
        %2424 = vst.msk [vmem:[#allocation3 + $0x70] sm:$0xff] %vm1356, %v2391
        %2425 = vst.msk [vmem:[#allocation3 + $0x78] sm:$0xff] %vm1356, %v2393
        %v2426 = vld [vmem:[#allocation3] sm:$0xff]
        %v2427 = vld [vmem:[#allocation3 + $0x8] sm:$0xff]
        %v2428 = vld [vmem:[#allocation3 + $0x10] sm:$0xff]
        %v2429 = vld [vmem:[#allocation3 + $0x18] sm:$0xff]
        %v2430 = vld [vmem:[#allocation3 + $0x20] sm:$0xff]
        %v2431 = vld [vmem:[#allocation3 + $0x28] sm:$0xff]
        %v2432 = vld [vmem:[#allocation3 + $0x30] sm:$0xff]
        %v2433 = vld [vmem:[#allocation3 + $0x38] sm:$0xff]
        %v2434 = vld [vmem:[#allocation3 + $0x40] sm:$0xff]
        %v2435 = vld [vmem:[#allocation3 + $0x48] sm:$0xff]
        %v2436 = vld [vmem:[#allocation3 + $0x50] sm:$0xff]
        %v2437 = vld [vmem:[#allocation3 + $0x58] sm:$0xff]
        %v2438 = vld [vmem:[#allocation3 + $0x60] sm:$0xff]
        %v2439 = vld [vmem:[#allocation3 + $0x68] sm:$0xff]
        %v2440 = vld [vmem:[#allocation3 + $0x70] sm:$0xff]
        %v2441 = vld [vmem:[#allocation3 + $0x78] sm:$0xff]
        %v2442 = vld [vmem:[%s2] sm:$0xff]
        %v2443 = vld [vmem:[%s2 + $0x8] sm:$0xff]
        %v2444 = vld [vmem:[%s2 + $0x10] sm:$0xff]
        %v2445 = vld [vmem:[%s2 + $0x18] sm:$0xff]
        %v2446 = vld [vmem:[%s2 + $0x20] sm:$0xff]
        %v2447 = vld [vmem:[%s2 + $0x28] sm:$0xff]
        %v2448 = vld [vmem:[%s2 + $0x30] sm:$0xff]
        %v2449 = vld [vmem:[%s2 + $0x38] sm:$0xff]
        %v2450 = vld [vmem:[%s2 + $0x40] sm:$0xff]
        %v2452 = vsel %vm1401, %v2426, 0
        %v2455 = vsel %vm1401, %v2427, 0
        %v2458 = vsel %vm1401, %v2428, 0
        %v2461 = vsel %vm1401, %v2429, 0
        %v2464 = vsel %vm1401, %v2430, 0
        %v2467 = vsel %vm1401, %v2431, 0
        %v2470 = vsel %vm1401, %v2432, 0
        %v2473 = vsel %vm1401, %v2433, 0
        %v2476 = vsel %vm1401, %v2434, 0
        %v2479 = vsel %vm1401, %v2435, 0
        %v2482 = vsel %vm1401, %v2436, 0
        %v2485 = vsel %vm1401, %v2437, 0
        %v2488 = vsel %vm1401, %v2438, 0
        %v2491 = vsel %vm1401, %v2439, 0
        %v2494 = vsel %vm1401, %v2440, 0
        %v2497 = vsel %vm1401, %v2441, 0
        %2499 = vmatpush.msra.mxu0 0.0
        %2500 = vmatpush.msra.mxu0 0.0
        %2501 = vmatpush.msra.mxu0 0.0
        %2502 = vmatpush.msra.mxu0 0.0
        %2503 = vmatpush.msra.mxu0 0.0
        %2504 = vmatpush.msra.mxu0 0.0
        %2505 = vmatpush.msra.mxu0 0.0
        %2506 = vmatpush.msra.mxu0 %v2450
        %2507 = vmatpush.msra.mxu0 %v2449
        %2508 = vmatpush.msra.mxu0 %v2448
        %2509 = vmatpush.msra.mxu0 %v2447
        %2510 = vmatpush.msra.mxu0 %v2446
        %2511 = vmatpush.msra.mxu0 %v2445
        %2512 = vmatpush.msra.mxu0 %v2444
        %2513 = vmatpush.msra.mxu0 %v2443
        %2514 = vmatpush.msra.mxu0 %v2442
        %2515 = vmatmul.f32.gmra.mxu0 %v2452
        %v2516 = vpop.f32.mrf.mxu0
        %v2517 = vadd.f32 %v1399, %v2516
        %2518 = vmatmul.f32.gmra.mxu0 %v2455
        %v2519 = vpop.f32.mrf.mxu0
        %v2520 = vadd.f32 %v1399, %v2519
        %2521 = vmatmul.f32.gmra.mxu0 %v2458
        %v2522 = vpop.f32.mrf.mxu0
        %v2523 = vadd.f32 %v1399, %v2522
        %2524 = vmatmul.f32.gmra.mxu0 %v2461
        %v2525 = vpop.f32.mrf.mxu0
        %v2526 = vadd.f32 %v1399, %v2525
        %2527 = vmatmul.f32.gmra.mxu0 %v2464
        %v2528 = vpop.f32.mrf.mxu0
        %v2529 = vadd.f32 %v1399, %v2528
        %2530 = vmatmul.f32.gmra.mxu0 %v2467
        %v2531 = vpop.f32.mrf.mxu0
        %v2532 = vadd.f32 %v1399, %v2531
        %2533 = vmatmul.f32.gmra.mxu0 %v2470
        %v2534 = vpop.f32.mrf.mxu0
        %v2535 = vadd.f32 %v1399, %v2534
        %2536 = vmatmul.f32.gmra.mxu0 %v2473
        %v2537 = vpop.f32.mrf.mxu0
        %v2538 = vadd.f32 %v1399, %v2537
        %2539 = vmatmul.f32.gmra.mxu0 %v2476
        %v2540 = vpop.f32.mrf.mxu0
        %v2541 = vadd.f32 %v1399, %v2540
        %2542 = vmatmul.f32.gmra.mxu0 %v2479
        %v2543 = vpop.f32.mrf.mxu0
        %v2544 = vadd.f32 %v1399, %v2543
        %2545 = vmatmul.f32.gmra.mxu0 %v2482
        %v2546 = vpop.f32.mrf.mxu0
        %v2547 = vadd.f32 %v1399, %v2546
        %2548 = vmatmul.f32.gmra.mxu0 %v2485
        %v2549 = vpop.f32.mrf.mxu0
        %v2550 = vadd.f32 %v1399, %v2549
        %2551 = vmatmul.f32.gmra.mxu0 %v2488
        %v2552 = vpop.f32.mrf.mxu0
        %v2553 = vadd.f32 %v1399, %v2552
        %2554 = vmatmul.f32.gmra.mxu0 %v2491
        %v2555 = vpop.f32.mrf.mxu0
        %v2556 = vadd.f32 %v1399, %v2555
        %2557 = vmatmul.f32.gmra.mxu0 %v2494
        %v2558 = vpop.f32.mrf.mxu0
        %v2559 = vadd.f32 %v1399, %v2558
        %2560 = vmatmul.f32.gmra.mxu0 %v2497
        %v2561 = vpop.f32.mrf.mxu0
        %v2562 = vadd.f32 %v1399, %v2561
        %2563 = vdwg.mxu0
        %2564 = vst.msk [vmem:[#allocation4 + $0x80] sm:$0xff] %vm426, %v2517
        %2565 = vst.msk [vmem:[#allocation4 + $0x88] sm:$0xff] %vm426, %v2520
        %2566 = vst.msk [vmem:[#allocation4 + $0x90] sm:$0xff] %vm426, %v2523
        %2567 = vst.msk [vmem:[#allocation4 + $0x98] sm:$0xff] %vm426, %v2526
        %2568 = vst.msk [vmem:[#allocation4 + $0xa0] sm:$0xff] %vm426, %v2529
        %2569 = vst.msk [vmem:[#allocation4 + $0xa8] sm:$0xff] %vm426, %v2532
        %2570 = vst.msk [vmem:[#allocation4 + $0xb0] sm:$0xff] %vm426, %v2535
        %2571 = vst.msk [vmem:[#allocation4 + $0xb8] sm:$0xff] %vm426, %v2538
        %2572 = vst.msk [vmem:[#allocation4 + $0xc0] sm:$0xff] %vm426, %v2541
        %2573 = vst.msk [vmem:[#allocation4 + $0xc8] sm:$0xff] %vm426, %v2544
        %2574 = vst.msk [vmem:[#allocation4 + $0xd0] sm:$0xff] %vm426, %v2547
        %2575 = vst.msk [vmem:[#allocation4 + $0xd8] sm:$0xff] %vm426, %v2550
        %2576 = vst.msk [vmem:[#allocation4 + $0xe0] sm:$0xff] %vm426, %v2553
        %2577 = vst.msk [vmem:[#allocation4 + $0xe8] sm:$0xff] %vm426, %v2556
        %2578 = vst.msk [vmem:[#allocation4 + $0xf0] sm:$0xff] %vm426, %v2559
        %2579 = vst.msk [vmem:[#allocation4 + $0xf8] sm:$0xff] %vm426, %v2562
        %v2580 = vsel %vm426, %v2517, 0.0
        %v2581 = vsel %vm426, %v2520, 0.0
        %v2582 = vadd.f32 %v2580, %v2581
        %v2583 = vsel %vm426, %v2523, 0.0
        %v2584 = vadd.f32 %v2582, %v2583
        %v2585 = vsel %vm426, %v2526, 0.0
        %v2586 = vadd.f32 %v2584, %v2585
        %v2587 = vsel %vm426, %v2529, 0.0
        %v2588 = vadd.f32 %v2586, %v2587
        %v2589 = vsel %vm426, %v2532, 0.0
        %v2590 = vadd.f32 %v2588, %v2589
        %v2591 = vsel %vm426, %v2535, 0.0
        %v2592 = vadd.f32 %v2590, %v2591
        %v2593 = vsel %vm426, %v2538, 0.0
        %v2594 = vadd.f32 %v2592, %v2593
        %v2595 = vsel %vm426, %v2541, 0.0
        %v2596 = vadd.f32 %v2594, %v2595
        %v2597 = vsel %vm426, %v2544, 0.0
        %v2598 = vadd.f32 %v2596, %v2597
        %v2599 = vsel %vm426, %v2547, 0.0
        %v2600 = vadd.f32 %v2598, %v2599
        %v2601 = vsel %vm426, %v2550, 0.0
        %v2602 = vadd.f32 %v2600, %v2601
        %v2603 = vsel %vm426, %v2553, 0.0
        %v2604 = vadd.f32 %v2602, %v2603
        %v2605 = vsel %vm426, %v2556, 0.0
        %v2606 = vadd.f32 %v2604, %v2605
        %v2607 = vsel %vm426, %v2559, 0.0
        %v2608 = vadd.f32 %v2606, %v2607
        %v2609 = vsel %vm426, %v2562, 0.0
        %v2610 = vadd.f32 %v2608, %v2609
        %v2611 = vrot.slane %v2610, 4
        %v2612 = vadd.f32 %v2610, %v2611
        %v2613 = vrot.slane %v2612, 2
        %v2614 = vadd.f32 %v2612, %v2613
        %v2615 = vrot.slane %v2614, 1
        %v2616 = vadd.f32 %v2614, %v2615
        %v2617 = vadd.f32 %v1568, %v2616
        %v2618 = vmul.f32 %v2517, %v2517
        %v2619 = vmul.f32 %v2520, %v2520
        %v2620 = vmul.f32 %v2523, %v2523
        %v2621 = vmul.f32 %v2526, %v2526
        %v2622 = vmul.f32 %v2529, %v2529
        %v2623 = vmul.f32 %v2532, %v2532
        %v2624 = vmul.f32 %v2535, %v2535
        %v2625 = vmul.f32 %v2538, %v2538
        %v2626 = vmul.f32 %v2541, %v2541
        %v2627 = vmul.f32 %v2544, %v2544
        %v2628 = vmul.f32 %v2547, %v2547
        %v2629 = vmul.f32 %v2550, %v2550
        %v2630 = vmul.f32 %v2553, %v2553
        %v2631 = vmul.f32 %v2556, %v2556
        %v2632 = vmul.f32 %v2559, %v2559
        %v2633 = vmul.f32 %v2562, %v2562
        %v2634 = vsel %vm426, %v2618, 0.0
        %v2635 = vsel %vm426, %v2619, 0.0
        %v2636 = vadd.f32 %v2634, %v2635
        %v2637 = vsel %vm426, %v2620, 0.0
        %v2638 = vadd.f32 %v2636, %v2637
        %v2639 = vsel %vm426, %v2621, 0.0
        %v2640 = vadd.f32 %v2638, %v2639
        %v2641 = vsel %vm426, %v2622, 0.0
        %v2642 = vadd.f32 %v2640, %v2641
        %v2643 = vsel %vm426, %v2623, 0.0
        %v2644 = vadd.f32 %v2642, %v2643
        %v2645 = vsel %vm426, %v2624, 0.0
        %v2646 = vadd.f32 %v2644, %v2645
        %v2647 = vsel %vm426, %v2625, 0.0
        %v2648 = vadd.f32 %v2646, %v2647
        %v2649 = vsel %vm426, %v2626, 0.0
        %v2650 = vadd.f32 %v2648, %v2649
        %v2651 = vsel %vm426, %v2627, 0.0
        %v2652 = vadd.f32 %v2650, %v2651
        %v2653 = vsel %vm426, %v2628, 0.0
        %v2654 = vadd.f32 %v2652, %v2653
        %v2655 = vsel %vm426, %v2629, 0.0
        %v2656 = vadd.f32 %v2654, %v2655
        %v2657 = vsel %vm426, %v2630, 0.0
        %v2658 = vadd.f32 %v2656, %v2657
        %v2659 = vsel %vm426, %v2631, 0.0
        %v2660 = vadd.f32 %v2658, %v2659
        %v2661 = vsel %vm426, %v2632, 0.0
        %v2662 = vadd.f32 %v2660, %v2661
        %v2663 = vsel %vm426, %v2633, 0.0
        %v2664 = vadd.f32 %v2662, %v2663
        %v2665 = vrot.slane %v2664, 4
        %v2666 = vadd.f32 %v2664, %v2665
        %v2667 = vrot.slane %v2666, 2
        %v2668 = vadd.f32 %v2666, %v2667
        %v2669 = vrot.slane %v2668, 1
        %v2670 = vadd.f32 %v2668, %v2669
        %v2671 = vadd.f32 %v1622, %v2670
        %v2672 = vmul.f32 %v2617, 0.00390625
        %v2673 = vmul.f32 %v2671, 0.00390625
        %v2674 = vmul.f32 %v2672, %v2672
        %v2675 = vsub.f32 %v2673, %v2674
        %v2676 = vadd.f32 %v2675, 1e-05
        %v2677 = vrsqrt.pop %v2676
        %v2678 = vmul.f32 %v2677, %v2676
        %v2679 = vmul.f32 %v2678, %v2677
        %v2680 = vmul.f32 0.5, %v2679
        %v2681 = vsub.f32 1.5, %v2680
        %v2682 = vmul.f32 %v2677, %v2681
        %vm2683 = vweird.f32 %v2676
        %vm2684 = vweird.f32 %v2677
        %vm2685 = vmor %vm2683, %vm2684
        %v2686 = vsel %vm2685, %v2677, %v2682
        %v2687 = vmul.f32 %v495, %v562
        %v2688 = vmul.f32 %v2687, %v2686
        %v2689 = vmul.f32 %v562, %v2672
        %v2690 = vmul.f32 %v2689, %v2686
        %v2691 = vsub.f32 %v563, %v2690
        %v2692 = vmul.f32 %v495, %v2691
        %2694 = vrot.lane.b32.xlu0 %v495, 120
        %v2695 = vpop.permute.xlu0 %2694
        %v2697 = vadd.f32 %v2692, %v2695
        %v2698 = vld [vmem:[#allocation4] sm:$0xff]
        %v2699 = vld [vmem:[#allocation4 + $0x8] sm:$0xff]
        %v2700 = vld [vmem:[#allocation4 + $0x10] sm:$0xff]
        %v2701 = vld [vmem:[#allocation4 + $0x18] sm:$0xff]
        %v2702 = vld [vmem:[#allocation4 + $0x20] sm:$0xff]
        %v2703 = vld [vmem:[#allocation4 + $0x28] sm:$0xff]
        %v2704 = vld [vmem:[#allocation4 + $0x30] sm:$0xff]
        %v2705 = vld [vmem:[#allocation4 + $0x38] sm:$0xff]
        %v2706 = vld [vmem:[#allocation4 + $0x40] sm:$0xff]
        %v2707 = vld [vmem:[#allocation4 + $0x48] sm:$0xff]
        %v2708 = vld [vmem:[#allocation4 + $0x50] sm:$0xff]
        %v2709 = vld [vmem:[#allocation4 + $0x58] sm:$0xff]
        %v2710 = vld [vmem:[#allocation4 + $0x60] sm:$0xff]
        %v2711 = vld [vmem:[#allocation4 + $0x68] sm:$0xff]
        %v2712 = vld [vmem:[#allocation4 + $0x70] sm:$0xff]
        %v2713 = vld [vmem:[#allocation4 + $0x78] sm:$0xff]
        %v2714 = vld [vmem:[#allocation4 + $0x80] sm:$0xff]
        %v2715 = vld [vmem:[#allocation4 + $0x88] sm:$0xff]
        %v2716 = vld [vmem:[#allocation4 + $0x90] sm:$0xff]
        %v2717 = vld [vmem:[#allocation4 + $0x98] sm:$0xff]
        %v2718 = vld [vmem:[#allocation4 + $0xa0] sm:$0xff]
        %v2719 = vld [vmem:[#allocation4 + $0xa8] sm:$0xff]
        %v2720 = vld [vmem:[#allocation4 + $0xb0] sm:$0xff]
        %v2721 = vld [vmem:[#allocation4 + $0xb8] sm:$0xff]
        %v2722 = vld [vmem:[#allocation4 + $0xc0] sm:$0xff]
        %v2723 = vld [vmem:[#allocation4 + $0xc8] sm:$0xff]
        %v2724 = vld [vmem:[#allocation4 + $0xd0] sm:$0xff]
        %v2725 = vld [vmem:[#allocation4 + $0xd8] sm:$0xff]
        %v2726 = vld [vmem:[#allocation4 + $0xe0] sm:$0xff]
        %v2727 = vld [vmem:[#allocation4 + $0xe8] sm:$0xff]
        %v2728 = vld [vmem:[#allocation4 + $0xf0] sm:$0xff]
        %v2729 = vld [vmem:[#allocation4 + $0xf8] sm:$0xff]
        %v2731 = vperm.slane %v2688, 0
        %v2733 = vmul.f32 %v2698, %v2731
        %v2734 = vmul.f32 %v2699, %v2731
        %v2735 = vmul.f32 %v2700, %v2731
        %v2736 = vmul.f32 %v2701, %v2731
        %v2737 = vmul.f32 %v2702, %v2731
        %v2738 = vmul.f32 %v2703, %v2731
        %v2739 = vmul.f32 %v2704, %v2731
        %v2740 = vmul.f32 %v2705, %v2731
        %v2741 = vmul.f32 %v2706, %v2731
        %v2742 = vmul.f32 %v2707, %v2731
        %v2743 = vmul.f32 %v2708, %v2731
        %v2744 = vmul.f32 %v2709, %v2731
        %v2745 = vmul.f32 %v2710, %v2731
        %v2746 = vmul.f32 %v2711, %v2731
        %v2747 = vmul.f32 %v2712, %v2731
        %v2748 = vmul.f32 %v2713, %v2731
        %v2749 = vmul.f32 %v2714, %v2731
        %v2750 = vmul.f32 %v2715, %v2731
        %v2751 = vmul.f32 %v2716, %v2731
        %v2752 = vmul.f32 %v2717, %v2731
        %v2753 = vmul.f32 %v2718, %v2731
        %v2754 = vmul.f32 %v2719, %v2731
        %v2755 = vmul.f32 %v2720, %v2731
        %v2756 = vmul.f32 %v2721, %v2731
        %v2757 = vmul.f32 %v2722, %v2731
        %v2758 = vmul.f32 %v2723, %v2731
        %v2759 = vmul.f32 %v2724, %v2731
        %v2760 = vmul.f32 %v2725, %v2731
        %v2761 = vmul.f32 %v2726, %v2731
        %v2762 = vmul.f32 %v2727, %v2731
        %v2763 = vmul.f32 %v2728, %v2731
        %v2764 = vmul.f32 %v2729, %v2731
        %v2766 = vperm.slane %v2697, 0
        %v2768 = vadd.f32 %v2733, %v2766
        %v2769 = vadd.f32 %v2734, %v2766
        %v2770 = vadd.f32 %v2735, %v2766
        %v2771 = vadd.f32 %v2736, %v2766
        %v2772 = vadd.f32 %v2737, %v2766
        %v2773 = vadd.f32 %v2738, %v2766
        %v2774 = vadd.f32 %v2739, %v2766
        %v2775 = vadd.f32 %v2740, %v2766
        %v2776 = vadd.f32 %v2741, %v2766
        %v2777 = vadd.f32 %v2742, %v2766
        %v2778 = vadd.f32 %v2743, %v2766
        %v2779 = vadd.f32 %v2744, %v2766
        %v2780 = vadd.f32 %v2745, %v2766
        %v2781 = vadd.f32 %v2746, %v2766
        %v2782 = vadd.f32 %v2747, %v2766
        %v2783 = vadd.f32 %v2748, %v2766
        %v2784 = vadd.f32 %v2749, %v2766
        %v2785 = vadd.f32 %v2750, %v2766
        %v2786 = vadd.f32 %v2751, %v2766
        %v2787 = vadd.f32 %v2752, %v2766
        %v2788 = vadd.f32 %v2753, %v2766
        %v2789 = vadd.f32 %v2754, %v2766
        %v2790 = vadd.f32 %v2755, %v2766
        %v2791 = vadd.f32 %v2756, %v2766
        %v2792 = vadd.f32 %v2757, %v2766
        %v2793 = vadd.f32 %v2758, %v2766
        %v2794 = vadd.f32 %v2759, %v2766
        %v2795 = vadd.f32 %v2760, %v2766
        %v2796 = vadd.f32 %v2761, %v2766
        %v2797 = vadd.f32 %v2762, %v2766
        %v2798 = vadd.f32 %v2763, %v2766
        %v2799 = vadd.f32 %v2764, %v2766
        %v2800 = vxor.u32 %v2768, 2147483648
        %v2801 = vxor.u32 %v2769, 2147483648
        %v2802 = vxor.u32 %v2770, 2147483648
        %v2803 = vxor.u32 %v2771, 2147483648
        %v2804 = vxor.u32 %v2772, 2147483648
        %v2805 = vxor.u32 %v2773, 2147483648
        %v2806 = vxor.u32 %v2774, 2147483648
        %v2807 = vxor.u32 %v2775, 2147483648
        %v2808 = vxor.u32 %v2776, 2147483648
        %v2809 = vxor.u32 %v2777, 2147483648
        %v2810 = vxor.u32 %v2778, 2147483648
        %v2811 = vxor.u32 %v2779, 2147483648
        %v2812 = vxor.u32 %v2780, 2147483648
        %v2813 = vxor.u32 %v2781, 2147483648
        %v2814 = vxor.u32 %v2782, 2147483648
        %v2815 = vxor.u32 %v2783, 2147483648
        %v2816 = vxor.u32 %v2784, 2147483648
        %v2817 = vxor.u32 %v2785, 2147483648
        %v2818 = vxor.u32 %v2786, 2147483648
        %v2819 = vxor.u32 %v2787, 2147483648
        %v2820 = vxor.u32 %v2788, 2147483648
        %v2821 = vxor.u32 %v2789, 2147483648
        %v2822 = vxor.u32 %v2790, 2147483648
        %v2823 = vxor.u32 %v2791, 2147483648
        %v2824 = vxor.u32 %v2792, 2147483648
        %v2825 = vxor.u32 %v2793, 2147483648
        %v2826 = vxor.u32 %v2794, 2147483648
        %v2827 = vxor.u32 %v2795, 2147483648
        %v2828 = vxor.u32 %v2796, 2147483648
        %v2829 = vxor.u32 %v2797, 2147483648
        %v2830 = vxor.u32 %v2798, 2147483648
        %v2831 = vxor.u32 %v2799, 2147483648
        %v2832 = vmul.f32 %v2800, 1.442695
        %v2833 = vpow.pop %v2832
        %v2834 = vmul.f32 %v2801, 1.442695
        %v2835 = vpow.pop %v2834
        %v2836 = vmul.f32 %v2802, 1.442695
        %v2837 = vpow.pop %v2836
        %v2838 = vmul.f32 %v2803, 1.442695
        %v2839 = vpow.pop %v2838
        %v2840 = vmul.f32 %v2804, 1.442695
        %v2841 = vpow.pop %v2840
        %v2842 = vmul.f32 %v2805, 1.442695
        %v2843 = vpow.pop %v2842
        %v2844 = vmul.f32 %v2806, 1.442695
        %v2845 = vpow.pop %v2844
        %v2846 = vmul.f32 %v2807, 1.442695
        %v2847 = vpow.pop %v2846
        %v2848 = vmul.f32 %v2808, 1.442695
        %v2849 = vpow.pop %v2848
        %v2850 = vmul.f32 %v2809, 1.442695
        %v2851 = vpow.pop %v2850
        %v2852 = vmul.f32 %v2810, 1.442695
        %v2853 = vpow.pop %v2852
        %v2854 = vmul.f32 %v2811, 1.442695
        %v2855 = vpow.pop %v2854
        %v2856 = vmul.f32 %v2812, 1.442695
        %v2857 = vpow.pop %v2856
        %v2858 = vmul.f32 %v2813, 1.442695
        %v2859 = vpow.pop %v2858
        %v2860 = vmul.f32 %v2814, 1.442695
        %v2861 = vpow.pop %v2860
        %v2862 = vmul.f32 %v2815, 1.442695
        %v2863 = vpow.pop %v2862
        %v2864 = vmul.f32 %v2816, 1.442695
        %v2865 = vpow.pop %v2864
        %v2866 = vmul.f32 %v2817, 1.442695
        %v2867 = vpow.pop %v2866
        %v2868 = vmul.f32 %v2818, 1.442695
        %v2869 = vpow.pop %v2868
        %v2870 = vmul.f32 %v2819, 1.442695
        %v2871 = vpow.pop %v2870
        %v2872 = vmul.f32 %v2820, 1.442695
        %v2873 = vpow.pop %v2872
        %v2874 = vmul.f32 %v2821, 1.442695
        %v2875 = vpow.pop %v2874
        %v2876 = vmul.f32 %v2822, 1.442695
        %v2877 = vpow.pop %v2876
        %v2878 = vmul.f32 %v2823, 1.442695
        %v2879 = vpow.pop %v2878
        %v2880 = vmul.f32 %v2824, 1.442695
        %v2881 = vpow.pop %v2880
        %v2882 = vmul.f32 %v2825, 1.442695
        %v2883 = vpow.pop %v2882
        %v2884 = vmul.f32 %v2826, 1.442695
        %v2885 = vpow.pop %v2884
        %v2886 = vmul.f32 %v2827, 1.442695
        %v2887 = vpow.pop %v2886
        %v2888 = vmul.f32 %v2828, 1.442695
        %v2889 = vpow.pop %v2888
        %v2890 = vmul.f32 %v2829, 1.442695
        %v2891 = vpow.pop %v2890
        %v2892 = vmul.f32 %v2830, 1.442695
        %v2893 = vpow.pop %v2892
        %v2894 = vmul.f32 %v2831, 1.442695
        %v2895 = vpow.pop %v2894
        %v2896 = vadd.f32 %v2833, 1.0
        %v2897 = vadd.f32 %v2835, 1.0
        %v2898 = vadd.f32 %v2837, 1.0
        %v2899 = vadd.f32 %v2839, 1.0
        %v2900 = vadd.f32 %v2841, 1.0
        %v2901 = vadd.f32 %v2843, 1.0
        %v2902 = vadd.f32 %v2845, 1.0
        %v2903 = vadd.f32 %v2847, 1.0
        %v2904 = vadd.f32 %v2849, 1.0
        %v2905 = vadd.f32 %v2851, 1.0
        %v2906 = vadd.f32 %v2853, 1.0
        %v2907 = vadd.f32 %v2855, 1.0
        %v2908 = vadd.f32 %v2857, 1.0
        %v2909 = vadd.f32 %v2859, 1.0
        %v2910 = vadd.f32 %v2861, 1.0
        %v2911 = vadd.f32 %v2863, 1.0
        %v2912 = vadd.f32 %v2865, 1.0
        %v2913 = vadd.f32 %v2867, 1.0
        %v2914 = vadd.f32 %v2869, 1.0
        %v2915 = vadd.f32 %v2871, 1.0
        %v2916 = vadd.f32 %v2873, 1.0
        %v2917 = vadd.f32 %v2875, 1.0
        %v2918 = vadd.f32 %v2877, 1.0
        %v2919 = vadd.f32 %v2879, 1.0
        %v2920 = vadd.f32 %v2881, 1.0
        %v2921 = vadd.f32 %v2883, 1.0
        %v2922 = vadd.f32 %v2885, 1.0
        %v2923 = vadd.f32 %v2887, 1.0
        %v2924 = vadd.f32 %v2889, 1.0
        %v2925 = vadd.f32 %v2891, 1.0
        %v2926 = vadd.f32 %v2893, 1.0
        %v2927 = vadd.f32 %v2895, 1.0
        %v2928 = vrcp.pop %v2896
        %v2929 = vmul.f32 %v2896, %v2928
        %v2930 = vsub.f32 1.0, %v2929
        %v2931 = vmul.f32 %v2928, %v2930
        %v2932 = vadd.f32 %v2928, %v2931
        %vm2933 = vweird.f32 %v2896
        %vm2934 = vweird.f32 %v2928
        %vm2935 = vmor %vm2933, %vm2934
        %v2936 = vsel %vm2935, %v2928, %v2932
        %v2937 = vand.u32 2147483647, %v2896
        %vm2938 = vcmp.eq.f32.partialorder %v2937, 8.507059e+37
        %v2939 = vand.u32 %v2896, 2147483648
        %v2940 = vor.u32 1.1754944e-38, %v2939
        %v2941 = vsel %vm2938, %v2940, %v2936
        %v2942 = vmul.f32 1.0, %v2941
        %v2943 = vrcp.pop %v2897
        %v2944 = vmul.f32 %v2897, %v2943
        %v2945 = vsub.f32 1.0, %v2944
        %v2946 = vmul.f32 %v2943, %v2945
        %v2947 = vadd.f32 %v2943, %v2946
        %vm2948 = vweird.f32 %v2897
        %vm2949 = vweird.f32 %v2943
        %vm2950 = vmor %vm2948, %vm2949
        %v2951 = vsel %vm2950, %v2943, %v2947
        %v2952 = vand.u32 2147483647, %v2897
        %vm2953 = vcmp.eq.f32.partialorder %v2952, 8.507059e+37
        %v2954 = vand.u32 %v2897, 2147483648
        %v2955 = vor.u32 1.1754944e-38, %v2954
        %v2956 = vsel %vm2953, %v2955, %v2951
        %v2957 = vmul.f32 1.0, %v2956
        %v2958 = vrcp.pop %v2898
        %v2959 = vmul.f32 %v2898, %v2958
        %v2960 = vsub.f32 1.0, %v2959
        %v2961 = vmul.f32 %v2958, %v2960
        %v2962 = vadd.f32 %v2958, %v2961
        %vm2963 = vweird.f32 %v2898
        %vm2964 = vweird.f32 %v2958
        %vm2965 = vmor %vm2963, %vm2964
        %v2966 = vsel %vm2965, %v2958, %v2962
        %v2967 = vand.u32 2147483647, %v2898
        %vm2968 = vcmp.eq.f32.partialorder %v2967, 8.507059e+37
        %v2969 = vand.u32 %v2898, 2147483648
        %v2970 = vor.u32 1.1754944e-38, %v2969
        %v2971 = vsel %vm2968, %v2970, %v2966
        %v2972 = vmul.f32 1.0, %v2971
        %v2973 = vrcp.pop %v2899
        %v2974 = vmul.f32 %v2899, %v2973
        %v2975 = vsub.f32 1.0, %v2974
        %v2976 = vmul.f32 %v2973, %v2975
        %v2977 = vadd.f32 %v2973, %v2976
        %vm2978 = vweird.f32 %v2899
        %vm2979 = vweird.f32 %v2973
        %vm2980 = vmor %vm2978, %vm2979
        %v2981 = vsel %vm2980, %v2973, %v2977
        %v2982 = vand.u32 2147483647, %v2899
        %vm2983 = vcmp.eq.f32.partialorder %v2982, 8.507059e+37
        %v2984 = vand.u32 %v2899, 2147483648
        %v2985 = vor.u32 1.1754944e-38, %v2984
        %v2986 = vsel %vm2983, %v2985, %v2981
        %v2987 = vmul.f32 1.0, %v2986
        %v2988 = vrcp.pop %v2900
        %v2989 = vmul.f32 %v2900, %v2988
        %v2990 = vsub.f32 1.0, %v2989
        %v2991 = vmul.f32 %v2988, %v2990
        %v2992 = vadd.f32 %v2988, %v2991
        %vm2993 = vweird.f32 %v2900
        %vm2994 = vweird.f32 %v2988
        %vm2995 = vmor %vm2993, %vm2994
        %v2996 = vsel %vm2995, %v2988, %v2992
        %v2997 = vand.u32 2147483647, %v2900
        %vm2998 = vcmp.eq.f32.partialorder %v2997, 8.507059e+37
        %v2999 = vand.u32 %v2900, 2147483648
        %v3000 = vor.u32 1.1754944e-38, %v2999
        %v3001 = vsel %vm2998, %v3000, %v2996
        %v3002 = vmul.f32 1.0, %v3001
        %v3003 = vrcp.pop %v2901
        %v3004 = vmul.f32 %v2901, %v3003
        %v3005 = vsub.f32 1.0, %v3004
        %v3006 = vmul.f32 %v3003, %v3005
        %v3007 = vadd.f32 %v3003, %v3006
        %vm3008 = vweird.f32 %v2901
        %vm3009 = vweird.f32 %v3003
        %vm3010 = vmor %vm3008, %vm3009
        %v3011 = vsel %vm3010, %v3003, %v3007
        %v3012 = vand.u32 2147483647, %v2901
        %vm3013 = vcmp.eq.f32.partialorder %v3012, 8.507059e+37
        %v3014 = vand.u32 %v2901, 2147483648
        %v3015 = vor.u32 1.1754944e-38, %v3014
        %v3016 = vsel %vm3013, %v3015, %v3011
        %v3017 = vmul.f32 1.0, %v3016
        %v3018 = vrcp.pop %v2902
        %v3019 = vmul.f32 %v2902, %v3018
        %v3020 = vsub.f32 1.0, %v3019
        %v3021 = vmul.f32 %v3018, %v3020
        %v3022 = vadd.f32 %v3018, %v3021
        %vm3023 = vweird.f32 %v2902
        %vm3024 = vweird.f32 %v3018
        %vm3025 = vmor %vm3023, %vm3024
        %v3026 = vsel %vm3025, %v3018, %v3022
        %v3027 = vand.u32 2147483647, %v2902
        %vm3028 = vcmp.eq.f32.partialorder %v3027, 8.507059e+37
        %v3029 = vand.u32 %v2902, 2147483648
        %v3030 = vor.u32 1.1754944e-38, %v3029
        %v3031 = vsel %vm3028, %v3030, %v3026
        %v3032 = vmul.f32 1.0, %v3031
        %v3033 = vrcp.pop %v2903
        %v3034 = vmul.f32 %v2903, %v3033
        %v3035 = vsub.f32 1.0, %v3034
        %v3036 = vmul.f32 %v3033, %v3035
        %v3037 = vadd.f32 %v3033, %v3036
        %vm3038 = vweird.f32 %v2903
        %vm3039 = vweird.f32 %v3033
        %vm3040 = vmor %vm3038, %vm3039
        %v3041 = vsel %vm3040, %v3033, %v3037
        %v3042 = vand.u32 2147483647, %v2903
        %vm3043 = vcmp.eq.f32.partialorder %v3042, 8.507059e+37
        %v3044 = vand.u32 %v2903, 2147483648
        %v3045 = vor.u32 1.1754944e-38, %v3044
        %v3046 = vsel %vm3043, %v3045, %v3041
        %v3047 = vmul.f32 1.0, %v3046
        %v3048 = vrcp.pop %v2904
        %v3049 = vmul.f32 %v2904, %v3048
        %v3050 = vsub.f32 1.0, %v3049
        %v3051 = vmul.f32 %v3048, %v3050
        %v3052 = vadd.f32 %v3048, %v3051
        %vm3053 = vweird.f32 %v2904
        %vm3054 = vweird.f32 %v3048
        %vm3055 = vmor %vm3053, %vm3054
        %v3056 = vsel %vm3055, %v3048, %v3052
        %v3057 = vand.u32 2147483647, %v2904
        %vm3058 = vcmp.eq.f32.partialorder %v3057, 8.507059e+37
        %v3059 = vand.u32 %v2904, 2147483648
        %v3060 = vor.u32 1.1754944e-38, %v3059
        %v3061 = vsel %vm3058, %v3060, %v3056
        %v3062 = vmul.f32 1.0, %v3061
        %v3063 = vrcp.pop %v2905
        %v3064 = vmul.f32 %v2905, %v3063
        %v3065 = vsub.f32 1.0, %v3064
        %v3066 = vmul.f32 %v3063, %v3065
        %v3067 = vadd.f32 %v3063, %v3066
        %vm3068 = vweird.f32 %v2905
        %vm3069 = vweird.f32 %v3063
        %vm3070 = vmor %vm3068, %vm3069
        %v3071 = vsel %vm3070, %v3063, %v3067
        %v3072 = vand.u32 2147483647, %v2905
        %vm3073 = vcmp.eq.f32.partialorder %v3072, 8.507059e+37
        %v3074 = vand.u32 %v2905, 2147483648
        %v3075 = vor.u32 1.1754944e-38, %v3074
        %v3076 = vsel %vm3073, %v3075, %v3071
        %v3077 = vmul.f32 1.0, %v3076
        %v3078 = vrcp.pop %v2906
        %v3079 = vmul.f32 %v2906, %v3078
        %v3080 = vsub.f32 1.0, %v3079
        %v3081 = vmul.f32 %v3078, %v3080
        %v3082 = vadd.f32 %v3078, %v3081
        %vm3083 = vweird.f32 %v2906
        %vm3084 = vweird.f32 %v3078
        %vm3085 = vmor %vm3083, %vm3084
        %v3086 = vsel %vm3085, %v3078, %v3082
        %v3087 = vand.u32 2147483647, %v2906
        %vm3088 = vcmp.eq.f32.partialorder %v3087, 8.507059e+37
        %v3089 = vand.u32 %v2906, 2147483648
        %v3090 = vor.u32 1.1754944e-38, %v3089
        %v3091 = vsel %vm3088, %v3090, %v3086
        %v3092 = vmul.f32 1.0, %v3091
        %v3093 = vrcp.pop %v2907
        %v3094 = vmul.f32 %v2907, %v3093
        %v3095 = vsub.f32 1.0, %v3094
        %v3096 = vmul.f32 %v3093, %v3095
        %v3097 = vadd.f32 %v3093, %v3096
        %vm3098 = vweird.f32 %v2907
        %vm3099 = vweird.f32 %v3093
        %vm3100 = vmor %vm3098, %vm3099
        %v3101 = vsel %vm3100, %v3093, %v3097
        %v3102 = vand.u32 2147483647, %v2907
        %vm3103 = vcmp.eq.f32.partialorder %v3102, 8.507059e+37
        %v3104 = vand.u32 %v2907, 2147483648
        %v3105 = vor.u32 1.1754944e-38, %v3104
        %v3106 = vsel %vm3103, %v3105, %v3101
        %v3107 = vmul.f32 1.0, %v3106
        %v3108 = vrcp.pop %v2908
        %v3109 = vmul.f32 %v2908, %v3108
        %v3110 = vsub.f32 1.0, %v3109
        %v3111 = vmul.f32 %v3108, %v3110
        %v3112 = vadd.f32 %v3108, %v3111
        %vm3113 = vweird.f32 %v2908
        %vm3114 = vweird.f32 %v3108
        %vm3115 = vmor %vm3113, %vm3114
        %v3116 = vsel %vm3115, %v3108, %v3112
        %v3117 = vand.u32 2147483647, %v2908
        %vm3118 = vcmp.eq.f32.partialorder %v3117, 8.507059e+37
        %v3119 = vand.u32 %v2908, 2147483648
        %v3120 = vor.u32 1.1754944e-38, %v3119
        %v3121 = vsel %vm3118, %v3120, %v3116
        %v3122 = vmul.f32 1.0, %v3121
        %v3123 = vrcp.pop %v2909
        %v3124 = vmul.f32 %v2909, %v3123
        %v3125 = vsub.f32 1.0, %v3124
        %v3126 = vmul.f32 %v3123, %v3125
        %v3127 = vadd.f32 %v3123, %v3126
        %vm3128 = vweird.f32 %v2909
        %vm3129 = vweird.f32 %v3123
        %vm3130 = vmor %vm3128, %vm3129
        %v3131 = vsel %vm3130, %v3123, %v3127
        %v3132 = vand.u32 2147483647, %v2909
        %vm3133 = vcmp.eq.f32.partialorder %v3132, 8.507059e+37
        %v3134 = vand.u32 %v2909, 2147483648
        %v3135 = vor.u32 1.1754944e-38, %v3134
        %v3136 = vsel %vm3133, %v3135, %v3131
        %v3137 = vmul.f32 1.0, %v3136
        %v3138 = vrcp.pop %v2910
        %v3139 = vmul.f32 %v2910, %v3138
        %v3140 = vsub.f32 1.0, %v3139
        %v3141 = vmul.f32 %v3138, %v3140
        %v3142 = vadd.f32 %v3138, %v3141
        %vm3143 = vweird.f32 %v2910
        %vm3144 = vweird.f32 %v3138
        %vm3145 = vmor %vm3143, %vm3144
        %v3146 = vsel %vm3145, %v3138, %v3142
        %v3147 = vand.u32 2147483647, %v2910
        %vm3148 = vcmp.eq.f32.partialorder %v3147, 8.507059e+37
        %v3149 = vand.u32 %v2910, 2147483648
        %v3150 = vor.u32 1.1754944e-38, %v3149
        %v3151 = vsel %vm3148, %v3150, %v3146
        %v3152 = vmul.f32 1.0, %v3151
        %v3153 = vrcp.pop %v2911
        %v3154 = vmul.f32 %v2911, %v3153
        %v3155 = vsub.f32 1.0, %v3154
        %v3156 = vmul.f32 %v3153, %v3155
        %v3157 = vadd.f32 %v3153, %v3156
        %vm3158 = vweird.f32 %v2911
        %vm3159 = vweird.f32 %v3153
        %vm3160 = vmor %vm3158, %vm3159
        %v3161 = vsel %vm3160, %v3153, %v3157
        %v3162 = vand.u32 2147483647, %v2911
        %vm3163 = vcmp.eq.f32.partialorder %v3162, 8.507059e+37
        %v3164 = vand.u32 %v2911, 2147483648
        %v3165 = vor.u32 1.1754944e-38, %v3164
        %v3166 = vsel %vm3163, %v3165, %v3161
        %v3167 = vmul.f32 1.0, %v3166
        %v3168 = vrcp.pop %v2912
        %v3169 = vmul.f32 %v2912, %v3168
        %v3170 = vsub.f32 1.0, %v3169
        %v3171 = vmul.f32 %v3168, %v3170
        %v3172 = vadd.f32 %v3168, %v3171
        %vm3173 = vweird.f32 %v2912
        %vm3174 = vweird.f32 %v3168
        %vm3175 = vmor %vm3173, %vm3174
        %v3176 = vsel %vm3175, %v3168, %v3172
        %v3177 = vand.u32 2147483647, %v2912
        %vm3178 = vcmp.eq.f32.partialorder %v3177, 8.507059e+37
        %v3179 = vand.u32 %v2912, 2147483648
        %v3180 = vor.u32 1.1754944e-38, %v3179
        %v3181 = vsel %vm3178, %v3180, %v3176
        %v3182 = vmul.f32 1.0, %v3181
        %v3183 = vrcp.pop %v2913
        %v3184 = vmul.f32 %v2913, %v3183
        %v3185 = vsub.f32 1.0, %v3184
        %v3186 = vmul.f32 %v3183, %v3185
        %v3187 = vadd.f32 %v3183, %v3186
        %vm3188 = vweird.f32 %v2913
        %vm3189 = vweird.f32 %v3183
        %vm3190 = vmor %vm3188, %vm3189
        %v3191 = vsel %vm3190, %v3183, %v3187
        %v3192 = vand.u32 2147483647, %v2913
        %vm3193 = vcmp.eq.f32.partialorder %v3192, 8.507059e+37
        %v3194 = vand.u32 %v2913, 2147483648
        %v3195 = vor.u32 1.1754944e-38, %v3194
        %v3196 = vsel %vm3193, %v3195, %v3191
        %v3197 = vmul.f32 1.0, %v3196
        %v3198 = vrcp.pop %v2914
        %v3199 = vmul.f32 %v2914, %v3198
        %v3200 = vsub.f32 1.0, %v3199
        %v3201 = vmul.f32 %v3198, %v3200
        %v3202 = vadd.f32 %v3198, %v3201
        %vm3203 = vweird.f32 %v2914
        %vm3204 = vweird.f32 %v3198
        %vm3205 = vmor %vm3203, %vm3204
        %v3206 = vsel %vm3205, %v3198, %v3202
        %v3207 = vand.u32 2147483647, %v2914
        %vm3208 = vcmp.eq.f32.partialorder %v3207, 8.507059e+37
        %v3209 = vand.u32 %v2914, 2147483648
        %v3210 = vor.u32 1.1754944e-38, %v3209
        %v3211 = vsel %vm3208, %v3210, %v3206
        %v3212 = vmul.f32 1.0, %v3211
        %v3213 = vrcp.pop %v2915
        %v3214 = vmul.f32 %v2915, %v3213
        %v3215 = vsub.f32 1.0, %v3214
        %v3216 = vmul.f32 %v3213, %v3215
        %v3217 = vadd.f32 %v3213, %v3216
        %vm3218 = vweird.f32 %v2915
        %vm3219 = vweird.f32 %v3213
        %vm3220 = vmor %vm3218, %vm3219
        %v3221 = vsel %vm3220, %v3213, %v3217
        %v3222 = vand.u32 2147483647, %v2915
        %vm3223 = vcmp.eq.f32.partialorder %v3222, 8.507059e+37
        %v3224 = vand.u32 %v2915, 2147483648
        %v3225 = vor.u32 1.1754944e-38, %v3224
        %v3226 = vsel %vm3223, %v3225, %v3221
        %v3227 = vmul.f32 1.0, %v3226
        %v3228 = vrcp.pop %v2916
        %v3229 = vmul.f32 %v2916, %v3228
        %v3230 = vsub.f32 1.0, %v3229
        %v3231 = vmul.f32 %v3228, %v3230
        %v3232 = vadd.f32 %v3228, %v3231
        %vm3233 = vweird.f32 %v2916
        %vm3234 = vweird.f32 %v3228
        %vm3235 = vmor %vm3233, %vm3234
        %v3236 = vsel %vm3235, %v3228, %v3232
        %v3237 = vand.u32 2147483647, %v2916
        %vm3238 = vcmp.eq.f32.partialorder %v3237, 8.507059e+37
        %v3239 = vand.u32 %v2916, 2147483648
        %v3240 = vor.u32 1.1754944e-38, %v3239
        %v3241 = vsel %vm3238, %v3240, %v3236
        %v3242 = vmul.f32 1.0, %v3241
        %v3243 = vrcp.pop %v2917
        %v3244 = vmul.f32 %v2917, %v3243
        %v3245 = vsub.f32 1.0, %v3244
        %v3246 = vmul.f32 %v3243, %v3245
        %v3247 = vadd.f32 %v3243, %v3246
        %vm3248 = vweird.f32 %v2917
        %vm3249 = vweird.f32 %v3243
        %vm3250 = vmor %vm3248, %vm3249
        %v3251 = vsel %vm3250, %v3243, %v3247
        %v3252 = vand.u32 2147483647, %v2917
        %vm3253 = vcmp.eq.f32.partialorder %v3252, 8.507059e+37
        %v3254 = vand.u32 %v2917, 2147483648
        %v3255 = vor.u32 1.1754944e-38, %v3254
        %v3256 = vsel %vm3253, %v3255, %v3251
        %v3257 = vmul.f32 1.0, %v3256
        %v3258 = vrcp.pop %v2918
        %v3259 = vmul.f32 %v2918, %v3258
        %v3260 = vsub.f32 1.0, %v3259
        %v3261 = vmul.f32 %v3258, %v3260
        %v3262 = vadd.f32 %v3258, %v3261
        %vm3263 = vweird.f32 %v2918
        %vm3264 = vweird.f32 %v3258
        %vm3265 = vmor %vm3263, %vm3264
        %v3266 = vsel %vm3265, %v3258, %v3262
        %v3267 = vand.u32 2147483647, %v2918
        %vm3268 = vcmp.eq.f32.partialorder %v3267, 8.507059e+37
        %v3269 = vand.u32 %v2918, 2147483648
        %v3270 = vor.u32 1.1754944e-38, %v3269
        %v3271 = vsel %vm3268, %v3270, %v3266
        %v3272 = vmul.f32 1.0, %v3271
        %v3273 = vrcp.pop %v2919
        %v3274 = vmul.f32 %v2919, %v3273
        %v3275 = vsub.f32 1.0, %v3274
        %v3276 = vmul.f32 %v3273, %v3275
        %v3277 = vadd.f32 %v3273, %v3276
        %vm3278 = vweird.f32 %v2919
        %vm3279 = vweird.f32 %v3273
        %vm3280 = vmor %vm3278, %vm3279
        %v3281 = vsel %vm3280, %v3273, %v3277
        %v3282 = vand.u32 2147483647, %v2919
        %vm3283 = vcmp.eq.f32.partialorder %v3282, 8.507059e+37
        %v3284 = vand.u32 %v2919, 2147483648
        %v3285 = vor.u32 1.1754944e-38, %v3284
        %v3286 = vsel %vm3283, %v3285, %v3281
        %v3287 = vmul.f32 1.0, %v3286
        %v3288 = vrcp.pop %v2920
        %v3289 = vmul.f32 %v2920, %v3288
        %v3290 = vsub.f32 1.0, %v3289
        %v3291 = vmul.f32 %v3288, %v3290
        %v3292 = vadd.f32 %v3288, %v3291
        %vm3293 = vweird.f32 %v2920
        %vm3294 = vweird.f32 %v3288
        %vm3295 = vmor %vm3293, %vm3294
        %v3296 = vsel %vm3295, %v3288, %v3292
        %v3297 = vand.u32 2147483647, %v2920
        %vm3298 = vcmp.eq.f32.partialorder %v3297, 8.507059e+37
        %v3299 = vand.u32 %v2920, 2147483648
        %v3300 = vor.u32 1.1754944e-38, %v3299
        %v3301 = vsel %vm3298, %v3300, %v3296
        %v3302 = vmul.f32 1.0, %v3301
        %v3303 = vrcp.pop %v2921
        %v3304 = vmul.f32 %v2921, %v3303
        %v3305 = vsub.f32 1.0, %v3304
        %v3306 = vmul.f32 %v3303, %v3305
        %v3307 = vadd.f32 %v3303, %v3306
        %vm3308 = vweird.f32 %v2921
        %vm3309 = vweird.f32 %v3303
        %vm3310 = vmor %vm3308, %vm3309
        %v3311 = vsel %vm3310, %v3303, %v3307
        %v3312 = vand.u32 2147483647, %v2921
        %vm3313 = vcmp.eq.f32.partialorder %v3312, 8.507059e+37
        %v3314 = vand.u32 %v2921, 2147483648
        %v3315 = vor.u32 1.1754944e-38, %v3314
        %v3316 = vsel %vm3313, %v3315, %v3311
        %v3317 = vmul.f32 1.0, %v3316
        %v3318 = vrcp.pop %v2922
        %v3319 = vmul.f32 %v2922, %v3318
        %v3320 = vsub.f32 1.0, %v3319
        %v3321 = vmul.f32 %v3318, %v3320
        %v3322 = vadd.f32 %v3318, %v3321
        %vm3323 = vweird.f32 %v2922
        %vm3324 = vweird.f32 %v3318
        %vm3325 = vmor %vm3323, %vm3324
        %v3326 = vsel %vm3325, %v3318, %v3322
        %v3327 = vand.u32 2147483647, %v2922
        %vm3328 = vcmp.eq.f32.partialorder %v3327, 8.507059e+37
        %v3329 = vand.u32 %v2922, 2147483648
        %v3330 = vor.u32 1.1754944e-38, %v3329
        %v3331 = vsel %vm3328, %v3330, %v3326
        %v3332 = vmul.f32 1.0, %v3331
        %v3333 = vrcp.pop %v2923
        %v3334 = vmul.f32 %v2923, %v3333
        %v3335 = vsub.f32 1.0, %v3334
        %v3336 = vmul.f32 %v3333, %v3335
        %v3337 = vadd.f32 %v3333, %v3336
        %vm3338 = vweird.f32 %v2923
        %vm3339 = vweird.f32 %v3333
        %vm3340 = vmor %vm3338, %vm3339
        %v3341 = vsel %vm3340, %v3333, %v3337
        %v3342 = vand.u32 2147483647, %v2923
        %vm3343 = vcmp.eq.f32.partialorder %v3342, 8.507059e+37
        %v3344 = vand.u32 %v2923, 2147483648
        %v3345 = vor.u32 1.1754944e-38, %v3344
        %v3346 = vsel %vm3343, %v3345, %v3341
        %v3347 = vmul.f32 1.0, %v3346
        %v3348 = vrcp.pop %v2924
        %v3349 = vmul.f32 %v2924, %v3348
        %v3350 = vsub.f32 1.0, %v3349
        %v3351 = vmul.f32 %v3348, %v3350
        %v3352 = vadd.f32 %v3348, %v3351
        %vm3353 = vweird.f32 %v2924
        %vm3354 = vweird.f32 %v3348
        %vm3355 = vmor %vm3353, %vm3354
        %v3356 = vsel %vm3355, %v3348, %v3352
        %v3357 = vand.u32 2147483647, %v2924
        %vm3358 = vcmp.eq.f32.partialorder %v3357, 8.507059e+37
        %v3359 = vand.u32 %v2924, 2147483648
        %v3360 = vor.u32 1.1754944e-38, %v3359
        %v3361 = vsel %vm3358, %v3360, %v3356
        %v3362 = vmul.f32 1.0, %v3361
        %v3363 = vrcp.pop %v2925
        %v3364 = vmul.f32 %v2925, %v3363
        %v3365 = vsub.f32 1.0, %v3364
        %v3366 = vmul.f32 %v3363, %v3365
        %v3367 = vadd.f32 %v3363, %v3366
        %vm3368 = vweird.f32 %v2925
        %vm3369 = vweird.f32 %v3363
        %vm3370 = vmor %vm3368, %vm3369
        %v3371 = vsel %vm3370, %v3363, %v3367
        %v3372 = vand.u32 2147483647, %v2925
        %vm3373 = vcmp.eq.f32.partialorder %v3372, 8.507059e+37
        %v3374 = vand.u32 %v2925, 2147483648
        %v3375 = vor.u32 1.1754944e-38, %v3374
        %v3376 = vsel %vm3373, %v3375, %v3371
        %v3377 = vmul.f32 1.0, %v3376
        %v3378 = vrcp.pop %v2926
        %v3379 = vmul.f32 %v2926, %v3378
        %v3380 = vsub.f32 1.0, %v3379
        %v3381 = vmul.f32 %v3378, %v3380
        %v3382 = vadd.f32 %v3378, %v3381
        %vm3383 = vweird.f32 %v2926
        %vm3384 = vweird.f32 %v3378
        %vm3385 = vmor %vm3383, %vm3384
        %v3386 = vsel %vm3385, %v3378, %v3382
        %v3387 = vand.u32 2147483647, %v2926
        %vm3388 = vcmp.eq.f32.partialorder %v3387, 8.507059e+37
        %v3389 = vand.u32 %v2926, 2147483648
        %v3390 = vor.u32 1.1754944e-38, %v3389
        %v3391 = vsel %vm3388, %v3390, %v3386
        %v3392 = vmul.f32 1.0, %v3391
        %v3393 = vrcp.pop %v2927
        %v3394 = vmul.f32 %v2927, %v3393
        %v3395 = vsub.f32 1.0, %v3394
        %v3396 = vmul.f32 %v3393, %v3395
        %v3397 = vadd.f32 %v3393, %v3396
        %vm3398 = vweird.f32 %v2927
        %vm3399 = vweird.f32 %v3393
        %vm3400 = vmor %vm3398, %vm3399
        %v3401 = vsel %vm3400, %v3393, %v3397
        %v3402 = vand.u32 2147483647, %v2927
        %vm3403 = vcmp.eq.f32.partialorder %v3402, 8.507059e+37
        %v3404 = vand.u32 %v2927, 2147483648
        %v3405 = vor.u32 1.1754944e-38, %v3404
        %v3406 = vsel %vm3403, %v3405, %v3401
        %v3407 = vmul.f32 1.0, %v3406
        %v3408 = vmul.f32 %v2768, %v2942
        %v3409 = vmul.f32 %v2769, %v2957
        %v3410 = vmul.f32 %v2770, %v2972
        %v3411 = vmul.f32 %v2771, %v2987
        %v3412 = vmul.f32 %v2772, %v3002
        %v3413 = vmul.f32 %v2773, %v3017
        %v3414 = vmul.f32 %v2774, %v3032
        %v3415 = vmul.f32 %v2775, %v3047
        %v3416 = vmul.f32 %v2776, %v3062
        %v3417 = vmul.f32 %v2777, %v3077
        %v3418 = vmul.f32 %v2778, %v3092
        %v3419 = vmul.f32 %v2779, %v3107
        %v3420 = vmul.f32 %v2780, %v3122
        %v3421 = vmul.f32 %v2781, %v3137
        %v3422 = vmul.f32 %v2782, %v3152
        %v3423 = vmul.f32 %v2783, %v3167
        %v3424 = vmul.f32 %v2784, %v3182
        %v3425 = vmul.f32 %v2785, %v3197
        %v3426 = vmul.f32 %v2786, %v3212
        %v3427 = vmul.f32 %v2787, %v3227
        %v3428 = vmul.f32 %v2788, %v3242
        %v3429 = vmul.f32 %v2789, %v3257
        %v3430 = vmul.f32 %v2790, %v3272
        %v3431 = vmul.f32 %v2791, %v3287
        %v3432 = vmul.f32 %v2792, %v3302
        %v3433 = vmul.f32 %v2793, %v3317
        %v3434 = vmul.f32 %v2794, %v3332
        %v3435 = vmul.f32 %v2795, %v3347
        %v3436 = vmul.f32 %v2796, %v3362
        %v3437 = vmul.f32 %v2797, %v3377
        %v3438 = vmul.f32 %v2798, %v3392
        %v3439 = vmul.f32 %v2799, %v3407
        %3440 = vst.msk [vmem:[%s528 + $0x1] sm:$0xff] %vm426, %v3408
        %3441 = vst.msk [vmem:[%s528 + $0x9] sm:$0xff] %vm426, %v3409
        %3442 = vst.msk [vmem:[%s528 + $0x19] sm:$0xff] %vm426, %v3410
        %3443 = vst.msk [vmem:[%s528 + $0x21] sm:$0xff] %vm426, %v3411
        %3444 = vst.msk [vmem:[%s528 + $0x31] sm:$0xff] %vm426, %v3412
        %3445 = vst.msk [vmem:[%s528 + $0x39] sm:$0xff] %vm426, %v3413
        %3446 = vst.msk [vmem:[%s528 + $0x49] sm:$0xff] %vm426, %v3414
        %3447 = vst.msk [vmem:[%s528 + $0x51] sm:$0xff] %vm426, %v3415
        %3448 = vst.msk [vmem:[%s528 + $0x61] sm:$0xff] %vm426, %v3416
        %3449 = vst.msk [vmem:[%s528 + $0x69] sm:$0xff] %vm426, %v3417
        %3450 = vst.msk [vmem:[%s528 + $0x79] sm:$0xff] %vm426, %v3418
        %3451 = vst.msk [vmem:[%s528 + $0x81] sm:$0xff] %vm426, %v3419
        %3452 = vst.msk [vmem:[%s528 + $0x91] sm:$0xff] %vm426, %v3420
        %3453 = vst.msk [vmem:[%s528 + $0x99] sm:$0xff] %vm426, %v3421
        %3454 = vst.msk [vmem:[%s528 + $0xa9] sm:$0xff] %vm426, %v3422
        %3455 = vst.msk [vmem:[%s528 + $0xb1] sm:$0xff] %vm426, %v3423
        %3456 = vst.msk [vmem:[%s528 + $0xc1] sm:$0xff] %vm426, %v3424
        %3457 = vst.msk [vmem:[%s528 + $0xc9] sm:$0xff] %vm426, %v3425
        %3458 = vst.msk [vmem:[%s528 + $0xd9] sm:$0xff] %vm426, %v3426
        %3459 = vst.msk [vmem:[%s528 + $0xe1] sm:$0xff] %vm426, %v3427
        %3460 = vst.msk [vmem:[%s528 + $0xf1] sm:$0xff] %vm426, %v3428
        %3461 = vst.msk [vmem:[%s528 + $0xf9] sm:$0xff] %vm426, %v3429
        %3462 = vst.msk [vmem:[%s528 + $0x109] sm:$0xff] %vm426, %v3430
        %3463 = vst.msk [vmem:[%s528 + $0x111] sm:$0xff] %vm426, %v3431
        %3464 = vst.msk [vmem:[%s528 + $0x121] sm:$0xff] %vm426, %v3432
        %3465 = vst.msk [vmem:[%s528 + $0x129] sm:$0xff] %vm426, %v3433
        %3466 = vst.msk [vmem:[%s528 + $0x139] sm:$0xff] %vm426, %v3434
        %3467 = vst.msk [vmem:[%s528 + $0x141] sm:$0xff] %vm426, %v3435
        %3468 = vst.msk [vmem:[%s528 + $0x151] sm:$0xff] %vm426, %v3436
        %3469 = vst.msk [vmem:[%s528 + $0x159] sm:$0xff] %vm426, %v3437
        %3470 = vst.msk [vmem:[%s528 + $0x169] sm:$0xff] %vm426, %v3438
        %3471 = vst.msk [vmem:[%s528 + $0x171] sm:$0xff] %vm426, %v3439
        %v3472 = vld [vmem:[%s7] sm:$0x1]
        %v3473 = vld [vmem:[%s8] sm:$0x1]
        %v3474 = vld [vmem:[%s9] sm:$0x1]
        %v3475 = vld [vmem:[#allocation2] sm:$0xff]
        %v3476 = vld [vmem:[#allocation2 + $0x8] sm:$0xff]
        %v3477 = vld [vmem:[#allocation2 + $0x18] sm:$0xff]
        %v3478 = vld [vmem:[#allocation2 + $0x20] sm:$0xff]
        %v3479 = vld [vmem:[#allocation2 + $0x30] sm:$0xff]
        %v3480 = vld [vmem:[#allocation2 + $0x38] sm:$0xff]
        %v3481 = vld [vmem:[#allocation2 + $0x48] sm:$0xff]
        %v3482 = vld [vmem:[#allocation2 + $0x50] sm:$0xff]
        %v3483 = vld [vmem:[#allocation2 + $0x60] sm:$0xff]
        %v3484 = vld [vmem:[#allocation2 + $0x68] sm:$0xff]
        %v3485 = vld [vmem:[#allocation2 + $0x78] sm:$0xff]
        %v3486 = vld [vmem:[#allocation2 + $0x80] sm:$0xff]
        %v3487 = vld [vmem:[#allocation2 + $0x90] sm:$0xff]
        %v3488 = vld [vmem:[#allocation2 + $0x98] sm:$0xff]
        %v3489 = vld [vmem:[#allocation2 + $0xa8] sm:$0xff]
        %v3490 = vld [vmem:[#allocation2 + $0xb0] sm:$0xff]
        %3491 = vst.msk [vmem:[#allocation3] sm:$0xff] %vm426, %v3475
        %3492 = vst.msk [vmem:[#allocation3 + $0x8] sm:$0xff] %vm426, %v3476
        %3493 = vst.msk [vmem:[#allocation3 + $0x10] sm:$0xff] %vm426, %v3477
        %3494 = vst.msk [vmem:[#allocation3 + $0x18] sm:$0xff] %vm426, %v3478
        %3495 = vst.msk [vmem:[#allocation3 + $0x20] sm:$0xff] %vm426, %v3479
        %3496 = vst.msk [vmem:[#allocation3 + $0x28] sm:$0xff] %vm426, %v3480
        %3497 = vst.msk [vmem:[#allocation3 + $0x30] sm:$0xff] %vm426, %v3481
        %3498 = vst.msk [vmem:[#allocation3 + $0x38] sm:$0xff] %vm426, %v3482
        %3499 = vst.msk [vmem:[#allocation3 + $0x40] sm:$0xff] %vm426, %v3483
        %3500 = vst.msk [vmem:[#allocation3 + $0x48] sm:$0xff] %vm426, %v3484
        %3501 = vst.msk [vmem:[#allocation3 + $0x50] sm:$0xff] %vm426, %v3485
        %3502 = vst.msk [vmem:[#allocation3 + $0x58] sm:$0xff] %vm426, %v3486
        %3503 = vst.msk [vmem:[#allocation3 + $0x60] sm:$0xff] %vm426, %v3487
        %3504 = vst.msk [vmem:[#allocation3 + $0x68] sm:$0xff] %vm426, %v3488
        %3505 = vst.msk [vmem:[#allocation3 + $0x70] sm:$0xff] %vm426, %v3489
        %3506 = vst.msk [vmem:[#allocation3 + $0x78] sm:$0xff] %vm426, %v3490
        %v3507 = vld [vmem:[#allocation2 + $0x1] sm:$0xff]
        %v3508 = vld [vmem:[#allocation2 + $0x9] sm:$0xff]
        %v3509 = vld [vmem:[#allocation2 + $0x19] sm:$0xff]
        %v3510 = vld [vmem:[#allocation2 + $0x21] sm:$0xff]
        %v3511 = vld [vmem:[#allocation2 + $0x31] sm:$0xff]
        %v3512 = vld [vmem:[#allocation2 + $0x39] sm:$0xff]
        %v3513 = vld [vmem:[#allocation2 + $0x49] sm:$0xff]
        %v3514 = vld [vmem:[#allocation2 + $0x51] sm:$0xff]
        %v3515 = vld [vmem:[#allocation2 + $0x61] sm:$0xff]
        %v3516 = vld [vmem:[#allocation2 + $0x69] sm:$0xff]
        %v3517 = vld [vmem:[#allocation2 + $0x79] sm:$0xff]
        %v3518 = vld [vmem:[#allocation2 + $0x81] sm:$0xff]
        %v3519 = vld [vmem:[#allocation2 + $0x91] sm:$0xff]
        %v3520 = vld [vmem:[#allocation2 + $0x99] sm:$0xff]
        %v3521 = vld [vmem:[#allocation2 + $0xa9] sm:$0xff]
        %v3522 = vld [vmem:[#allocation2 + $0xb1] sm:$0xff]
        %3539 = vrot.lane.b32.xlu0 %v3507, 8
        %v3540 = vpop.permute.xlu0 %3539
        %3541 = vrot.lane.b32.xlu0 %v3508, 8
        %v3542 = vpop.permute.xlu0 %3541
        %3543 = vrot.lane.b32.xlu0 %v3509, 8
        %v3544 = vpop.permute.xlu0 %3543
        %3545 = vrot.lane.b32.xlu0 %v3510, 8
        %v3546 = vpop.permute.xlu0 %3545
        %3547 = vrot.lane.b32.xlu0 %v3511, 8
        %v3548 = vpop.permute.xlu0 %3547
        %3549 = vrot.lane.b32.xlu0 %v3512, 8
        %v3550 = vpop.permute.xlu0 %3549
        %3551 = vrot.lane.b32.xlu0 %v3513, 8
        %v3552 = vpop.permute.xlu0 %3551
        %3553 = vrot.lane.b32.xlu0 %v3514, 8
        %v3554 = vpop.permute.xlu0 %3553
        %3555 = vrot.lane.b32.xlu0 %v3515, 8
        %v3556 = vpop.permute.xlu0 %3555
        %3557 = vrot.lane.b32.xlu0 %v3516, 8
        %v3558 = vpop.permute.xlu0 %3557
        %3559 = vrot.lane.b32.xlu0 %v3517, 8
        %v3560 = vpop.permute.xlu0 %3559
        %3561 = vrot.lane.b32.xlu0 %v3518, 8
        %v3562 = vpop.permute.xlu0 %3561
        %3563 = vrot.lane.b32.xlu0 %v3519, 8
        %v3564 = vpop.permute.xlu0 %3563
        %3565 = vrot.lane.b32.xlu0 %v3520, 8
        %v3566 = vpop.permute.xlu0 %3565
        %3567 = vrot.lane.b32.xlu0 %v3521, 8
        %v3568 = vpop.permute.xlu0 %3567
        %3569 = vrot.lane.b32.xlu0 %v3522, 8
        %v3570 = vpop.permute.xlu0 %3569
        %3587 = vst.msk [vmem:[#allocation3] sm:$0xff] %vm676, %v3540
        %3588 = vst.msk [vmem:[#allocation3 + $0x8] sm:$0xff] %vm676, %v3542
        %3589 = vst.msk [vmem:[#allocation3 + $0x10] sm:$0xff] %vm676, %v3544
        %3590 = vst.msk [vmem:[#allocation3 + $0x18] sm:$0xff] %vm676, %v3546
        %3591 = vst.msk [vmem:[#allocation3 + $0x20] sm:$0xff] %vm676, %v3548
        %3592 = vst.msk [vmem:[#allocation3 + $0x28] sm:$0xff] %vm676, %v3550
        %3593 = vst.msk [vmem:[#allocation3 + $0x30] sm:$0xff] %vm676, %v3552
        %3594 = vst.msk [vmem:[#allocation3 + $0x38] sm:$0xff] %vm676, %v3554
        %3595 = vst.msk [vmem:[#allocation3 + $0x40] sm:$0xff] %vm676, %v3556
        %3596 = vst.msk [vmem:[#allocation3 + $0x48] sm:$0xff] %vm676, %v3558
        %3597 = vst.msk [vmem:[#allocation3 + $0x50] sm:$0xff] %vm676, %v3560
        %3598 = vst.msk [vmem:[#allocation3 + $0x58] sm:$0xff] %vm676, %v3562
        %3599 = vst.msk [vmem:[#allocation3 + $0x60] sm:$0xff] %vm676, %v3564
        %3600 = vst.msk [vmem:[#allocation3 + $0x68] sm:$0xff] %vm676, %v3566
        %3601 = vst.msk [vmem:[#allocation3 + $0x70] sm:$0xff] %vm676, %v3568
        %3602 = vst.msk [vmem:[#allocation3 + $0x78] sm:$0xff] %vm676, %v3570
        %v3603 = vld [vmem:[#allocation2 + $0x2] sm:$0xff]
        %v3604 = vld [vmem:[#allocation2 + $0xa] sm:$0xff]
        %v3605 = vld [vmem:[#allocation2 + $0x1a] sm:$0xff]
        %v3606 = vld [vmem:[#allocation2 + $0x22] sm:$0xff]
        %v3607 = vld [vmem:[#allocation2 + $0x32] sm:$0xff]
        %v3608 = vld [vmem:[#allocation2 + $0x3a] sm:$0xff]
        %v3609 = vld [vmem:[#allocation2 + $0x4a] sm:$0xff]
        %v3610 = vld [vmem:[#allocation2 + $0x52] sm:$0xff]
        %v3611 = vld [vmem:[#allocation2 + $0x62] sm:$0xff]
        %v3612 = vld [vmem:[#allocation2 + $0x6a] sm:$0xff]
        %v3613 = vld [vmem:[#allocation2 + $0x7a] sm:$0xff]
        %v3614 = vld [vmem:[#allocation2 + $0x82] sm:$0xff]
        %v3615 = vld [vmem:[#allocation2 + $0x92] sm:$0xff]
        %v3616 = vld [vmem:[#allocation2 + $0x9a] sm:$0xff]
        %v3617 = vld [vmem:[#allocation2 + $0xaa] sm:$0xff]
        %v3618 = vld [vmem:[#allocation2 + $0xb2] sm:$0xff]
        %3635 = vrot.lane.b32.xlu0 %v3603, 16
        %v3636 = vpop.permute.xlu0 %3635
        %3637 = vrot.lane.b32.xlu0 %v3604, 16
        %v3638 = vpop.permute.xlu0 %3637
        %3639 = vrot.lane.b32.xlu0 %v3605, 16
        %v3640 = vpop.permute.xlu0 %3639
        %3641 = vrot.lane.b32.xlu0 %v3606, 16
        %v3642 = vpop.permute.xlu0 %3641
        %3643 = vrot.lane.b32.xlu0 %v3607, 16
        %v3644 = vpop.permute.xlu0 %3643
        %3645 = vrot.lane.b32.xlu0 %v3608, 16
        %v3646 = vpop.permute.xlu0 %3645
        %3647 = vrot.lane.b32.xlu0 %v3609, 16
        %v3648 = vpop.permute.xlu0 %3647
        %3649 = vrot.lane.b32.xlu0 %v3610, 16
        %v3650 = vpop.permute.xlu0 %3649
        %3651 = vrot.lane.b32.xlu0 %v3611, 16
        %v3652 = vpop.permute.xlu0 %3651
        %3653 = vrot.lane.b32.xlu0 %v3612, 16
        %v3654 = vpop.permute.xlu0 %3653
        %3655 = vrot.lane.b32.xlu0 %v3613, 16
        %v3656 = vpop.permute.xlu0 %3655
        %3657 = vrot.lane.b32.xlu0 %v3614, 16
        %v3658 = vpop.permute.xlu0 %3657
        %3659 = vrot.lane.b32.xlu0 %v3615, 16
        %v3660 = vpop.permute.xlu0 %3659
        %3661 = vrot.lane.b32.xlu0 %v3616, 16
        %v3662 = vpop.permute.xlu0 %3661
        %3663 = vrot.lane.b32.xlu0 %v3617, 16
        %v3664 = vpop.permute.xlu0 %3663
        %3665 = vrot.lane.b32.xlu0 %v3618, 16
        %v3666 = vpop.permute.xlu0 %3665
        %3683 = vst.msk [vmem:[#allocation3] sm:$0xff] %vm773, %v3636
        %3684 = vst.msk [vmem:[#allocation3 + $0x8] sm:$0xff] %vm773, %v3638
        %3685 = vst.msk [vmem:[#allocation3 + $0x10] sm:$0xff] %vm773, %v3640
        %3686 = vst.msk [vmem:[#allocation3 + $0x18] sm:$0xff] %vm773, %v3642
        %3687 = vst.msk [vmem:[#allocation3 + $0x20] sm:$0xff] %vm773, %v3644
        %3688 = vst.msk [vmem:[#allocation3 + $0x28] sm:$0xff] %vm773, %v3646
        %3689 = vst.msk [vmem:[#allocation3 + $0x30] sm:$0xff] %vm773, %v3648
        %3690 = vst.msk [vmem:[#allocation3 + $0x38] sm:$0xff] %vm773, %v3650
        %3691 = vst.msk [vmem:[#allocation3 + $0x40] sm:$0xff] %vm773, %v3652
        %3692 = vst.msk [vmem:[#allocation3 + $0x48] sm:$0xff] %vm773, %v3654
        %3693 = vst.msk [vmem:[#allocation3 + $0x50] sm:$0xff] %vm773, %v3656
        %3694 = vst.msk [vmem:[#allocation3 + $0x58] sm:$0xff] %vm773, %v3658
        %3695 = vst.msk [vmem:[#allocation3 + $0x60] sm:$0xff] %vm773, %v3660
        %3696 = vst.msk [vmem:[#allocation3 + $0x68] sm:$0xff] %vm773, %v3662
        %3697 = vst.msk [vmem:[#allocation3 + $0x70] sm:$0xff] %vm773, %v3664
        %3698 = vst.msk [vmem:[#allocation3 + $0x78] sm:$0xff] %vm773, %v3666
        %v3699 = vld [vmem:[%s528] sm:$0xff]
        %v3700 = vld [vmem:[%s528 + $0x8] sm:$0xff]
        %v3701 = vld [vmem:[%s528 + $0x18] sm:$0xff]
        %v3702 = vld [vmem:[%s528 + $0x20] sm:$0xff]
        %v3703 = vld [vmem:[%s528 + $0x30] sm:$0xff]
        %v3704 = vld [vmem:[%s528 + $0x38] sm:$0xff]
        %v3705 = vld [vmem:[%s528 + $0x48] sm:$0xff]
        %v3706 = vld [vmem:[%s528 + $0x50] sm:$0xff]
        %v3707 = vld [vmem:[%s528 + $0x60] sm:$0xff]
        %v3708 = vld [vmem:[%s528 + $0x68] sm:$0xff]
        %v3709 = vld [vmem:[%s528 + $0x78] sm:$0xff]
        %v3710 = vld [vmem:[%s528 + $0x80] sm:$0xff]
        %v3711 = vld [vmem:[%s528 + $0x90] sm:$0xff]
        %v3712 = vld [vmem:[%s528 + $0x98] sm:$0xff]
        %v3713 = vld [vmem:[%s528 + $0xa8] sm:$0xff]
        %v3714 = vld [vmem:[%s528 + $0xb0] sm:$0xff]
        %3731 = vrot.lane.b32.xlu0 %v3699, 24
        %v3732 = vpop.permute.xlu0 %3731
        %3733 = vrot.lane.b32.xlu0 %v3700, 24
        %v3734 = vpop.permute.xlu0 %3733
        %3735 = vrot.lane.b32.xlu0 %v3701, 24
        %v3736 = vpop.permute.xlu0 %3735
        %3737 = vrot.lane.b32.xlu0 %v3702, 24
        %v3738 = vpop.permute.xlu0 %3737
        %3739 = vrot.lane.b32.xlu0 %v3703, 24
        %v3740 = vpop.permute.xlu0 %3739
        %3741 = vrot.lane.b32.xlu0 %v3704, 24
        %v3742 = vpop.permute.xlu0 %3741
        %3743 = vrot.lane.b32.xlu0 %v3705, 24
        %v3744 = vpop.permute.xlu0 %3743
        %3745 = vrot.lane.b32.xlu0 %v3706, 24
        %v3746 = vpop.permute.xlu0 %3745
        %3747 = vrot.lane.b32.xlu0 %v3707, 24
        %v3748 = vpop.permute.xlu0 %3747
        %3749 = vrot.lane.b32.xlu0 %v3708, 24
        %v3750 = vpop.permute.xlu0 %3749
        %3751 = vrot.lane.b32.xlu0 %v3709, 24
        %v3752 = vpop.permute.xlu0 %3751
        %3753 = vrot.lane.b32.xlu0 %v3710, 24
        %v3754 = vpop.permute.xlu0 %3753
        %3755 = vrot.lane.b32.xlu0 %v3711, 24
        %v3756 = vpop.permute.xlu0 %3755
        %3757 = vrot.lane.b32.xlu0 %v3712, 24
        %v3758 = vpop.permute.xlu0 %3757
        %3759 = vrot.lane.b32.xlu0 %v3713, 24
        %v3760 = vpop.permute.xlu0 %3759
        %3761 = vrot.lane.b32.xlu0 %v3714, 24
        %v3762 = vpop.permute.xlu0 %3761
        %3779 = vst.msk [vmem:[#allocation3] sm:$0xff] %vm870, %v3732
        %3780 = vst.msk [vmem:[#allocation3 + $0x8] sm:$0xff] %vm870, %v3734
        %3781 = vst.msk [vmem:[#allocation3 + $0x10] sm:$0xff] %vm870, %v3736
        %3782 = vst.msk [vmem:[#allocation3 + $0x18] sm:$0xff] %vm870, %v3738
        %3783 = vst.msk [vmem:[#allocation3 + $0x20] sm:$0xff] %vm870, %v3740
        %3784 = vst.msk [vmem:[#allocation3 + $0x28] sm:$0xff] %vm870, %v3742
        %3785 = vst.msk [vmem:[#allocation3 + $0x30] sm:$0xff] %vm870, %v3744
        %3786 = vst.msk [vmem:[#allocation3 + $0x38] sm:$0xff] %vm870, %v3746
        %3787 = vst.msk [vmem:[#allocation3 + $0x40] sm:$0xff] %vm870, %v3748
        %3788 = vst.msk [vmem:[#allocation3 + $0x48] sm:$0xff] %vm870, %v3750
        %3789 = vst.msk [vmem:[#allocation3 + $0x50] sm:$0xff] %vm870, %v3752
        %3790 = vst.msk [vmem:[#allocation3 + $0x58] sm:$0xff] %vm870, %v3754
        %3791 = vst.msk [vmem:[#allocation3 + $0x60] sm:$0xff] %vm870, %v3756
        %3792 = vst.msk [vmem:[#allocation3 + $0x68] sm:$0xff] %vm870, %v3758
        %3793 = vst.msk [vmem:[#allocation3 + $0x70] sm:$0xff] %vm870, %v3760
        %3794 = vst.msk [vmem:[#allocation3 + $0x78] sm:$0xff] %vm870, %v3762
        %v3795 = vld [vmem:[%s528 + $0x1] sm:$0xff]
        %v3796 = vld [vmem:[%s528 + $0x9] sm:$0xff]
        %v3797 = vld [vmem:[%s528 + $0x19] sm:$0xff]
        %v3798 = vld [vmem:[%s528 + $0x21] sm:$0xff]
        %v3799 = vld [vmem:[%s528 + $0x31] sm:$0xff]
        %v3800 = vld [vmem:[%s528 + $0x39] sm:$0xff]
        %v3801 = vld [vmem:[%s528 + $0x49] sm:$0xff]
        %v3802 = vld [vmem:[%s528 + $0x51] sm:$0xff]
        %v3803 = vld [vmem:[%s528 + $0x61] sm:$0xff]
        %v3804 = vld [vmem:[%s528 + $0x69] sm:$0xff]
        %v3805 = vld [vmem:[%s528 + $0x79] sm:$0xff]
        %v3806 = vld [vmem:[%s528 + $0x81] sm:$0xff]
        %v3807 = vld [vmem:[%s528 + $0x91] sm:$0xff]
        %v3808 = vld [vmem:[%s528 + $0x99] sm:$0xff]
        %v3809 = vld [vmem:[%s528 + $0xa9] sm:$0xff]
        %v3810 = vld [vmem:[%s528 + $0xb1] sm:$0xff]
        %3827 = vrot.lane.b32.xlu0 %v3795, 32
        %v3828 = vpop.permute.xlu0 %3827
        %3829 = vrot.lane.b32.xlu0 %v3796, 32
        %v3830 = vpop.permute.xlu0 %3829
        %3831 = vrot.lane.b32.xlu0 %v3797, 32
        %v3832 = vpop.permute.xlu0 %3831
        %3833 = vrot.lane.b32.xlu0 %v3798, 32
        %v3834 = vpop.permute.xlu0 %3833
        %3835 = vrot.lane.b32.xlu0 %v3799, 32
        %v3836 = vpop.permute.xlu0 %3835
        %3837 = vrot.lane.b32.xlu0 %v3800, 32
        %v3838 = vpop.permute.xlu0 %3837
        %3839 = vrot.lane.b32.xlu0 %v3801, 32
        %v3840 = vpop.permute.xlu0 %3839
        %3841 = vrot.lane.b32.xlu0 %v3802, 32
        %v3842 = vpop.permute.xlu0 %3841
        %3843 = vrot.lane.b32.xlu0 %v3803, 32
        %v3844 = vpop.permute.xlu0 %3843
        %3845 = vrot.lane.b32.xlu0 %v3804, 32
        %v3846 = vpop.permute.xlu0 %3845
        %3847 = vrot.lane.b32.xlu0 %v3805, 32
        %v3848 = vpop.permute.xlu0 %3847
        %3849 = vrot.lane.b32.xlu0 %v3806, 32
        %v3850 = vpop.permute.xlu0 %3849
        %3851 = vrot.lane.b32.xlu0 %v3807, 32
        %v3852 = vpop.permute.xlu0 %3851
        %3853 = vrot.lane.b32.xlu0 %v3808, 32
        %v3854 = vpop.permute.xlu0 %3853
        %3855 = vrot.lane.b32.xlu0 %v3809, 32
        %v3856 = vpop.permute.xlu0 %3855
        %3857 = vrot.lane.b32.xlu0 %v3810, 32
        %v3858 = vpop.permute.xlu0 %3857
        %3875 = vst.msk [vmem:[#allocation3] sm:$0xff] %vm967, %v3828
        %3876 = vst.msk [vmem:[#allocation3 + $0x8] sm:$0xff] %vm967, %v3830
        %3877 = vst.msk [vmem:[#allocation3 + $0x10] sm:$0xff] %vm967, %v3832
        %3878 = vst.msk [vmem:[#allocation3 + $0x18] sm:$0xff] %vm967, %v3834
        %3879 = vst.msk [vmem:[#allocation3 + $0x20] sm:$0xff] %vm967, %v3836
        %3880 = vst.msk [vmem:[#allocation3 + $0x28] sm:$0xff] %vm967, %v3838
        %3881 = vst.msk [vmem:[#allocation3 + $0x30] sm:$0xff] %vm967, %v3840
        %3882 = vst.msk [vmem:[#allocation3 + $0x38] sm:$0xff] %vm967, %v3842
        %3883 = vst.msk [vmem:[#allocation3 + $0x40] sm:$0xff] %vm967, %v3844
        %3884 = vst.msk [vmem:[#allocation3 + $0x48] sm:$0xff] %vm967, %v3846
        %3885 = vst.msk [vmem:[#allocation3 + $0x50] sm:$0xff] %vm967, %v3848
        %3886 = vst.msk [vmem:[#allocation3 + $0x58] sm:$0xff] %vm967, %v3850
        %3887 = vst.msk [vmem:[#allocation3 + $0x60] sm:$0xff] %vm967, %v3852
        %3888 = vst.msk [vmem:[#allocation3 + $0x68] sm:$0xff] %vm967, %v3854
        %3889 = vst.msk [vmem:[#allocation3 + $0x70] sm:$0xff] %vm967, %v3856
        %3890 = vst.msk [vmem:[#allocation3 + $0x78] sm:$0xff] %vm967, %v3858
        %v3891 = vld [vmem:[%s528 + $0x2] sm:$0xff]
        %v3892 = vld [vmem:[%s528 + $0xa] sm:$0xff]
        %v3893 = vld [vmem:[%s528 + $0x1a] sm:$0xff]
        %v3894 = vld [vmem:[%s528 + $0x22] sm:$0xff]
        %v3895 = vld [vmem:[%s528 + $0x32] sm:$0xff]
        %v3896 = vld [vmem:[%s528 + $0x3a] sm:$0xff]
        %v3897 = vld [vmem:[%s528 + $0x4a] sm:$0xff]
        %v3898 = vld [vmem:[%s528 + $0x52] sm:$0xff]
        %v3899 = vld [vmem:[%s528 + $0x62] sm:$0xff]
        %v3900 = vld [vmem:[%s528 + $0x6a] sm:$0xff]
        %v3901 = vld [vmem:[%s528 + $0x7a] sm:$0xff]
        %v3902 = vld [vmem:[%s528 + $0x82] sm:$0xff]
        %v3903 = vld [vmem:[%s528 + $0x92] sm:$0xff]
        %v3904 = vld [vmem:[%s528 + $0x9a] sm:$0xff]
        %v3905 = vld [vmem:[%s528 + $0xaa] sm:$0xff]
        %v3906 = vld [vmem:[%s528 + $0xb2] sm:$0xff]
        %3923 = vrot.lane.b32.xlu0 %v3891, 40
        %v3924 = vpop.permute.xlu0 %3923
        %3925 = vrot.lane.b32.xlu0 %v3892, 40
        %v3926 = vpop.permute.xlu0 %3925
        %3927 = vrot.lane.b32.xlu0 %v3893, 40
        %v3928 = vpop.permute.xlu0 %3927
        %3929 = vrot.lane.b32.xlu0 %v3894, 40
        %v3930 = vpop.permute.xlu0 %3929
        %3931 = vrot.lane.b32.xlu0 %v3895, 40
        %v3932 = vpop.permute.xlu0 %3931
        %3933 = vrot.lane.b32.xlu0 %v3896, 40
        %v3934 = vpop.permute.xlu0 %3933
        %3935 = vrot.lane.b32.xlu0 %v3897, 40
        %v3936 = vpop.permute.xlu0 %3935
        %3937 = vrot.lane.b32.xlu0 %v3898, 40
        %v3938 = vpop.permute.xlu0 %3937
        %3939 = vrot.lane.b32.xlu0 %v3899, 40
        %v3940 = vpop.permute.xlu0 %3939
        %3941 = vrot.lane.b32.xlu0 %v3900, 40
        %v3942 = vpop.permute.xlu0 %3941
        %3943 = vrot.lane.b32.xlu0 %v3901, 40
        %v3944 = vpop.permute.xlu0 %3943
        %3945 = vrot.lane.b32.xlu0 %v3902, 40
        %v3946 = vpop.permute.xlu0 %3945
        %3947 = vrot.lane.b32.xlu0 %v3903, 40
        %v3948 = vpop.permute.xlu0 %3947
        %3949 = vrot.lane.b32.xlu0 %v3904, 40
        %v3950 = vpop.permute.xlu0 %3949
        %3951 = vrot.lane.b32.xlu0 %v3905, 40
        %v3952 = vpop.permute.xlu0 %3951
        %3953 = vrot.lane.b32.xlu0 %v3906, 40
        %v3954 = vpop.permute.xlu0 %3953
        %3971 = vst.msk [vmem:[#allocation3] sm:$0xff] %vm1064, %v3924
        %3972 = vst.msk [vmem:[#allocation3 + $0x8] sm:$0xff] %vm1064, %v3926
        %3973 = vst.msk [vmem:[#allocation3 + $0x10] sm:$0xff] %vm1064, %v3928
        %3974 = vst.msk [vmem:[#allocation3 + $0x18] sm:$0xff] %vm1064, %v3930
        %3975 = vst.msk [vmem:[#allocation3 + $0x20] sm:$0xff] %vm1064, %v3932
        %3976 = vst.msk [vmem:[#allocation3 + $0x28] sm:$0xff] %vm1064, %v3934
        %3977 = vst.msk [vmem:[#allocation3 + $0x30] sm:$0xff] %vm1064, %v3936
        %3978 = vst.msk [vmem:[#allocation3 + $0x38] sm:$0xff] %vm1064, %v3938
        %3979 = vst.msk [vmem:[#allocation3 + $0x40] sm:$0xff] %vm1064, %v3940
        %3980 = vst.msk [vmem:[#allocation3 + $0x48] sm:$0xff] %vm1064, %v3942
        %3981 = vst.msk [vmem:[#allocation3 + $0x50] sm:$0xff] %vm1064, %v3944
        %3982 = vst.msk [vmem:[#allocation3 + $0x58] sm:$0xff] %vm1064, %v3946
        %3983 = vst.msk [vmem:[#allocation3 + $0x60] sm:$0xff] %vm1064, %v3948
        %3984 = vst.msk [vmem:[#allocation3 + $0x68] sm:$0xff] %vm1064, %v3950
        %3985 = vst.msk [vmem:[#allocation3 + $0x70] sm:$0xff] %vm1064, %v3952
        %3986 = vst.msk [vmem:[#allocation3 + $0x78] sm:$0xff] %vm1064, %v3954
        %v3987 = vld [vmem:[%s1081] sm:$0xff]
        %v3988 = vld [vmem:[%s1081 + $0x8] sm:$0xff]
        %v3989 = vld [vmem:[%s1081 + $0x18] sm:$0xff]
        %v3990 = vld [vmem:[%s1081 + $0x20] sm:$0xff]
        %v3991 = vld [vmem:[%s1081 + $0x30] sm:$0xff]
        %v3992 = vld [vmem:[%s1081 + $0x38] sm:$0xff]
        %v3993 = vld [vmem:[%s1081 + $0x48] sm:$0xff]
        %v3994 = vld [vmem:[%s1081 + $0x50] sm:$0xff]
        %v3995 = vld [vmem:[%s1081 + $0x60] sm:$0xff]
        %v3996 = vld [vmem:[%s1081 + $0x68] sm:$0xff]
        %v3997 = vld [vmem:[%s1081 + $0x78] sm:$0xff]
        %v3998 = vld [vmem:[%s1081 + $0x80] sm:$0xff]
        %v3999 = vld [vmem:[%s1081 + $0x90] sm:$0xff]
        %v4000 = vld [vmem:[%s1081 + $0x98] sm:$0xff]
        %v4001 = vld [vmem:[%s1081 + $0xa8] sm:$0xff]
        %v4002 = vld [vmem:[%s1081 + $0xb0] sm:$0xff]
        %4019 = vrot.lane.b32.xlu0 %v3987, 48
        %v4020 = vpop.permute.xlu0 %4019
        %4021 = vrot.lane.b32.xlu0 %v3988, 48
        %v4022 = vpop.permute.xlu0 %4021
        %4023 = vrot.lane.b32.xlu0 %v3989, 48
        %v4024 = vpop.permute.xlu0 %4023
        %4025 = vrot.lane.b32.xlu0 %v3990, 48
        %v4026 = vpop.permute.xlu0 %4025
        %4027 = vrot.lane.b32.xlu0 %v3991, 48
        %v4028 = vpop.permute.xlu0 %4027
        %4029 = vrot.lane.b32.xlu0 %v3992, 48
        %v4030 = vpop.permute.xlu0 %4029
        %4031 = vrot.lane.b32.xlu0 %v3993, 48
        %v4032 = vpop.permute.xlu0 %4031
        %4033 = vrot.lane.b32.xlu0 %v3994, 48
        %v4034 = vpop.permute.xlu0 %4033
        %4035 = vrot.lane.b32.xlu0 %v3995, 48
        %v4036 = vpop.permute.xlu0 %4035
        %4037 = vrot.lane.b32.xlu0 %v3996, 48
        %v4038 = vpop.permute.xlu0 %4037
        %4039 = vrot.lane.b32.xlu0 %v3997, 48
        %v4040 = vpop.permute.xlu0 %4039
        %4041 = vrot.lane.b32.xlu0 %v3998, 48
        %v4042 = vpop.permute.xlu0 %4041
        %4043 = vrot.lane.b32.xlu0 %v3999, 48
        %v4044 = vpop.permute.xlu0 %4043
        %4045 = vrot.lane.b32.xlu0 %v4000, 48
        %v4046 = vpop.permute.xlu0 %4045
        %4047 = vrot.lane.b32.xlu0 %v4001, 48
        %v4048 = vpop.permute.xlu0 %4047
        %4049 = vrot.lane.b32.xlu0 %v4002, 48
        %v4050 = vpop.permute.xlu0 %4049
        %4067 = vst.msk [vmem:[#allocation3] sm:$0xff] %vm1162, %v4020
        %4068 = vst.msk [vmem:[#allocation3 + $0x8] sm:$0xff] %vm1162, %v4022
        %4069 = vst.msk [vmem:[#allocation3 + $0x10] sm:$0xff] %vm1162, %v4024
        %4070 = vst.msk [vmem:[#allocation3 + $0x18] sm:$0xff] %vm1162, %v4026
        %4071 = vst.msk [vmem:[#allocation3 + $0x20] sm:$0xff] %vm1162, %v4028
        %4072 = vst.msk [vmem:[#allocation3 + $0x28] sm:$0xff] %vm1162, %v4030
        %4073 = vst.msk [vmem:[#allocation3 + $0x30] sm:$0xff] %vm1162, %v4032
        %4074 = vst.msk [vmem:[#allocation3 + $0x38] sm:$0xff] %vm1162, %v4034
        %4075 = vst.msk [vmem:[#allocation3 + $0x40] sm:$0xff] %vm1162, %v4036
        %4076 = vst.msk [vmem:[#allocation3 + $0x48] sm:$0xff] %vm1162, %v4038
        %4077 = vst.msk [vmem:[#allocation3 + $0x50] sm:$0xff] %vm1162, %v4040
        %4078 = vst.msk [vmem:[#allocation3 + $0x58] sm:$0xff] %vm1162, %v4042
        %4079 = vst.msk [vmem:[#allocation3 + $0x60] sm:$0xff] %vm1162, %v4044
        %4080 = vst.msk [vmem:[#allocation3 + $0x68] sm:$0xff] %vm1162, %v4046
        %4081 = vst.msk [vmem:[#allocation3 + $0x70] sm:$0xff] %vm1162, %v4048
        %4082 = vst.msk [vmem:[#allocation3 + $0x78] sm:$0xff] %vm1162, %v4050
        %v4083 = vld [vmem:[%s1081 + $0x1] sm:$0xff]
        %v4084 = vld [vmem:[%s1081 + $0x9] sm:$0xff]
        %v4085 = vld [vmem:[%s1081 + $0x19] sm:$0xff]
        %v4086 = vld [vmem:[%s1081 + $0x21] sm:$0xff]
        %v4087 = vld [vmem:[%s1081 + $0x31] sm:$0xff]
        %v4088 = vld [vmem:[%s1081 + $0x39] sm:$0xff]
        %v4089 = vld [vmem:[%s1081 + $0x49] sm:$0xff]
        %v4090 = vld [vmem:[%s1081 + $0x51] sm:$0xff]
        %v4091 = vld [vmem:[%s1081 + $0x61] sm:$0xff]
        %v4092 = vld [vmem:[%s1081 + $0x69] sm:$0xff]
        %v4093 = vld [vmem:[%s1081 + $0x79] sm:$0xff]
        %v4094 = vld [vmem:[%s1081 + $0x81] sm:$0xff]
        %v4095 = vld [vmem:[%s1081 + $0x91] sm:$0xff]
        %v4096 = vld [vmem:[%s1081 + $0x99] sm:$0xff]
        %v4097 = vld [vmem:[%s1081 + $0xa9] sm:$0xff]
        %v4098 = vld [vmem:[%s1081 + $0xb1] sm:$0xff]
        %4115 = vrot.lane.b32.xlu0 %v4083, 56
        %v4116 = vpop.permute.xlu0 %4115
        %4117 = vrot.lane.b32.xlu0 %v4084, 56
        %v4118 = vpop.permute.xlu0 %4117
        %4119 = vrot.lane.b32.xlu0 %v4085, 56
        %v4120 = vpop.permute.xlu0 %4119
        %4121 = vrot.lane.b32.xlu0 %v4086, 56
        %v4122 = vpop.permute.xlu0 %4121
        %4123 = vrot.lane.b32.xlu0 %v4087, 56
        %v4124 = vpop.permute.xlu0 %4123
        %4125 = vrot.lane.b32.xlu0 %v4088, 56
        %v4126 = vpop.permute.xlu0 %4125
        %4127 = vrot.lane.b32.xlu0 %v4089, 56
        %v4128 = vpop.permute.xlu0 %4127
        %4129 = vrot.lane.b32.xlu0 %v4090, 56
        %v4130 = vpop.permute.xlu0 %4129
        %4131 = vrot.lane.b32.xlu0 %v4091, 56
        %v4132 = vpop.permute.xlu0 %4131
        %4133 = vrot.lane.b32.xlu0 %v4092, 56
        %v4134 = vpop.permute.xlu0 %4133
        %4135 = vrot.lane.b32.xlu0 %v4093, 56
        %v4136 = vpop.permute.xlu0 %4135
        %4137 = vrot.lane.b32.xlu0 %v4094, 56
        %v4138 = vpop.permute.xlu0 %4137
        %4139 = vrot.lane.b32.xlu0 %v4095, 56
        %v4140 = vpop.permute.xlu0 %4139
        %4141 = vrot.lane.b32.xlu0 %v4096, 56
        %v4142 = vpop.permute.xlu0 %4141
        %4143 = vrot.lane.b32.xlu0 %v4097, 56
        %v4144 = vpop.permute.xlu0 %4143
        %4145 = vrot.lane.b32.xlu0 %v4098, 56
        %v4146 = vpop.permute.xlu0 %4145
        %4163 = vst.msk [vmem:[#allocation3] sm:$0xff] %vm1259, %v4116
        %4164 = vst.msk [vmem:[#allocation3 + $0x8] sm:$0xff] %vm1259, %v4118
        %4165 = vst.msk [vmem:[#allocation3 + $0x10] sm:$0xff] %vm1259, %v4120
        %4166 = vst.msk [vmem:[#allocation3 + $0x18] sm:$0xff] %vm1259, %v4122
        %4167 = vst.msk [vmem:[#allocation3 + $0x20] sm:$0xff] %vm1259, %v4124
        %4168 = vst.msk [vmem:[#allocation3 + $0x28] sm:$0xff] %vm1259, %v4126
        %4169 = vst.msk [vmem:[#allocation3 + $0x30] sm:$0xff] %vm1259, %v4128
        %4170 = vst.msk [vmem:[#allocation3 + $0x38] sm:$0xff] %vm1259, %v4130
        %4171 = vst.msk [vmem:[#allocation3 + $0x40] sm:$0xff] %vm1259, %v4132
        %4172 = vst.msk [vmem:[#allocation3 + $0x48] sm:$0xff] %vm1259, %v4134
        %4173 = vst.msk [vmem:[#allocation3 + $0x50] sm:$0xff] %vm1259, %v4136
        %4174 = vst.msk [vmem:[#allocation3 + $0x58] sm:$0xff] %vm1259, %v4138
        %4175 = vst.msk [vmem:[#allocation3 + $0x60] sm:$0xff] %vm1259, %v4140
        %4176 = vst.msk [vmem:[#allocation3 + $0x68] sm:$0xff] %vm1259, %v4142
        %4177 = vst.msk [vmem:[#allocation3 + $0x70] sm:$0xff] %vm1259, %v4144
        %4178 = vst.msk [vmem:[#allocation3 + $0x78] sm:$0xff] %vm1259, %v4146
        %v4179 = vld [vmem:[%s1081 + $0x2] sm:$0xff]
        %v4180 = vld [vmem:[%s1081 + $0xa] sm:$0xff]
        %v4181 = vld [vmem:[%s1081 + $0x1a] sm:$0xff]
        %v4182 = vld [vmem:[%s1081 + $0x22] sm:$0xff]
        %v4183 = vld [vmem:[%s1081 + $0x32] sm:$0xff]
        %v4184 = vld [vmem:[%s1081 + $0x3a] sm:$0xff]
        %v4185 = vld [vmem:[%s1081 + $0x4a] sm:$0xff]
        %v4186 = vld [vmem:[%s1081 + $0x52] sm:$0xff]
        %v4187 = vld [vmem:[%s1081 + $0x62] sm:$0xff]
        %v4188 = vld [vmem:[%s1081 + $0x6a] sm:$0xff]
        %v4189 = vld [vmem:[%s1081 + $0x7a] sm:$0xff]
        %v4190 = vld [vmem:[%s1081 + $0x82] sm:$0xff]
        %v4191 = vld [vmem:[%s1081 + $0x92] sm:$0xff]
        %v4192 = vld [vmem:[%s1081 + $0x9a] sm:$0xff]
        %v4193 = vld [vmem:[%s1081 + $0xaa] sm:$0xff]
        %v4194 = vld [vmem:[%s1081 + $0xb2] sm:$0xff]
        %4211 = vrot.lane.b32.xlu0 %v4179, 64
        %v4212 = vpop.permute.xlu0 %4211
        %4213 = vrot.lane.b32.xlu0 %v4180, 64
        %v4214 = vpop.permute.xlu0 %4213
        %4215 = vrot.lane.b32.xlu0 %v4181, 64
        %v4216 = vpop.permute.xlu0 %4215
        %4217 = vrot.lane.b32.xlu0 %v4182, 64
        %v4218 = vpop.permute.xlu0 %4217
        %4219 = vrot.lane.b32.xlu0 %v4183, 64
        %v4220 = vpop.permute.xlu0 %4219
        %4221 = vrot.lane.b32.xlu0 %v4184, 64
        %v4222 = vpop.permute.xlu0 %4221
        %4223 = vrot.lane.b32.xlu0 %v4185, 64
        %v4224 = vpop.permute.xlu0 %4223
        %4225 = vrot.lane.b32.xlu0 %v4186, 64
        %v4226 = vpop.permute.xlu0 %4225
        %4227 = vrot.lane.b32.xlu0 %v4187, 64
        %v4228 = vpop.permute.xlu0 %4227
        %4229 = vrot.lane.b32.xlu0 %v4188, 64
        %v4230 = vpop.permute.xlu0 %4229
        %4231 = vrot.lane.b32.xlu0 %v4189, 64
        %v4232 = vpop.permute.xlu0 %4231
        %4233 = vrot.lane.b32.xlu0 %v4190, 64
        %v4234 = vpop.permute.xlu0 %4233
        %4235 = vrot.lane.b32.xlu0 %v4191, 64
        %v4236 = vpop.permute.xlu0 %4235
        %4237 = vrot.lane.b32.xlu0 %v4192, 64
        %v4238 = vpop.permute.xlu0 %4237
        %4239 = vrot.lane.b32.xlu0 %v4193, 64
        %v4240 = vpop.permute.xlu0 %4239
        %4241 = vrot.lane.b32.xlu0 %v4194, 64
        %v4242 = vpop.permute.xlu0 %4241
        %4259 = vst.msk [vmem:[#allocation3] sm:$0xff] %vm1356, %v4212
        %4260 = vst.msk [vmem:[#allocation3 + $0x8] sm:$0xff] %vm1356, %v4214
        %4261 = vst.msk [vmem:[#allocation3 + $0x10] sm:$0xff] %vm1356, %v4216
        %4262 = vst.msk [vmem:[#allocation3 + $0x18] sm:$0xff] %vm1356, %v4218
        %4263 = vst.msk [vmem:[#allocation3 + $0x20] sm:$0xff] %vm1356, %v4220
        %4264 = vst.msk [vmem:[#allocation3 + $0x28] sm:$0xff] %vm1356, %v4222
        %4265 = vst.msk [vmem:[#allocation3 + $0x30] sm:$0xff] %vm1356, %v4224
        %4266 = vst.msk [vmem:[#allocation3 + $0x38] sm:$0xff] %vm1356, %v4226
        %4267 = vst.msk [vmem:[#allocation3 + $0x40] sm:$0xff] %vm1356, %v4228
        %4268 = vst.msk [vmem:[#allocation3 + $0x48] sm:$0xff] %vm1356, %v4230
        %4269 = vst.msk [vmem:[#allocation3 + $0x50] sm:$0xff] %vm1356, %v4232
        %4270 = vst.msk [vmem:[#allocation3 + $0x58] sm:$0xff] %vm1356, %v4234
        %4271 = vst.msk [vmem:[#allocation3 + $0x60] sm:$0xff] %vm1356, %v4236
        %4272 = vst.msk [vmem:[#allocation3 + $0x68] sm:$0xff] %vm1356, %v4238
        %4273 = vst.msk [vmem:[#allocation3 + $0x70] sm:$0xff] %vm1356, %v4240
        %4274 = vst.msk [vmem:[#allocation3 + $0x78] sm:$0xff] %vm1356, %v4242
        %v4275 = vld [vmem:[#allocation3] sm:$0xff]
        %v4276 = vld [vmem:[#allocation3 + $0x8] sm:$0xff]
        %v4277 = vld [vmem:[#allocation3 + $0x10] sm:$0xff]
        %v4278 = vld [vmem:[#allocation3 + $0x18] sm:$0xff]
        %v4279 = vld [vmem:[#allocation3 + $0x20] sm:$0xff]
        %v4280 = vld [vmem:[#allocation3 + $0x28] sm:$0xff]
        %v4281 = vld [vmem:[#allocation3 + $0x30] sm:$0xff]
        %v4282 = vld [vmem:[#allocation3 + $0x38] sm:$0xff]
        %v4283 = vld [vmem:[#allocation3 + $0x40] sm:$0xff]
        %v4284 = vld [vmem:[#allocation3 + $0x48] sm:$0xff]
        %v4285 = vld [vmem:[#allocation3 + $0x50] sm:$0xff]
        %v4286 = vld [vmem:[#allocation3 + $0x58] sm:$0xff]
        %v4287 = vld [vmem:[#allocation3 + $0x60] sm:$0xff]
        %v4288 = vld [vmem:[#allocation3 + $0x68] sm:$0xff]
        %v4289 = vld [vmem:[#allocation3 + $0x70] sm:$0xff]
        %v4290 = vld [vmem:[#allocation3 + $0x78] sm:$0xff]
        %v4291 = vld [vmem:[%s6] sm:$0xff]
        %v4292 = vld [vmem:[%s6 + $0x8] sm:$0xff]
        %v4293 = vld [vmem:[%s6 + $0x10] sm:$0xff]
        %v4294 = vld [vmem:[%s6 + $0x18] sm:$0xff]
        %v4295 = vld [vmem:[%s6 + $0x20] sm:$0xff]
        %v4296 = vld [vmem:[%s6 + $0x28] sm:$0xff]
        %v4297 = vld [vmem:[%s6 + $0x30] sm:$0xff]
        %v4298 = vld [vmem:[%s6 + $0x38] sm:$0xff]
        %v4299 = vld [vmem:[%s6 + $0x40] sm:$0xff]
        %v4301 = vperm.slane %v3472, 0
        %v4304 = vsel %vm1401, %v4275, 0
        %v4307 = vsel %vm1401, %v4276, 0
        %v4310 = vsel %vm1401, %v4277, 0
        %v4313 = vsel %vm1401, %v4278, 0
        %v4316 = vsel %vm1401, %v4279, 0
        %v4319 = vsel %vm1401, %v4280, 0
        %v4322 = vsel %vm1401, %v4281, 0
        %v4325 = vsel %vm1401, %v4282, 0
        %v4328 = vsel %vm1401, %v4283, 0
        %v4331 = vsel %vm1401, %v4284, 0
        %v4334 = vsel %vm1401, %v4285, 0
        %v4337 = vsel %vm1401, %v4286, 0
        %v4340 = vsel %vm1401, %v4287, 0
        %v4343 = vsel %vm1401, %v4288, 0
        %v4346 = vsel %vm1401, %v4289, 0
        %v4349 = vsel %vm1401, %v4290, 0
        %4351 = vmatpush.msra.mxu0 0.0
        %4352 = vmatpush.msra.mxu0 0.0
        %4353 = vmatpush.msra.mxu0 0.0
        %4354 = vmatpush.msra.mxu0 0.0
        %4355 = vmatpush.msra.mxu0 0.0
        %4356 = vmatpush.msra.mxu0 0.0
        %4357 = vmatpush.msra.mxu0 0.0
        %4358 = vmatpush.msra.mxu0 %v4299
        %4359 = vmatpush.msra.mxu0 %v4298
        %4360 = vmatpush.msra.mxu0 %v4297
        %4361 = vmatpush.msra.mxu0 %v4296
        %4362 = vmatpush.msra.mxu0 %v4295
        %4363 = vmatpush.msra.mxu0 %v4294
        %4364 = vmatpush.msra.mxu0 %v4293
        %4365 = vmatpush.msra.mxu0 %v4292
        %4366 = vmatpush.msra.mxu0 %v4291
        %4367 = vmatmul.f32.gmra.mxu0 %v4304
        %v4368 = vpop.f32.mrf.mxu0
        %v4369 = vadd.f32 %v4301, %v4368
        %4370 = vmatmul.f32.gmra.mxu0 %v4307
        %v4371 = vpop.f32.mrf.mxu0
        %v4372 = vadd.f32 %v4301, %v4371
        %4373 = vmatmul.f32.gmra.mxu0 %v4310
        %v4374 = vpop.f32.mrf.mxu0
        %v4375 = vadd.f32 %v4301, %v4374
        %4376 = vmatmul.f32.gmra.mxu0 %v4313
        %v4377 = vpop.f32.mrf.mxu0
        %v4378 = vadd.f32 %v4301, %v4377
        %4379 = vmatmul.f32.gmra.mxu0 %v4316
        %v4380 = vpop.f32.mrf.mxu0
        %v4381 = vadd.f32 %v4301, %v4380
        %4382 = vmatmul.f32.gmra.mxu0 %v4319
        %v4383 = vpop.f32.mrf.mxu0
        %v4384 = vadd.f32 %v4301, %v4383
        %4385 = vmatmul.f32.gmra.mxu0 %v4322
        %v4386 = vpop.f32.mrf.mxu0
        %v4387 = vadd.f32 %v4301, %v4386
        %4388 = vmatmul.f32.gmra.mxu0 %v4325
        %v4389 = vpop.f32.mrf.mxu0
        %v4390 = vadd.f32 %v4301, %v4389
        %4391 = vmatmul.f32.gmra.mxu0 %v4328
        %v4392 = vpop.f32.mrf.mxu0
        %v4393 = vadd.f32 %v4301, %v4392
        %4394 = vmatmul.f32.gmra.mxu0 %v4331
        %v4395 = vpop.f32.mrf.mxu0
        %v4396 = vadd.f32 %v4301, %v4395
        %4397 = vmatmul.f32.gmra.mxu0 %v4334
        %v4398 = vpop.f32.mrf.mxu0
        %v4399 = vadd.f32 %v4301, %v4398
        %4400 = vmatmul.f32.gmra.mxu0 %v4337
        %v4401 = vpop.f32.mrf.mxu0
        %v4402 = vadd.f32 %v4301, %v4401
        %4403 = vmatmul.f32.gmra.mxu0 %v4340
        %v4404 = vpop.f32.mrf.mxu0
        %v4405 = vadd.f32 %v4301, %v4404
        %4406 = vmatmul.f32.gmra.mxu0 %v4343
        %v4407 = vpop.f32.mrf.mxu0
        %v4408 = vadd.f32 %v4301, %v4407
        %4409 = vmatmul.f32.gmra.mxu0 %v4346
        %v4410 = vpop.f32.mrf.mxu0
        %v4411 = vadd.f32 %v4301, %v4410
        %4412 = vmatmul.f32.gmra.mxu0 %v4349
        %v4413 = vpop.f32.mrf.mxu0
        %v4414 = vadd.f32 %v4301, %v4413
        %4415 = vdwg.mxu0
        %4416 = vst.msk [vmem:[#allocation4] sm:$0xff] %vm426, %v4369
        %4417 = vst.msk [vmem:[#allocation4 + $0x8] sm:$0xff] %vm426, %v4372
        %4418 = vst.msk [vmem:[#allocation4 + $0x10] sm:$0xff] %vm426, %v4375
        %4419 = vst.msk [vmem:[#allocation4 + $0x18] sm:$0xff] %vm426, %v4378
        %4420 = vst.msk [vmem:[#allocation4 + $0x20] sm:$0xff] %vm426, %v4381
        %4421 = vst.msk [vmem:[#allocation4 + $0x28] sm:$0xff] %vm426, %v4384
        %4422 = vst.msk [vmem:[#allocation4 + $0x30] sm:$0xff] %vm426, %v4387
        %4423 = vst.msk [vmem:[#allocation4 + $0x38] sm:$0xff] %vm426, %v4390
        %4424 = vst.msk [vmem:[#allocation4 + $0x40] sm:$0xff] %vm426, %v4393
        %4425 = vst.msk [vmem:[#allocation4 + $0x48] sm:$0xff] %vm426, %v4396
        %4426 = vst.msk [vmem:[#allocation4 + $0x50] sm:$0xff] %vm426, %v4399
        %4427 = vst.msk [vmem:[#allocation4 + $0x58] sm:$0xff] %vm426, %v4402
        %4428 = vst.msk [vmem:[#allocation4 + $0x60] sm:$0xff] %vm426, %v4405
        %4429 = vst.msk [vmem:[#allocation4 + $0x68] sm:$0xff] %vm426, %v4408
        %4430 = vst.msk [vmem:[#allocation4 + $0x70] sm:$0xff] %vm426, %v4411
        %4431 = vst.msk [vmem:[#allocation4 + $0x78] sm:$0xff] %vm426, %v4414
        %v4432 = vsel %vm426, %v4369, 0.0
        %v4433 = vsel %vm426, %v4372, 0.0
        %v4434 = vadd.f32 %v4432, %v4433
        %v4435 = vsel %vm426, %v4375, 0.0
        %v4436 = vadd.f32 %v4434, %v4435
        %v4437 = vsel %vm426, %v4378, 0.0
        %v4438 = vadd.f32 %v4436, %v4437
        %v4439 = vsel %vm426, %v4381, 0.0
        %v4440 = vadd.f32 %v4438, %v4439
        %v4441 = vsel %vm426, %v4384, 0.0
        %v4442 = vadd.f32 %v4440, %v4441
        %v4443 = vsel %vm426, %v4387, 0.0
        %v4444 = vadd.f32 %v4442, %v4443
        %v4445 = vsel %vm426, %v4390, 0.0
        %v4446 = vadd.f32 %v4444, %v4445
        %v4447 = vsel %vm426, %v4393, 0.0
        %v4448 = vadd.f32 %v4446, %v4447
        %v4449 = vsel %vm426, %v4396, 0.0
        %v4450 = vadd.f32 %v4448, %v4449
        %v4451 = vsel %vm426, %v4399, 0.0
        %v4452 = vadd.f32 %v4450, %v4451
        %v4453 = vsel %vm426, %v4402, 0.0
        %v4454 = vadd.f32 %v4452, %v4453
        %v4455 = vsel %vm426, %v4405, 0.0
        %v4456 = vadd.f32 %v4454, %v4455
        %v4457 = vsel %vm426, %v4408, 0.0
        %v4458 = vadd.f32 %v4456, %v4457
        %v4459 = vsel %vm426, %v4411, 0.0
        %v4460 = vadd.f32 %v4458, %v4459
        %v4461 = vsel %vm426, %v4414, 0.0
        %v4462 = vadd.f32 %v4460, %v4461
        %v4463 = vrot.slane %v4462, 4
        %v4464 = vadd.f32 %v4462, %v4463
        %v4465 = vrot.slane %v4464, 2
        %v4466 = vadd.f32 %v4464, %v4465
        %v4467 = vrot.slane %v4466, 1
        %v4468 = vadd.f32 %v4466, %v4467
        %v4469 = vadd.f32 %v4468, 0.0
        %v4470 = vmul.f32 %v4369, %v4369
        %v4471 = vmul.f32 %v4372, %v4372
        %v4472 = vmul.f32 %v4375, %v4375
        %v4473 = vmul.f32 %v4378, %v4378
        %v4474 = vmul.f32 %v4381, %v4381
        %v4475 = vmul.f32 %v4384, %v4384
        %v4476 = vmul.f32 %v4387, %v4387
        %v4477 = vmul.f32 %v4390, %v4390
        %v4478 = vmul.f32 %v4393, %v4393
        %v4479 = vmul.f32 %v4396, %v4396
        %v4480 = vmul.f32 %v4399, %v4399
        %v4481 = vmul.f32 %v4402, %v4402
        %v4482 = vmul.f32 %v4405, %v4405
        %v4483 = vmul.f32 %v4408, %v4408
        %v4484 = vmul.f32 %v4411, %v4411
        %v4485 = vmul.f32 %v4414, %v4414
        %v4486 = vsel %vm426, %v4470, 0.0
        %v4487 = vsel %vm426, %v4471, 0.0
        %v4488 = vadd.f32 %v4486, %v4487
        %v4489 = vsel %vm426, %v4472, 0.0
        %v4490 = vadd.f32 %v4488, %v4489
        %v4491 = vsel %vm426, %v4473, 0.0
        %v4492 = vadd.f32 %v4490, %v4491
        %v4493 = vsel %vm426, %v4474, 0.0
        %v4494 = vadd.f32 %v4492, %v4493
        %v4495 = vsel %vm426, %v4475, 0.0
        %v4496 = vadd.f32 %v4494, %v4495
        %v4497 = vsel %vm426, %v4476, 0.0
        %v4498 = vadd.f32 %v4496, %v4497
        %v4499 = vsel %vm426, %v4477, 0.0
        %v4500 = vadd.f32 %v4498, %v4499
        %v4501 = vsel %vm426, %v4478, 0.0
        %v4502 = vadd.f32 %v4500, %v4501
        %v4503 = vsel %vm426, %v4479, 0.0
        %v4504 = vadd.f32 %v4502, %v4503
        %v4505 = vsel %vm426, %v4480, 0.0
        %v4506 = vadd.f32 %v4504, %v4505
        %v4507 = vsel %vm426, %v4481, 0.0
        %v4508 = vadd.f32 %v4506, %v4507
        %v4509 = vsel %vm426, %v4482, 0.0
        %v4510 = vadd.f32 %v4508, %v4509
        %v4511 = vsel %vm426, %v4483, 0.0
        %v4512 = vadd.f32 %v4510, %v4511
        %v4513 = vsel %vm426, %v4484, 0.0
        %v4514 = vadd.f32 %v4512, %v4513
        %v4515 = vsel %vm426, %v4485, 0.0
        %v4516 = vadd.f32 %v4514, %v4515
        %v4517 = vrot.slane %v4516, 4
        %v4518 = vadd.f32 %v4516, %v4517
        %v4519 = vrot.slane %v4518, 2
        %v4520 = vadd.f32 %v4518, %v4519
        %v4521 = vrot.slane %v4520, 1
        %v4522 = vadd.f32 %v4520, %v4521
        %v4523 = vadd.f32 %v4522, 0.0
        %v4524 = vld [vmem:[%s1623] sm:$0xff]
        %v4525 = vld [vmem:[%s1623 + $0x8] sm:$0xff]
        %v4526 = vld [vmem:[%s1623 + $0x18] sm:$0xff]
        %v4527 = vld [vmem:[%s1623 + $0x20] sm:$0xff]
        %v4528 = vld [vmem:[%s1623 + $0x30] sm:$0xff]
        %v4529 = vld [vmem:[%s1623 + $0x38] sm:$0xff]
        %v4530 = vld [vmem:[%s1623 + $0x48] sm:$0xff]
        %v4531 = vld [vmem:[%s1623 + $0x50] sm:$0xff]
        %v4532 = vld [vmem:[%s1623 + $0x60] sm:$0xff]
        %v4533 = vld [vmem:[%s1623 + $0x68] sm:$0xff]
        %v4534 = vld [vmem:[%s1623 + $0x78] sm:$0xff]
        %v4535 = vld [vmem:[%s1623 + $0x80] sm:$0xff]
        %v4536 = vld [vmem:[%s1623 + $0x90] sm:$0xff]
        %v4537 = vld [vmem:[%s1623 + $0x98] sm:$0xff]
        %v4538 = vld [vmem:[%s1623 + $0xa8] sm:$0xff]
        %v4539 = vld [vmem:[%s1623 + $0xb0] sm:$0xff]
        %4540 = vst.msk [vmem:[#allocation3] sm:$0xff] %vm426, %v4524
        %4541 = vst.msk [vmem:[#allocation3 + $0x8] sm:$0xff] %vm426, %v4525
        %4542 = vst.msk [vmem:[#allocation3 + $0x10] sm:$0xff] %vm426, %v4526
        %4543 = vst.msk [vmem:[#allocation3 + $0x18] sm:$0xff] %vm426, %v4527
        %4544 = vst.msk [vmem:[#allocation3 + $0x20] sm:$0xff] %vm426, %v4528
        %4545 = vst.msk [vmem:[#allocation3 + $0x28] sm:$0xff] %vm426, %v4529
        %4546 = vst.msk [vmem:[#allocation3 + $0x30] sm:$0xff] %vm426, %v4530
        %4547 = vst.msk [vmem:[#allocation3 + $0x38] sm:$0xff] %vm426, %v4531
        %4548 = vst.msk [vmem:[#allocation3 + $0x40] sm:$0xff] %vm426, %v4532
        %4549 = vst.msk [vmem:[#allocation3 + $0x48] sm:$0xff] %vm426, %v4533
        %4550 = vst.msk [vmem:[#allocation3 + $0x50] sm:$0xff] %vm426, %v4534
        %4551 = vst.msk [vmem:[#allocation3 + $0x58] sm:$0xff] %vm426, %v4535
        %4552 = vst.msk [vmem:[#allocation3 + $0x60] sm:$0xff] %vm426, %v4536
        %4553 = vst.msk [vmem:[#allocation3 + $0x68] sm:$0xff] %vm426, %v4537
        %4554 = vst.msk [vmem:[#allocation3 + $0x70] sm:$0xff] %vm426, %v4538
        %4555 = vst.msk [vmem:[#allocation3 + $0x78] sm:$0xff] %vm426, %v4539
        %v4556 = vld [vmem:[%s1623 + $0x1] sm:$0xff]
        %v4557 = vld [vmem:[%s1623 + $0x9] sm:$0xff]
        %v4558 = vld [vmem:[%s1623 + $0x19] sm:$0xff]
        %v4559 = vld [vmem:[%s1623 + $0x21] sm:$0xff]
        %v4560 = vld [vmem:[%s1623 + $0x31] sm:$0xff]
        %v4561 = vld [vmem:[%s1623 + $0x39] sm:$0xff]
        %v4562 = vld [vmem:[%s1623 + $0x49] sm:$0xff]
        %v4563 = vld [vmem:[%s1623 + $0x51] sm:$0xff]
        %v4564 = vld [vmem:[%s1623 + $0x61] sm:$0xff]
        %v4565 = vld [vmem:[%s1623 + $0x69] sm:$0xff]
        %v4566 = vld [vmem:[%s1623 + $0x79] sm:$0xff]
        %v4567 = vld [vmem:[%s1623 + $0x81] sm:$0xff]
        %v4568 = vld [vmem:[%s1623 + $0x91] sm:$0xff]
        %v4569 = vld [vmem:[%s1623 + $0x99] sm:$0xff]
        %v4570 = vld [vmem:[%s1623 + $0xa9] sm:$0xff]
        %v4571 = vld [vmem:[%s1623 + $0xb1] sm:$0xff]
        %4588 = vrot.lane.b32.xlu0 %v4556, 8
        %v4589 = vpop.permute.xlu0 %4588
        %4590 = vrot.lane.b32.xlu0 %v4557, 8
        %v4591 = vpop.permute.xlu0 %4590
        %4592 = vrot.lane.b32.xlu0 %v4558, 8
        %v4593 = vpop.permute.xlu0 %4592
        %4594 = vrot.lane.b32.xlu0 %v4559, 8
        %v4595 = vpop.permute.xlu0 %4594
        %4596 = vrot.lane.b32.xlu0 %v4560, 8
        %v4597 = vpop.permute.xlu0 %4596
        %4598 = vrot.lane.b32.xlu0 %v4561, 8
        %v4599 = vpop.permute.xlu0 %4598
        %4600 = vrot.lane.b32.xlu0 %v4562, 8
        %v4601 = vpop.permute.xlu0 %4600
        %4602 = vrot.lane.b32.xlu0 %v4563, 8
        %v4603 = vpop.permute.xlu0 %4602
        %4604 = vrot.lane.b32.xlu0 %v4564, 8
        %v4605 = vpop.permute.xlu0 %4604
        %4606 = vrot.lane.b32.xlu0 %v4565, 8
        %v4607 = vpop.permute.xlu0 %4606
        %4608 = vrot.lane.b32.xlu0 %v4566, 8
        %v4609 = vpop.permute.xlu0 %4608
        %4610 = vrot.lane.b32.xlu0 %v4567, 8
        %v4611 = vpop.permute.xlu0 %4610
        %4612 = vrot.lane.b32.xlu0 %v4568, 8
        %v4613 = vpop.permute.xlu0 %4612
        %4614 = vrot.lane.b32.xlu0 %v4569, 8
        %v4615 = vpop.permute.xlu0 %4614
        %4616 = vrot.lane.b32.xlu0 %v4570, 8
        %v4617 = vpop.permute.xlu0 %4616
        %4618 = vrot.lane.b32.xlu0 %v4571, 8
        %v4619 = vpop.permute.xlu0 %4618
        %4636 = vst.msk [vmem:[#allocation3] sm:$0xff] %vm676, %v4589
        %4637 = vst.msk [vmem:[#allocation3 + $0x8] sm:$0xff] %vm676, %v4591
        %4638 = vst.msk [vmem:[#allocation3 + $0x10] sm:$0xff] %vm676, %v4593
        %4639 = vst.msk [vmem:[#allocation3 + $0x18] sm:$0xff] %vm676, %v4595
        %4640 = vst.msk [vmem:[#allocation3 + $0x20] sm:$0xff] %vm676, %v4597
        %4641 = vst.msk [vmem:[#allocation3 + $0x28] sm:$0xff] %vm676, %v4599
        %4642 = vst.msk [vmem:[#allocation3 + $0x30] sm:$0xff] %vm676, %v4601
        %4643 = vst.msk [vmem:[#allocation3 + $0x38] sm:$0xff] %vm676, %v4603
        %4644 = vst.msk [vmem:[#allocation3 + $0x40] sm:$0xff] %vm676, %v4605
        %4645 = vst.msk [vmem:[#allocation3 + $0x48] sm:$0xff] %vm676, %v4607
        %4646 = vst.msk [vmem:[#allocation3 + $0x50] sm:$0xff] %vm676, %v4609
        %4647 = vst.msk [vmem:[#allocation3 + $0x58] sm:$0xff] %vm676, %v4611
        %4648 = vst.msk [vmem:[#allocation3 + $0x60] sm:$0xff] %vm676, %v4613
        %4649 = vst.msk [vmem:[#allocation3 + $0x68] sm:$0xff] %vm676, %v4615
        %4650 = vst.msk [vmem:[#allocation3 + $0x70] sm:$0xff] %vm676, %v4617
        %4651 = vst.msk [vmem:[#allocation3 + $0x78] sm:$0xff] %vm676, %v4619
        %v4652 = vld [vmem:[%s1623 + $0x2] sm:$0xff]
        %v4653 = vld [vmem:[%s1623 + $0xa] sm:$0xff]
        %v4654 = vld [vmem:[%s1623 + $0x1a] sm:$0xff]
        %v4655 = vld [vmem:[%s1623 + $0x22] sm:$0xff]
        %v4656 = vld [vmem:[%s1623 + $0x32] sm:$0xff]
        %v4657 = vld [vmem:[%s1623 + $0x3a] sm:$0xff]
        %v4658 = vld [vmem:[%s1623 + $0x4a] sm:$0xff]
        %v4659 = vld [vmem:[%s1623 + $0x52] sm:$0xff]
        %v4660 = vld [vmem:[%s1623 + $0x62] sm:$0xff]
        %v4661 = vld [vmem:[%s1623 + $0x6a] sm:$0xff]
        %v4662 = vld [vmem:[%s1623 + $0x7a] sm:$0xff]
        %v4663 = vld [vmem:[%s1623 + $0x82] sm:$0xff]
        %v4664 = vld [vmem:[%s1623 + $0x92] sm:$0xff]
        %v4665 = vld [vmem:[%s1623 + $0x9a] sm:$0xff]
        %v4666 = vld [vmem:[%s1623 + $0xaa] sm:$0xff]
        %v4667 = vld [vmem:[%s1623 + $0xb2] sm:$0xff]
        %4684 = vrot.lane.b32.xlu0 %v4652, 16
        %v4685 = vpop.permute.xlu0 %4684
        %4686 = vrot.lane.b32.xlu0 %v4653, 16
        %v4687 = vpop.permute.xlu0 %4686
        %4688 = vrot.lane.b32.xlu0 %v4654, 16
        %v4689 = vpop.permute.xlu0 %4688
        %4690 = vrot.lane.b32.xlu0 %v4655, 16
        %v4691 = vpop.permute.xlu0 %4690
        %4692 = vrot.lane.b32.xlu0 %v4656, 16
        %v4693 = vpop.permute.xlu0 %4692
        %4694 = vrot.lane.b32.xlu0 %v4657, 16
        %v4695 = vpop.permute.xlu0 %4694
        %4696 = vrot.lane.b32.xlu0 %v4658, 16
        %v4697 = vpop.permute.xlu0 %4696
        %4698 = vrot.lane.b32.xlu0 %v4659, 16
        %v4699 = vpop.permute.xlu0 %4698
        %4700 = vrot.lane.b32.xlu0 %v4660, 16
        %v4701 = vpop.permute.xlu0 %4700
        %4702 = vrot.lane.b32.xlu0 %v4661, 16
        %v4703 = vpop.permute.xlu0 %4702
        %4704 = vrot.lane.b32.xlu0 %v4662, 16
        %v4705 = vpop.permute.xlu0 %4704
        %4706 = vrot.lane.b32.xlu0 %v4663, 16
        %v4707 = vpop.permute.xlu0 %4706
        %4708 = vrot.lane.b32.xlu0 %v4664, 16
        %v4709 = vpop.permute.xlu0 %4708
        %4710 = vrot.lane.b32.xlu0 %v4665, 16
        %v4711 = vpop.permute.xlu0 %4710
        %4712 = vrot.lane.b32.xlu0 %v4666, 16
        %v4713 = vpop.permute.xlu0 %4712
        %4714 = vrot.lane.b32.xlu0 %v4667, 16
        %v4715 = vpop.permute.xlu0 %4714
        %4732 = vst.msk [vmem:[#allocation3] sm:$0xff] %vm773, %v4685
        %4733 = vst.msk [vmem:[#allocation3 + $0x8] sm:$0xff] %vm773, %v4687
        %4734 = vst.msk [vmem:[#allocation3 + $0x10] sm:$0xff] %vm773, %v4689
        %4735 = vst.msk [vmem:[#allocation3 + $0x18] sm:$0xff] %vm773, %v4691
        %4736 = vst.msk [vmem:[#allocation3 + $0x20] sm:$0xff] %vm773, %v4693
        %4737 = vst.msk [vmem:[#allocation3 + $0x28] sm:$0xff] %vm773, %v4695
        %4738 = vst.msk [vmem:[#allocation3 + $0x30] sm:$0xff] %vm773, %v4697
        %4739 = vst.msk [vmem:[#allocation3 + $0x38] sm:$0xff] %vm773, %v4699
        %4740 = vst.msk [vmem:[#allocation3 + $0x40] sm:$0xff] %vm773, %v4701
        %4741 = vst.msk [vmem:[#allocation3 + $0x48] sm:$0xff] %vm773, %v4703
        %4742 = vst.msk [vmem:[#allocation3 + $0x50] sm:$0xff] %vm773, %v4705
        %4743 = vst.msk [vmem:[#allocation3 + $0x58] sm:$0xff] %vm773, %v4707
        %4744 = vst.msk [vmem:[#allocation3 + $0x60] sm:$0xff] %vm773, %v4709
        %4745 = vst.msk [vmem:[#allocation3 + $0x68] sm:$0xff] %vm773, %v4711
        %4746 = vst.msk [vmem:[#allocation3 + $0x70] sm:$0xff] %vm773, %v4713
        %4747 = vst.msk [vmem:[#allocation3 + $0x78] sm:$0xff] %vm773, %v4715
        %v4748 = vld [vmem:[%s1848] sm:$0xff]
        %v4749 = vld [vmem:[%s1848 + $0x8] sm:$0xff]
        %v4750 = vld [vmem:[%s1848 + $0x18] sm:$0xff]
        %v4751 = vld [vmem:[%s1848 + $0x20] sm:$0xff]
        %v4752 = vld [vmem:[%s1848 + $0x30] sm:$0xff]
        %v4753 = vld [vmem:[%s1848 + $0x38] sm:$0xff]
        %v4754 = vld [vmem:[%s1848 + $0x48] sm:$0xff]
        %v4755 = vld [vmem:[%s1848 + $0x50] sm:$0xff]
        %v4756 = vld [vmem:[%s1848 + $0x60] sm:$0xff]
        %v4757 = vld [vmem:[%s1848 + $0x68] sm:$0xff]
        %v4758 = vld [vmem:[%s1848 + $0x78] sm:$0xff]
        %v4759 = vld [vmem:[%s1848 + $0x80] sm:$0xff]
        %v4760 = vld [vmem:[%s1848 + $0x90] sm:$0xff]
        %v4761 = vld [vmem:[%s1848 + $0x98] sm:$0xff]
        %v4762 = vld [vmem:[%s1848 + $0xa8] sm:$0xff]
        %v4763 = vld [vmem:[%s1848 + $0xb0] sm:$0xff]
        %4780 = vrot.lane.b32.xlu0 %v4748, 24
        %v4781 = vpop.permute.xlu0 %4780
        %4782 = vrot.lane.b32.xlu0 %v4749, 24
        %v4783 = vpop.permute.xlu0 %4782
        %4784 = vrot.lane.b32.xlu0 %v4750, 24
        %v4785 = vpop.permute.xlu0 %4784
        %4786 = vrot.lane.b32.xlu0 %v4751, 24
        %v4787 = vpop.permute.xlu0 %4786
        %4788 = vrot.lane.b32.xlu0 %v4752, 24
        %v4789 = vpop.permute.xlu0 %4788
        %4790 = vrot.lane.b32.xlu0 %v4753, 24
        %v4791 = vpop.permute.xlu0 %4790
        %4792 = vrot.lane.b32.xlu0 %v4754, 24
        %v4793 = vpop.permute.xlu0 %4792
        %4794 = vrot.lane.b32.xlu0 %v4755, 24
        %v4795 = vpop.permute.xlu0 %4794
        %4796 = vrot.lane.b32.xlu0 %v4756, 24
        %v4797 = vpop.permute.xlu0 %4796
        %4798 = vrot.lane.b32.xlu0 %v4757, 24
        %v4799 = vpop.permute.xlu0 %4798
        %4800 = vrot.lane.b32.xlu0 %v4758, 24
        %v4801 = vpop.permute.xlu0 %4800
        %4802 = vrot.lane.b32.xlu0 %v4759, 24
        %v4803 = vpop.permute.xlu0 %4802
        %4804 = vrot.lane.b32.xlu0 %v4760, 24
        %v4805 = vpop.permute.xlu0 %4804
        %4806 = vrot.lane.b32.xlu0 %v4761, 24
        %v4807 = vpop.permute.xlu0 %4806
        %4808 = vrot.lane.b32.xlu0 %v4762, 24
        %v4809 = vpop.permute.xlu0 %4808
        %4810 = vrot.lane.b32.xlu0 %v4763, 24
        %v4811 = vpop.permute.xlu0 %4810
        %4828 = vst.msk [vmem:[#allocation3] sm:$0xff] %vm870, %v4781
        %4829 = vst.msk [vmem:[#allocation3 + $0x8] sm:$0xff] %vm870, %v4783
        %4830 = vst.msk [vmem:[#allocation3 + $0x10] sm:$0xff] %vm870, %v4785
        %4831 = vst.msk [vmem:[#allocation3 + $0x18] sm:$0xff] %vm870, %v4787
        %4832 = vst.msk [vmem:[#allocation3 + $0x20] sm:$0xff] %vm870, %v4789
        %4833 = vst.msk [vmem:[#allocation3 + $0x28] sm:$0xff] %vm870, %v4791
        %4834 = vst.msk [vmem:[#allocation3 + $0x30] sm:$0xff] %vm870, %v4793
        %4835 = vst.msk [vmem:[#allocation3 + $0x38] sm:$0xff] %vm870, %v4795
        %4836 = vst.msk [vmem:[#allocation3 + $0x40] sm:$0xff] %vm870, %v4797
        %4837 = vst.msk [vmem:[#allocation3 + $0x48] sm:$0xff] %vm870, %v4799
        %4838 = vst.msk [vmem:[#allocation3 + $0x50] sm:$0xff] %vm870, %v4801
        %4839 = vst.msk [vmem:[#allocation3 + $0x58] sm:$0xff] %vm870, %v4803
        %4840 = vst.msk [vmem:[#allocation3 + $0x60] sm:$0xff] %vm870, %v4805
        %4841 = vst.msk [vmem:[#allocation3 + $0x68] sm:$0xff] %vm870, %v4807
        %4842 = vst.msk [vmem:[#allocation3 + $0x70] sm:$0xff] %vm870, %v4809
        %4843 = vst.msk [vmem:[#allocation3 + $0x78] sm:$0xff] %vm870, %v4811
        %v4844 = vld [vmem:[%s1848 + $0x1] sm:$0xff]
        %v4845 = vld [vmem:[%s1848 + $0x9] sm:$0xff]
        %v4846 = vld [vmem:[%s1848 + $0x19] sm:$0xff]
        %v4847 = vld [vmem:[%s1848 + $0x21] sm:$0xff]
        %v4848 = vld [vmem:[%s1848 + $0x31] sm:$0xff]
        %v4849 = vld [vmem:[%s1848 + $0x39] sm:$0xff]
        %v4850 = vld [vmem:[%s1848 + $0x49] sm:$0xff]
        %v4851 = vld [vmem:[%s1848 + $0x51] sm:$0xff]
        %v4852 = vld [vmem:[%s1848 + $0x61] sm:$0xff]
        %v4853 = vld [vmem:[%s1848 + $0x69] sm:$0xff]
        %v4854 = vld [vmem:[%s1848 + $0x79] sm:$0xff]
        %v4855 = vld [vmem:[%s1848 + $0x81] sm:$0xff]
        %v4856 = vld [vmem:[%s1848 + $0x91] sm:$0xff]
        %v4857 = vld [vmem:[%s1848 + $0x99] sm:$0xff]
        %v4858 = vld [vmem:[%s1848 + $0xa9] sm:$0xff]
        %v4859 = vld [vmem:[%s1848 + $0xb1] sm:$0xff]
        %4876 = vrot.lane.b32.xlu0 %v4844, 32
        %v4877 = vpop.permute.xlu0 %4876
        %4878 = vrot.lane.b32.xlu0 %v4845, 32
        %v4879 = vpop.permute.xlu0 %4878
        %4880 = vrot.lane.b32.xlu0 %v4846, 32
        %v4881 = vpop.permute.xlu0 %4880
        %4882 = vrot.lane.b32.xlu0 %v4847, 32
        %v4883 = vpop.permute.xlu0 %4882
        %4884 = vrot.lane.b32.xlu0 %v4848, 32
        %v4885 = vpop.permute.xlu0 %4884
        %4886 = vrot.lane.b32.xlu0 %v4849, 32
        %v4887 = vpop.permute.xlu0 %4886
        %4888 = vrot.lane.b32.xlu0 %v4850, 32
        %v4889 = vpop.permute.xlu0 %4888
        %4890 = vrot.lane.b32.xlu0 %v4851, 32
        %v4891 = vpop.permute.xlu0 %4890
        %4892 = vrot.lane.b32.xlu0 %v4852, 32
        %v4893 = vpop.permute.xlu0 %4892
        %4894 = vrot.lane.b32.xlu0 %v4853, 32
        %v4895 = vpop.permute.xlu0 %4894
        %4896 = vrot.lane.b32.xlu0 %v4854, 32
        %v4897 = vpop.permute.xlu0 %4896
        %4898 = vrot.lane.b32.xlu0 %v4855, 32
        %v4899 = vpop.permute.xlu0 %4898
        %4900 = vrot.lane.b32.xlu0 %v4856, 32
        %v4901 = vpop.permute.xlu0 %4900
        %4902 = vrot.lane.b32.xlu0 %v4857, 32
        %v4903 = vpop.permute.xlu0 %4902
        %4904 = vrot.lane.b32.xlu0 %v4858, 32
        %v4905 = vpop.permute.xlu0 %4904
        %4906 = vrot.lane.b32.xlu0 %v4859, 32
        %v4907 = vpop.permute.xlu0 %4906
        %4924 = vst.msk [vmem:[#allocation3] sm:$0xff] %vm967, %v4877
        %4925 = vst.msk [vmem:[#allocation3 + $0x8] sm:$0xff] %vm967, %v4879
        %4926 = vst.msk [vmem:[#allocation3 + $0x10] sm:$0xff] %vm967, %v4881
        %4927 = vst.msk [vmem:[#allocation3 + $0x18] sm:$0xff] %vm967, %v4883
        %4928 = vst.msk [vmem:[#allocation3 + $0x20] sm:$0xff] %vm967, %v4885
        %4929 = vst.msk [vmem:[#allocation3 + $0x28] sm:$0xff] %vm967, %v4887
        %4930 = vst.msk [vmem:[#allocation3 + $0x30] sm:$0xff] %vm967, %v4889
        %4931 = vst.msk [vmem:[#allocation3 + $0x38] sm:$0xff] %vm967, %v4891
        %4932 = vst.msk [vmem:[#allocation3 + $0x40] sm:$0xff] %vm967, %v4893
        %4933 = vst.msk [vmem:[#allocation3 + $0x48] sm:$0xff] %vm967, %v4895
        %4934 = vst.msk [vmem:[#allocation3 + $0x50] sm:$0xff] %vm967, %v4897
        %4935 = vst.msk [vmem:[#allocation3 + $0x58] sm:$0xff] %vm967, %v4899
        %4936 = vst.msk [vmem:[#allocation3 + $0x60] sm:$0xff] %vm967, %v4901
        %4937 = vst.msk [vmem:[#allocation3 + $0x68] sm:$0xff] %vm967, %v4903
        %4938 = vst.msk [vmem:[#allocation3 + $0x70] sm:$0xff] %vm967, %v4905
        %4939 = vst.msk [vmem:[#allocation3 + $0x78] sm:$0xff] %vm967, %v4907
        %v4940 = vld [vmem:[%s1848 + $0x2] sm:$0xff]
        %v4941 = vld [vmem:[%s1848 + $0xa] sm:$0xff]
        %v4942 = vld [vmem:[%s1848 + $0x1a] sm:$0xff]
        %v4943 = vld [vmem:[%s1848 + $0x22] sm:$0xff]
        %v4944 = vld [vmem:[%s1848 + $0x32] sm:$0xff]
        %v4945 = vld [vmem:[%s1848 + $0x3a] sm:$0xff]
        %v4946 = vld [vmem:[%s1848 + $0x4a] sm:$0xff]
        %v4947 = vld [vmem:[%s1848 + $0x52] sm:$0xff]
        %v4948 = vld [vmem:[%s1848 + $0x62] sm:$0xff]
        %v4949 = vld [vmem:[%s1848 + $0x6a] sm:$0xff]
        %v4950 = vld [vmem:[%s1848 + $0x7a] sm:$0xff]
        %v4951 = vld [vmem:[%s1848 + $0x82] sm:$0xff]
        %v4952 = vld [vmem:[%s1848 + $0x92] sm:$0xff]
        %v4953 = vld [vmem:[%s1848 + $0x9a] sm:$0xff]
        %v4954 = vld [vmem:[%s1848 + $0xaa] sm:$0xff]
        %v4955 = vld [vmem:[%s1848 + $0xb2] sm:$0xff]
        %4972 = vrot.lane.b32.xlu0 %v4940, 40
        %v4973 = vpop.permute.xlu0 %4972
        %4974 = vrot.lane.b32.xlu0 %v4941, 40
        %v4975 = vpop.permute.xlu0 %4974
        %4976 = vrot.lane.b32.xlu0 %v4942, 40
        %v4977 = vpop.permute.xlu0 %4976
        %4978 = vrot.lane.b32.xlu0 %v4943, 40
        %v4979 = vpop.permute.xlu0 %4978
        %4980 = vrot.lane.b32.xlu0 %v4944, 40
        %v4981 = vpop.permute.xlu0 %4980
        %4982 = vrot.lane.b32.xlu0 %v4945, 40
        %v4983 = vpop.permute.xlu0 %4982
        %4984 = vrot.lane.b32.xlu0 %v4946, 40
        %v4985 = vpop.permute.xlu0 %4984
        %4986 = vrot.lane.b32.xlu0 %v4947, 40
        %v4987 = vpop.permute.xlu0 %4986
        %4988 = vrot.lane.b32.xlu0 %v4948, 40
        %v4989 = vpop.permute.xlu0 %4988
        %4990 = vrot.lane.b32.xlu0 %v4949, 40
        %v4991 = vpop.permute.xlu0 %4990
        %4992 = vrot.lane.b32.xlu0 %v4950, 40
        %v4993 = vpop.permute.xlu0 %4992
        %4994 = vrot.lane.b32.xlu0 %v4951, 40
        %v4995 = vpop.permute.xlu0 %4994
        %4996 = vrot.lane.b32.xlu0 %v4952, 40
        %v4997 = vpop.permute.xlu0 %4996
        %4998 = vrot.lane.b32.xlu0 %v4953, 40
        %v4999 = vpop.permute.xlu0 %4998
        %5000 = vrot.lane.b32.xlu0 %v4954, 40
        %v5001 = vpop.permute.xlu0 %5000
        %5002 = vrot.lane.b32.xlu0 %v4955, 40
        %v5003 = vpop.permute.xlu0 %5002
        %5020 = vst.msk [vmem:[#allocation3] sm:$0xff] %vm1064, %v4973
        %5021 = vst.msk [vmem:[#allocation3 + $0x8] sm:$0xff] %vm1064, %v4975
        %5022 = vst.msk [vmem:[#allocation3 + $0x10] sm:$0xff] %vm1064, %v4977
        %5023 = vst.msk [vmem:[#allocation3 + $0x18] sm:$0xff] %vm1064, %v4979
        %5024 = vst.msk [vmem:[#allocation3 + $0x20] sm:$0xff] %vm1064, %v4981
        %5025 = vst.msk [vmem:[#allocation3 + $0x28] sm:$0xff] %vm1064, %v4983
        %5026 = vst.msk [vmem:[#allocation3 + $0x30] sm:$0xff] %vm1064, %v4985
        %5027 = vst.msk [vmem:[#allocation3 + $0x38] sm:$0xff] %vm1064, %v4987
        %5028 = vst.msk [vmem:[#allocation3 + $0x40] sm:$0xff] %vm1064, %v4989
        %5029 = vst.msk [vmem:[#allocation3 + $0x48] sm:$0xff] %vm1064, %v4991
        %5030 = vst.msk [vmem:[#allocation3 + $0x50] sm:$0xff] %vm1064, %v4993
        %5031 = vst.msk [vmem:[#allocation3 + $0x58] sm:$0xff] %vm1064, %v4995
        %5032 = vst.msk [vmem:[#allocation3 + $0x60] sm:$0xff] %vm1064, %v4997
        %5033 = vst.msk [vmem:[#allocation3 + $0x68] sm:$0xff] %vm1064, %v4999
        %5034 = vst.msk [vmem:[#allocation3 + $0x70] sm:$0xff] %vm1064, %v5001
        %5035 = vst.msk [vmem:[#allocation3 + $0x78] sm:$0xff] %vm1064, %v5003
        %v5036 = vld [vmem:[%s2137] sm:$0xff]
        %v5037 = vld [vmem:[%s2137 + $0x8] sm:$0xff]
        %v5038 = vld [vmem:[%s2137 + $0x18] sm:$0xff]
        %v5039 = vld [vmem:[%s2137 + $0x20] sm:$0xff]
        %v5040 = vld [vmem:[%s2137 + $0x30] sm:$0xff]
        %v5041 = vld [vmem:[%s2137 + $0x38] sm:$0xff]
        %v5042 = vld [vmem:[%s2137 + $0x48] sm:$0xff]
        %v5043 = vld [vmem:[%s2137 + $0x50] sm:$0xff]
        %v5044 = vld [vmem:[%s2137 + $0x60] sm:$0xff]
        %v5045 = vld [vmem:[%s2137 + $0x68] sm:$0xff]
        %v5046 = vld [vmem:[%s2137 + $0x78] sm:$0xff]
        %v5047 = vld [vmem:[%s2137 + $0x80] sm:$0xff]
        %v5048 = vld [vmem:[%s2137 + $0x90] sm:$0xff]
        %v5049 = vld [vmem:[%s2137 + $0x98] sm:$0xff]
        %v5050 = vld [vmem:[%s2137 + $0xa8] sm:$0xff]
        %v5051 = vld [vmem:[%s2137 + $0xb0] sm:$0xff]
        %5068 = vrot.lane.b32.xlu0 %v5036, 48
        %v5069 = vpop.permute.xlu0 %5068
        %5070 = vrot.lane.b32.xlu0 %v5037, 48
        %v5071 = vpop.permute.xlu0 %5070
        %5072 = vrot.lane.b32.xlu0 %v5038, 48
        %v5073 = vpop.permute.xlu0 %5072
        %5074 = vrot.lane.b32.xlu0 %v5039, 48
        %v5075 = vpop.permute.xlu0 %5074
        %5076 = vrot.lane.b32.xlu0 %v5040, 48
        %v5077 = vpop.permute.xlu0 %5076
        %5078 = vrot.lane.b32.xlu0 %v5041, 48
        %v5079 = vpop.permute.xlu0 %5078
        %5080 = vrot.lane.b32.xlu0 %v5042, 48
        %v5081 = vpop.permute.xlu0 %5080
        %5082 = vrot.lane.b32.xlu0 %v5043, 48
        %v5083 = vpop.permute.xlu0 %5082
        %5084 = vrot.lane.b32.xlu0 %v5044, 48
        %v5085 = vpop.permute.xlu0 %5084
        %5086 = vrot.lane.b32.xlu0 %v5045, 48
        %v5087 = vpop.permute.xlu0 %5086
        %5088 = vrot.lane.b32.xlu0 %v5046, 48
        %v5089 = vpop.permute.xlu0 %5088
        %5090 = vrot.lane.b32.xlu0 %v5047, 48
        %v5091 = vpop.permute.xlu0 %5090
        %5092 = vrot.lane.b32.xlu0 %v5048, 48
        %v5093 = vpop.permute.xlu0 %5092
        %5094 = vrot.lane.b32.xlu0 %v5049, 48
        %v5095 = vpop.permute.xlu0 %5094
        %5096 = vrot.lane.b32.xlu0 %v5050, 48
        %v5097 = vpop.permute.xlu0 %5096
        %5098 = vrot.lane.b32.xlu0 %v5051, 48
        %v5099 = vpop.permute.xlu0 %5098
        %5116 = vst.msk [vmem:[#allocation3] sm:$0xff] %vm1162, %v5069
        %5117 = vst.msk [vmem:[#allocation3 + $0x8] sm:$0xff] %vm1162, %v5071
        %5118 = vst.msk [vmem:[#allocation3 + $0x10] sm:$0xff] %vm1162, %v5073
        %5119 = vst.msk [vmem:[#allocation3 + $0x18] sm:$0xff] %vm1162, %v5075
        %5120 = vst.msk [vmem:[#allocation3 + $0x20] sm:$0xff] %vm1162, %v5077
        %5121 = vst.msk [vmem:[#allocation3 + $0x28] sm:$0xff] %vm1162, %v5079
        %5122 = vst.msk [vmem:[#allocation3 + $0x30] sm:$0xff] %vm1162, %v5081
        %5123 = vst.msk [vmem:[#allocation3 + $0x38] sm:$0xff] %vm1162, %v5083
        %5124 = vst.msk [vmem:[#allocation3 + $0x40] sm:$0xff] %vm1162, %v5085
        %5125 = vst.msk [vmem:[#allocation3 + $0x48] sm:$0xff] %vm1162, %v5087
        %5126 = vst.msk [vmem:[#allocation3 + $0x50] sm:$0xff] %vm1162, %v5089
        %5127 = vst.msk [vmem:[#allocation3 + $0x58] sm:$0xff] %vm1162, %v5091
        %5128 = vst.msk [vmem:[#allocation3 + $0x60] sm:$0xff] %vm1162, %v5093
        %5129 = vst.msk [vmem:[#allocation3 + $0x68] sm:$0xff] %vm1162, %v5095
        %5130 = vst.msk [vmem:[#allocation3 + $0x70] sm:$0xff] %vm1162, %v5097
        %5131 = vst.msk [vmem:[#allocation3 + $0x78] sm:$0xff] %vm1162, %v5099
        %v5132 = vld [vmem:[%s2137 + $0x1] sm:$0xff]
        %v5133 = vld [vmem:[%s2137 + $0x9] sm:$0xff]
        %v5134 = vld [vmem:[%s2137 + $0x19] sm:$0xff]
        %v5135 = vld [vmem:[%s2137 + $0x21] sm:$0xff]
        %v5136 = vld [vmem:[%s2137 + $0x31] sm:$0xff]
        %v5137 = vld [vmem:[%s2137 + $0x39] sm:$0xff]
        %v5138 = vld [vmem:[%s2137 + $0x49] sm:$0xff]
        %v5139 = vld [vmem:[%s2137 + $0x51] sm:$0xff]
        %v5140 = vld [vmem:[%s2137 + $0x61] sm:$0xff]
        %v5141 = vld [vmem:[%s2137 + $0x69] sm:$0xff]
        %v5142 = vld [vmem:[%s2137 + $0x79] sm:$0xff]
        %v5143 = vld [vmem:[%s2137 + $0x81] sm:$0xff]
        %v5144 = vld [vmem:[%s2137 + $0x91] sm:$0xff]
        %v5145 = vld [vmem:[%s2137 + $0x99] sm:$0xff]
        %v5146 = vld [vmem:[%s2137 + $0xa9] sm:$0xff]
        %v5147 = vld [vmem:[%s2137 + $0xb1] sm:$0xff]
        %5164 = vrot.lane.b32.xlu0 %v5132, 56
        %v5165 = vpop.permute.xlu0 %5164
        %5166 = vrot.lane.b32.xlu0 %v5133, 56
        %v5167 = vpop.permute.xlu0 %5166
        %5168 = vrot.lane.b32.xlu0 %v5134, 56
        %v5169 = vpop.permute.xlu0 %5168
        %5170 = vrot.lane.b32.xlu0 %v5135, 56
        %v5171 = vpop.permute.xlu0 %5170
        %5172 = vrot.lane.b32.xlu0 %v5136, 56
        %v5173 = vpop.permute.xlu0 %5172
        %5174 = vrot.lane.b32.xlu0 %v5137, 56
        %v5175 = vpop.permute.xlu0 %5174
        %5176 = vrot.lane.b32.xlu0 %v5138, 56
        %v5177 = vpop.permute.xlu0 %5176
        %5178 = vrot.lane.b32.xlu0 %v5139, 56
        %v5179 = vpop.permute.xlu0 %5178
        %5180 = vrot.lane.b32.xlu0 %v5140, 56
        %v5181 = vpop.permute.xlu0 %5180
        %5182 = vrot.lane.b32.xlu0 %v5141, 56
        %v5183 = vpop.permute.xlu0 %5182
        %5184 = vrot.lane.b32.xlu0 %v5142, 56
        %v5185 = vpop.permute.xlu0 %5184
        %5186 = vrot.lane.b32.xlu0 %v5143, 56
        %v5187 = vpop.permute.xlu0 %5186
        %5188 = vrot.lane.b32.xlu0 %v5144, 56
        %v5189 = vpop.permute.xlu0 %5188
        %5190 = vrot.lane.b32.xlu0 %v5145, 56
        %v5191 = vpop.permute.xlu0 %5190
        %5192 = vrot.lane.b32.xlu0 %v5146, 56
        %v5193 = vpop.permute.xlu0 %5192
        %5194 = vrot.lane.b32.xlu0 %v5147, 56
        %v5195 = vpop.permute.xlu0 %5194
        %5212 = vst.msk [vmem:[#allocation3] sm:$0xff] %vm1259, %v5165
        %5213 = vst.msk [vmem:[#allocation3 + $0x8] sm:$0xff] %vm1259, %v5167
        %5214 = vst.msk [vmem:[#allocation3 + $0x10] sm:$0xff] %vm1259, %v5169
        %5215 = vst.msk [vmem:[#allocation3 + $0x18] sm:$0xff] %vm1259, %v5171
        %5216 = vst.msk [vmem:[#allocation3 + $0x20] sm:$0xff] %vm1259, %v5173
        %5217 = vst.msk [vmem:[#allocation3 + $0x28] sm:$0xff] %vm1259, %v5175
        %5218 = vst.msk [vmem:[#allocation3 + $0x30] sm:$0xff] %vm1259, %v5177
        %5219 = vst.msk [vmem:[#allocation3 + $0x38] sm:$0xff] %vm1259, %v5179
        %5220 = vst.msk [vmem:[#allocation3 + $0x40] sm:$0xff] %vm1259, %v5181
        %5221 = vst.msk [vmem:[#allocation3 + $0x48] sm:$0xff] %vm1259, %v5183
        %5222 = vst.msk [vmem:[#allocation3 + $0x50] sm:$0xff] %vm1259, %v5185
        %5223 = vst.msk [vmem:[#allocation3 + $0x58] sm:$0xff] %vm1259, %v5187
        %5224 = vst.msk [vmem:[#allocation3 + $0x60] sm:$0xff] %vm1259, %v5189
        %5225 = vst.msk [vmem:[#allocation3 + $0x68] sm:$0xff] %vm1259, %v5191
        %5226 = vst.msk [vmem:[#allocation3 + $0x70] sm:$0xff] %vm1259, %v5193
        %5227 = vst.msk [vmem:[#allocation3 + $0x78] sm:$0xff] %vm1259, %v5195
        %v5228 = vld [vmem:[%s2137 + $0x2] sm:$0xff]
        %v5229 = vld [vmem:[%s2137 + $0xa] sm:$0xff]
        %v5230 = vld [vmem:[%s2137 + $0x1a] sm:$0xff]
        %v5231 = vld [vmem:[%s2137 + $0x22] sm:$0xff]
        %v5232 = vld [vmem:[%s2137 + $0x32] sm:$0xff]
        %v5233 = vld [vmem:[%s2137 + $0x3a] sm:$0xff]
        %v5234 = vld [vmem:[%s2137 + $0x4a] sm:$0xff]
        %v5235 = vld [vmem:[%s2137 + $0x52] sm:$0xff]
        %v5236 = vld [vmem:[%s2137 + $0x62] sm:$0xff]
        %v5237 = vld [vmem:[%s2137 + $0x6a] sm:$0xff]
        %v5238 = vld [vmem:[%s2137 + $0x7a] sm:$0xff]
        %v5239 = vld [vmem:[%s2137 + $0x82] sm:$0xff]
        %v5240 = vld [vmem:[%s2137 + $0x92] sm:$0xff]
        %v5241 = vld [vmem:[%s2137 + $0x9a] sm:$0xff]
        %v5242 = vld [vmem:[%s2137 + $0xaa] sm:$0xff]
        %v5243 = vld [vmem:[%s2137 + $0xb2] sm:$0xff]
        %5260 = vrot.lane.b32.xlu0 %v5228, 64
        %v5261 = vpop.permute.xlu0 %5260
        %5262 = vrot.lane.b32.xlu0 %v5229, 64
        %v5263 = vpop.permute.xlu0 %5262
        %5264 = vrot.lane.b32.xlu0 %v5230, 64
        %v5265 = vpop.permute.xlu0 %5264
        %5266 = vrot.lane.b32.xlu0 %v5231, 64
        %v5267 = vpop.permute.xlu0 %5266
        %5268 = vrot.lane.b32.xlu0 %v5232, 64
        %v5269 = vpop.permute.xlu0 %5268
        %5270 = vrot.lane.b32.xlu0 %v5233, 64
        %v5271 = vpop.permute.xlu0 %5270
        %5272 = vrot.lane.b32.xlu0 %v5234, 64
        %v5273 = vpop.permute.xlu0 %5272
        %5274 = vrot.lane.b32.xlu0 %v5235, 64
        %v5275 = vpop.permute.xlu0 %5274
        %5276 = vrot.lane.b32.xlu0 %v5236, 64
        %v5277 = vpop.permute.xlu0 %5276
        %5278 = vrot.lane.b32.xlu0 %v5237, 64
        %v5279 = vpop.permute.xlu0 %5278
        %5280 = vrot.lane.b32.xlu0 %v5238, 64
        %v5281 = vpop.permute.xlu0 %5280
        %5282 = vrot.lane.b32.xlu0 %v5239, 64
        %v5283 = vpop.permute.xlu0 %5282
        %5284 = vrot.lane.b32.xlu0 %v5240, 64
        %v5285 = vpop.permute.xlu0 %5284
        %5286 = vrot.lane.b32.xlu0 %v5241, 64
        %v5287 = vpop.permute.xlu0 %5286
        %5288 = vrot.lane.b32.xlu0 %v5242, 64
        %v5289 = vpop.permute.xlu0 %5288
        %5290 = vrot.lane.b32.xlu0 %v5243, 64
        %v5291 = vpop.permute.xlu0 %5290
        %5308 = vst.msk [vmem:[#allocation3] sm:$0xff] %vm1356, %v5261
        %5309 = vst.msk [vmem:[#allocation3 + $0x8] sm:$0xff] %vm1356, %v5263
        %5310 = vst.msk [vmem:[#allocation3 + $0x10] sm:$0xff] %vm1356, %v5265
        %5311 = vst.msk [vmem:[#allocation3 + $0x18] sm:$0xff] %vm1356, %v5267
        %5312 = vst.msk [vmem:[#allocation3 + $0x20] sm:$0xff] %vm1356, %v5269
        %5313 = vst.msk [vmem:[#allocation3 + $0x28] sm:$0xff] %vm1356, %v5271
        %5314 = vst.msk [vmem:[#allocation3 + $0x30] sm:$0xff] %vm1356, %v5273
        %5315 = vst.msk [vmem:[#allocation3 + $0x38] sm:$0xff] %vm1356, %v5275
        %5316 = vst.msk [vmem:[#allocation3 + $0x40] sm:$0xff] %vm1356, %v5277
        %5317 = vst.msk [vmem:[#allocation3 + $0x48] sm:$0xff] %vm1356, %v5279
        %5318 = vst.msk [vmem:[#allocation3 + $0x50] sm:$0xff] %vm1356, %v5281
        %5319 = vst.msk [vmem:[#allocation3 + $0x58] sm:$0xff] %vm1356, %v5283
        %5320 = vst.msk [vmem:[#allocation3 + $0x60] sm:$0xff] %vm1356, %v5285
        %5321 = vst.msk [vmem:[#allocation3 + $0x68] sm:$0xff] %vm1356, %v5287
        %5322 = vst.msk [vmem:[#allocation3 + $0x70] sm:$0xff] %vm1356, %v5289
        %5323 = vst.msk [vmem:[#allocation3 + $0x78] sm:$0xff] %vm1356, %v5291
        %v5324 = vld [vmem:[#allocation3] sm:$0xff]
        %v5325 = vld [vmem:[#allocation3 + $0x8] sm:$0xff]
        %v5326 = vld [vmem:[#allocation3 + $0x10] sm:$0xff]
        %v5327 = vld [vmem:[#allocation3 + $0x18] sm:$0xff]
        %v5328 = vld [vmem:[#allocation3 + $0x20] sm:$0xff]
        %v5329 = vld [vmem:[#allocation3 + $0x28] sm:$0xff]
        %v5330 = vld [vmem:[#allocation3 + $0x30] sm:$0xff]
        %v5331 = vld [vmem:[#allocation3 + $0x38] sm:$0xff]
        %v5332 = vld [vmem:[#allocation3 + $0x40] sm:$0xff]
        %v5333 = vld [vmem:[#allocation3 + $0x48] sm:$0xff]
        %v5334 = vld [vmem:[#allocation3 + $0x50] sm:$0xff]
        %v5335 = vld [vmem:[#allocation3 + $0x58] sm:$0xff]
        %v5336 = vld [vmem:[#allocation3 + $0x60] sm:$0xff]
        %v5337 = vld [vmem:[#allocation3 + $0x68] sm:$0xff]
        %v5338 = vld [vmem:[#allocation3 + $0x70] sm:$0xff]
        %v5339 = vld [vmem:[#allocation3 + $0x78] sm:$0xff]
        %v5340 = vld [vmem:[%s6] sm:$0xff]
        %v5341 = vld [vmem:[%s6 + $0x8] sm:$0xff]
        %v5342 = vld [vmem:[%s6 + $0x10] sm:$0xff]
        %v5343 = vld [vmem:[%s6 + $0x18] sm:$0xff]
        %v5344 = vld [vmem:[%s6 + $0x20] sm:$0xff]
        %v5345 = vld [vmem:[%s6 + $0x28] sm:$0xff]
        %v5346 = vld [vmem:[%s6 + $0x30] sm:$0xff]
        %v5347 = vld [vmem:[%s6 + $0x38] sm:$0xff]
        %v5348 = vld [vmem:[%s6 + $0x40] sm:$0xff]
        %v5350 = vsel %vm1401, %v5324, 0
        %v5353 = vsel %vm1401, %v5325, 0
        %v5356 = vsel %vm1401, %v5326, 0
        %v5359 = vsel %vm1401, %v5327, 0
        %v5362 = vsel %vm1401, %v5328, 0
        %v5365 = vsel %vm1401, %v5329, 0
        %v5368 = vsel %vm1401, %v5330, 0
        %v5371 = vsel %vm1401, %v5331, 0
        %v5374 = vsel %vm1401, %v5332, 0
        %v5377 = vsel %vm1401, %v5333, 0
        %v5380 = vsel %vm1401, %v5334, 0
        %v5383 = vsel %vm1401, %v5335, 0
        %v5386 = vsel %vm1401, %v5336, 0
        %v5389 = vsel %vm1401, %v5337, 0
        %v5392 = vsel %vm1401, %v5338, 0
        %v5395 = vsel %vm1401, %v5339, 0
        %5397 = vmatpush.msra.mxu0 0.0
        %5398 = vmatpush.msra.mxu0 0.0
        %5399 = vmatpush.msra.mxu0 0.0
        %5400 = vmatpush.msra.mxu0 0.0
        %5401 = vmatpush.msra.mxu0 0.0
        %5402 = vmatpush.msra.mxu0 0.0
        %5403 = vmatpush.msra.mxu0 0.0
        %5404 = vmatpush.msra.mxu0 %v5348
        %5405 = vmatpush.msra.mxu0 %v5347
        %5406 = vmatpush.msra.mxu0 %v5346
        %5407 = vmatpush.msra.mxu0 %v5345
        %5408 = vmatpush.msra.mxu0 %v5344
        %5409 = vmatpush.msra.mxu0 %v5343
        %5410 = vmatpush.msra.mxu0 %v5342
        %5411 = vmatpush.msra.mxu0 %v5341
        %5412 = vmatpush.msra.mxu0 %v5340
        %5413 = vmatmul.f32.gmra.mxu0 %v5350
        %v5414 = vpop.f32.mrf.mxu0
        %v5415 = vadd.f32 %v4301, %v5414
        %5416 = vmatmul.f32.gmra.mxu0 %v5353
        %v5417 = vpop.f32.mrf.mxu0
        %v5418 = vadd.f32 %v4301, %v5417
        %5419 = vmatmul.f32.gmra.mxu0 %v5356
        %v5420 = vpop.f32.mrf.mxu0
        %v5421 = vadd.f32 %v4301, %v5420
        %5422 = vmatmul.f32.gmra.mxu0 %v5359
        %v5423 = vpop.f32.mrf.mxu0
        %v5424 = vadd.f32 %v4301, %v5423
        %5425 = vmatmul.f32.gmra.mxu0 %v5362
        %v5426 = vpop.f32.mrf.mxu0
        %v5427 = vadd.f32 %v4301, %v5426
        %5428 = vmatmul.f32.gmra.mxu0 %v5365
        %v5429 = vpop.f32.mrf.mxu0
        %v5430 = vadd.f32 %v4301, %v5429
        %5431 = vmatmul.f32.gmra.mxu0 %v5368
        %v5432 = vpop.f32.mrf.mxu0
        %v5433 = vadd.f32 %v4301, %v5432
        %5434 = vmatmul.f32.gmra.mxu0 %v5371
        %v5435 = vpop.f32.mrf.mxu0
        %v5436 = vadd.f32 %v4301, %v5435
        %5437 = vmatmul.f32.gmra.mxu0 %v5374
        %v5438 = vpop.f32.mrf.mxu0
        %v5439 = vadd.f32 %v4301, %v5438
        %5440 = vmatmul.f32.gmra.mxu0 %v5377
        %v5441 = vpop.f32.mrf.mxu0
        %v5442 = vadd.f32 %v4301, %v5441
        %5443 = vmatmul.f32.gmra.mxu0 %v5380
        %v5444 = vpop.f32.mrf.mxu0
        %v5445 = vadd.f32 %v4301, %v5444
        %5446 = vmatmul.f32.gmra.mxu0 %v5383
        %v5447 = vpop.f32.mrf.mxu0
        %v5448 = vadd.f32 %v4301, %v5447
        %5449 = vmatmul.f32.gmra.mxu0 %v5386
        %v5450 = vpop.f32.mrf.mxu0
        %v5451 = vadd.f32 %v4301, %v5450
        %5452 = vmatmul.f32.gmra.mxu0 %v5389
        %v5453 = vpop.f32.mrf.mxu0
        %v5454 = vadd.f32 %v4301, %v5453
        %5455 = vmatmul.f32.gmra.mxu0 %v5392
        %v5456 = vpop.f32.mrf.mxu0
        %v5457 = vadd.f32 %v4301, %v5456
        %5458 = vmatmul.f32.gmra.mxu0 %v5395
        %v5459 = vpop.f32.mrf.mxu0
        %v5460 = vadd.f32 %v4301, %v5459
        %5461 = vdwg.mxu0
        %5462 = vst.msk [vmem:[#allocation4 + $0x80] sm:$0xff] %vm426, %v5415
        %5463 = vst.msk [vmem:[#allocation4 + $0x88] sm:$0xff] %vm426, %v5418
        %5464 = vst.msk [vmem:[#allocation4 + $0x90] sm:$0xff] %vm426, %v5421
        %5465 = vst.msk [vmem:[#allocation4 + $0x98] sm:$0xff] %vm426, %v5424
        %5466 = vst.msk [vmem:[#allocation4 + $0xa0] sm:$0xff] %vm426, %v5427
        %5467 = vst.msk [vmem:[#allocation4 + $0xa8] sm:$0xff] %vm426, %v5430
        %5468 = vst.msk [vmem:[#allocation4 + $0xb0] sm:$0xff] %vm426, %v5433
        %5469 = vst.msk [vmem:[#allocation4 + $0xb8] sm:$0xff] %vm426, %v5436
        %5470 = vst.msk [vmem:[#allocation4 + $0xc0] sm:$0xff] %vm426, %v5439
        %5471 = vst.msk [vmem:[#allocation4 + $0xc8] sm:$0xff] %vm426, %v5442
        %5472 = vst.msk [vmem:[#allocation4 + $0xd0] sm:$0xff] %vm426, %v5445
        %5473 = vst.msk [vmem:[#allocation4 + $0xd8] sm:$0xff] %vm426, %v5448
        %5474 = vst.msk [vmem:[#allocation4 + $0xe0] sm:$0xff] %vm426, %v5451
        %5475 = vst.msk [vmem:[#allocation4 + $0xe8] sm:$0xff] %vm426, %v5454
        %5476 = vst.msk [vmem:[#allocation4 + $0xf0] sm:$0xff] %vm426, %v5457
        %5477 = vst.msk [vmem:[#allocation4 + $0xf8] sm:$0xff] %vm426, %v5460
        %v5478 = vsel %vm426, %v5415, 0.0
        %v5479 = vsel %vm426, %v5418, 0.0
        %v5480 = vadd.f32 %v5478, %v5479
        %v5481 = vsel %vm426, %v5421, 0.0
        %v5482 = vadd.f32 %v5480, %v5481
        %v5483 = vsel %vm426, %v5424, 0.0
        %v5484 = vadd.f32 %v5482, %v5483
        %v5485 = vsel %vm426, %v5427, 0.0
        %v5486 = vadd.f32 %v5484, %v5485
        %v5487 = vsel %vm426, %v5430, 0.0
        %v5488 = vadd.f32 %v5486, %v5487
        %v5489 = vsel %vm426, %v5433, 0.0
        %v5490 = vadd.f32 %v5488, %v5489
        %v5491 = vsel %vm426, %v5436, 0.0
        %v5492 = vadd.f32 %v5490, %v5491
        %v5493 = vsel %vm426, %v5439, 0.0
        %v5494 = vadd.f32 %v5492, %v5493
        %v5495 = vsel %vm426, %v5442, 0.0
        %v5496 = vadd.f32 %v5494, %v5495
        %v5497 = vsel %vm426, %v5445, 0.0
        %v5498 = vadd.f32 %v5496, %v5497
        %v5499 = vsel %vm426, %v5448, 0.0
        %v5500 = vadd.f32 %v5498, %v5499
        %v5501 = vsel %vm426, %v5451, 0.0
        %v5502 = vadd.f32 %v5500, %v5501
        %v5503 = vsel %vm426, %v5454, 0.0
        %v5504 = vadd.f32 %v5502, %v5503
        %v5505 = vsel %vm426, %v5457, 0.0
        %v5506 = vadd.f32 %v5504, %v5505
        %v5507 = vsel %vm426, %v5460, 0.0
        %v5508 = vadd.f32 %v5506, %v5507
        %v5509 = vrot.slane %v5508, 4
        %v5510 = vadd.f32 %v5508, %v5509
        %v5511 = vrot.slane %v5510, 2
        %v5512 = vadd.f32 %v5510, %v5511
        %v5513 = vrot.slane %v5512, 1
        %v5514 = vadd.f32 %v5512, %v5513
        %v5515 = vadd.f32 %v4469, %v5514
        %v5516 = vmul.f32 %v5415, %v5415
        %v5517 = vmul.f32 %v5418, %v5418
        %v5518 = vmul.f32 %v5421, %v5421
        %v5519 = vmul.f32 %v5424, %v5424
        %v5520 = vmul.f32 %v5427, %v5427
        %v5521 = vmul.f32 %v5430, %v5430
        %v5522 = vmul.f32 %v5433, %v5433
        %v5523 = vmul.f32 %v5436, %v5436
        %v5524 = vmul.f32 %v5439, %v5439
        %v5525 = vmul.f32 %v5442, %v5442
        %v5526 = vmul.f32 %v5445, %v5445
        %v5527 = vmul.f32 %v5448, %v5448
        %v5528 = vmul.f32 %v5451, %v5451
        %v5529 = vmul.f32 %v5454, %v5454
        %v5530 = vmul.f32 %v5457, %v5457
        %v5531 = vmul.f32 %v5460, %v5460
        %v5532 = vsel %vm426, %v5516, 0.0
        %v5533 = vsel %vm426, %v5517, 0.0
        %v5534 = vadd.f32 %v5532, %v5533
        %v5535 = vsel %vm426, %v5518, 0.0
        %v5536 = vadd.f32 %v5534, %v5535
        %v5537 = vsel %vm426, %v5519, 0.0
        %v5538 = vadd.f32 %v5536, %v5537
        %v5539 = vsel %vm426, %v5520, 0.0
        %v5540 = vadd.f32 %v5538, %v5539
        %v5541 = vsel %vm426, %v5521, 0.0
        %v5542 = vadd.f32 %v5540, %v5541
        %v5543 = vsel %vm426, %v5522, 0.0
        %v5544 = vadd.f32 %v5542, %v5543
        %v5545 = vsel %vm426, %v5523, 0.0
        %v5546 = vadd.f32 %v5544, %v5545
        %v5547 = vsel %vm426, %v5524, 0.0
        %v5548 = vadd.f32 %v5546, %v5547
        %v5549 = vsel %vm426, %v5525, 0.0
        %v5550 = vadd.f32 %v5548, %v5549
        %v5551 = vsel %vm426, %v5526, 0.0
        %v5552 = vadd.f32 %v5550, %v5551
        %v5553 = vsel %vm426, %v5527, 0.0
        %v5554 = vadd.f32 %v5552, %v5553
        %v5555 = vsel %vm426, %v5528, 0.0
        %v5556 = vadd.f32 %v5554, %v5555
        %v5557 = vsel %vm426, %v5529, 0.0
        %v5558 = vadd.f32 %v5556, %v5557
        %v5559 = vsel %vm426, %v5530, 0.0
        %v5560 = vadd.f32 %v5558, %v5559
        %v5561 = vsel %vm426, %v5531, 0.0
        %v5562 = vadd.f32 %v5560, %v5561
        %v5563 = vrot.slane %v5562, 4
        %v5564 = vadd.f32 %v5562, %v5563
        %v5565 = vrot.slane %v5564, 2
        %v5566 = vadd.f32 %v5564, %v5565
        %v5567 = vrot.slane %v5566, 1
        %v5568 = vadd.f32 %v5566, %v5567
        %v5569 = vadd.f32 %v4523, %v5568
        %v5570 = vmul.f32 %v5515, 0.00390625
        %v5571 = vmul.f32 %v5569, 0.00390625
        %v5572 = vmul.f32 %v5570, %v5570
        %v5573 = vsub.f32 %v5571, %v5572
        %v5574 = vadd.f32 %v5573, 1e-05
        %v5575 = vrsqrt.pop %v5574
        %v5576 = vmul.f32 %v5575, %v5574
        %v5577 = vmul.f32 %v5576, %v5575
        %v5578 = vmul.f32 0.5, %v5577
        %v5579 = vsub.f32 1.5, %v5578
        %v5580 = vmul.f32 %v5575, %v5579
        %vm5581 = vweird.f32 %v5574
        %vm5582 = vweird.f32 %v5575
        %vm5583 = vmor %vm5581, %vm5582
        %v5584 = vsel %vm5583, %v5575, %v5580
        %5586 = vrot.lane.b32.xlu0 %v3473, 16
        %v5587 = vpop.permute.xlu0 %5586
        %v5589 = vmul.f32 %v495, %v5587
        %5591 = vrot.lane.b32.xlu0 %v5584, 16
        %v5592 = vpop.permute.xlu0 %5591
        %v5594 = vmul.f32 %v5589, %v5592
        %v5595 = vmul.f32 %v3473, %v5570
        %v5596 = vmul.f32 %v5595, %v5584
        %v5597 = vsub.f32 %v3474, %v5596
        %5599 = vrot.lane.b32.xlu0 %v5597, 16
        %v5600 = vpop.permute.xlu0 %5599
        %v5602 = vmul.f32 %v495, %v5600
        %v5603 = vadd.f32 %v5602, %v2695
        %v5604 = vld [vmem:[#allocation4] sm:$0xff]
        %v5605 = vld [vmem:[#allocation4 + $0x8] sm:$0xff]
        %v5606 = vld [vmem:[#allocation4 + $0x10] sm:$0xff]
        %v5607 = vld [vmem:[#allocation4 + $0x18] sm:$0xff]
        %v5608 = vld [vmem:[#allocation4 + $0x20] sm:$0xff]
        %v5609 = vld [vmem:[#allocation4 + $0x28] sm:$0xff]
        %v5610 = vld [vmem:[#allocation4 + $0x30] sm:$0xff]
        %v5611 = vld [vmem:[#allocation4 + $0x38] sm:$0xff]
        %v5612 = vld [vmem:[#allocation4 + $0x40] sm:$0xff]
        %v5613 = vld [vmem:[#allocation4 + $0x48] sm:$0xff]
        %v5614 = vld [vmem:[#allocation4 + $0x50] sm:$0xff]
        %v5615 = vld [vmem:[#allocation4 + $0x58] sm:$0xff]
        %v5616 = vld [vmem:[#allocation4 + $0x60] sm:$0xff]
        %v5617 = vld [vmem:[#allocation4 + $0x68] sm:$0xff]
        %v5618 = vld [vmem:[#allocation4 + $0x70] sm:$0xff]
        %v5619 = vld [vmem:[#allocation4 + $0x78] sm:$0xff]
        %v5620 = vld [vmem:[#allocation4 + $0x80] sm:$0xff]
        %v5621 = vld [vmem:[#allocation4 + $0x88] sm:$0xff]
        %v5622 = vld [vmem:[#allocation4 + $0x90] sm:$0xff]
        %v5623 = vld [vmem:[#allocation4 + $0x98] sm:$0xff]
        %v5624 = vld [vmem:[#allocation4 + $0xa0] sm:$0xff]
        %v5625 = vld [vmem:[#allocation4 + $0xa8] sm:$0xff]
        %v5626 = vld [vmem:[#allocation4 + $0xb0] sm:$0xff]
        %v5627 = vld [vmem:[#allocation4 + $0xb8] sm:$0xff]
        %v5628 = vld [vmem:[#allocation4 + $0xc0] sm:$0xff]
        %v5629 = vld [vmem:[#allocation4 + $0xc8] sm:$0xff]
        %v5630 = vld [vmem:[#allocation4 + $0xd0] sm:$0xff]
        %v5631 = vld [vmem:[#allocation4 + $0xd8] sm:$0xff]
        %v5632 = vld [vmem:[#allocation4 + $0xe0] sm:$0xff]
        %v5633 = vld [vmem:[#allocation4 + $0xe8] sm:$0xff]
        %v5634 = vld [vmem:[#allocation4 + $0xf0] sm:$0xff]
        %v5635 = vld [vmem:[#allocation4 + $0xf8] sm:$0xff]
        %v5637 = vperm.slane %v5594, 0
        %5638 = vrot.lane.b32.xlu0 %v5637, 112
        %v5639 = vpop.permute.xlu0 %5638
        %v5641 = vmul.f32 %v5604, %v5639
        %v5642 = vmul.f32 %v5605, %v5639
        %v5643 = vmul.f32 %v5606, %v5639
        %v5644 = vmul.f32 %v5607, %v5639
        %v5645 = vmul.f32 %v5608, %v5639
        %v5646 = vmul.f32 %v5609, %v5639
        %v5647 = vmul.f32 %v5610, %v5639
        %v5648 = vmul.f32 %v5611, %v5639
        %v5649 = vmul.f32 %v5612, %v5639
        %v5650 = vmul.f32 %v5613, %v5639
        %v5651 = vmul.f32 %v5614, %v5639
        %v5652 = vmul.f32 %v5615, %v5639
        %v5653 = vmul.f32 %v5616, %v5639
        %v5654 = vmul.f32 %v5617, %v5639
        %v5655 = vmul.f32 %v5618, %v5639
        %v5656 = vmul.f32 %v5619, %v5639
        %v5657 = vmul.f32 %v5620, %v5639
        %v5658 = vmul.f32 %v5621, %v5639
        %v5659 = vmul.f32 %v5622, %v5639
        %v5660 = vmul.f32 %v5623, %v5639
        %v5661 = vmul.f32 %v5624, %v5639
        %v5662 = vmul.f32 %v5625, %v5639
        %v5663 = vmul.f32 %v5626, %v5639
        %v5664 = vmul.f32 %v5627, %v5639
        %v5665 = vmul.f32 %v5628, %v5639
        %v5666 = vmul.f32 %v5629, %v5639
        %v5667 = vmul.f32 %v5630, %v5639
        %v5668 = vmul.f32 %v5631, %v5639
        %v5669 = vmul.f32 %v5632, %v5639
        %v5670 = vmul.f32 %v5633, %v5639
        %v5671 = vmul.f32 %v5634, %v5639
        %v5672 = vmul.f32 %v5635, %v5639
        %v5674 = vperm.slane %v5603, 0
        %5675 = vrot.lane.b32.xlu0 %v5674, 112
        %v5676 = vpop.permute.xlu0 %5675
        %v5678 = vadd.f32 %v5641, %v5676
        %v5679 = vadd.f32 %v5642, %v5676
        %v5680 = vadd.f32 %v5643, %v5676
        %v5681 = vadd.f32 %v5644, %v5676
        %v5682 = vadd.f32 %v5645, %v5676
        %v5683 = vadd.f32 %v5646, %v5676
        %v5684 = vadd.f32 %v5647, %v5676
        %v5685 = vadd.f32 %v5648, %v5676
        %v5686 = vadd.f32 %v5649, %v5676
        %v5687 = vadd.f32 %v5650, %v5676
        %v5688 = vadd.f32 %v5651, %v5676
        %v5689 = vadd.f32 %v5652, %v5676
        %v5690 = vadd.f32 %v5653, %v5676
        %v5691 = vadd.f32 %v5654, %v5676
        %v5692 = vadd.f32 %v5655, %v5676
        %v5693 = vadd.f32 %v5656, %v5676
        %v5694 = vadd.f32 %v5657, %v5676
        %v5695 = vadd.f32 %v5658, %v5676
        %v5696 = vadd.f32 %v5659, %v5676
        %v5697 = vadd.f32 %v5660, %v5676
        %v5698 = vadd.f32 %v5661, %v5676
        %v5699 = vadd.f32 %v5662, %v5676
        %v5700 = vadd.f32 %v5663, %v5676
        %v5701 = vadd.f32 %v5664, %v5676
        %v5702 = vadd.f32 %v5665, %v5676
        %v5703 = vadd.f32 %v5666, %v5676
        %v5704 = vadd.f32 %v5667, %v5676
        %v5705 = vadd.f32 %v5668, %v5676
        %v5706 = vadd.f32 %v5669, %v5676
        %v5707 = vadd.f32 %v5670, %v5676
        %v5708 = vadd.f32 %v5671, %v5676
        %v5709 = vadd.f32 %v5672, %v5676
        %v5710 = vxor.u32 %v5678, 2147483648
        %v5711 = vxor.u32 %v5679, 2147483648
        %v5712 = vxor.u32 %v5680, 2147483648
        %v5713 = vxor.u32 %v5681, 2147483648
        %v5714 = vxor.u32 %v5682, 2147483648
        %v5715 = vxor.u32 %v5683, 2147483648
        %v5716 = vxor.u32 %v5684, 2147483648
        %v5717 = vxor.u32 %v5685, 2147483648
        %v5718 = vxor.u32 %v5686, 2147483648
        %v5719 = vxor.u32 %v5687, 2147483648
        %v5720 = vxor.u32 %v5688, 2147483648
        %v5721 = vxor.u32 %v5689, 2147483648
        %v5722 = vxor.u32 %v5690, 2147483648
        %v5723 = vxor.u32 %v5691, 2147483648
        %v5724 = vxor.u32 %v5692, 2147483648
        %v5725 = vxor.u32 %v5693, 2147483648
        %v5726 = vxor.u32 %v5694, 2147483648
        %v5727 = vxor.u32 %v5695, 2147483648
        %v5728 = vxor.u32 %v5696, 2147483648
        %v5729 = vxor.u32 %v5697, 2147483648
        %v5730 = vxor.u32 %v5698, 2147483648
        %v5731 = vxor.u32 %v5699, 2147483648
        %v5732 = vxor.u32 %v5700, 2147483648
        %v5733 = vxor.u32 %v5701, 2147483648
        %v5734 = vxor.u32 %v5702, 2147483648
        %v5735 = vxor.u32 %v5703, 2147483648
        %v5736 = vxor.u32 %v5704, 2147483648
        %v5737 = vxor.u32 %v5705, 2147483648
        %v5738 = vxor.u32 %v5706, 2147483648
        %v5739 = vxor.u32 %v5707, 2147483648
        %v5740 = vxor.u32 %v5708, 2147483648
        %v5741 = vxor.u32 %v5709, 2147483648
        %v5742 = vmul.f32 %v5710, 1.442695
        %v5743 = vpow.pop %v5742
        %v5744 = vmul.f32 %v5711, 1.442695
        %v5745 = vpow.pop %v5744
        %v5746 = vmul.f32 %v5712, 1.442695
        %v5747 = vpow.pop %v5746
        %v5748 = vmul.f32 %v5713, 1.442695
        %v5749 = vpow.pop %v5748
        %v5750 = vmul.f32 %v5714, 1.442695
        %v5751 = vpow.pop %v5750
        %v5752 = vmul.f32 %v5715, 1.442695
        %v5753 = vpow.pop %v5752
        %v5754 = vmul.f32 %v5716, 1.442695
        %v5755 = vpow.pop %v5754
        %v5756 = vmul.f32 %v5717, 1.442695
        %v5757 = vpow.pop %v5756
        %v5758 = vmul.f32 %v5718, 1.442695
        %v5759 = vpow.pop %v5758
        %v5760 = vmul.f32 %v5719, 1.442695
        %v5761 = vpow.pop %v5760
        %v5762 = vmul.f32 %v5720, 1.442695
        %v5763 = vpow.pop %v5762
        %v5764 = vmul.f32 %v5721, 1.442695
        %v5765 = vpow.pop %v5764
        %v5766 = vmul.f32 %v5722, 1.442695
        %v5767 = vpow.pop %v5766
        %v5768 = vmul.f32 %v5723, 1.442695
        %v5769 = vpow.pop %v5768
        %v5770 = vmul.f32 %v5724, 1.442695
        %v5771 = vpow.pop %v5770
        %v5772 = vmul.f32 %v5725, 1.442695
        %v5773 = vpow.pop %v5772
        %v5774 = vmul.f32 %v5726, 1.442695
        %v5775 = vpow.pop %v5774
        %v5776 = vmul.f32 %v5727, 1.442695
        %v5777 = vpow.pop %v5776
        %v5778 = vmul.f32 %v5728, 1.442695
        %v5779 = vpow.pop %v5778
        %v5780 = vmul.f32 %v5729, 1.442695
        %v5781 = vpow.pop %v5780
        %v5782 = vmul.f32 %v5730, 1.442695
        %v5783 = vpow.pop %v5782
        %v5784 = vmul.f32 %v5731, 1.442695
        %v5785 = vpow.pop %v5784
        %v5786 = vmul.f32 %v5732, 1.442695
        %v5787 = vpow.pop %v5786
        %v5788 = vmul.f32 %v5733, 1.442695
        %v5789 = vpow.pop %v5788
        %v5790 = vmul.f32 %v5734, 1.442695
        %v5791 = vpow.pop %v5790
        %v5792 = vmul.f32 %v5735, 1.442695
        %v5793 = vpow.pop %v5792
        %v5794 = vmul.f32 %v5736, 1.442695
        %v5795 = vpow.pop %v5794
        %v5796 = vmul.f32 %v5737, 1.442695
        %v5797 = vpow.pop %v5796
        %v5798 = vmul.f32 %v5738, 1.442695
        %v5799 = vpow.pop %v5798
        %v5800 = vmul.f32 %v5739, 1.442695
        %v5801 = vpow.pop %v5800
        %v5802 = vmul.f32 %v5740, 1.442695
        %v5803 = vpow.pop %v5802
        %v5804 = vmul.f32 %v5741, 1.442695
        %v5805 = vpow.pop %v5804
        %v5806 = vadd.f32 %v5743, 1.0
        %v5807 = vadd.f32 %v5745, 1.0
        %v5808 = vadd.f32 %v5747, 1.0
        %v5809 = vadd.f32 %v5749, 1.0
        %v5810 = vadd.f32 %v5751, 1.0
        %v5811 = vadd.f32 %v5753, 1.0
        %v5812 = vadd.f32 %v5755, 1.0
        %v5813 = vadd.f32 %v5757, 1.0
        %v5814 = vadd.f32 %v5759, 1.0
        %v5815 = vadd.f32 %v5761, 1.0
        %v5816 = vadd.f32 %v5763, 1.0
        %v5817 = vadd.f32 %v5765, 1.0
        %v5818 = vadd.f32 %v5767, 1.0
        %v5819 = vadd.f32 %v5769, 1.0
        %v5820 = vadd.f32 %v5771, 1.0
        %v5821 = vadd.f32 %v5773, 1.0
        %v5822 = vadd.f32 %v5775, 1.0
        %v5823 = vadd.f32 %v5777, 1.0
        %v5824 = vadd.f32 %v5779, 1.0
        %v5825 = vadd.f32 %v5781, 1.0
        %v5826 = vadd.f32 %v5783, 1.0
        %v5827 = vadd.f32 %v5785, 1.0
        %v5828 = vadd.f32 %v5787, 1.0
        %v5829 = vadd.f32 %v5789, 1.0
        %v5830 = vadd.f32 %v5791, 1.0
        %v5831 = vadd.f32 %v5793, 1.0
        %v5832 = vadd.f32 %v5795, 1.0
        %v5833 = vadd.f32 %v5797, 1.0
        %v5834 = vadd.f32 %v5799, 1.0
        %v5835 = vadd.f32 %v5801, 1.0
        %v5836 = vadd.f32 %v5803, 1.0
        %v5837 = vadd.f32 %v5805, 1.0
        %v5838 = vrcp.pop %v5806
        %v5839 = vmul.f32 %v5806, %v5838
        %v5840 = vsub.f32 1.0, %v5839
        %v5841 = vmul.f32 %v5838, %v5840
        %v5842 = vadd.f32 %v5838, %v5841
        %vm5843 = vweird.f32 %v5806
        %vm5844 = vweird.f32 %v5838
        %vm5845 = vmor %vm5843, %vm5844
        %v5846 = vsel %vm5845, %v5838, %v5842
        %v5847 = vand.u32 2147483647, %v5806
        %vm5848 = vcmp.eq.f32.partialorder %v5847, 8.507059e+37
        %v5849 = vand.u32 %v5806, 2147483648
        %v5850 = vor.u32 1.1754944e-38, %v5849
        %v5851 = vsel %vm5848, %v5850, %v5846
        %v5852 = vmul.f32 1.0, %v5851
        %v5853 = vrcp.pop %v5807
        %v5854 = vmul.f32 %v5807, %v5853
        %v5855 = vsub.f32 1.0, %v5854
        %v5856 = vmul.f32 %v5853, %v5855
        %v5857 = vadd.f32 %v5853, %v5856
        %vm5858 = vweird.f32 %v5807
        %vm5859 = vweird.f32 %v5853
        %vm5860 = vmor %vm5858, %vm5859
        %v5861 = vsel %vm5860, %v5853, %v5857
        %v5862 = vand.u32 2147483647, %v5807
        %vm5863 = vcmp.eq.f32.partialorder %v5862, 8.507059e+37
        %v5864 = vand.u32 %v5807, 2147483648
        %v5865 = vor.u32 1.1754944e-38, %v5864
        %v5866 = vsel %vm5863, %v5865, %v5861
        %v5867 = vmul.f32 1.0, %v5866
        %v5868 = vrcp.pop %v5808
        %v5869 = vmul.f32 %v5808, %v5868
        %v5870 = vsub.f32 1.0, %v5869
        %v5871 = vmul.f32 %v5868, %v5870
        %v5872 = vadd.f32 %v5868, %v5871
        %vm5873 = vweird.f32 %v5808
        %vm5874 = vweird.f32 %v5868
        %vm5875 = vmor %vm5873, %vm5874
        %v5876 = vsel %vm5875, %v5868, %v5872
        %v5877 = vand.u32 2147483647, %v5808
        %vm5878 = vcmp.eq.f32.partialorder %v5877, 8.507059e+37
        %v5879 = vand.u32 %v5808, 2147483648
        %v5880 = vor.u32 1.1754944e-38, %v5879
        %v5881 = vsel %vm5878, %v5880, %v5876
        %v5882 = vmul.f32 1.0, %v5881
        %v5883 = vrcp.pop %v5809
        %v5884 = vmul.f32 %v5809, %v5883
        %v5885 = vsub.f32 1.0, %v5884
        %v5886 = vmul.f32 %v5883, %v5885
        %v5887 = vadd.f32 %v5883, %v5886
        %vm5888 = vweird.f32 %v5809
        %vm5889 = vweird.f32 %v5883
        %vm5890 = vmor %vm5888, %vm5889
        %v5891 = vsel %vm5890, %v5883, %v5887
        %v5892 = vand.u32 2147483647, %v5809
        %vm5893 = vcmp.eq.f32.partialorder %v5892, 8.507059e+37
        %v5894 = vand.u32 %v5809, 2147483648
        %v5895 = vor.u32 1.1754944e-38, %v5894
        %v5896 = vsel %vm5893, %v5895, %v5891
        %v5897 = vmul.f32 1.0, %v5896
        %v5898 = vrcp.pop %v5810
        %v5899 = vmul.f32 %v5810, %v5898
        %v5900 = vsub.f32 1.0, %v5899
        %v5901 = vmul.f32 %v5898, %v5900
        %v5902 = vadd.f32 %v5898, %v5901
        %vm5903 = vweird.f32 %v5810
        %vm5904 = vweird.f32 %v5898
        %vm5905 = vmor %vm5903, %vm5904
        %v5906 = vsel %vm5905, %v5898, %v5902
        %v5907 = vand.u32 2147483647, %v5810
        %vm5908 = vcmp.eq.f32.partialorder %v5907, 8.507059e+37
        %v5909 = vand.u32 %v5810, 2147483648
        %v5910 = vor.u32 1.1754944e-38, %v5909
        %v5911 = vsel %vm5908, %v5910, %v5906
        %v5912 = vmul.f32 1.0, %v5911
        %v5913 = vrcp.pop %v5811
        %v5914 = vmul.f32 %v5811, %v5913
        %v5915 = vsub.f32 1.0, %v5914
        %v5916 = vmul.f32 %v5913, %v5915
        %v5917 = vadd.f32 %v5913, %v5916
        %vm5918 = vweird.f32 %v5811
        %vm5919 = vweird.f32 %v5913
        %vm5920 = vmor %vm5918, %vm5919
        %v5921 = vsel %vm5920, %v5913, %v5917
        %v5922 = vand.u32 2147483647, %v5811
        %vm5923 = vcmp.eq.f32.partialorder %v5922, 8.507059e+37
        %v5924 = vand.u32 %v5811, 2147483648
        %v5925 = vor.u32 1.1754944e-38, %v5924
        %v5926 = vsel %vm5923, %v5925, %v5921
        %v5927 = vmul.f32 1.0, %v5926
        %v5928 = vrcp.pop %v5812
        %v5929 = vmul.f32 %v5812, %v5928
        %v5930 = vsub.f32 1.0, %v5929
        %v5931 = vmul.f32 %v5928, %v5930
        %v5932 = vadd.f32 %v5928, %v5931
        %vm5933 = vweird.f32 %v5812
        %vm5934 = vweird.f32 %v5928
        %vm5935 = vmor %vm5933, %vm5934
        %v5936 = vsel %vm5935, %v5928, %v5932
        %v5937 = vand.u32 2147483647, %v5812
        %vm5938 = vcmp.eq.f32.partialorder %v5937, 8.507059e+37
        %v5939 = vand.u32 %v5812, 2147483648
        %v5940 = vor.u32 1.1754944e-38, %v5939
        %v5941 = vsel %vm5938, %v5940, %v5936
        %v5942 = vmul.f32 1.0, %v5941
        %v5943 = vrcp.pop %v5813
        %v5944 = vmul.f32 %v5813, %v5943
        %v5945 = vsub.f32 1.0, %v5944
        %v5946 = vmul.f32 %v5943, %v5945
        %v5947 = vadd.f32 %v5943, %v5946
        %vm5948 = vweird.f32 %v5813
        %vm5949 = vweird.f32 %v5943
        %vm5950 = vmor %vm5948, %vm5949
        %v5951 = vsel %vm5950, %v5943, %v5947
        %v5952 = vand.u32 2147483647, %v5813
        %vm5953 = vcmp.eq.f32.partialorder %v5952, 8.507059e+37
        %v5954 = vand.u32 %v5813, 2147483648
        %v5955 = vor.u32 1.1754944e-38, %v5954
        %v5956 = vsel %vm5953, %v5955, %v5951
        %v5957 = vmul.f32 1.0, %v5956
        %v5958 = vrcp.pop %v5814
        %v5959 = vmul.f32 %v5814, %v5958
        %v5960 = vsub.f32 1.0, %v5959
        %v5961 = vmul.f32 %v5958, %v5960
        %v5962 = vadd.f32 %v5958, %v5961
        %vm5963 = vweird.f32 %v5814
        %vm5964 = vweird.f32 %v5958
        %vm5965 = vmor %vm5963, %vm5964
        %v5966 = vsel %vm5965, %v5958, %v5962
        %v5967 = vand.u32 2147483647, %v5814
        %vm5968 = vcmp.eq.f32.partialorder %v5967, 8.507059e+37
        %v5969 = vand.u32 %v5814, 2147483648
        %v5970 = vor.u32 1.1754944e-38, %v5969
        %v5971 = vsel %vm5968, %v5970, %v5966
        %v5972 = vmul.f32 1.0, %v5971
        %v5973 = vrcp.pop %v5815
        %v5974 = vmul.f32 %v5815, %v5973
        %v5975 = vsub.f32 1.0, %v5974
        %v5976 = vmul.f32 %v5973, %v5975
        %v5977 = vadd.f32 %v5973, %v5976
        %vm5978 = vweird.f32 %v5815
        %vm5979 = vweird.f32 %v5973
        %vm5980 = vmor %vm5978, %vm5979
        %v5981 = vsel %vm5980, %v5973, %v5977
        %v5982 = vand.u32 2147483647, %v5815
        %vm5983 = vcmp.eq.f32.partialorder %v5982, 8.507059e+37
        %v5984 = vand.u32 %v5815, 2147483648
        %v5985 = vor.u32 1.1754944e-38, %v5984
        %v5986 = vsel %vm5983, %v5985, %v5981
        %v5987 = vmul.f32 1.0, %v5986
        %v5988 = vrcp.pop %v5816
        %v5989 = vmul.f32 %v5816, %v5988
        %v5990 = vsub.f32 1.0, %v5989
        %v5991 = vmul.f32 %v5988, %v5990
        %v5992 = vadd.f32 %v5988, %v5991
        %vm5993 = vweird.f32 %v5816
        %vm5994 = vweird.f32 %v5988
        %vm5995 = vmor %vm5993, %vm5994
        %v5996 = vsel %vm5995, %v5988, %v5992
        %v5997 = vand.u32 2147483647, %v5816
        %vm5998 = vcmp.eq.f32.partialorder %v5997, 8.507059e+37
        %v5999 = vand.u32 %v5816, 2147483648
        %v6000 = vor.u32 1.1754944e-38, %v5999
        %v6001 = vsel %vm5998, %v6000, %v5996
        %v6002 = vmul.f32 1.0, %v6001
        %v6003 = vrcp.pop %v5817
        %v6004 = vmul.f32 %v5817, %v6003
        %v6005 = vsub.f32 1.0, %v6004
        %v6006 = vmul.f32 %v6003, %v6005
        %v6007 = vadd.f32 %v6003, %v6006
        %vm6008 = vweird.f32 %v5817
        %vm6009 = vweird.f32 %v6003
        %vm6010 = vmor %vm6008, %vm6009
        %v6011 = vsel %vm6010, %v6003, %v6007
        %v6012 = vand.u32 2147483647, %v5817
        %vm6013 = vcmp.eq.f32.partialorder %v6012, 8.507059e+37
        %v6014 = vand.u32 %v5817, 2147483648
        %v6015 = vor.u32 1.1754944e-38, %v6014
        %v6016 = vsel %vm6013, %v6015, %v6011
        %v6017 = vmul.f32 1.0, %v6016
        %v6018 = vrcp.pop %v5818
        %v6019 = vmul.f32 %v5818, %v6018
        %v6020 = vsub.f32 1.0, %v6019
        %v6021 = vmul.f32 %v6018, %v6020
        %v6022 = vadd.f32 %v6018, %v6021
        %vm6023 = vweird.f32 %v5818
        %vm6024 = vweird.f32 %v6018
        %vm6025 = vmor %vm6023, %vm6024
        %v6026 = vsel %vm6025, %v6018, %v6022
        %v6027 = vand.u32 2147483647, %v5818
        %vm6028 = vcmp.eq.f32.partialorder %v6027, 8.507059e+37
        %v6029 = vand.u32 %v5818, 2147483648
        %v6030 = vor.u32 1.1754944e-38, %v6029
        %v6031 = vsel %vm6028, %v6030, %v6026
        %v6032 = vmul.f32 1.0, %v6031
        %v6033 = vrcp.pop %v5819
        %v6034 = vmul.f32 %v5819, %v6033
        %v6035 = vsub.f32 1.0, %v6034
        %v6036 = vmul.f32 %v6033, %v6035
        %v6037 = vadd.f32 %v6033, %v6036
        %vm6038 = vweird.f32 %v5819
        %vm6039 = vweird.f32 %v6033
        %vm6040 = vmor %vm6038, %vm6039
        %v6041 = vsel %vm6040, %v6033, %v6037
        %v6042 = vand.u32 2147483647, %v5819
        %vm6043 = vcmp.eq.f32.partialorder %v6042, 8.507059e+37
        %v6044 = vand.u32 %v5819, 2147483648
        %v6045 = vor.u32 1.1754944e-38, %v6044
        %v6046 = vsel %vm6043, %v6045, %v6041
        %v6047 = vmul.f32 1.0, %v6046
        %v6048 = vrcp.pop %v5820
        %v6049 = vmul.f32 %v5820, %v6048
        %v6050 = vsub.f32 1.0, %v6049
        %v6051 = vmul.f32 %v6048, %v6050
        %v6052 = vadd.f32 %v6048, %v6051
        %vm6053 = vweird.f32 %v5820
        %vm6054 = vweird.f32 %v6048
        %vm6055 = vmor %vm6053, %vm6054
        %v6056 = vsel %vm6055, %v6048, %v6052
        %v6057 = vand.u32 2147483647, %v5820
        %vm6058 = vcmp.eq.f32.partialorder %v6057, 8.507059e+37
        %v6059 = vand.u32 %v5820, 2147483648
        %v6060 = vor.u32 1.1754944e-38, %v6059
        %v6061 = vsel %vm6058, %v6060, %v6056
        %v6062 = vmul.f32 1.0, %v6061
        %v6063 = vrcp.pop %v5821
        %v6064 = vmul.f32 %v5821, %v6063
        %v6065 = vsub.f32 1.0, %v6064
        %v6066 = vmul.f32 %v6063, %v6065
        %v6067 = vadd.f32 %v6063, %v6066
        %vm6068 = vweird.f32 %v5821
        %vm6069 = vweird.f32 %v6063
        %vm6070 = vmor %vm6068, %vm6069
        %v6071 = vsel %vm6070, %v6063, %v6067
        %v6072 = vand.u32 2147483647, %v5821
        %vm6073 = vcmp.eq.f32.partialorder %v6072, 8.507059e+37
        %v6074 = vand.u32 %v5821, 2147483648
        %v6075 = vor.u32 1.1754944e-38, %v6074
        %v6076 = vsel %vm6073, %v6075, %v6071
        %v6077 = vmul.f32 1.0, %v6076
        %v6078 = vrcp.pop %v5822
        %v6079 = vmul.f32 %v5822, %v6078
        %v6080 = vsub.f32 1.0, %v6079
        %v6081 = vmul.f32 %v6078, %v6080
        %v6082 = vadd.f32 %v6078, %v6081
        %vm6083 = vweird.f32 %v5822
        %vm6084 = vweird.f32 %v6078
        %vm6085 = vmor %vm6083, %vm6084
        %v6086 = vsel %vm6085, %v6078, %v6082
        %v6087 = vand.u32 2147483647, %v5822
        %vm6088 = vcmp.eq.f32.partialorder %v6087, 8.507059e+37
        %v6089 = vand.u32 %v5822, 2147483648
        %v6090 = vor.u32 1.1754944e-38, %v6089
        %v6091 = vsel %vm6088, %v6090, %v6086
        %v6092 = vmul.f32 1.0, %v6091
        %v6093 = vrcp.pop %v5823
        %v6094 = vmul.f32 %v5823, %v6093
        %v6095 = vsub.f32 1.0, %v6094
        %v6096 = vmul.f32 %v6093, %v6095
        %v6097 = vadd.f32 %v6093, %v6096
        %vm6098 = vweird.f32 %v5823
        %vm6099 = vweird.f32 %v6093
        %vm6100 = vmor %vm6098, %vm6099
        %v6101 = vsel %vm6100, %v6093, %v6097
        %v6102 = vand.u32 2147483647, %v5823
        %vm6103 = vcmp.eq.f32.partialorder %v6102, 8.507059e+37
        %v6104 = vand.u32 %v5823, 2147483648
        %v6105 = vor.u32 1.1754944e-38, %v6104
        %v6106 = vsel %vm6103, %v6105, %v6101
        %v6107 = vmul.f32 1.0, %v6106
        %v6108 = vrcp.pop %v5824
        %v6109 = vmul.f32 %v5824, %v6108
        %v6110 = vsub.f32 1.0, %v6109
        %v6111 = vmul.f32 %v6108, %v6110
        %v6112 = vadd.f32 %v6108, %v6111
        %vm6113 = vweird.f32 %v5824
        %vm6114 = vweird.f32 %v6108
        %vm6115 = vmor %vm6113, %vm6114
        %v6116 = vsel %vm6115, %v6108, %v6112
        %v6117 = vand.u32 2147483647, %v5824
        %vm6118 = vcmp.eq.f32.partialorder %v6117, 8.507059e+37
        %v6119 = vand.u32 %v5824, 2147483648
        %v6120 = vor.u32 1.1754944e-38, %v6119
        %v6121 = vsel %vm6118, %v6120, %v6116
        %v6122 = vmul.f32 1.0, %v6121
        %v6123 = vrcp.pop %v5825
        %v6124 = vmul.f32 %v5825, %v6123
        %v6125 = vsub.f32 1.0, %v6124
        %v6126 = vmul.f32 %v6123, %v6125
        %v6127 = vadd.f32 %v6123, %v6126
        %vm6128 = vweird.f32 %v5825
        %vm6129 = vweird.f32 %v6123
        %vm6130 = vmor %vm6128, %vm6129
        %v6131 = vsel %vm6130, %v6123, %v6127
        %v6132 = vand.u32 2147483647, %v5825
        %vm6133 = vcmp.eq.f32.partialorder %v6132, 8.507059e+37
        %v6134 = vand.u32 %v5825, 2147483648
        %v6135 = vor.u32 1.1754944e-38, %v6134
        %v6136 = vsel %vm6133, %v6135, %v6131
        %v6137 = vmul.f32 1.0, %v6136
        %v6138 = vrcp.pop %v5826
        %v6139 = vmul.f32 %v5826, %v6138
        %v6140 = vsub.f32 1.0, %v6139
        %v6141 = vmul.f32 %v6138, %v6140
        %v6142 = vadd.f32 %v6138, %v6141
        %vm6143 = vweird.f32 %v5826
        %vm6144 = vweird.f32 %v6138
        %vm6145 = vmor %vm6143, %vm6144
        %v6146 = vsel %vm6145, %v6138, %v6142
        %v6147 = vand.u32 2147483647, %v5826
        %vm6148 = vcmp.eq.f32.partialorder %v6147, 8.507059e+37
        %v6149 = vand.u32 %v5826, 2147483648
        %v6150 = vor.u32 1.1754944e-38, %v6149
        %v6151 = vsel %vm6148, %v6150, %v6146
        %v6152 = vmul.f32 1.0, %v6151
        %v6153 = vrcp.pop %v5827
        %v6154 = vmul.f32 %v5827, %v6153
        %v6155 = vsub.f32 1.0, %v6154
        %v6156 = vmul.f32 %v6153, %v6155
        %v6157 = vadd.f32 %v6153, %v6156
        %vm6158 = vweird.f32 %v5827
        %vm6159 = vweird.f32 %v6153
        %vm6160 = vmor %vm6158, %vm6159
        %v6161 = vsel %vm6160, %v6153, %v6157
        %v6162 = vand.u32 2147483647, %v5827
        %vm6163 = vcmp.eq.f32.partialorder %v6162, 8.507059e+37
        %v6164 = vand.u32 %v5827, 2147483648
        %v6165 = vor.u32 1.1754944e-38, %v6164
        %v6166 = vsel %vm6163, %v6165, %v6161
        %v6167 = vmul.f32 1.0, %v6166
        %v6168 = vrcp.pop %v5828
        %v6169 = vmul.f32 %v5828, %v6168
        %v6170 = vsub.f32 1.0, %v6169
        %v6171 = vmul.f32 %v6168, %v6170
        %v6172 = vadd.f32 %v6168, %v6171
        %vm6173 = vweird.f32 %v5828
        %vm6174 = vweird.f32 %v6168
        %vm6175 = vmor %vm6173, %vm6174
        %v6176 = vsel %vm6175, %v6168, %v6172
        %v6177 = vand.u32 2147483647, %v5828
        %vm6178 = vcmp.eq.f32.partialorder %v6177, 8.507059e+37
        %v6179 = vand.u32 %v5828, 2147483648
        %v6180 = vor.u32 1.1754944e-38, %v6179
        %v6181 = vsel %vm6178, %v6180, %v6176
        %v6182 = vmul.f32 1.0, %v6181
        %v6183 = vrcp.pop %v5829
        %v6184 = vmul.f32 %v5829, %v6183
        %v6185 = vsub.f32 1.0, %v6184
        %v6186 = vmul.f32 %v6183, %v6185
        %v6187 = vadd.f32 %v6183, %v6186
        %vm6188 = vweird.f32 %v5829
        %vm6189 = vweird.f32 %v6183
        %vm6190 = vmor %vm6188, %vm6189
        %v6191 = vsel %vm6190, %v6183, %v6187
        %v6192 = vand.u32 2147483647, %v5829
        %vm6193 = vcmp.eq.f32.partialorder %v6192, 8.507059e+37
        %v6194 = vand.u32 %v5829, 2147483648
        %v6195 = vor.u32 1.1754944e-38, %v6194
        %v6196 = vsel %vm6193, %v6195, %v6191
        %v6197 = vmul.f32 1.0, %v6196
        %v6198 = vrcp.pop %v5830
        %v6199 = vmul.f32 %v5830, %v6198
        %v6200 = vsub.f32 1.0, %v6199
        %v6201 = vmul.f32 %v6198, %v6200
        %v6202 = vadd.f32 %v6198, %v6201
        %vm6203 = vweird.f32 %v5830
        %vm6204 = vweird.f32 %v6198
        %vm6205 = vmor %vm6203, %vm6204
        %v6206 = vsel %vm6205, %v6198, %v6202
        %v6207 = vand.u32 2147483647, %v5830
        %vm6208 = vcmp.eq.f32.partialorder %v6207, 8.507059e+37
        %v6209 = vand.u32 %v5830, 2147483648
        %v6210 = vor.u32 1.1754944e-38, %v6209
        %v6211 = vsel %vm6208, %v6210, %v6206
        %v6212 = vmul.f32 1.0, %v6211
        %v6213 = vrcp.pop %v5831
        %v6214 = vmul.f32 %v5831, %v6213
        %v6215 = vsub.f32 1.0, %v6214
        %v6216 = vmul.f32 %v6213, %v6215
        %v6217 = vadd.f32 %v6213, %v6216
        %vm6218 = vweird.f32 %v5831
        %vm6219 = vweird.f32 %v6213
        %vm6220 = vmor %vm6218, %vm6219
        %v6221 = vsel %vm6220, %v6213, %v6217
        %v6222 = vand.u32 2147483647, %v5831
        %vm6223 = vcmp.eq.f32.partialorder %v6222, 8.507059e+37
        %v6224 = vand.u32 %v5831, 2147483648
        %v6225 = vor.u32 1.1754944e-38, %v6224
        %v6226 = vsel %vm6223, %v6225, %v6221
        %v6227 = vmul.f32 1.0, %v6226
        %v6228 = vrcp.pop %v5832
        %v6229 = vmul.f32 %v5832, %v6228
        %v6230 = vsub.f32 1.0, %v6229
        %v6231 = vmul.f32 %v6228, %v6230
        %v6232 = vadd.f32 %v6228, %v6231
        %vm6233 = vweird.f32 %v5832
        %vm6234 = vweird.f32 %v6228
        %vm6235 = vmor %vm6233, %vm6234
        %v6236 = vsel %vm6235, %v6228, %v6232
        %v6237 = vand.u32 2147483647, %v5832
        %vm6238 = vcmp.eq.f32.partialorder %v6237, 8.507059e+37
        %v6239 = vand.u32 %v5832, 2147483648
        %v6240 = vor.u32 1.1754944e-38, %v6239
        %v6241 = vsel %vm6238, %v6240, %v6236
        %v6242 = vmul.f32 1.0, %v6241
        %v6243 = vrcp.pop %v5833
        %v6244 = vmul.f32 %v5833, %v6243
        %v6245 = vsub.f32 1.0, %v6244
        %v6246 = vmul.f32 %v6243, %v6245
        %v6247 = vadd.f32 %v6243, %v6246
        %vm6248 = vweird.f32 %v5833
        %vm6249 = vweird.f32 %v6243
        %vm6250 = vmor %vm6248, %vm6249
        %v6251 = vsel %vm6250, %v6243, %v6247
        %v6252 = vand.u32 2147483647, %v5833
        %vm6253 = vcmp.eq.f32.partialorder %v6252, 8.507059e+37
        %v6254 = vand.u32 %v5833, 2147483648
        %v6255 = vor.u32 1.1754944e-38, %v6254
        %v6256 = vsel %vm6253, %v6255, %v6251
        %v6257 = vmul.f32 1.0, %v6256
        %v6258 = vrcp.pop %v5834
        %v6259 = vmul.f32 %v5834, %v6258
        %v6260 = vsub.f32 1.0, %v6259
        %v6261 = vmul.f32 %v6258, %v6260
        %v6262 = vadd.f32 %v6258, %v6261
        %vm6263 = vweird.f32 %v5834
        %vm6264 = vweird.f32 %v6258
        %vm6265 = vmor %vm6263, %vm6264
        %v6266 = vsel %vm6265, %v6258, %v6262
        %v6267 = vand.u32 2147483647, %v5834
        %vm6268 = vcmp.eq.f32.partialorder %v6267, 8.507059e+37
        %v6269 = vand.u32 %v5834, 2147483648
        %v6270 = vor.u32 1.1754944e-38, %v6269
        %v6271 = vsel %vm6268, %v6270, %v6266
        %v6272 = vmul.f32 1.0, %v6271
        %v6273 = vrcp.pop %v5835
        %v6274 = vmul.f32 %v5835, %v6273
        %v6275 = vsub.f32 1.0, %v6274
        %v6276 = vmul.f32 %v6273, %v6275
        %v6277 = vadd.f32 %v6273, %v6276
        %vm6278 = vweird.f32 %v5835
        %vm6279 = vweird.f32 %v6273
        %vm6280 = vmor %vm6278, %vm6279
        %v6281 = vsel %vm6280, %v6273, %v6277
        %v6282 = vand.u32 2147483647, %v5835
        %vm6283 = vcmp.eq.f32.partialorder %v6282, 8.507059e+37
        %v6284 = vand.u32 %v5835, 2147483648
        %v6285 = vor.u32 1.1754944e-38, %v6284
        %v6286 = vsel %vm6283, %v6285, %v6281
        %v6287 = vmul.f32 1.0, %v6286
        %v6288 = vrcp.pop %v5836
        %v6289 = vmul.f32 %v5836, %v6288
        %v6290 = vsub.f32 1.0, %v6289
        %v6291 = vmul.f32 %v6288, %v6290
        %v6292 = vadd.f32 %v6288, %v6291
        %vm6293 = vweird.f32 %v5836
        %vm6294 = vweird.f32 %v6288
        %vm6295 = vmor %vm6293, %vm6294
        %v6296 = vsel %vm6295, %v6288, %v6292
        %v6297 = vand.u32 2147483647, %v5836
        %vm6298 = vcmp.eq.f32.partialorder %v6297, 8.507059e+37
        %v6299 = vand.u32 %v5836, 2147483648
        %v6300 = vor.u32 1.1754944e-38, %v6299
        %v6301 = vsel %vm6298, %v6300, %v6296
        %v6302 = vmul.f32 1.0, %v6301
        %v6303 = vrcp.pop %v5837
        %v6304 = vmul.f32 %v5837, %v6303
        %v6305 = vsub.f32 1.0, %v6304
        %v6306 = vmul.f32 %v6303, %v6305
        %v6307 = vadd.f32 %v6303, %v6306
        %vm6308 = vweird.f32 %v5837
        %vm6309 = vweird.f32 %v6303
        %vm6310 = vmor %vm6308, %vm6309
        %v6311 = vsel %vm6310, %v6303, %v6307
        %v6312 = vand.u32 2147483647, %v5837
        %vm6313 = vcmp.eq.f32.partialorder %v6312, 8.507059e+37
        %v6314 = vand.u32 %v5837, 2147483648
        %v6315 = vor.u32 1.1754944e-38, %v6314
        %v6316 = vsel %vm6313, %v6315, %v6311
        %v6317 = vmul.f32 1.0, %v6316
        %v6318 = vmul.f32 %v5678, %v5852
        %v6319 = vmul.f32 %v5679, %v5867
        %v6320 = vmul.f32 %v5680, %v5882
        %v6321 = vmul.f32 %v5681, %v5897
        %v6322 = vmul.f32 %v5682, %v5912
        %v6323 = vmul.f32 %v5683, %v5927
        %v6324 = vmul.f32 %v5684, %v5942
        %v6325 = vmul.f32 %v5685, %v5957
        %v6326 = vmul.f32 %v5686, %v5972
        %v6327 = vmul.f32 %v5687, %v5987
        %v6328 = vmul.f32 %v5688, %v6002
        %v6329 = vmul.f32 %v5689, %v6017
        %v6330 = vmul.f32 %v5690, %v6032
        %v6331 = vmul.f32 %v5691, %v6047
        %v6332 = vmul.f32 %v5692, %v6062
        %v6333 = vmul.f32 %v5693, %v6077
        %v6334 = vmul.f32 %v5694, %v6092
        %v6335 = vmul.f32 %v5695, %v6107
        %v6336 = vmul.f32 %v5696, %v6122
        %v6337 = vmul.f32 %v5697, %v6137
        %v6338 = vmul.f32 %v5698, %v6152
        %v6339 = vmul.f32 %v5699, %v6167
        %v6340 = vmul.f32 %v5700, %v6182
        %v6341 = vmul.f32 %v5701, %v6197
        %v6342 = vmul.f32 %v5702, %v6212
        %v6343 = vmul.f32 %v5703, %v6227
        %v6344 = vmul.f32 %v5704, %v6242
        %v6345 = vmul.f32 %v5705, %v6257
        %v6346 = vmul.f32 %v5706, %v6272
        %v6347 = vmul.f32 %v5707, %v6287
        %v6348 = vmul.f32 %v5708, %v6302
        %v6349 = vmul.f32 %v5709, %v6317
        %6350 = vst.msk [vmem:[%s528 + $0x1] sm:$0xff] %vm426, %v6318
        %6351 = vst.msk [vmem:[%s528 + $0x9] sm:$0xff] %vm426, %v6319
        %6352 = vst.msk [vmem:[%s528 + $0x19] sm:$0xff] %vm426, %v6320
        %6353 = vst.msk [vmem:[%s528 + $0x21] sm:$0xff] %vm426, %v6321
        %6354 = vst.msk [vmem:[%s528 + $0x31] sm:$0xff] %vm426, %v6322
        %6355 = vst.msk [vmem:[%s528 + $0x39] sm:$0xff] %vm426, %v6323
        %6356 = vst.msk [vmem:[%s528 + $0x49] sm:$0xff] %vm426, %v6324
        %6357 = vst.msk [vmem:[%s528 + $0x51] sm:$0xff] %vm426, %v6325
        %6358 = vst.msk [vmem:[%s528 + $0x61] sm:$0xff] %vm426, %v6326
        %6359 = vst.msk [vmem:[%s528 + $0x69] sm:$0xff] %vm426, %v6327
        %6360 = vst.msk [vmem:[%s528 + $0x79] sm:$0xff] %vm426, %v6328
        %6361 = vst.msk [vmem:[%s528 + $0x81] sm:$0xff] %vm426, %v6329
        %6362 = vst.msk [vmem:[%s528 + $0x91] sm:$0xff] %vm426, %v6330
        %6363 = vst.msk [vmem:[%s528 + $0x99] sm:$0xff] %vm426, %v6331
        %6364 = vst.msk [vmem:[%s528 + $0xa9] sm:$0xff] %vm426, %v6332
        %6365 = vst.msk [vmem:[%s528 + $0xb1] sm:$0xff] %vm426, %v6333
        %6366 = vst.msk [vmem:[%s528 + $0xc1] sm:$0xff] %vm426, %v6334
        %6367 = vst.msk [vmem:[%s528 + $0xc9] sm:$0xff] %vm426, %v6335
        %6368 = vst.msk [vmem:[%s528 + $0xd9] sm:$0xff] %vm426, %v6336
        %6369 = vst.msk [vmem:[%s528 + $0xe1] sm:$0xff] %vm426, %v6337
        %6370 = vst.msk [vmem:[%s528 + $0xf1] sm:$0xff] %vm426, %v6338
        %6371 = vst.msk [vmem:[%s528 + $0xf9] sm:$0xff] %vm426, %v6339
        %6372 = vst.msk [vmem:[%s528 + $0x109] sm:$0xff] %vm426, %v6340
        %6373 = vst.msk [vmem:[%s528 + $0x111] sm:$0xff] %vm426, %v6341
        %6374 = vst.msk [vmem:[%s528 + $0x121] sm:$0xff] %vm426, %v6342
        %6375 = vst.msk [vmem:[%s528 + $0x129] sm:$0xff] %vm426, %v6343
        %6376 = vst.msk [vmem:[%s528 + $0x139] sm:$0xff] %vm426, %v6344
        %6377 = vst.msk [vmem:[%s528 + $0x141] sm:$0xff] %vm426, %v6345
        %6378 = vst.msk [vmem:[%s528 + $0x151] sm:$0xff] %vm426, %v6346
        %6379 = vst.msk [vmem:[%s528 + $0x159] sm:$0xff] %vm426, %v6347
        %6380 = vst.msk [vmem:[%s528 + $0x169] sm:$0xff] %vm426, %v6348
        %6381 = vst.msk [vmem:[%s528 + $0x171] sm:$0xff] %vm426, %v6349
        %v6382 = vld [vmem:[%s11] sm:$0x1]
        %v6383 = vld [vmem:[#allocation2] sm:$0xff]
        %v6384 = vld [vmem:[#allocation2 + $0x8] sm:$0xff]
        %v6385 = vld [vmem:[#allocation2 + $0x18] sm:$0xff]
        %v6386 = vld [vmem:[#allocation2 + $0x20] sm:$0xff]
        %v6387 = vld [vmem:[#allocation2 + $0x30] sm:$0xff]
        %v6388 = vld [vmem:[#allocation2 + $0x38] sm:$0xff]
        %v6389 = vld [vmem:[#allocation2 + $0x48] sm:$0xff]
        %v6390 = vld [vmem:[#allocation2 + $0x50] sm:$0xff]
        %v6391 = vld [vmem:[#allocation2 + $0x60] sm:$0xff]
        %v6392 = vld [vmem:[#allocation2 + $0x68] sm:$0xff]
        %v6393 = vld [vmem:[#allocation2 + $0x78] sm:$0xff]
        %v6394 = vld [vmem:[#allocation2 + $0x80] sm:$0xff]
        %v6395 = vld [vmem:[#allocation2 + $0x90] sm:$0xff]
        %v6396 = vld [vmem:[#allocation2 + $0x98] sm:$0xff]
        %v6397 = vld [vmem:[#allocation2 + $0xa8] sm:$0xff]
        %v6398 = vld [vmem:[#allocation2 + $0xb0] sm:$0xff]
        %6399 = vst.msk [vmem:[#allocation3] sm:$0xff] %vm426, %v6383
        %6400 = vst.msk [vmem:[#allocation3 + $0x8] sm:$0xff] %vm426, %v6384
        %6401 = vst.msk [vmem:[#allocation3 + $0x10] sm:$0xff] %vm426, %v6385
        %6402 = vst.msk [vmem:[#allocation3 + $0x18] sm:$0xff] %vm426, %v6386
        %6403 = vst.msk [vmem:[#allocation3 + $0x20] sm:$0xff] %vm426, %v6387
        %6404 = vst.msk [vmem:[#allocation3 + $0x28] sm:$0xff] %vm426, %v6388
        %6405 = vst.msk [vmem:[#allocation3 + $0x30] sm:$0xff] %vm426, %v6389
        %6406 = vst.msk [vmem:[#allocation3 + $0x38] sm:$0xff] %vm426, %v6390
        %6407 = vst.msk [vmem:[#allocation3 + $0x40] sm:$0xff] %vm426, %v6391
        %6408 = vst.msk [vmem:[#allocation3 + $0x48] sm:$0xff] %vm426, %v6392
        %6409 = vst.msk [vmem:[#allocation3 + $0x50] sm:$0xff] %vm426, %v6393
        %6410 = vst.msk [vmem:[#allocation3 + $0x58] sm:$0xff] %vm426, %v6394
        %6411 = vst.msk [vmem:[#allocation3 + $0x60] sm:$0xff] %vm426, %v6395
        %6412 = vst.msk [vmem:[#allocation3 + $0x68] sm:$0xff] %vm426, %v6396
        %6413 = vst.msk [vmem:[#allocation3 + $0x70] sm:$0xff] %vm426, %v6397
        %6414 = vst.msk [vmem:[#allocation3 + $0x78] sm:$0xff] %vm426, %v6398
        %v6415 = vld [vmem:[#allocation2 + $0x1] sm:$0xff]
        %v6416 = vld [vmem:[#allocation2 + $0x9] sm:$0xff]
        %v6417 = vld [vmem:[#allocation2 + $0x19] sm:$0xff]
        %v6418 = vld [vmem:[#allocation2 + $0x21] sm:$0xff]
        %v6419 = vld [vmem:[#allocation2 + $0x31] sm:$0xff]
        %v6420 = vld [vmem:[#allocation2 + $0x39] sm:$0xff]
        %v6421 = vld [vmem:[#allocation2 + $0x49] sm:$0xff]
        %v6422 = vld [vmem:[#allocation2 + $0x51] sm:$0xff]
        %v6423 = vld [vmem:[#allocation2 + $0x61] sm:$0xff]
        %v6424 = vld [vmem:[#allocation2 + $0x69] sm:$0xff]
        %v6425 = vld [vmem:[#allocation2 + $0x79] sm:$0xff]
        %v6426 = vld [vmem:[#allocation2 + $0x81] sm:$0xff]
        %v6427 = vld [vmem:[#allocation2 + $0x91] sm:$0xff]
        %v6428 = vld [vmem:[#allocation2 + $0x99] sm:$0xff]
        %v6429 = vld [vmem:[#allocation2 + $0xa9] sm:$0xff]
        %v6430 = vld [vmem:[#allocation2 + $0xb1] sm:$0xff]
        %6447 = vrot.lane.b32.xlu0 %v6415, 8
        %v6448 = vpop.permute.xlu0 %6447
        %6449 = vrot.lane.b32.xlu0 %v6416, 8
        %v6450 = vpop.permute.xlu0 %6449
        %6451 = vrot.lane.b32.xlu0 %v6417, 8
        %v6452 = vpop.permute.xlu0 %6451
        %6453 = vrot.lane.b32.xlu0 %v6418, 8
        %v6454 = vpop.permute.xlu0 %6453
        %6455 = vrot.lane.b32.xlu0 %v6419, 8
        %v6456 = vpop.permute.xlu0 %6455
        %6457 = vrot.lane.b32.xlu0 %v6420, 8
        %v6458 = vpop.permute.xlu0 %6457
        %6459 = vrot.lane.b32.xlu0 %v6421, 8
        %v6460 = vpop.permute.xlu0 %6459
        %6461 = vrot.lane.b32.xlu0 %v6422, 8
        %v6462 = vpop.permute.xlu0 %6461
        %6463 = vrot.lane.b32.xlu0 %v6423, 8
        %v6464 = vpop.permute.xlu0 %6463
        %6465 = vrot.lane.b32.xlu0 %v6424, 8
        %v6466 = vpop.permute.xlu0 %6465
        %6467 = vrot.lane.b32.xlu0 %v6425, 8
        %v6468 = vpop.permute.xlu0 %6467
        %6469 = vrot.lane.b32.xlu0 %v6426, 8
        %v6470 = vpop.permute.xlu0 %6469
        %6471 = vrot.lane.b32.xlu0 %v6427, 8
        %v6472 = vpop.permute.xlu0 %6471
        %6473 = vrot.lane.b32.xlu0 %v6428, 8
        %v6474 = vpop.permute.xlu0 %6473
        %6475 = vrot.lane.b32.xlu0 %v6429, 8
        %v6476 = vpop.permute.xlu0 %6475
        %6477 = vrot.lane.b32.xlu0 %v6430, 8
        %v6478 = vpop.permute.xlu0 %6477
        %6495 = vst.msk [vmem:[#allocation3] sm:$0xff] %vm676, %v6448
        %6496 = vst.msk [vmem:[#allocation3 + $0x8] sm:$0xff] %vm676, %v6450
        %6497 = vst.msk [vmem:[#allocation3 + $0x10] sm:$0xff] %vm676, %v6452
        %6498 = vst.msk [vmem:[#allocation3 + $0x18] sm:$0xff] %vm676, %v6454
        %6499 = vst.msk [vmem:[#allocation3 + $0x20] sm:$0xff] %vm676, %v6456
        %6500 = vst.msk [vmem:[#allocation3 + $0x28] sm:$0xff] %vm676, %v6458
        %6501 = vst.msk [vmem:[#allocation3 + $0x30] sm:$0xff] %vm676, %v6460
        %6502 = vst.msk [vmem:[#allocation3 + $0x38] sm:$0xff] %vm676, %v6462
        %6503 = vst.msk [vmem:[#allocation3 + $0x40] sm:$0xff] %vm676, %v6464
        %6504 = vst.msk [vmem:[#allocation3 + $0x48] sm:$0xff] %vm676, %v6466
        %6505 = vst.msk [vmem:[#allocation3 + $0x50] sm:$0xff] %vm676, %v6468
        %6506 = vst.msk [vmem:[#allocation3 + $0x58] sm:$0xff] %vm676, %v6470
        %6507 = vst.msk [vmem:[#allocation3 + $0x60] sm:$0xff] %vm676, %v6472
        %6508 = vst.msk [vmem:[#allocation3 + $0x68] sm:$0xff] %vm676, %v6474
        %6509 = vst.msk [vmem:[#allocation3 + $0x70] sm:$0xff] %vm676, %v6476
        %6510 = vst.msk [vmem:[#allocation3 + $0x78] sm:$0xff] %vm676, %v6478
        %v6511 = vld [vmem:[#allocation2 + $0x2] sm:$0xff]
        %v6512 = vld [vmem:[#allocation2 + $0xa] sm:$0xff]
        %v6513 = vld [vmem:[#allocation2 + $0x1a] sm:$0xff]
        %v6514 = vld [vmem:[#allocation2 + $0x22] sm:$0xff]
        %v6515 = vld [vmem:[#allocation2 + $0x32] sm:$0xff]
        %v6516 = vld [vmem:[#allocation2 + $0x3a] sm:$0xff]
        %v6517 = vld [vmem:[#allocation2 + $0x4a] sm:$0xff]
        %v6518 = vld [vmem:[#allocation2 + $0x52] sm:$0xff]
        %v6519 = vld [vmem:[#allocation2 + $0x62] sm:$0xff]
        %v6520 = vld [vmem:[#allocation2 + $0x6a] sm:$0xff]
        %v6521 = vld [vmem:[#allocation2 + $0x7a] sm:$0xff]
        %v6522 = vld [vmem:[#allocation2 + $0x82] sm:$0xff]
        %v6523 = vld [vmem:[#allocation2 + $0x92] sm:$0xff]
        %v6524 = vld [vmem:[#allocation2 + $0x9a] sm:$0xff]
        %v6525 = vld [vmem:[#allocation2 + $0xaa] sm:$0xff]
        %v6526 = vld [vmem:[#allocation2 + $0xb2] sm:$0xff]
        %6543 = vrot.lane.b32.xlu0 %v6511, 16
        %v6544 = vpop.permute.xlu0 %6543
        %6545 = vrot.lane.b32.xlu0 %v6512, 16
        %v6546 = vpop.permute.xlu0 %6545
        %6547 = vrot.lane.b32.xlu0 %v6513, 16
        %v6548 = vpop.permute.xlu0 %6547
        %6549 = vrot.lane.b32.xlu0 %v6514, 16
        %v6550 = vpop.permute.xlu0 %6549
        %6551 = vrot.lane.b32.xlu0 %v6515, 16
        %v6552 = vpop.permute.xlu0 %6551
        %6553 = vrot.lane.b32.xlu0 %v6516, 16
        %v6554 = vpop.permute.xlu0 %6553
        %6555 = vrot.lane.b32.xlu0 %v6517, 16
        %v6556 = vpop.permute.xlu0 %6555
        %6557 = vrot.lane.b32.xlu0 %v6518, 16
        %v6558 = vpop.permute.xlu0 %6557
        %6559 = vrot.lane.b32.xlu0 %v6519, 16
        %v6560 = vpop.permute.xlu0 %6559
        %6561 = vrot.lane.b32.xlu0 %v6520, 16
        %v6562 = vpop.permute.xlu0 %6561
        %6563 = vrot.lane.b32.xlu0 %v6521, 16
        %v6564 = vpop.permute.xlu0 %6563
        %6565 = vrot.lane.b32.xlu0 %v6522, 16
        %v6566 = vpop.permute.xlu0 %6565
        %6567 = vrot.lane.b32.xlu0 %v6523, 16
        %v6568 = vpop.permute.xlu0 %6567
        %6569 = vrot.lane.b32.xlu0 %v6524, 16
        %v6570 = vpop.permute.xlu0 %6569
        %6571 = vrot.lane.b32.xlu0 %v6525, 16
        %v6572 = vpop.permute.xlu0 %6571
        %6573 = vrot.lane.b32.xlu0 %v6526, 16
        %v6574 = vpop.permute.xlu0 %6573
        %6591 = vst.msk [vmem:[#allocation3] sm:$0xff] %vm773, %v6544
        %6592 = vst.msk [vmem:[#allocation3 + $0x8] sm:$0xff] %vm773, %v6546
        %6593 = vst.msk [vmem:[#allocation3 + $0x10] sm:$0xff] %vm773, %v6548
        %6594 = vst.msk [vmem:[#allocation3 + $0x18] sm:$0xff] %vm773, %v6550
        %6595 = vst.msk [vmem:[#allocation3 + $0x20] sm:$0xff] %vm773, %v6552
        %6596 = vst.msk [vmem:[#allocation3 + $0x28] sm:$0xff] %vm773, %v6554
        %6597 = vst.msk [vmem:[#allocation3 + $0x30] sm:$0xff] %vm773, %v6556
        %6598 = vst.msk [vmem:[#allocation3 + $0x38] sm:$0xff] %vm773, %v6558
        %6599 = vst.msk [vmem:[#allocation3 + $0x40] sm:$0xff] %vm773, %v6560
        %6600 = vst.msk [vmem:[#allocation3 + $0x48] sm:$0xff] %vm773, %v6562
        %6601 = vst.msk [vmem:[#allocation3 + $0x50] sm:$0xff] %vm773, %v6564
        %6602 = vst.msk [vmem:[#allocation3 + $0x58] sm:$0xff] %vm773, %v6566
        %6603 = vst.msk [vmem:[#allocation3 + $0x60] sm:$0xff] %vm773, %v6568
        %6604 = vst.msk [vmem:[#allocation3 + $0x68] sm:$0xff] %vm773, %v6570
        %6605 = vst.msk [vmem:[#allocation3 + $0x70] sm:$0xff] %vm773, %v6572
        %6606 = vst.msk [vmem:[#allocation3 + $0x78] sm:$0xff] %vm773, %v6574
        %v6607 = vld [vmem:[%s528] sm:$0xff]
        %v6608 = vld [vmem:[%s528 + $0x8] sm:$0xff]
        %v6609 = vld [vmem:[%s528 + $0x18] sm:$0xff]
        %v6610 = vld [vmem:[%s528 + $0x20] sm:$0xff]
        %v6611 = vld [vmem:[%s528 + $0x30] sm:$0xff]
        %v6612 = vld [vmem:[%s528 + $0x38] sm:$0xff]
        %v6613 = vld [vmem:[%s528 + $0x48] sm:$0xff]
        %v6614 = vld [vmem:[%s528 + $0x50] sm:$0xff]
        %v6615 = vld [vmem:[%s528 + $0x60] sm:$0xff]
        %v6616 = vld [vmem:[%s528 + $0x68] sm:$0xff]
        %v6617 = vld [vmem:[%s528 + $0x78] sm:$0xff]
        %v6618 = vld [vmem:[%s528 + $0x80] sm:$0xff]
        %v6619 = vld [vmem:[%s528 + $0x90] sm:$0xff]
        %v6620 = vld [vmem:[%s528 + $0x98] sm:$0xff]
        %v6621 = vld [vmem:[%s528 + $0xa8] sm:$0xff]
        %v6622 = vld [vmem:[%s528 + $0xb0] sm:$0xff]
        %6639 = vrot.lane.b32.xlu0 %v6607, 24
        %v6640 = vpop.permute.xlu0 %6639
        %6641 = vrot.lane.b32.xlu0 %v6608, 24
        %v6642 = vpop.permute.xlu0 %6641
        %6643 = vrot.lane.b32.xlu0 %v6609, 24
        %v6644 = vpop.permute.xlu0 %6643
        %6645 = vrot.lane.b32.xlu0 %v6610, 24
        %v6646 = vpop.permute.xlu0 %6645
        %6647 = vrot.lane.b32.xlu0 %v6611, 24
        %v6648 = vpop.permute.xlu0 %6647
        %6649 = vrot.lane.b32.xlu0 %v6612, 24
        %v6650 = vpop.permute.xlu0 %6649
        %6651 = vrot.lane.b32.xlu0 %v6613, 24
        %v6652 = vpop.permute.xlu0 %6651
        %6653 = vrot.lane.b32.xlu0 %v6614, 24
        %v6654 = vpop.permute.xlu0 %6653
        %6655 = vrot.lane.b32.xlu0 %v6615, 24
        %v6656 = vpop.permute.xlu0 %6655
        %6657 = vrot.lane.b32.xlu0 %v6616, 24
        %v6658 = vpop.permute.xlu0 %6657
        %6659 = vrot.lane.b32.xlu0 %v6617, 24
        %v6660 = vpop.permute.xlu0 %6659
        %6661 = vrot.lane.b32.xlu0 %v6618, 24
        %v6662 = vpop.permute.xlu0 %6661
        %6663 = vrot.lane.b32.xlu0 %v6619, 24
        %v6664 = vpop.permute.xlu0 %6663
        %6665 = vrot.lane.b32.xlu0 %v6620, 24
        %v6666 = vpop.permute.xlu0 %6665
        %6667 = vrot.lane.b32.xlu0 %v6621, 24
        %v6668 = vpop.permute.xlu0 %6667
        %6669 = vrot.lane.b32.xlu0 %v6622, 24
        %v6670 = vpop.permute.xlu0 %6669
        %6687 = vst.msk [vmem:[#allocation3] sm:$0xff] %vm870, %v6640
        %6688 = vst.msk [vmem:[#allocation3 + $0x8] sm:$0xff] %vm870, %v6642
        %6689 = vst.msk [vmem:[#allocation3 + $0x10] sm:$0xff] %vm870, %v6644
        %6690 = vst.msk [vmem:[#allocation3 + $0x18] sm:$0xff] %vm870, %v6646
        %6691 = vst.msk [vmem:[#allocation3 + $0x20] sm:$0xff] %vm870, %v6648
        %6692 = vst.msk [vmem:[#allocation3 + $0x28] sm:$0xff] %vm870, %v6650
        %6693 = vst.msk [vmem:[#allocation3 + $0x30] sm:$0xff] %vm870, %v6652
        %6694 = vst.msk [vmem:[#allocation3 + $0x38] sm:$0xff] %vm870, %v6654
        %6695 = vst.msk [vmem:[#allocation3 + $0x40] sm:$0xff] %vm870, %v6656
        %6696 = vst.msk [vmem:[#allocation3 + $0x48] sm:$0xff] %vm870, %v6658
        %6697 = vst.msk [vmem:[#allocation3 + $0x50] sm:$0xff] %vm870, %v6660
        %6698 = vst.msk [vmem:[#allocation3 + $0x58] sm:$0xff] %vm870, %v6662
        %6699 = vst.msk [vmem:[#allocation3 + $0x60] sm:$0xff] %vm870, %v6664
        %6700 = vst.msk [vmem:[#allocation3 + $0x68] sm:$0xff] %vm870, %v6666
        %6701 = vst.msk [vmem:[#allocation3 + $0x70] sm:$0xff] %vm870, %v6668
        %6702 = vst.msk [vmem:[#allocation3 + $0x78] sm:$0xff] %vm870, %v6670
        %v6703 = vld [vmem:[%s528 + $0x1] sm:$0xff]
        %v6704 = vld [vmem:[%s528 + $0x9] sm:$0xff]
        %v6705 = vld [vmem:[%s528 + $0x19] sm:$0xff]
        %v6706 = vld [vmem:[%s528 + $0x21] sm:$0xff]
        %v6707 = vld [vmem:[%s528 + $0x31] sm:$0xff]
        %v6708 = vld [vmem:[%s528 + $0x39] sm:$0xff]
        %v6709 = vld [vmem:[%s528 + $0x49] sm:$0xff]
        %v6710 = vld [vmem:[%s528 + $0x51] sm:$0xff]
        %v6711 = vld [vmem:[%s528 + $0x61] sm:$0xff]
        %v6712 = vld [vmem:[%s528 + $0x69] sm:$0xff]
        %v6713 = vld [vmem:[%s528 + $0x79] sm:$0xff]
        %v6714 = vld [vmem:[%s528 + $0x81] sm:$0xff]
        %v6715 = vld [vmem:[%s528 + $0x91] sm:$0xff]
        %v6716 = vld [vmem:[%s528 + $0x99] sm:$0xff]
        %v6717 = vld [vmem:[%s528 + $0xa9] sm:$0xff]
        %v6718 = vld [vmem:[%s528 + $0xb1] sm:$0xff]
        %6735 = vrot.lane.b32.xlu0 %v6703, 32
        %v6736 = vpop.permute.xlu0 %6735
        %6737 = vrot.lane.b32.xlu0 %v6704, 32
        %v6738 = vpop.permute.xlu0 %6737
        %6739 = vrot.lane.b32.xlu0 %v6705, 32
        %v6740 = vpop.permute.xlu0 %6739
        %6741 = vrot.lane.b32.xlu0 %v6706, 32
        %v6742 = vpop.permute.xlu0 %6741
        %6743 = vrot.lane.b32.xlu0 %v6707, 32
        %v6744 = vpop.permute.xlu0 %6743
        %6745 = vrot.lane.b32.xlu0 %v6708, 32
        %v6746 = vpop.permute.xlu0 %6745
        %6747 = vrot.lane.b32.xlu0 %v6709, 32
        %v6748 = vpop.permute.xlu0 %6747
        %6749 = vrot.lane.b32.xlu0 %v6710, 32
        %v6750 = vpop.permute.xlu0 %6749
        %6751 = vrot.lane.b32.xlu0 %v6711, 32
        %v6752 = vpop.permute.xlu0 %6751
        %6753 = vrot.lane.b32.xlu0 %v6712, 32
        %v6754 = vpop.permute.xlu0 %6753
        %6755 = vrot.lane.b32.xlu0 %v6713, 32
        %v6756 = vpop.permute.xlu0 %6755
        %6757 = vrot.lane.b32.xlu0 %v6714, 32
        %v6758 = vpop.permute.xlu0 %6757
        %6759 = vrot.lane.b32.xlu0 %v6715, 32
        %v6760 = vpop.permute.xlu0 %6759
        %6761 = vrot.lane.b32.xlu0 %v6716, 32
        %v6762 = vpop.permute.xlu0 %6761
        %6763 = vrot.lane.b32.xlu0 %v6717, 32
        %v6764 = vpop.permute.xlu0 %6763
        %6765 = vrot.lane.b32.xlu0 %v6718, 32
        %v6766 = vpop.permute.xlu0 %6765
        %6783 = vst.msk [vmem:[#allocation3] sm:$0xff] %vm967, %v6736
        %6784 = vst.msk [vmem:[#allocation3 + $0x8] sm:$0xff] %vm967, %v6738
        %6785 = vst.msk [vmem:[#allocation3 + $0x10] sm:$0xff] %vm967, %v6740
        %6786 = vst.msk [vmem:[#allocation3 + $0x18] sm:$0xff] %vm967, %v6742
        %6787 = vst.msk [vmem:[#allocation3 + $0x20] sm:$0xff] %vm967, %v6744
        %6788 = vst.msk [vmem:[#allocation3 + $0x28] sm:$0xff] %vm967, %v6746
        %6789 = vst.msk [vmem:[#allocation3 + $0x30] sm:$0xff] %vm967, %v6748
        %6790 = vst.msk [vmem:[#allocation3 + $0x38] sm:$0xff] %vm967, %v6750
        %6791 = vst.msk [vmem:[#allocation3 + $0x40] sm:$0xff] %vm967, %v6752
        %6792 = vst.msk [vmem:[#allocation3 + $0x48] sm:$0xff] %vm967, %v6754
        %6793 = vst.msk [vmem:[#allocation3 + $0x50] sm:$0xff] %vm967, %v6756
        %6794 = vst.msk [vmem:[#allocation3 + $0x58] sm:$0xff] %vm967, %v6758
        %6795 = vst.msk [vmem:[#allocation3 + $0x60] sm:$0xff] %vm967, %v6760
        %6796 = vst.msk [vmem:[#allocation3 + $0x68] sm:$0xff] %vm967, %v6762
        %6797 = vst.msk [vmem:[#allocation3 + $0x70] sm:$0xff] %vm967, %v6764
        %6798 = vst.msk [vmem:[#allocation3 + $0x78] sm:$0xff] %vm967, %v6766
        %v6799 = vld [vmem:[%s528 + $0x2] sm:$0xff]
        %v6800 = vld [vmem:[%s528 + $0xa] sm:$0xff]
        %v6801 = vld [vmem:[%s528 + $0x1a] sm:$0xff]
        %v6802 = vld [vmem:[%s528 + $0x22] sm:$0xff]
        %v6803 = vld [vmem:[%s528 + $0x32] sm:$0xff]
        %v6804 = vld [vmem:[%s528 + $0x3a] sm:$0xff]
        %v6805 = vld [vmem:[%s528 + $0x4a] sm:$0xff]
        %v6806 = vld [vmem:[%s528 + $0x52] sm:$0xff]
        %v6807 = vld [vmem:[%s528 + $0x62] sm:$0xff]
        %v6808 = vld [vmem:[%s528 + $0x6a] sm:$0xff]
        %v6809 = vld [vmem:[%s528 + $0x7a] sm:$0xff]
        %v6810 = vld [vmem:[%s528 + $0x82] sm:$0xff]
        %v6811 = vld [vmem:[%s528 + $0x92] sm:$0xff]
        %v6812 = vld [vmem:[%s528 + $0x9a] sm:$0xff]
        %v6813 = vld [vmem:[%s528 + $0xaa] sm:$0xff]
        %v6814 = vld [vmem:[%s528 + $0xb2] sm:$0xff]
        %6831 = vrot.lane.b32.xlu0 %v6799, 40
        %v6832 = vpop.permute.xlu0 %6831
        %6833 = vrot.lane.b32.xlu0 %v6800, 40
        %v6834 = vpop.permute.xlu0 %6833
        %6835 = vrot.lane.b32.xlu0 %v6801, 40
        %v6836 = vpop.permute.xlu0 %6835
        %6837 = vrot.lane.b32.xlu0 %v6802, 40
        %v6838 = vpop.permute.xlu0 %6837
        %6839 = vrot.lane.b32.xlu0 %v6803, 40
        %v6840 = vpop.permute.xlu0 %6839
        %6841 = vrot.lane.b32.xlu0 %v6804, 40
        %v6842 = vpop.permute.xlu0 %6841
        %6843 = vrot.lane.b32.xlu0 %v6805, 40
        %v6844 = vpop.permute.xlu0 %6843
        %6845 = vrot.lane.b32.xlu0 %v6806, 40
        %v6846 = vpop.permute.xlu0 %6845
        %6847 = vrot.lane.b32.xlu0 %v6807, 40
        %v6848 = vpop.permute.xlu0 %6847
        %6849 = vrot.lane.b32.xlu0 %v6808, 40
        %v6850 = vpop.permute.xlu0 %6849
        %6851 = vrot.lane.b32.xlu0 %v6809, 40
        %v6852 = vpop.permute.xlu0 %6851
        %6853 = vrot.lane.b32.xlu0 %v6810, 40
        %v6854 = vpop.permute.xlu0 %6853
        %6855 = vrot.lane.b32.xlu0 %v6811, 40
        %v6856 = vpop.permute.xlu0 %6855
        %6857 = vrot.lane.b32.xlu0 %v6812, 40
        %v6858 = vpop.permute.xlu0 %6857
        %6859 = vrot.lane.b32.xlu0 %v6813, 40
        %v6860 = vpop.permute.xlu0 %6859
        %6861 = vrot.lane.b32.xlu0 %v6814, 40
        %v6862 = vpop.permute.xlu0 %6861
        %6879 = vst.msk [vmem:[#allocation3] sm:$0xff] %vm1064, %v6832
        %6880 = vst.msk [vmem:[#allocation3 + $0x8] sm:$0xff] %vm1064, %v6834
        %6881 = vst.msk [vmem:[#allocation3 + $0x10] sm:$0xff] %vm1064, %v6836
        %6882 = vst.msk [vmem:[#allocation3 + $0x18] sm:$0xff] %vm1064, %v6838
        %6883 = vst.msk [vmem:[#allocation3 + $0x20] sm:$0xff] %vm1064, %v6840
        %6884 = vst.msk [vmem:[#allocation3 + $0x28] sm:$0xff] %vm1064, %v6842
        %6885 = vst.msk [vmem:[#allocation3 + $0x30] sm:$0xff] %vm1064, %v6844
        %6886 = vst.msk [vmem:[#allocation3 + $0x38] sm:$0xff] %vm1064, %v6846
        %6887 = vst.msk [vmem:[#allocation3 + $0x40] sm:$0xff] %vm1064, %v6848
        %6888 = vst.msk [vmem:[#allocation3 + $0x48] sm:$0xff] %vm1064, %v6850
        %6889 = vst.msk [vmem:[#allocation3 + $0x50] sm:$0xff] %vm1064, %v6852
        %6890 = vst.msk [vmem:[#allocation3 + $0x58] sm:$0xff] %vm1064, %v6854
        %6891 = vst.msk [vmem:[#allocation3 + $0x60] sm:$0xff] %vm1064, %v6856
        %6892 = vst.msk [vmem:[#allocation3 + $0x68] sm:$0xff] %vm1064, %v6858
        %6893 = vst.msk [vmem:[#allocation3 + $0x70] sm:$0xff] %vm1064, %v6860
        %6894 = vst.msk [vmem:[#allocation3 + $0x78] sm:$0xff] %vm1064, %v6862
        %v6895 = vld [vmem:[%s1081] sm:$0xff]
        %v6896 = vld [vmem:[%s1081 + $0x8] sm:$0xff]
        %v6897 = vld [vmem:[%s1081 + $0x18] sm:$0xff]
        %v6898 = vld [vmem:[%s1081 + $0x20] sm:$0xff]
        %v6899 = vld [vmem:[%s1081 + $0x30] sm:$0xff]
        %v6900 = vld [vmem:[%s1081 + $0x38] sm:$0xff]
        %v6901 = vld [vmem:[%s1081 + $0x48] sm:$0xff]
        %v6902 = vld [vmem:[%s1081 + $0x50] sm:$0xff]
        %v6903 = vld [vmem:[%s1081 + $0x60] sm:$0xff]
        %v6904 = vld [vmem:[%s1081 + $0x68] sm:$0xff]
        %v6905 = vld [vmem:[%s1081 + $0x78] sm:$0xff]
        %v6906 = vld [vmem:[%s1081 + $0x80] sm:$0xff]
        %v6907 = vld [vmem:[%s1081 + $0x90] sm:$0xff]
        %v6908 = vld [vmem:[%s1081 + $0x98] sm:$0xff]
        %v6909 = vld [vmem:[%s1081 + $0xa8] sm:$0xff]
        %v6910 = vld [vmem:[%s1081 + $0xb0] sm:$0xff]
        %6927 = vrot.lane.b32.xlu0 %v6895, 48
        %v6928 = vpop.permute.xlu0 %6927
        %6929 = vrot.lane.b32.xlu0 %v6896, 48
        %v6930 = vpop.permute.xlu0 %6929
        %6931 = vrot.lane.b32.xlu0 %v6897, 48
        %v6932 = vpop.permute.xlu0 %6931
        %6933 = vrot.lane.b32.xlu0 %v6898, 48
        %v6934 = vpop.permute.xlu0 %6933
        %6935 = vrot.lane.b32.xlu0 %v6899, 48
        %v6936 = vpop.permute.xlu0 %6935
        %6937 = vrot.lane.b32.xlu0 %v6900, 48
        %v6938 = vpop.permute.xlu0 %6937
        %6939 = vrot.lane.b32.xlu0 %v6901, 48
        %v6940 = vpop.permute.xlu0 %6939
        %6941 = vrot.lane.b32.xlu0 %v6902, 48
        %v6942 = vpop.permute.xlu0 %6941
        %6943 = vrot.lane.b32.xlu0 %v6903, 48
        %v6944 = vpop.permute.xlu0 %6943
        %6945 = vrot.lane.b32.xlu0 %v6904, 48
        %v6946 = vpop.permute.xlu0 %6945
        %6947 = vrot.lane.b32.xlu0 %v6905, 48
        %v6948 = vpop.permute.xlu0 %6947
        %6949 = vrot.lane.b32.xlu0 %v6906, 48
        %v6950 = vpop.permute.xlu0 %6949
        %6951 = vrot.lane.b32.xlu0 %v6907, 48
        %v6952 = vpop.permute.xlu0 %6951
        %6953 = vrot.lane.b32.xlu0 %v6908, 48
        %v6954 = vpop.permute.xlu0 %6953
        %6955 = vrot.lane.b32.xlu0 %v6909, 48
        %v6956 = vpop.permute.xlu0 %6955
        %6957 = vrot.lane.b32.xlu0 %v6910, 48
        %v6958 = vpop.permute.xlu0 %6957
        %6975 = vst.msk [vmem:[#allocation3] sm:$0xff] %vm1162, %v6928
        %6976 = vst.msk [vmem:[#allocation3 + $0x8] sm:$0xff] %vm1162, %v6930
        %6977 = vst.msk [vmem:[#allocation3 + $0x10] sm:$0xff] %vm1162, %v6932
        %6978 = vst.msk [vmem:[#allocation3 + $0x18] sm:$0xff] %vm1162, %v6934
        %6979 = vst.msk [vmem:[#allocation3 + $0x20] sm:$0xff] %vm1162, %v6936
        %6980 = vst.msk [vmem:[#allocation3 + $0x28] sm:$0xff] %vm1162, %v6938
        %6981 = vst.msk [vmem:[#allocation3 + $0x30] sm:$0xff] %vm1162, %v6940
        %6982 = vst.msk [vmem:[#allocation3 + $0x38] sm:$0xff] %vm1162, %v6942
        %6983 = vst.msk [vmem:[#allocation3 + $0x40] sm:$0xff] %vm1162, %v6944
        %6984 = vst.msk [vmem:[#allocation3 + $0x48] sm:$0xff] %vm1162, %v6946
        %6985 = vst.msk [vmem:[#allocation3 + $0x50] sm:$0xff] %vm1162, %v6948
        %6986 = vst.msk [vmem:[#allocation3 + $0x58] sm:$0xff] %vm1162, %v6950
        %6987 = vst.msk [vmem:[#allocation3 + $0x60] sm:$0xff] %vm1162, %v6952
        %6988 = vst.msk [vmem:[#allocation3 + $0x68] sm:$0xff] %vm1162, %v6954
        %6989 = vst.msk [vmem:[#allocation3 + $0x70] sm:$0xff] %vm1162, %v6956
        %6990 = vst.msk [vmem:[#allocation3 + $0x78] sm:$0xff] %vm1162, %v6958
        %v6991 = vld [vmem:[%s1081 + $0x1] sm:$0xff]
        %v6992 = vld [vmem:[%s1081 + $0x9] sm:$0xff]
        %v6993 = vld [vmem:[%s1081 + $0x19] sm:$0xff]
        %v6994 = vld [vmem:[%s1081 + $0x21] sm:$0xff]
        %v6995 = vld [vmem:[%s1081 + $0x31] sm:$0xff]
        %v6996 = vld [vmem:[%s1081 + $0x39] sm:$0xff]
        %v6997 = vld [vmem:[%s1081 + $0x49] sm:$0xff]
        %v6998 = vld [vmem:[%s1081 + $0x51] sm:$0xff]
        %v6999 = vld [vmem:[%s1081 + $0x61] sm:$0xff]
        %v7000 = vld [vmem:[%s1081 + $0x69] sm:$0xff]
        %v7001 = vld [vmem:[%s1081 + $0x79] sm:$0xff]
        %v7002 = vld [vmem:[%s1081 + $0x81] sm:$0xff]
        %v7003 = vld [vmem:[%s1081 + $0x91] sm:$0xff]
        %v7004 = vld [vmem:[%s1081 + $0x99] sm:$0xff]
        %v7005 = vld [vmem:[%s1081 + $0xa9] sm:$0xff]
        %v7006 = vld [vmem:[%s1081 + $0xb1] sm:$0xff]
        %7023 = vrot.lane.b32.xlu0 %v6991, 56
        %v7024 = vpop.permute.xlu0 %7023
        %7025 = vrot.lane.b32.xlu0 %v6992, 56
        %v7026 = vpop.permute.xlu0 %7025
        %7027 = vrot.lane.b32.xlu0 %v6993, 56
        %v7028 = vpop.permute.xlu0 %7027
        %7029 = vrot.lane.b32.xlu0 %v6994, 56
        %v7030 = vpop.permute.xlu0 %7029
        %7031 = vrot.lane.b32.xlu0 %v6995, 56
        %v7032 = vpop.permute.xlu0 %7031
        %7033 = vrot.lane.b32.xlu0 %v6996, 56
        %v7034 = vpop.permute.xlu0 %7033
        %7035 = vrot.lane.b32.xlu0 %v6997, 56
        %v7036 = vpop.permute.xlu0 %7035
        %7037 = vrot.lane.b32.xlu0 %v6998, 56
        %v7038 = vpop.permute.xlu0 %7037
        %7039 = vrot.lane.b32.xlu0 %v6999, 56
        %v7040 = vpop.permute.xlu0 %7039
        %7041 = vrot.lane.b32.xlu0 %v7000, 56
        %v7042 = vpop.permute.xlu0 %7041
        %7043 = vrot.lane.b32.xlu0 %v7001, 56
        %v7044 = vpop.permute.xlu0 %7043
        %7045 = vrot.lane.b32.xlu0 %v7002, 56
        %v7046 = vpop.permute.xlu0 %7045
        %7047 = vrot.lane.b32.xlu0 %v7003, 56
        %v7048 = vpop.permute.xlu0 %7047
        %7049 = vrot.lane.b32.xlu0 %v7004, 56
        %v7050 = vpop.permute.xlu0 %7049
        %7051 = vrot.lane.b32.xlu0 %v7005, 56
        %v7052 = vpop.permute.xlu0 %7051
        %7053 = vrot.lane.b32.xlu0 %v7006, 56
        %v7054 = vpop.permute.xlu0 %7053
        %7071 = vst.msk [vmem:[#allocation3] sm:$0xff] %vm1259, %v7024
        %7072 = vst.msk [vmem:[#allocation3 + $0x8] sm:$0xff] %vm1259, %v7026
        %7073 = vst.msk [vmem:[#allocation3 + $0x10] sm:$0xff] %vm1259, %v7028
        %7074 = vst.msk [vmem:[#allocation3 + $0x18] sm:$0xff] %vm1259, %v7030
        %7075 = vst.msk [vmem:[#allocation3 + $0x20] sm:$0xff] %vm1259, %v7032
        %7076 = vst.msk [vmem:[#allocation3 + $0x28] sm:$0xff] %vm1259, %v7034
        %7077 = vst.msk [vmem:[#allocation3 + $0x30] sm:$0xff] %vm1259, %v7036
        %7078 = vst.msk [vmem:[#allocation3 + $0x38] sm:$0xff] %vm1259, %v7038
        %7079 = vst.msk [vmem:[#allocation3 + $0x40] sm:$0xff] %vm1259, %v7040
        %7080 = vst.msk [vmem:[#allocation3 + $0x48] sm:$0xff] %vm1259, %v7042
        %7081 = vst.msk [vmem:[#allocation3 + $0x50] sm:$0xff] %vm1259, %v7044
        %7082 = vst.msk [vmem:[#allocation3 + $0x58] sm:$0xff] %vm1259, %v7046
        %7083 = vst.msk [vmem:[#allocation3 + $0x60] sm:$0xff] %vm1259, %v7048
        %7084 = vst.msk [vmem:[#allocation3 + $0x68] sm:$0xff] %vm1259, %v7050
        %7085 = vst.msk [vmem:[#allocation3 + $0x70] sm:$0xff] %vm1259, %v7052
        %7086 = vst.msk [vmem:[#allocation3 + $0x78] sm:$0xff] %vm1259, %v7054
        %v7087 = vld [vmem:[%s1081 + $0x2] sm:$0xff]
        %v7088 = vld [vmem:[%s1081 + $0xa] sm:$0xff]
        %v7089 = vld [vmem:[%s1081 + $0x1a] sm:$0xff]
        %v7090 = vld [vmem:[%s1081 + $0x22] sm:$0xff]
        %v7091 = vld [vmem:[%s1081 + $0x32] sm:$0xff]
        %v7092 = vld [vmem:[%s1081 + $0x3a] sm:$0xff]
        %v7093 = vld [vmem:[%s1081 + $0x4a] sm:$0xff]
        %v7094 = vld [vmem:[%s1081 + $0x52] sm:$0xff]
        %v7095 = vld [vmem:[%s1081 + $0x62] sm:$0xff]
        %v7096 = vld [vmem:[%s1081 + $0x6a] sm:$0xff]
        %v7097 = vld [vmem:[%s1081 + $0x7a] sm:$0xff]
        %v7098 = vld [vmem:[%s1081 + $0x82] sm:$0xff]
        %v7099 = vld [vmem:[%s1081 + $0x92] sm:$0xff]
        %v7100 = vld [vmem:[%s1081 + $0x9a] sm:$0xff]
        %v7101 = vld [vmem:[%s1081 + $0xaa] sm:$0xff]
        %v7102 = vld [vmem:[%s1081 + $0xb2] sm:$0xff]
        %7119 = vrot.lane.b32.xlu0 %v7087, 64
        %v7120 = vpop.permute.xlu0 %7119
        %7121 = vrot.lane.b32.xlu0 %v7088, 64
        %v7122 = vpop.permute.xlu0 %7121
        %7123 = vrot.lane.b32.xlu0 %v7089, 64
        %v7124 = vpop.permute.xlu0 %7123
        %7125 = vrot.lane.b32.xlu0 %v7090, 64
        %v7126 = vpop.permute.xlu0 %7125
        %7127 = vrot.lane.b32.xlu0 %v7091, 64
        %v7128 = vpop.permute.xlu0 %7127
        %7129 = vrot.lane.b32.xlu0 %v7092, 64
        %v7130 = vpop.permute.xlu0 %7129
        %7131 = vrot.lane.b32.xlu0 %v7093, 64
        %v7132 = vpop.permute.xlu0 %7131
        %7133 = vrot.lane.b32.xlu0 %v7094, 64
        %v7134 = vpop.permute.xlu0 %7133
        %7135 = vrot.lane.b32.xlu0 %v7095, 64
        %v7136 = vpop.permute.xlu0 %7135
        %7137 = vrot.lane.b32.xlu0 %v7096, 64
        %v7138 = vpop.permute.xlu0 %7137
        %7139 = vrot.lane.b32.xlu0 %v7097, 64
        %v7140 = vpop.permute.xlu0 %7139
        %7141 = vrot.lane.b32.xlu0 %v7098, 64
        %v7142 = vpop.permute.xlu0 %7141
        %7143 = vrot.lane.b32.xlu0 %v7099, 64
        %v7144 = vpop.permute.xlu0 %7143
        %7145 = vrot.lane.b32.xlu0 %v7100, 64
        %v7146 = vpop.permute.xlu0 %7145
        %7147 = vrot.lane.b32.xlu0 %v7101, 64
        %v7148 = vpop.permute.xlu0 %7147
        %7149 = vrot.lane.b32.xlu0 %v7102, 64
        %v7150 = vpop.permute.xlu0 %7149
        %7167 = vst.msk [vmem:[#allocation3] sm:$0xff] %vm1356, %v7120
        %7168 = vst.msk [vmem:[#allocation3 + $0x8] sm:$0xff] %vm1356, %v7122
        %7169 = vst.msk [vmem:[#allocation3 + $0x10] sm:$0xff] %vm1356, %v7124
        %7170 = vst.msk [vmem:[#allocation3 + $0x18] sm:$0xff] %vm1356, %v7126
        %7171 = vst.msk [vmem:[#allocation3 + $0x20] sm:$0xff] %vm1356, %v7128
        %7172 = vst.msk [vmem:[#allocation3 + $0x28] sm:$0xff] %vm1356, %v7130
        %7173 = vst.msk [vmem:[#allocation3 + $0x30] sm:$0xff] %vm1356, %v7132
        %7174 = vst.msk [vmem:[#allocation3 + $0x38] sm:$0xff] %vm1356, %v7134
        %7175 = vst.msk [vmem:[#allocation3 + $0x40] sm:$0xff] %vm1356, %v7136
        %7176 = vst.msk [vmem:[#allocation3 + $0x48] sm:$0xff] %vm1356, %v7138
        %7177 = vst.msk [vmem:[#allocation3 + $0x50] sm:$0xff] %vm1356, %v7140
        %7178 = vst.msk [vmem:[#allocation3 + $0x58] sm:$0xff] %vm1356, %v7142
        %7179 = vst.msk [vmem:[#allocation3 + $0x60] sm:$0xff] %vm1356, %v7144
        %7180 = vst.msk [vmem:[#allocation3 + $0x68] sm:$0xff] %vm1356, %v7146
        %7181 = vst.msk [vmem:[#allocation3 + $0x70] sm:$0xff] %vm1356, %v7148
        %7182 = vst.msk [vmem:[#allocation3 + $0x78] sm:$0xff] %vm1356, %v7150
        %v7183 = vld [vmem:[#allocation3] sm:$0xff]
        %v7184 = vld [vmem:[#allocation3 + $0x8] sm:$0xff]
        %v7185 = vld [vmem:[#allocation3 + $0x10] sm:$0xff]
        %v7186 = vld [vmem:[#allocation3 + $0x18] sm:$0xff]
        %v7187 = vld [vmem:[#allocation3 + $0x20] sm:$0xff]
        %v7188 = vld [vmem:[#allocation3 + $0x28] sm:$0xff]
        %v7189 = vld [vmem:[#allocation3 + $0x30] sm:$0xff]
        %v7190 = vld [vmem:[#allocation3 + $0x38] sm:$0xff]
        %v7191 = vld [vmem:[#allocation3 + $0x40] sm:$0xff]
        %v7192 = vld [vmem:[#allocation3 + $0x48] sm:$0xff]
        %v7193 = vld [vmem:[#allocation3 + $0x50] sm:$0xff]
        %v7194 = vld [vmem:[#allocation3 + $0x58] sm:$0xff]
        %v7195 = vld [vmem:[#allocation3 + $0x60] sm:$0xff]
        %v7196 = vld [vmem:[#allocation3 + $0x68] sm:$0xff]
        %v7197 = vld [vmem:[#allocation3 + $0x70] sm:$0xff]
        %v7198 = vld [vmem:[#allocation3 + $0x78] sm:$0xff]
        %v7199 = vld [vmem:[%s10] sm:$0xff]
        %v7200 = vld [vmem:[%s10 + $0x8] sm:$0xff]
        %v7201 = vld [vmem:[%s10 + $0x10] sm:$0xff]
        %v7202 = vld [vmem:[%s10 + $0x18] sm:$0xff]
        %v7203 = vld [vmem:[%s10 + $0x20] sm:$0xff]
        %v7204 = vld [vmem:[%s10 + $0x28] sm:$0xff]
        %v7205 = vld [vmem:[%s10 + $0x30] sm:$0xff]
        %v7206 = vld [vmem:[%s10 + $0x38] sm:$0xff]
        %v7207 = vld [vmem:[%s10 + $0x40] sm:$0xff]
        %v7209 = vperm.slane %v6382, 0
        %v7212 = vsel %vm1401, %v7183, 0
        %v7215 = vsel %vm1401, %v7184, 0
        %v7218 = vsel %vm1401, %v7185, 0
        %v7221 = vsel %vm1401, %v7186, 0
        %v7224 = vsel %vm1401, %v7187, 0
        %v7227 = vsel %vm1401, %v7188, 0
        %v7230 = vsel %vm1401, %v7189, 0
        %v7233 = vsel %vm1401, %v7190, 0
        %v7236 = vsel %vm1401, %v7191, 0
        %v7239 = vsel %vm1401, %v7192, 0
        %v7242 = vsel %vm1401, %v7193, 0
        %v7245 = vsel %vm1401, %v7194, 0
        %v7248 = vsel %vm1401, %v7195, 0
        %v7251 = vsel %vm1401, %v7196, 0
        %v7254 = vsel %vm1401, %v7197, 0
        %v7257 = vsel %vm1401, %v7198, 0
        %7259 = vmatpush.msra.mxu0 0.0
        %7260 = vmatpush.msra.mxu0 0.0
        %7261 = vmatpush.msra.mxu0 0.0
        %7262 = vmatpush.msra.mxu0 0.0
        %7263 = vmatpush.msra.mxu0 0.0
        %7264 = vmatpush.msra.mxu0 0.0
        %7265 = vmatpush.msra.mxu0 0.0
        %7266 = vmatpush.msra.mxu0 %v7207
        %7267 = vmatpush.msra.mxu0 %v7206
        %7268 = vmatpush.msra.mxu0 %v7205
        %7269 = vmatpush.msra.mxu0 %v7204
        %7270 = vmatpush.msra.mxu0 %v7203
        %7271 = vmatpush.msra.mxu0 %v7202
        %7272 = vmatpush.msra.mxu0 %v7201
        %7273 = vmatpush.msra.mxu0 %v7200
        %7274 = vmatpush.msra.mxu0 %v7199
        %7275 = vmatmul.f32.gmra.mxu0 %v7212
        %v7276 = vpop.f32.mrf.mxu0
        %v7277 = vadd.f32 %v7209, %v7276
        %7278 = vmatmul.f32.gmra.mxu0 %v7215
        %v7279 = vpop.f32.mrf.mxu0
        %v7280 = vadd.f32 %v7209, %v7279
        %7281 = vmatmul.f32.gmra.mxu0 %v7218
        %v7282 = vpop.f32.mrf.mxu0
        %v7283 = vadd.f32 %v7209, %v7282
        %7284 = vmatmul.f32.gmra.mxu0 %v7221
        %v7285 = vpop.f32.mrf.mxu0
        %v7286 = vadd.f32 %v7209, %v7285
        %7287 = vmatmul.f32.gmra.mxu0 %v7224
        %v7288 = vpop.f32.mrf.mxu0
        %v7289 = vadd.f32 %v7209, %v7288
        %7290 = vmatmul.f32.gmra.mxu0 %v7227
        %v7291 = vpop.f32.mrf.mxu0
        %v7292 = vadd.f32 %v7209, %v7291
        %7293 = vmatmul.f32.gmra.mxu0 %v7230
        %v7294 = vpop.f32.mrf.mxu0
        %v7295 = vadd.f32 %v7209, %v7294
        %7296 = vmatmul.f32.gmra.mxu0 %v7233
        %v7297 = vpop.f32.mrf.mxu0
        %v7298 = vadd.f32 %v7209, %v7297
        %7299 = vmatmul.f32.gmra.mxu0 %v7236
        %v7300 = vpop.f32.mrf.mxu0
        %v7301 = vadd.f32 %v7209, %v7300
        %7302 = vmatmul.f32.gmra.mxu0 %v7239
        %v7303 = vpop.f32.mrf.mxu0
        %v7304 = vadd.f32 %v7209, %v7303
        %7305 = vmatmul.f32.gmra.mxu0 %v7242
        %v7306 = vpop.f32.mrf.mxu0
        %v7307 = vadd.f32 %v7209, %v7306
        %7308 = vmatmul.f32.gmra.mxu0 %v7245
        %v7309 = vpop.f32.mrf.mxu0
        %v7310 = vadd.f32 %v7209, %v7309
        %7311 = vmatmul.f32.gmra.mxu0 %v7248
        %v7312 = vpop.f32.mrf.mxu0
        %v7313 = vadd.f32 %v7209, %v7312
        %7314 = vmatmul.f32.gmra.mxu0 %v7251
        %v7315 = vpop.f32.mrf.mxu0
        %v7316 = vadd.f32 %v7209, %v7315
        %7317 = vmatmul.f32.gmra.mxu0 %v7254
        %v7318 = vpop.f32.mrf.mxu0
        %v7319 = vadd.f32 %v7209, %v7318
        %7320 = vmatmul.f32.gmra.mxu0 %v7257
        %v7321 = vpop.f32.mrf.mxu0
        %v7322 = vadd.f32 %v7209, %v7321
        %7323 = vdwg.mxu0
        %s7324 = scalar_lea.vmem [#allocation5], 16
        %7325 = vst.msk [vmem:[%s7324] sm:$0xff] %vm472, %v7277
        %7326 = vst.msk [vmem:[%s7324 + $0x8] sm:$0xff] %vm472, %v7280
        %s7327 = scalar_lea.vmem [#allocation5], 32
        %7328 = vst.msk [vmem:[%s7327] sm:$0xff] %vm472, %v7283
        %7329 = vst.msk [vmem:[%s7327 + $0x8] sm:$0xff] %vm472, %v7286
        %7330 = vst.msk [vmem:[%s7327 + $0x10] sm:$0xff] %vm472, %v7289
        %7331 = vst.msk [vmem:[%s7327 + $0x18] sm:$0xff] %vm472, %v7292
        %7332 = vst.msk [vmem:[%s7327 + $0x20] sm:$0xff] %vm472, %v7295
        %7333 = vst.msk [vmem:[%s7327 + $0x28] sm:$0xff] %vm472, %v7298
        %7334 = vst.msk [vmem:[%s7327 + $0x30] sm:$0xff] %vm472, %v7301
        %7335 = vst.msk [vmem:[%s7327 + $0x38] sm:$0xff] %vm472, %v7304
        %7336 = vst.msk [vmem:[%s7327 + $0x40] sm:$0xff] %vm472, %v7307
        %7337 = vst.msk [vmem:[%s7327 + $0x48] sm:$0xff] %vm472, %v7310
        %7338 = vst.msk [vmem:[%s7327 + $0x50] sm:$0xff] %vm472, %v7313
        %7339 = vst.msk [vmem:[%s7327 + $0x58] sm:$0xff] %vm472, %v7316
        %s7340 = scalar_lea.vmem [#allocation5], 128
        %7341 = vst.msk [vmem:[%s7340] sm:$0xff] %vm472, %v7319
        %7342 = vst.msk [vmem:[%s7340 + $0x8] sm:$0xff] %vm472, %v7322
        %v7343 = vld [vmem:[%s11] sm:$0x1]
        %v7344 = vld [vmem:[%s1623] sm:$0xff]
        %v7345 = vld [vmem:[%s1623 + $0x8] sm:$0xff]
        %v7346 = vld [vmem:[%s1623 + $0x18] sm:$0xff]
        %v7347 = vld [vmem:[%s1623 + $0x20] sm:$0xff]
        %v7348 = vld [vmem:[%s1623 + $0x30] sm:$0xff]
        %v7349 = vld [vmem:[%s1623 + $0x38] sm:$0xff]
        %v7350 = vld [vmem:[%s1623 + $0x48] sm:$0xff]
        %v7351 = vld [vmem:[%s1623 + $0x50] sm:$0xff]
        %v7352 = vld [vmem:[%s1623 + $0x60] sm:$0xff]
        %v7353 = vld [vmem:[%s1623 + $0x68] sm:$0xff]
        %v7354 = vld [vmem:[%s1623 + $0x78] sm:$0xff]
        %v7355 = vld [vmem:[%s1623 + $0x80] sm:$0xff]
        %v7356 = vld [vmem:[%s1623 + $0x90] sm:$0xff]
        %v7357 = vld [vmem:[%s1623 + $0x98] sm:$0xff]
        %v7358 = vld [vmem:[%s1623 + $0xa8] sm:$0xff]
        %v7359 = vld [vmem:[%s1623 + $0xb0] sm:$0xff]
        %7360 = vst.msk [vmem:[#allocation3] sm:$0xff] %vm426, %v7344
        %7361 = vst.msk [vmem:[#allocation3 + $0x8] sm:$0xff] %vm426, %v7345
        %7362 = vst.msk [vmem:[#allocation3 + $0x10] sm:$0xff] %vm426, %v7346
        %7363 = vst.msk [vmem:[#allocation3 + $0x18] sm:$0xff] %vm426, %v7347
        %7364 = vst.msk [vmem:[#allocation3 + $0x20] sm:$0xff] %vm426, %v7348
        %7365 = vst.msk [vmem:[#allocation3 + $0x28] sm:$0xff] %vm426, %v7349
        %7366 = vst.msk [vmem:[#allocation3 + $0x30] sm:$0xff] %vm426, %v7350
        %7367 = vst.msk [vmem:[#allocation3 + $0x38] sm:$0xff] %vm426, %v7351
        %7368 = vst.msk [vmem:[#allocation3 + $0x40] sm:$0xff] %vm426, %v7352
        %7369 = vst.msk [vmem:[#allocation3 + $0x48] sm:$0xff] %vm426, %v7353
        %7370 = vst.msk [vmem:[#allocation3 + $0x50] sm:$0xff] %vm426, %v7354
        %7371 = vst.msk [vmem:[#allocation3 + $0x58] sm:$0xff] %vm426, %v7355
        %7372 = vst.msk [vmem:[#allocation3 + $0x60] sm:$0xff] %vm426, %v7356
        %7373 = vst.msk [vmem:[#allocation3 + $0x68] sm:$0xff] %vm426, %v7357
        %7374 = vst.msk [vmem:[#allocation3 + $0x70] sm:$0xff] %vm426, %v7358
        %7375 = vst.msk [vmem:[#allocation3 + $0x78] sm:$0xff] %vm426, %v7359
        %v7376 = vld [vmem:[%s1623 + $0x1] sm:$0xff]
        %v7377 = vld [vmem:[%s1623 + $0x9] sm:$0xff]
        %v7378 = vld [vmem:[%s1623 + $0x19] sm:$0xff]
        %v7379 = vld [vmem:[%s1623 + $0x21] sm:$0xff]
        %v7380 = vld [vmem:[%s1623 + $0x31] sm:$0xff]
        %v7381 = vld [vmem:[%s1623 + $0x39] sm:$0xff]
        %v7382 = vld [vmem:[%s1623 + $0x49] sm:$0xff]
        %v7383 = vld [vmem:[%s1623 + $0x51] sm:$0xff]
        %v7384 = vld [vmem:[%s1623 + $0x61] sm:$0xff]
        %v7385 = vld [vmem:[%s1623 + $0x69] sm:$0xff]
        %v7386 = vld [vmem:[%s1623 + $0x79] sm:$0xff]
        %v7387 = vld [vmem:[%s1623 + $0x81] sm:$0xff]
        %v7388 = vld [vmem:[%s1623 + $0x91] sm:$0xff]
        %v7389 = vld [vmem:[%s1623 + $0x99] sm:$0xff]
        %v7390 = vld [vmem:[%s1623 + $0xa9] sm:$0xff]
        %v7391 = vld [vmem:[%s1623 + $0xb1] sm:$0xff]
        %7408 = vrot.lane.b32.xlu0 %v7376, 8
        %v7409 = vpop.permute.xlu0 %7408
        %7410 = vrot.lane.b32.xlu0 %v7377, 8
        %v7411 = vpop.permute.xlu0 %7410
        %7412 = vrot.lane.b32.xlu0 %v7378, 8
        %v7413 = vpop.permute.xlu0 %7412
        %7414 = vrot.lane.b32.xlu0 %v7379, 8
        %v7415 = vpop.permute.xlu0 %7414
        %7416 = vrot.lane.b32.xlu0 %v7380, 8
        %v7417 = vpop.permute.xlu0 %7416
        %7418 = vrot.lane.b32.xlu0 %v7381, 8
        %v7419 = vpop.permute.xlu0 %7418
        %7420 = vrot.lane.b32.xlu0 %v7382, 8
        %v7421 = vpop.permute.xlu0 %7420
        %7422 = vrot.lane.b32.xlu0 %v7383, 8
        %v7423 = vpop.permute.xlu0 %7422
        %7424 = vrot.lane.b32.xlu0 %v7384, 8
        %v7425 = vpop.permute.xlu0 %7424
        %7426 = vrot.lane.b32.xlu0 %v7385, 8
        %v7427 = vpop.permute.xlu0 %7426
        %7428 = vrot.lane.b32.xlu0 %v7386, 8
        %v7429 = vpop.permute.xlu0 %7428
        %7430 = vrot.lane.b32.xlu0 %v7387, 8
        %v7431 = vpop.permute.xlu0 %7430
        %7432 = vrot.lane.b32.xlu0 %v7388, 8
        %v7433 = vpop.permute.xlu0 %7432
        %7434 = vrot.lane.b32.xlu0 %v7389, 8
        %v7435 = vpop.permute.xlu0 %7434
        %7436 = vrot.lane.b32.xlu0 %v7390, 8
        %v7437 = vpop.permute.xlu0 %7436
        %7438 = vrot.lane.b32.xlu0 %v7391, 8
        %v7439 = vpop.permute.xlu0 %7438
        %7456 = vst.msk [vmem:[#allocation3] sm:$0xff] %vm676, %v7409
        %7457 = vst.msk [vmem:[#allocation3 + $0x8] sm:$0xff] %vm676, %v7411
        %7458 = vst.msk [vmem:[#allocation3 + $0x10] sm:$0xff] %vm676, %v7413
        %7459 = vst.msk [vmem:[#allocation3 + $0x18] sm:$0xff] %vm676, %v7415
        %7460 = vst.msk [vmem:[#allocation3 + $0x20] sm:$0xff] %vm676, %v7417
        %7461 = vst.msk [vmem:[#allocation3 + $0x28] sm:$0xff] %vm676, %v7419
        %7462 = vst.msk [vmem:[#allocation3 + $0x30] sm:$0xff] %vm676, %v7421
        %7463 = vst.msk [vmem:[#allocation3 + $0x38] sm:$0xff] %vm676, %v7423
        %7464 = vst.msk [vmem:[#allocation3 + $0x40] sm:$0xff] %vm676, %v7425
        %7465 = vst.msk [vmem:[#allocation3 + $0x48] sm:$0xff] %vm676, %v7427
        %7466 = vst.msk [vmem:[#allocation3 + $0x50] sm:$0xff] %vm676, %v7429
        %7467 = vst.msk [vmem:[#allocation3 + $0x58] sm:$0xff] %vm676, %v7431
        %7468 = vst.msk [vmem:[#allocation3 + $0x60] sm:$0xff] %vm676, %v7433
        %7469 = vst.msk [vmem:[#allocation3 + $0x68] sm:$0xff] %vm676, %v7435
        %7470 = vst.msk [vmem:[#allocation3 + $0x70] sm:$0xff] %vm676, %v7437
        %7471 = vst.msk [vmem:[#allocation3 + $0x78] sm:$0xff] %vm676, %v7439
        %v7472 = vld [vmem:[%s1623 + $0x2] sm:$0xff]
        %v7473 = vld [vmem:[%s1623 + $0xa] sm:$0xff]
        %v7474 = vld [vmem:[%s1623 + $0x1a] sm:$0xff]
        %v7475 = vld [vmem:[%s1623 + $0x22] sm:$0xff]
        %v7476 = vld [vmem:[%s1623 + $0x32] sm:$0xff]
        %v7477 = vld [vmem:[%s1623 + $0x3a] sm:$0xff]
        %v7478 = vld [vmem:[%s1623 + $0x4a] sm:$0xff]
        %v7479 = vld [vmem:[%s1623 + $0x52] sm:$0xff]
        %v7480 = vld [vmem:[%s1623 + $0x62] sm:$0xff]
        %v7481 = vld [vmem:[%s1623 + $0x6a] sm:$0xff]
        %v7482 = vld [vmem:[%s1623 + $0x7a] sm:$0xff]
        %v7483 = vld [vmem:[%s1623 + $0x82] sm:$0xff]
        %v7484 = vld [vmem:[%s1623 + $0x92] sm:$0xff]
        %v7485 = vld [vmem:[%s1623 + $0x9a] sm:$0xff]
        %v7486 = vld [vmem:[%s1623 + $0xaa] sm:$0xff]
        %v7487 = vld [vmem:[%s1623 + $0xb2] sm:$0xff]
        %7504 = vrot.lane.b32.xlu0 %v7472, 16
        %v7505 = vpop.permute.xlu0 %7504
        %7506 = vrot.lane.b32.xlu0 %v7473, 16
        %v7507 = vpop.permute.xlu0 %7506
        %7508 = vrot.lane.b32.xlu0 %v7474, 16
        %v7509 = vpop.permute.xlu0 %7508
        %7510 = vrot.lane.b32.xlu0 %v7475, 16
        %v7511 = vpop.permute.xlu0 %7510
        %7512 = vrot.lane.b32.xlu0 %v7476, 16
        %v7513 = vpop.permute.xlu0 %7512
        %7514 = vrot.lane.b32.xlu0 %v7477, 16
        %v7515 = vpop.permute.xlu0 %7514
        %7516 = vrot.lane.b32.xlu0 %v7478, 16
        %v7517 = vpop.permute.xlu0 %7516
        %7518 = vrot.lane.b32.xlu0 %v7479, 16
        %v7519 = vpop.permute.xlu0 %7518
        %7520 = vrot.lane.b32.xlu0 %v7480, 16
        %v7521 = vpop.permute.xlu0 %7520
        %7522 = vrot.lane.b32.xlu0 %v7481, 16
        %v7523 = vpop.permute.xlu0 %7522
        %7524 = vrot.lane.b32.xlu0 %v7482, 16
        %v7525 = vpop.permute.xlu0 %7524
        %7526 = vrot.lane.b32.xlu0 %v7483, 16
        %v7527 = vpop.permute.xlu0 %7526
        %7528 = vrot.lane.b32.xlu0 %v7484, 16
        %v7529 = vpop.permute.xlu0 %7528
        %7530 = vrot.lane.b32.xlu0 %v7485, 16
        %v7531 = vpop.permute.xlu0 %7530
        %7532 = vrot.lane.b32.xlu0 %v7486, 16
        %v7533 = vpop.permute.xlu0 %7532
        %7534 = vrot.lane.b32.xlu0 %v7487, 16
        %v7535 = vpop.permute.xlu0 %7534
        %7552 = vst.msk [vmem:[#allocation3] sm:$0xff] %vm773, %v7505
        %7553 = vst.msk [vmem:[#allocation3 + $0x8] sm:$0xff] %vm773, %v7507
        %7554 = vst.msk [vmem:[#allocation3 + $0x10] sm:$0xff] %vm773, %v7509
        %7555 = vst.msk [vmem:[#allocation3 + $0x18] sm:$0xff] %vm773, %v7511
        %7556 = vst.msk [vmem:[#allocation3 + $0x20] sm:$0xff] %vm773, %v7513
        %7557 = vst.msk [vmem:[#allocation3 + $0x28] sm:$0xff] %vm773, %v7515
        %7558 = vst.msk [vmem:[#allocation3 + $0x30] sm:$0xff] %vm773, %v7517
        %7559 = vst.msk [vmem:[#allocation3 + $0x38] sm:$0xff] %vm773, %v7519
        %7560 = vst.msk [vmem:[#allocation3 + $0x40] sm:$0xff] %vm773, %v7521
        %7561 = vst.msk [vmem:[#allocation3 + $0x48] sm:$0xff] %vm773, %v7523
        %7562 = vst.msk [vmem:[#allocation3 + $0x50] sm:$0xff] %vm773, %v7525
        %7563 = vst.msk [vmem:[#allocation3 + $0x58] sm:$0xff] %vm773, %v7527
        %7564 = vst.msk [vmem:[#allocation3 + $0x60] sm:$0xff] %vm773, %v7529
        %7565 = vst.msk [vmem:[#allocation3 + $0x68] sm:$0xff] %vm773, %v7531
        %7566 = vst.msk [vmem:[#allocation3 + $0x70] sm:$0xff] %vm773, %v7533
        %7567 = vst.msk [vmem:[#allocation3 + $0x78] sm:$0xff] %vm773, %v7535
        %v7568 = vld [vmem:[%s1848] sm:$0xff]
        %v7569 = vld [vmem:[%s1848 + $0x8] sm:$0xff]
        %v7570 = vld [vmem:[%s1848 + $0x18] sm:$0xff]
        %v7571 = vld [vmem:[%s1848 + $0x20] sm:$0xff]
        %v7572 = vld [vmem:[%s1848 + $0x30] sm:$0xff]
        %v7573 = vld [vmem:[%s1848 + $0x38] sm:$0xff]
        %v7574 = vld [vmem:[%s1848 + $0x48] sm:$0xff]
        %v7575 = vld [vmem:[%s1848 + $0x50] sm:$0xff]
        %v7576 = vld [vmem:[%s1848 + $0x60] sm:$0xff]
        %v7577 = vld [vmem:[%s1848 + $0x68] sm:$0xff]
        %v7578 = vld [vmem:[%s1848 + $0x78] sm:$0xff]
        %v7579 = vld [vmem:[%s1848 + $0x80] sm:$0xff]
        %v7580 = vld [vmem:[%s1848 + $0x90] sm:$0xff]
        %v7581 = vld [vmem:[%s1848 + $0x98] sm:$0xff]
        %v7582 = vld [vmem:[%s1848 + $0xa8] sm:$0xff]
        %v7583 = vld [vmem:[%s1848 + $0xb0] sm:$0xff]
        %7600 = vrot.lane.b32.xlu0 %v7568, 24
        %v7601 = vpop.permute.xlu0 %7600
        %7602 = vrot.lane.b32.xlu0 %v7569, 24
        %v7603 = vpop.permute.xlu0 %7602
        %7604 = vrot.lane.b32.xlu0 %v7570, 24
        %v7605 = vpop.permute.xlu0 %7604
        %7606 = vrot.lane.b32.xlu0 %v7571, 24
        %v7607 = vpop.permute.xlu0 %7606
        %7608 = vrot.lane.b32.xlu0 %v7572, 24
        %v7609 = vpop.permute.xlu0 %7608
        %7610 = vrot.lane.b32.xlu0 %v7573, 24
        %v7611 = vpop.permute.xlu0 %7610
        %7612 = vrot.lane.b32.xlu0 %v7574, 24
        %v7613 = vpop.permute.xlu0 %7612
        %7614 = vrot.lane.b32.xlu0 %v7575, 24
        %v7615 = vpop.permute.xlu0 %7614
        %7616 = vrot.lane.b32.xlu0 %v7576, 24
        %v7617 = vpop.permute.xlu0 %7616
        %7618 = vrot.lane.b32.xlu0 %v7577, 24
        %v7619 = vpop.permute.xlu0 %7618
        %7620 = vrot.lane.b32.xlu0 %v7578, 24
        %v7621 = vpop.permute.xlu0 %7620
        %7622 = vrot.lane.b32.xlu0 %v7579, 24
        %v7623 = vpop.permute.xlu0 %7622
        %7624 = vrot.lane.b32.xlu0 %v7580, 24
        %v7625 = vpop.permute.xlu0 %7624
        %7626 = vrot.lane.b32.xlu0 %v7581, 24
        %v7627 = vpop.permute.xlu0 %7626
        %7628 = vrot.lane.b32.xlu0 %v7582, 24
        %v7629 = vpop.permute.xlu0 %7628
        %7630 = vrot.lane.b32.xlu0 %v7583, 24
        %v7631 = vpop.permute.xlu0 %7630
        %7648 = vst.msk [vmem:[#allocation3] sm:$0xff] %vm870, %v7601
        %7649 = vst.msk [vmem:[#allocation3 + $0x8] sm:$0xff] %vm870, %v7603
        %7650 = vst.msk [vmem:[#allocation3 + $0x10] sm:$0xff] %vm870, %v7605
        %7651 = vst.msk [vmem:[#allocation3 + $0x18] sm:$0xff] %vm870, %v7607
        %7652 = vst.msk [vmem:[#allocation3 + $0x20] sm:$0xff] %vm870, %v7609
        %7653 = vst.msk [vmem:[#allocation3 + $0x28] sm:$0xff] %vm870, %v7611
        %7654 = vst.msk [vmem:[#allocation3 + $0x30] sm:$0xff] %vm870, %v7613
        %7655 = vst.msk [vmem:[#allocation3 + $0x38] sm:$0xff] %vm870, %v7615
        %7656 = vst.msk [vmem:[#allocation3 + $0x40] sm:$0xff] %vm870, %v7617
        %7657 = vst.msk [vmem:[#allocation3 + $0x48] sm:$0xff] %vm870, %v7619
        %7658 = vst.msk [vmem:[#allocation3 + $0x50] sm:$0xff] %vm870, %v7621
        %7659 = vst.msk [vmem:[#allocation3 + $0x58] sm:$0xff] %vm870, %v7623
        %7660 = vst.msk [vmem:[#allocation3 + $0x60] sm:$0xff] %vm870, %v7625
        %7661 = vst.msk [vmem:[#allocation3 + $0x68] sm:$0xff] %vm870, %v7627
        %7662 = vst.msk [vmem:[#allocation3 + $0x70] sm:$0xff] %vm870, %v7629
        %7663 = vst.msk [vmem:[#allocation3 + $0x78] sm:$0xff] %vm870, %v7631
        %v7664 = vld [vmem:[%s1848 + $0x1] sm:$0xff]
        %v7665 = vld [vmem:[%s1848 + $0x9] sm:$0xff]
        %v7666 = vld [vmem:[%s1848 + $0x19] sm:$0xff]
        %v7667 = vld [vmem:[%s1848 + $0x21] sm:$0xff]
        %v7668 = vld [vmem:[%s1848 + $0x31] sm:$0xff]
        %v7669 = vld [vmem:[%s1848 + $0x39] sm:$0xff]
        %v7670 = vld [vmem:[%s1848 + $0x49] sm:$0xff]
        %v7671 = vld [vmem:[%s1848 + $0x51] sm:$0xff]
        %v7672 = vld [vmem:[%s1848 + $0x61] sm:$0xff]
        %v7673 = vld [vmem:[%s1848 + $0x69] sm:$0xff]
        %v7674 = vld [vmem:[%s1848 + $0x79] sm:$0xff]
        %v7675 = vld [vmem:[%s1848 + $0x81] sm:$0xff]
        %v7676 = vld [vmem:[%s1848 + $0x91] sm:$0xff]
        %v7677 = vld [vmem:[%s1848 + $0x99] sm:$0xff]
        %v7678 = vld [vmem:[%s1848 + $0xa9] sm:$0xff]
        %v7679 = vld [vmem:[%s1848 + $0xb1] sm:$0xff]
        %7696 = vrot.lane.b32.xlu0 %v7664, 32
        %v7697 = vpop.permute.xlu0 %7696
        %7698 = vrot.lane.b32.xlu0 %v7665, 32
        %v7699 = vpop.permute.xlu0 %7698
        %7700 = vrot.lane.b32.xlu0 %v7666, 32
        %v7701 = vpop.permute.xlu0 %7700
        %7702 = vrot.lane.b32.xlu0 %v7667, 32
        %v7703 = vpop.permute.xlu0 %7702
        %7704 = vrot.lane.b32.xlu0 %v7668, 32
        %v7705 = vpop.permute.xlu0 %7704
        %7706 = vrot.lane.b32.xlu0 %v7669, 32
        %v7707 = vpop.permute.xlu0 %7706
        %7708 = vrot.lane.b32.xlu0 %v7670, 32
        %v7709 = vpop.permute.xlu0 %7708
        %7710 = vrot.lane.b32.xlu0 %v7671, 32
        %v7711 = vpop.permute.xlu0 %7710
        %7712 = vrot.lane.b32.xlu0 %v7672, 32
        %v7713 = vpop.permute.xlu0 %7712
        %7714 = vrot.lane.b32.xlu0 %v7673, 32
        %v7715 = vpop.permute.xlu0 %7714
        %7716 = vrot.lane.b32.xlu0 %v7674, 32
        %v7717 = vpop.permute.xlu0 %7716
        %7718 = vrot.lane.b32.xlu0 %v7675, 32
        %v7719 = vpop.permute.xlu0 %7718
        %7720 = vrot.lane.b32.xlu0 %v7676, 32
        %v7721 = vpop.permute.xlu0 %7720
        %7722 = vrot.lane.b32.xlu0 %v7677, 32
        %v7723 = vpop.permute.xlu0 %7722
        %7724 = vrot.lane.b32.xlu0 %v7678, 32
        %v7725 = vpop.permute.xlu0 %7724
        %7726 = vrot.lane.b32.xlu0 %v7679, 32
        %v7727 = vpop.permute.xlu0 %7726
        %7744 = vst.msk [vmem:[#allocation3] sm:$0xff] %vm967, %v7697
        %7745 = vst.msk [vmem:[#allocation3 + $0x8] sm:$0xff] %vm967, %v7699
        %7746 = vst.msk [vmem:[#allocation3 + $0x10] sm:$0xff] %vm967, %v7701
        %7747 = vst.msk [vmem:[#allocation3 + $0x18] sm:$0xff] %vm967, %v7703
        %7748 = vst.msk [vmem:[#allocation3 + $0x20] sm:$0xff] %vm967, %v7705
        %7749 = vst.msk [vmem:[#allocation3 + $0x28] sm:$0xff] %vm967, %v7707
        %7750 = vst.msk [vmem:[#allocation3 + $0x30] sm:$0xff] %vm967, %v7709
        %7751 = vst.msk [vmem:[#allocation3 + $0x38] sm:$0xff] %vm967, %v7711
        %7752 = vst.msk [vmem:[#allocation3 + $0x40] sm:$0xff] %vm967, %v7713
        %7753 = vst.msk [vmem:[#allocation3 + $0x48] sm:$0xff] %vm967, %v7715
        %7754 = vst.msk [vmem:[#allocation3 + $0x50] sm:$0xff] %vm967, %v7717
        %7755 = vst.msk [vmem:[#allocation3 + $0x58] sm:$0xff] %vm967, %v7719
        %7756 = vst.msk [vmem:[#allocation3 + $0x60] sm:$0xff] %vm967, %v7721
        %7757 = vst.msk [vmem:[#allocation3 + $0x68] sm:$0xff] %vm967, %v7723
        %7758 = vst.msk [vmem:[#allocation3 + $0x70] sm:$0xff] %vm967, %v7725
        %7759 = vst.msk [vmem:[#allocation3 + $0x78] sm:$0xff] %vm967, %v7727
        %v7760 = vld [vmem:[%s1848 + $0x2] sm:$0xff]
        %v7761 = vld [vmem:[%s1848 + $0xa] sm:$0xff]
        %v7762 = vld [vmem:[%s1848 + $0x1a] sm:$0xff]
        %v7763 = vld [vmem:[%s1848 + $0x22] sm:$0xff]
        %v7764 = vld [vmem:[%s1848 + $0x32] sm:$0xff]
        %v7765 = vld [vmem:[%s1848 + $0x3a] sm:$0xff]
        %v7766 = vld [vmem:[%s1848 + $0x4a] sm:$0xff]
        %v7767 = vld [vmem:[%s1848 + $0x52] sm:$0xff]
        %v7768 = vld [vmem:[%s1848 + $0x62] sm:$0xff]
        %v7769 = vld [vmem:[%s1848 + $0x6a] sm:$0xff]
        %v7770 = vld [vmem:[%s1848 + $0x7a] sm:$0xff]
        %v7771 = vld [vmem:[%s1848 + $0x82] sm:$0xff]
        %v7772 = vld [vmem:[%s1848 + $0x92] sm:$0xff]
        %v7773 = vld [vmem:[%s1848 + $0x9a] sm:$0xff]
        %v7774 = vld [vmem:[%s1848 + $0xaa] sm:$0xff]
        %v7775 = vld [vmem:[%s1848 + $0xb2] sm:$0xff]
        %7792 = vrot.lane.b32.xlu0 %v7760, 40
        %v7793 = vpop.permute.xlu0 %7792
        %7794 = vrot.lane.b32.xlu0 %v7761, 40
        %v7795 = vpop.permute.xlu0 %7794
        %7796 = vrot.lane.b32.xlu0 %v7762, 40
        %v7797 = vpop.permute.xlu0 %7796
        %7798 = vrot.lane.b32.xlu0 %v7763, 40
        %v7799 = vpop.permute.xlu0 %7798
        %7800 = vrot.lane.b32.xlu0 %v7764, 40
        %v7801 = vpop.permute.xlu0 %7800
        %7802 = vrot.lane.b32.xlu0 %v7765, 40
        %v7803 = vpop.permute.xlu0 %7802
        %7804 = vrot.lane.b32.xlu0 %v7766, 40
        %v7805 = vpop.permute.xlu0 %7804
        %7806 = vrot.lane.b32.xlu0 %v7767, 40
        %v7807 = vpop.permute.xlu0 %7806
        %7808 = vrot.lane.b32.xlu0 %v7768, 40
        %v7809 = vpop.permute.xlu0 %7808
        %7810 = vrot.lane.b32.xlu0 %v7769, 40
        %v7811 = vpop.permute.xlu0 %7810
        %7812 = vrot.lane.b32.xlu0 %v7770, 40
        %v7813 = vpop.permute.xlu0 %7812
        %7814 = vrot.lane.b32.xlu0 %v7771, 40
        %v7815 = vpop.permute.xlu0 %7814
        %7816 = vrot.lane.b32.xlu0 %v7772, 40
        %v7817 = vpop.permute.xlu0 %7816
        %7818 = vrot.lane.b32.xlu0 %v7773, 40
        %v7819 = vpop.permute.xlu0 %7818
        %7820 = vrot.lane.b32.xlu0 %v7774, 40
        %v7821 = vpop.permute.xlu0 %7820
        %7822 = vrot.lane.b32.xlu0 %v7775, 40
        %v7823 = vpop.permute.xlu0 %7822
        %7840 = vst.msk [vmem:[#allocation3] sm:$0xff] %vm1064, %v7793
        %7841 = vst.msk [vmem:[#allocation3 + $0x8] sm:$0xff] %vm1064, %v7795
        %7842 = vst.msk [vmem:[#allocation3 + $0x10] sm:$0xff] %vm1064, %v7797
        %7843 = vst.msk [vmem:[#allocation3 + $0x18] sm:$0xff] %vm1064, %v7799
        %7844 = vst.msk [vmem:[#allocation3 + $0x20] sm:$0xff] %vm1064, %v7801
        %7845 = vst.msk [vmem:[#allocation3 + $0x28] sm:$0xff] %vm1064, %v7803
        %7846 = vst.msk [vmem:[#allocation3 + $0x30] sm:$0xff] %vm1064, %v7805
        %7847 = vst.msk [vmem:[#allocation3 + $0x38] sm:$0xff] %vm1064, %v7807
        %7848 = vst.msk [vmem:[#allocation3 + $0x40] sm:$0xff] %vm1064, %v7809
        %7849 = vst.msk [vmem:[#allocation3 + $0x48] sm:$0xff] %vm1064, %v7811
        %7850 = vst.msk [vmem:[#allocation3 + $0x50] sm:$0xff] %vm1064, %v7813
        %7851 = vst.msk [vmem:[#allocation3 + $0x58] sm:$0xff] %vm1064, %v7815
        %7852 = vst.msk [vmem:[#allocation3 + $0x60] sm:$0xff] %vm1064, %v7817
        %7853 = vst.msk [vmem:[#allocation3 + $0x68] sm:$0xff] %vm1064, %v7819
        %7854 = vst.msk [vmem:[#allocation3 + $0x70] sm:$0xff] %vm1064, %v7821
        %7855 = vst.msk [vmem:[#allocation3 + $0x78] sm:$0xff] %vm1064, %v7823
        %v7856 = vld [vmem:[%s2137] sm:$0xff]
        %v7857 = vld [vmem:[%s2137 + $0x8] sm:$0xff]
        %v7858 = vld [vmem:[%s2137 + $0x18] sm:$0xff]
        %v7859 = vld [vmem:[%s2137 + $0x20] sm:$0xff]
        %v7860 = vld [vmem:[%s2137 + $0x30] sm:$0xff]
        %v7861 = vld [vmem:[%s2137 + $0x38] sm:$0xff]
        %v7862 = vld [vmem:[%s2137 + $0x48] sm:$0xff]
        %v7863 = vld [vmem:[%s2137 + $0x50] sm:$0xff]
        %v7864 = vld [vmem:[%s2137 + $0x60] sm:$0xff]
        %v7865 = vld [vmem:[%s2137 + $0x68] sm:$0xff]
        %v7866 = vld [vmem:[%s2137 + $0x78] sm:$0xff]
        %v7867 = vld [vmem:[%s2137 + $0x80] sm:$0xff]
        %v7868 = vld [vmem:[%s2137 + $0x90] sm:$0xff]
        %v7869 = vld [vmem:[%s2137 + $0x98] sm:$0xff]
        %v7870 = vld [vmem:[%s2137 + $0xa8] sm:$0xff]
        %v7871 = vld [vmem:[%s2137 + $0xb0] sm:$0xff]
        %7888 = vrot.lane.b32.xlu0 %v7856, 48
        %v7889 = vpop.permute.xlu0 %7888
        %7890 = vrot.lane.b32.xlu0 %v7857, 48
        %v7891 = vpop.permute.xlu0 %7890
        %7892 = vrot.lane.b32.xlu0 %v7858, 48
        %v7893 = vpop.permute.xlu0 %7892
        %7894 = vrot.lane.b32.xlu0 %v7859, 48
        %v7895 = vpop.permute.xlu0 %7894
        %7896 = vrot.lane.b32.xlu0 %v7860, 48
        %v7897 = vpop.permute.xlu0 %7896
        %7898 = vrot.lane.b32.xlu0 %v7861, 48
        %v7899 = vpop.permute.xlu0 %7898
        %7900 = vrot.lane.b32.xlu0 %v7862, 48
        %v7901 = vpop.permute.xlu0 %7900
        %7902 = vrot.lane.b32.xlu0 %v7863, 48
        %v7903 = vpop.permute.xlu0 %7902
        %7904 = vrot.lane.b32.xlu0 %v7864, 48
        %v7905 = vpop.permute.xlu0 %7904
        %7906 = vrot.lane.b32.xlu0 %v7865, 48
        %v7907 = vpop.permute.xlu0 %7906
        %7908 = vrot.lane.b32.xlu0 %v7866, 48
        %v7909 = vpop.permute.xlu0 %7908
        %7910 = vrot.lane.b32.xlu0 %v7867, 48
        %v7911 = vpop.permute.xlu0 %7910
        %7912 = vrot.lane.b32.xlu0 %v7868, 48
        %v7913 = vpop.permute.xlu0 %7912
        %7914 = vrot.lane.b32.xlu0 %v7869, 48
        %v7915 = vpop.permute.xlu0 %7914
        %7916 = vrot.lane.b32.xlu0 %v7870, 48
        %v7917 = vpop.permute.xlu0 %7916
        %7918 = vrot.lane.b32.xlu0 %v7871, 48
        %v7919 = vpop.permute.xlu0 %7918
        %7936 = vst.msk [vmem:[#allocation3] sm:$0xff] %vm1162, %v7889
        %7937 = vst.msk [vmem:[#allocation3 + $0x8] sm:$0xff] %vm1162, %v7891
        %7938 = vst.msk [vmem:[#allocation3 + $0x10] sm:$0xff] %vm1162, %v7893
        %7939 = vst.msk [vmem:[#allocation3 + $0x18] sm:$0xff] %vm1162, %v7895
        %7940 = vst.msk [vmem:[#allocation3 + $0x20] sm:$0xff] %vm1162, %v7897
        %7941 = vst.msk [vmem:[#allocation3 + $0x28] sm:$0xff] %vm1162, %v7899
        %7942 = vst.msk [vmem:[#allocation3 + $0x30] sm:$0xff] %vm1162, %v7901
        %7943 = vst.msk [vmem:[#allocation3 + $0x38] sm:$0xff] %vm1162, %v7903
        %7944 = vst.msk [vmem:[#allocation3 + $0x40] sm:$0xff] %vm1162, %v7905
        %7945 = vst.msk [vmem:[#allocation3 + $0x48] sm:$0xff] %vm1162, %v7907
        %7946 = vst.msk [vmem:[#allocation3 + $0x50] sm:$0xff] %vm1162, %v7909
        %7947 = vst.msk [vmem:[#allocation3 + $0x58] sm:$0xff] %vm1162, %v7911
        %7948 = vst.msk [vmem:[#allocation3 + $0x60] sm:$0xff] %vm1162, %v7913
        %7949 = vst.msk [vmem:[#allocation3 + $0x68] sm:$0xff] %vm1162, %v7915
        %7950 = vst.msk [vmem:[#allocation3 + $0x70] sm:$0xff] %vm1162, %v7917
        %7951 = vst.msk [vmem:[#allocation3 + $0x78] sm:$0xff] %vm1162, %v7919
        %v7952 = vld [vmem:[%s2137 + $0x1] sm:$0xff]
        %v7953 = vld [vmem:[%s2137 + $0x9] sm:$0xff]
        %v7954 = vld [vmem:[%s2137 + $0x19] sm:$0xff]
        %v7955 = vld [vmem:[%s2137 + $0x21] sm:$0xff]
        %v7956 = vld [vmem:[%s2137 + $0x31] sm:$0xff]
        %v7957 = vld [vmem:[%s2137 + $0x39] sm:$0xff]
        %v7958 = vld [vmem:[%s2137 + $0x49] sm:$0xff]
        %v7959 = vld [vmem:[%s2137 + $0x51] sm:$0xff]
        %v7960 = vld [vmem:[%s2137 + $0x61] sm:$0xff]
        %v7961 = vld [vmem:[%s2137 + $0x69] sm:$0xff]
        %v7962 = vld [vmem:[%s2137 + $0x79] sm:$0xff]
        %v7963 = vld [vmem:[%s2137 + $0x81] sm:$0xff]
        %v7964 = vld [vmem:[%s2137 + $0x91] sm:$0xff]
        %v7965 = vld [vmem:[%s2137 + $0x99] sm:$0xff]
        %v7966 = vld [vmem:[%s2137 + $0xa9] sm:$0xff]
        %v7967 = vld [vmem:[%s2137 + $0xb1] sm:$0xff]
        %7984 = vrot.lane.b32.xlu0 %v7952, 56
        %v7985 = vpop.permute.xlu0 %7984
        %7986 = vrot.lane.b32.xlu0 %v7953, 56
        %v7987 = vpop.permute.xlu0 %7986
        %7988 = vrot.lane.b32.xlu0 %v7954, 56
        %v7989 = vpop.permute.xlu0 %7988
        %7990 = vrot.lane.b32.xlu0 %v7955, 56
        %v7991 = vpop.permute.xlu0 %7990
        %7992 = vrot.lane.b32.xlu0 %v7956, 56
        %v7993 = vpop.permute.xlu0 %7992
        %7994 = vrot.lane.b32.xlu0 %v7957, 56
        %v7995 = vpop.permute.xlu0 %7994
        %7996 = vrot.lane.b32.xlu0 %v7958, 56
        %v7997 = vpop.permute.xlu0 %7996
        %7998 = vrot.lane.b32.xlu0 %v7959, 56
        %v7999 = vpop.permute.xlu0 %7998
        %8000 = vrot.lane.b32.xlu0 %v7960, 56
        %v8001 = vpop.permute.xlu0 %8000
        %8002 = vrot.lane.b32.xlu0 %v7961, 56
        %v8003 = vpop.permute.xlu0 %8002
        %8004 = vrot.lane.b32.xlu0 %v7962, 56
        %v8005 = vpop.permute.xlu0 %8004
        %8006 = vrot.lane.b32.xlu0 %v7963, 56
        %v8007 = vpop.permute.xlu0 %8006
        %8008 = vrot.lane.b32.xlu0 %v7964, 56
        %v8009 = vpop.permute.xlu0 %8008
        %8010 = vrot.lane.b32.xlu0 %v7965, 56
        %v8011 = vpop.permute.xlu0 %8010
        %8012 = vrot.lane.b32.xlu0 %v7966, 56
        %v8013 = vpop.permute.xlu0 %8012
        %8014 = vrot.lane.b32.xlu0 %v7967, 56
        %v8015 = vpop.permute.xlu0 %8014
        %8032 = vst.msk [vmem:[#allocation3] sm:$0xff] %vm1259, %v7985
        %8033 = vst.msk [vmem:[#allocation3 + $0x8] sm:$0xff] %vm1259, %v7987
        %8034 = vst.msk [vmem:[#allocation3 + $0x10] sm:$0xff] %vm1259, %v7989
        %8035 = vst.msk [vmem:[#allocation3 + $0x18] sm:$0xff] %vm1259, %v7991
        %8036 = vst.msk [vmem:[#allocation3 + $0x20] sm:$0xff] %vm1259, %v7993
        %8037 = vst.msk [vmem:[#allocation3 + $0x28] sm:$0xff] %vm1259, %v7995
        %8038 = vst.msk [vmem:[#allocation3 + $0x30] sm:$0xff] %vm1259, %v7997
        %8039 = vst.msk [vmem:[#allocation3 + $0x38] sm:$0xff] %vm1259, %v7999
        %8040 = vst.msk [vmem:[#allocation3 + $0x40] sm:$0xff] %vm1259, %v8001
        %8041 = vst.msk [vmem:[#allocation3 + $0x48] sm:$0xff] %vm1259, %v8003
        %8042 = vst.msk [vmem:[#allocation3 + $0x50] sm:$0xff] %vm1259, %v8005
        %8043 = vst.msk [vmem:[#allocation3 + $0x58] sm:$0xff] %vm1259, %v8007
        %8044 = vst.msk [vmem:[#allocation3 + $0x60] sm:$0xff] %vm1259, %v8009
        %8045 = vst.msk [vmem:[#allocation3 + $0x68] sm:$0xff] %vm1259, %v8011
        %8046 = vst.msk [vmem:[#allocation3 + $0x70] sm:$0xff] %vm1259, %v8013
        %8047 = vst.msk [vmem:[#allocation3 + $0x78] sm:$0xff] %vm1259, %v8015
        %v8048 = vld [vmem:[%s2137 + $0x2] sm:$0xff]
        %v8049 = vld [vmem:[%s2137 + $0xa] sm:$0xff]
        %v8050 = vld [vmem:[%s2137 + $0x1a] sm:$0xff]
        %v8051 = vld [vmem:[%s2137 + $0x22] sm:$0xff]
        %v8052 = vld [vmem:[%s2137 + $0x32] sm:$0xff]
        %v8053 = vld [vmem:[%s2137 + $0x3a] sm:$0xff]
        %v8054 = vld [vmem:[%s2137 + $0x4a] sm:$0xff]
        %v8055 = vld [vmem:[%s2137 + $0x52] sm:$0xff]
        %v8056 = vld [vmem:[%s2137 + $0x62] sm:$0xff]
        %v8057 = vld [vmem:[%s2137 + $0x6a] sm:$0xff]
        %v8058 = vld [vmem:[%s2137 + $0x7a] sm:$0xff]
        %v8059 = vld [vmem:[%s2137 + $0x82] sm:$0xff]
        %v8060 = vld [vmem:[%s2137 + $0x92] sm:$0xff]
        %v8061 = vld [vmem:[%s2137 + $0x9a] sm:$0xff]
        %v8062 = vld [vmem:[%s2137 + $0xaa] sm:$0xff]
        %v8063 = vld [vmem:[%s2137 + $0xb2] sm:$0xff]
        %8080 = vrot.lane.b32.xlu0 %v8048, 64
        %v8081 = vpop.permute.xlu0 %8080
        %8082 = vrot.lane.b32.xlu0 %v8049, 64
        %v8083 = vpop.permute.xlu0 %8082
        %8084 = vrot.lane.b32.xlu0 %v8050, 64
        %v8085 = vpop.permute.xlu0 %8084
        %8086 = vrot.lane.b32.xlu0 %v8051, 64
        %v8087 = vpop.permute.xlu0 %8086
        %8088 = vrot.lane.b32.xlu0 %v8052, 64
        %v8089 = vpop.permute.xlu0 %8088
        %8090 = vrot.lane.b32.xlu0 %v8053, 64
        %v8091 = vpop.permute.xlu0 %8090
        %8092 = vrot.lane.b32.xlu0 %v8054, 64
        %v8093 = vpop.permute.xlu0 %8092
        %8094 = vrot.lane.b32.xlu0 %v8055, 64
        %v8095 = vpop.permute.xlu0 %8094
        %8096 = vrot.lane.b32.xlu0 %v8056, 64
        %v8097 = vpop.permute.xlu0 %8096
        %8098 = vrot.lane.b32.xlu0 %v8057, 64
        %v8099 = vpop.permute.xlu0 %8098
        %8100 = vrot.lane.b32.xlu0 %v8058, 64
        %v8101 = vpop.permute.xlu0 %8100
        %8102 = vrot.lane.b32.xlu0 %v8059, 64
        %v8103 = vpop.permute.xlu0 %8102
        %8104 = vrot.lane.b32.xlu0 %v8060, 64
        %v8105 = vpop.permute.xlu0 %8104
        %8106 = vrot.lane.b32.xlu0 %v8061, 64
        %v8107 = vpop.permute.xlu0 %8106
        %8108 = vrot.lane.b32.xlu0 %v8062, 64
        %v8109 = vpop.permute.xlu0 %8108
        %8110 = vrot.lane.b32.xlu0 %v8063, 64
        %v8111 = vpop.permute.xlu0 %8110
        %8128 = vst.msk [vmem:[#allocation3] sm:$0xff] %vm1356, %v8081
        %8129 = vst.msk [vmem:[#allocation3 + $0x8] sm:$0xff] %vm1356, %v8083
        %8130 = vst.msk [vmem:[#allocation3 + $0x10] sm:$0xff] %vm1356, %v8085
        %8131 = vst.msk [vmem:[#allocation3 + $0x18] sm:$0xff] %vm1356, %v8087
        %8132 = vst.msk [vmem:[#allocation3 + $0x20] sm:$0xff] %vm1356, %v8089
        %8133 = vst.msk [vmem:[#allocation3 + $0x28] sm:$0xff] %vm1356, %v8091
        %8134 = vst.msk [vmem:[#allocation3 + $0x30] sm:$0xff] %vm1356, %v8093
        %8135 = vst.msk [vmem:[#allocation3 + $0x38] sm:$0xff] %vm1356, %v8095
        %8136 = vst.msk [vmem:[#allocation3 + $0x40] sm:$0xff] %vm1356, %v8097
        %8137 = vst.msk [vmem:[#allocation3 + $0x48] sm:$0xff] %vm1356, %v8099
        %8138 = vst.msk [vmem:[#allocation3 + $0x50] sm:$0xff] %vm1356, %v8101
        %8139 = vst.msk [vmem:[#allocation3 + $0x58] sm:$0xff] %vm1356, %v8103
        %8140 = vst.msk [vmem:[#allocation3 + $0x60] sm:$0xff] %vm1356, %v8105
        %8141 = vst.msk [vmem:[#allocation3 + $0x68] sm:$0xff] %vm1356, %v8107
        %8142 = vst.msk [vmem:[#allocation3 + $0x70] sm:$0xff] %vm1356, %v8109
        %8143 = vst.msk [vmem:[#allocation3 + $0x78] sm:$0xff] %vm1356, %v8111
        %v8144 = vld [vmem:[#allocation3] sm:$0xff]
        %v8145 = vld [vmem:[#allocation3 + $0x8] sm:$0xff]
        %v8146 = vld [vmem:[#allocation3 + $0x10] sm:$0xff]
        %v8147 = vld [vmem:[#allocation3 + $0x18] sm:$0xff]
        %v8148 = vld [vmem:[#allocation3 + $0x20] sm:$0xff]
        %v8149 = vld [vmem:[#allocation3 + $0x28] sm:$0xff]
        %v8150 = vld [vmem:[#allocation3 + $0x30] sm:$0xff]
        %v8151 = vld [vmem:[#allocation3 + $0x38] sm:$0xff]
        %v8152 = vld [vmem:[#allocation3 + $0x40] sm:$0xff]
        %v8153 = vld [vmem:[#allocation3 + $0x48] sm:$0xff]
        %v8154 = vld [vmem:[#allocation3 + $0x50] sm:$0xff]
        %v8155 = vld [vmem:[#allocation3 + $0x58] sm:$0xff]
        %v8156 = vld [vmem:[#allocation3 + $0x60] sm:$0xff]
        %v8157 = vld [vmem:[#allocation3 + $0x68] sm:$0xff]
        %v8158 = vld [vmem:[#allocation3 + $0x70] sm:$0xff]
        %v8159 = vld [vmem:[#allocation3 + $0x78] sm:$0xff]
        %v8160 = vld [vmem:[%s10] sm:$0xff]
        %v8161 = vld [vmem:[%s10 + $0x8] sm:$0xff]
        %v8162 = vld [vmem:[%s10 + $0x10] sm:$0xff]
        %v8163 = vld [vmem:[%s10 + $0x18] sm:$0xff]
        %v8164 = vld [vmem:[%s10 + $0x20] sm:$0xff]
        %v8165 = vld [vmem:[%s10 + $0x28] sm:$0xff]
        %v8166 = vld [vmem:[%s10 + $0x30] sm:$0xff]
        %v8167 = vld [vmem:[%s10 + $0x38] sm:$0xff]
        %v8168 = vld [vmem:[%s10 + $0x40] sm:$0xff]
        %v8170 = vperm.slane %v7343, 0
        %v8173 = vsel %vm1401, %v8144, 0
        %v8176 = vsel %vm1401, %v8145, 0
        %v8179 = vsel %vm1401, %v8146, 0
        %v8182 = vsel %vm1401, %v8147, 0
        %v8185 = vsel %vm1401, %v8148, 0
        %v8188 = vsel %vm1401, %v8149, 0
        %v8191 = vsel %vm1401, %v8150, 0
        %v8194 = vsel %vm1401, %v8151, 0
        %v8197 = vsel %vm1401, %v8152, 0
        %v8200 = vsel %vm1401, %v8153, 0
        %v8203 = vsel %vm1401, %v8154, 0
        %v8206 = vsel %vm1401, %v8155, 0
        %v8209 = vsel %vm1401, %v8156, 0
        %v8212 = vsel %vm1401, %v8157, 0
        %v8215 = vsel %vm1401, %v8158, 0
        %v8218 = vsel %vm1401, %v8159, 0
        %8220 = vmatpush.msra.mxu0 0.0
        %8221 = vmatpush.msra.mxu0 0.0
        %8222 = vmatpush.msra.mxu0 0.0
        %8223 = vmatpush.msra.mxu0 0.0
        %8224 = vmatpush.msra.mxu0 0.0
        %8225 = vmatpush.msra.mxu0 0.0
        %8226 = vmatpush.msra.mxu0 0.0
        %8227 = vmatpush.msra.mxu0 %v8168
        %8228 = vmatpush.msra.mxu0 %v8167
        %8229 = vmatpush.msra.mxu0 %v8166
        %8230 = vmatpush.msra.mxu0 %v8165
        %8231 = vmatpush.msra.mxu0 %v8164
        %8232 = vmatpush.msra.mxu0 %v8163
        %8233 = vmatpush.msra.mxu0 %v8162
        %8234 = vmatpush.msra.mxu0 %v8161
        %8235 = vmatpush.msra.mxu0 %v8160
        %8236 = vmatmul.f32.gmra.mxu0 %v8173
        %v8237 = vpop.f32.mrf.mxu0
        %v8238 = vadd.f32 %v8170, %v8237
        %8239 = vmatmul.f32.gmra.mxu0 %v8176
        %v8240 = vpop.f32.mrf.mxu0
        %v8241 = vadd.f32 %v8170, %v8240
        %8242 = vmatmul.f32.gmra.mxu0 %v8179
        %v8243 = vpop.f32.mrf.mxu0
        %v8244 = vadd.f32 %v8170, %v8243
        %8245 = vmatmul.f32.gmra.mxu0 %v8182
        %v8246 = vpop.f32.mrf.mxu0
        %v8247 = vadd.f32 %v8170, %v8246
        %8248 = vmatmul.f32.gmra.mxu0 %v8185
        %v8249 = vpop.f32.mrf.mxu0
        %v8250 = vadd.f32 %v8170, %v8249
        %8251 = vmatmul.f32.gmra.mxu0 %v8188
        %v8252 = vpop.f32.mrf.mxu0
        %v8253 = vadd.f32 %v8170, %v8252
        %8254 = vmatmul.f32.gmra.mxu0 %v8191
        %v8255 = vpop.f32.mrf.mxu0
        %v8256 = vadd.f32 %v8170, %v8255
        %8257 = vmatmul.f32.gmra.mxu0 %v8194
        %v8258 = vpop.f32.mrf.mxu0
        %v8259 = vadd.f32 %v8170, %v8258
        %8260 = vmatmul.f32.gmra.mxu0 %v8197
        %v8261 = vpop.f32.mrf.mxu0
        %v8262 = vadd.f32 %v8170, %v8261
        %8263 = vmatmul.f32.gmra.mxu0 %v8200
        %v8264 = vpop.f32.mrf.mxu0
        %v8265 = vadd.f32 %v8170, %v8264
        %8266 = vmatmul.f32.gmra.mxu0 %v8203
        %v8267 = vpop.f32.mrf.mxu0
        %v8268 = vadd.f32 %v8170, %v8267
        %8269 = vmatmul.f32.gmra.mxu0 %v8206
        %v8270 = vpop.f32.mrf.mxu0
        %v8271 = vadd.f32 %v8170, %v8270
        %8272 = vmatmul.f32.gmra.mxu0 %v8209
        %v8273 = vpop.f32.mrf.mxu0
        %v8274 = vadd.f32 %v8170, %v8273
        %8275 = vmatmul.f32.gmra.mxu0 %v8212
        %v8276 = vpop.f32.mrf.mxu0
        %v8277 = vadd.f32 %v8170, %v8276
        %8278 = vmatmul.f32.gmra.mxu0 %v8215
        %v8279 = vpop.f32.mrf.mxu0
        %v8280 = vadd.f32 %v8170, %v8279
        %8281 = vmatmul.f32.gmra.mxu0 %v8218
        %v8282 = vpop.f32.mrf.mxu0
        %v8283 = vadd.f32 %v8170, %v8282
        %8284 = vdwg.mxu0
        %s8285 = scalar_lea.vmem [#allocation5], 144
        %8286 = vst.msk [vmem:[%s8285] sm:$0xff] %vm472, %v8238
        %8287 = vst.msk [vmem:[%s8285 + $0x8] sm:$0xff] %vm472, %v8241
        %s8288 = scalar_lea.vmem [#allocation5], 160
        %8289 = vst.msk [vmem:[%s8288] sm:$0xff] %vm472, %v8244
        %8290 = vst.msk [vmem:[%s8288 + $0x8] sm:$0xff] %vm472, %v8247
        %8291 = vst.msk [vmem:[%s8288 + $0x10] sm:$0xff] %vm472, %v8250
        %8292 = vst.msk [vmem:[%s8288 + $0x18] sm:$0xff] %vm472, %v8253
        %8293 = vst.msk [vmem:[%s8288 + $0x20] sm:$0xff] %vm472, %v8256
        %8294 = vst.msk [vmem:[%s8288 + $0x28] sm:$0xff] %vm472, %v8259
        %8295 = vst.msk [vmem:[%s8288 + $0x30] sm:$0xff] %vm472, %v8262
        %8296 = vst.msk [vmem:[%s8288 + $0x38] sm:$0xff] %vm472, %v8265
        %8297 = vst.msk [vmem:[%s8288 + $0x40] sm:$0xff] %vm472, %v8268
        %8298 = vst.msk [vmem:[%s8288 + $0x48] sm:$0xff] %vm472, %v8271
        %8299 = vst.msk [vmem:[%s8288 + $0x50] sm:$0xff] %vm472, %v8274
        %8300 = vst.msk [vmem:[%s8288 + $0x58] sm:$0xff] %vm472, %v8277
        %s8301 = scalar_lea.vmem [#allocation5], 256
        %8302 = vst.msk [vmem:[%s8301] sm:$0xff] %vm472, %v8280
        %8303 = vst.msk [vmem:[%s8301 + $0x8] sm:$0xff] %vm472, %v8283
        %v8304 = vld [vmem:[#allocation5] sm:$0xff]
        %v8305 = vld [vmem:[#allocation5 + $0x8] sm:$0xff]
        %v8306 = vld [vmem:[#allocation5 + $0x20] sm:$0xff]
        %v8307 = vld [vmem:[#allocation5 + $0x28] sm:$0xff]
        %v8308 = vld [vmem:[#allocation5 + $0x40] sm:$0xff]
        %v8309 = vld [vmem:[#allocation5 + $0x48] sm:$0xff]
        %v8310 = vld [vmem:[#allocation5 + $0x60] sm:$0xff]
        %v8311 = vld [vmem:[#allocation5 + $0x68] sm:$0xff]
        %v8312 = vld [vmem:[#allocation5 + $0x80] sm:$0xff]
        %v8313 = vld [vmem:[#allocation5 + $0x88] sm:$0xff]
        %v8314 = vld [vmem:[#allocation5 + $0xa0] sm:$0xff]
        %v8315 = vld [vmem:[#allocation5 + $0xa8] sm:$0xff]
        %v8316 = vld [vmem:[#allocation5 + $0xc0] sm:$0xff]
        %v8317 = vld [vmem:[#allocation5 + $0xc8] sm:$0xff]
        %v8318 = vld [vmem:[#allocation5 + $0xe0] sm:$0xff]
        %v8319 = vld [vmem:[#allocation5 + $0xe8] sm:$0xff]
        %v8320 = vld [vmem:[%s7324] sm:$0xff]
        %v8321 = vld [vmem:[%s7324 + $0x8] sm:$0xff]
        %v8322 = vld [vmem:[%s7324 + $0x20] sm:$0xff]
        %v8323 = vld [vmem:[%s7324 + $0x28] sm:$0xff]
        %v8324 = vld [vmem:[%s7324 + $0x40] sm:$0xff]
        %v8325 = vld [vmem:[%s7324 + $0x48] sm:$0xff]
        %v8326 = vld [vmem:[%s7324 + $0x60] sm:$0xff]
        %v8327 = vld [vmem:[%s7324 + $0x68] sm:$0xff]
        %v8328 = vld [vmem:[%s7324 + $0x80] sm:$0xff]
        %v8329 = vld [vmem:[%s7324 + $0x88] sm:$0xff]
        %v8330 = vld [vmem:[%s7324 + $0xa0] sm:$0xff]
        %v8331 = vld [vmem:[%s7324 + $0xa8] sm:$0xff]
        %v8332 = vld [vmem:[%s7324 + $0xc0] sm:$0xff]
        %v8333 = vld [vmem:[%s7324 + $0xc8] sm:$0xff]
        %v8334 = vld [vmem:[%s7324 + $0xe0] sm:$0xff]
        %v8335 = vld [vmem:[%s7324 + $0xe8] sm:$0xff]
        %v8336 = vadd.f32 %v8304, %v8320
        %v8337 = vadd.f32 %v8305, %v8321
        %v8338 = vadd.f32 %v8306, %v8322
        %v8339 = vadd.f32 %v8307, %v8323
        %v8340 = vadd.f32 %v8308, %v8324
        %v8341 = vadd.f32 %v8309, %v8325
        %v8342 = vadd.f32 %v8310, %v8326
        %v8343 = vadd.f32 %v8311, %v8327
        %v8344 = vadd.f32 %v8312, %v8328
        %v8345 = vadd.f32 %v8313, %v8329
        %v8346 = vadd.f32 %v8314, %v8330
        %v8347 = vadd.f32 %v8315, %v8331
        %v8348 = vadd.f32 %v8316, %v8332
        %v8349 = vadd.f32 %v8317, %v8333
        %v8350 = vadd.f32 %v8318, %v8334
        %v8351 = vadd.f32 %v8319, %v8335
        %v8352 = vld [vmem:[%s7327] sm:$0xff]
        %v8353 = vld [vmem:[%s7327 + $0x8] sm:$0xff]
        %v8354 = vld [vmem:[%s7327 + $0x20] sm:$0xff]
        %v8355 = vld [vmem:[%s7327 + $0x28] sm:$0xff]
        %v8356 = vld [vmem:[%s7327 + $0x40] sm:$0xff]
        %v8357 = vld [vmem:[%s7327 + $0x48] sm:$0xff]
        %v8358 = vld [vmem:[%s7327 + $0x60] sm:$0xff]
        %v8359 = vld [vmem:[%s7327 + $0x68] sm:$0xff]
        %v8360 = vld [vmem:[%s7327 + $0x80] sm:$0xff]
        %v8361 = vld [vmem:[%s7327 + $0x88] sm:$0xff]
        %v8362 = vld [vmem:[%s7327 + $0xa0] sm:$0xff]
        %v8363 = vld [vmem:[%s7327 + $0xa8] sm:$0xff]
        %v8364 = vld [vmem:[%s7327 + $0xc0] sm:$0xff]
        %v8365 = vld [vmem:[%s7327 + $0xc8] sm:$0xff]
        %v8366 = vld [vmem:[%s7327 + $0xe0] sm:$0xff]
        %v8367 = vld [vmem:[%s7327 + $0xe8] sm:$0xff]
        %v8368 = vadd.f32 %v8336, %v8352
        %v8369 = vadd.f32 %v8337, %v8353
        %v8370 = vadd.f32 %v8338, %v8354
        %v8371 = vadd.f32 %v8339, %v8355
        %v8372 = vadd.f32 %v8340, %v8356
        %v8373 = vadd.f32 %v8341, %v8357
        %v8374 = vadd.f32 %v8342, %v8358
        %v8375 = vadd.f32 %v8343, %v8359
        %v8376 = vadd.f32 %v8344, %v8360
        %v8377 = vadd.f32 %v8345, %v8361
        %v8378 = vadd.f32 %v8346, %v8362
        %v8379 = vadd.f32 %v8347, %v8363
        %v8380 = vadd.f32 %v8348, %v8364
        %v8381 = vadd.f32 %v8349, %v8365
        %v8382 = vadd.f32 %v8350, %v8366
        %v8383 = vadd.f32 %v8351, %v8367
        %8384 = vst.msk [vmem:[#allocation6 + $0x1] sm:$0xff] %vm472, %v8368
        %8385 = vst.msk [vmem:[#allocation6 + $0x9] sm:$0xff] %vm472, %v8369
        %8386 = vst.msk [vmem:[#allocation6 + $0x19] sm:$0xff] %vm472, %v8370
        %8387 = vst.msk [vmem:[#allocation6 + $0x21] sm:$0xff] %vm472, %v8371
        %8388 = vst.msk [vmem:[#allocation6 + $0x31] sm:$0xff] %vm472, %v8372
        %8389 = vst.msk [vmem:[#allocation6 + $0x39] sm:$0xff] %vm472, %v8373
        %8390 = vst.msk [vmem:[#allocation6 + $0x49] sm:$0xff] %vm472, %v8374
        %8391 = vst.msk [vmem:[#allocation6 + $0x51] sm:$0xff] %vm472, %v8375
        %8392 = vst.msk [vmem:[#allocation6 + $0x61] sm:$0xff] %vm472, %v8376
        %8393 = vst.msk [vmem:[#allocation6 + $0x69] sm:$0xff] %vm472, %v8377
        %8394 = vst.msk [vmem:[#allocation6 + $0x79] sm:$0xff] %vm472, %v8378
        %8395 = vst.msk [vmem:[#allocation6 + $0x81] sm:$0xff] %vm472, %v8379
        %8396 = vst.msk [vmem:[#allocation6 + $0x91] sm:$0xff] %vm472, %v8380
        %8397 = vst.msk [vmem:[#allocation6 + $0x99] sm:$0xff] %vm472, %v8381
        %8398 = vst.msk [vmem:[#allocation6 + $0xa9] sm:$0xff] %vm472, %v8382
        %8399 = vst.msk [vmem:[#allocation6 + $0xb1] sm:$0xff] %vm472, %v8383
        %v8400 = vld [vmem:[#allocation6] sm:$0xff]
        %v8401 = vld [vmem:[#allocation6 + $0x8] sm:$0xff]
        %v8402 = vld [vmem:[#allocation6 + $0x18] sm:$0xff]
        %v8403 = vld [vmem:[#allocation6 + $0x20] sm:$0xff]
        %v8404 = vld [vmem:[#allocation6 + $0x30] sm:$0xff]
        %v8405 = vld [vmem:[#allocation6 + $0x38] sm:$0xff]
        %v8406 = vld [vmem:[#allocation6 + $0x48] sm:$0xff]
        %v8407 = vld [vmem:[#allocation6 + $0x50] sm:$0xff]
        %v8408 = vld [vmem:[#allocation6 + $0x60] sm:$0xff]
        %v8409 = vld [vmem:[#allocation6 + $0x68] sm:$0xff]
        %v8410 = vld [vmem:[#allocation6 + $0x78] sm:$0xff]
        %v8411 = vld [vmem:[#allocation6 + $0x80] sm:$0xff]
        %v8412 = vld [vmem:[#allocation6 + $0x90] sm:$0xff]
        %v8413 = vld [vmem:[#allocation6 + $0x98] sm:$0xff]
        %v8414 = vld [vmem:[#allocation6 + $0xa8] sm:$0xff]
        %v8415 = vld [vmem:[#allocation6 + $0xb0] sm:$0xff]
        %v8416 = vld [vmem:[#allocation6 + $0x1] sm:$0xff]
        %v8417 = vld [vmem:[#allocation6 + $0x9] sm:$0xff]
        %v8418 = vld [vmem:[#allocation6 + $0x19] sm:$0xff]
        %v8419 = vld [vmem:[#allocation6 + $0x21] sm:$0xff]
        %v8420 = vld [vmem:[#allocation6 + $0x31] sm:$0xff]
        %v8421 = vld [vmem:[#allocation6 + $0x39] sm:$0xff]
        %v8422 = vld [vmem:[#allocation6 + $0x49] sm:$0xff]
        %v8423 = vld [vmem:[#allocation6 + $0x51] sm:$0xff]
        %v8424 = vld [vmem:[#allocation6 + $0x61] sm:$0xff]
        %v8425 = vld [vmem:[#allocation6 + $0x69] sm:$0xff]
        %v8426 = vld [vmem:[#allocation6 + $0x79] sm:$0xff]
        %v8427 = vld [vmem:[#allocation6 + $0x81] sm:$0xff]
        %v8428 = vld [vmem:[#allocation6 + $0x91] sm:$0xff]
        %v8429 = vld [vmem:[#allocation6 + $0x99] sm:$0xff]
        %v8430 = vld [vmem:[#allocation6 + $0xa9] sm:$0xff]
        %v8431 = vld [vmem:[#allocation6 + $0xb1] sm:$0xff]
        %v8432 = vadd.f32 %v8400, %v8416
        %v8433 = vadd.f32 %v8401, %v8417
        %v8434 = vadd.f32 %v8402, %v8418
        %v8435 = vadd.f32 %v8403, %v8419
        %v8436 = vadd.f32 %v8404, %v8420
        %v8437 = vadd.f32 %v8405, %v8421
        %v8438 = vadd.f32 %v8406, %v8422
        %v8439 = vadd.f32 %v8407, %v8423
        %v8440 = vadd.f32 %v8408, %v8424
        %v8441 = vadd.f32 %v8409, %v8425
        %v8442 = vadd.f32 %v8410, %v8426
        %v8443 = vadd.f32 %v8411, %v8427
        %v8444 = vadd.f32 %v8412, %v8428
        %v8445 = vadd.f32 %v8413, %v8429
        %v8446 = vadd.f32 %v8414, %v8430
        %v8447 = vadd.f32 %v8415, %v8431
        %v8448 = vld [vmem:[#allocation6 + $0x2] sm:$0xff]
        %v8449 = vld [vmem:[#allocation6 + $0xa] sm:$0xff]
        %v8450 = vld [vmem:[#allocation6 + $0x1a] sm:$0xff]
        %v8451 = vld [vmem:[#allocation6 + $0x22] sm:$0xff]
        %v8452 = vld [vmem:[#allocation6 + $0x32] sm:$0xff]
        %v8453 = vld [vmem:[#allocation6 + $0x3a] sm:$0xff]
        %v8454 = vld [vmem:[#allocation6 + $0x4a] sm:$0xff]
        %v8455 = vld [vmem:[#allocation6 + $0x52] sm:$0xff]
        %v8456 = vld [vmem:[#allocation6 + $0x62] sm:$0xff]
        %v8457 = vld [vmem:[#allocation6 + $0x6a] sm:$0xff]
        %v8458 = vld [vmem:[#allocation6 + $0x7a] sm:$0xff]
        %v8459 = vld [vmem:[#allocation6 + $0x82] sm:$0xff]
        %v8460 = vld [vmem:[#allocation6 + $0x92] sm:$0xff]
        %v8461 = vld [vmem:[#allocation6 + $0x9a] sm:$0xff]
        %v8462 = vld [vmem:[#allocation6 + $0xaa] sm:$0xff]
        %v8463 = vld [vmem:[#allocation6 + $0xb2] sm:$0xff]
        %v8464 = vadd.f32 %v8432, %v8448
        %v8465 = vadd.f32 %v8433, %v8449
        %v8466 = vadd.f32 %v8434, %v8450
        %v8467 = vadd.f32 %v8435, %v8451
        %v8468 = vadd.f32 %v8436, %v8452
        %v8469 = vadd.f32 %v8437, %v8453
        %v8470 = vadd.f32 %v8438, %v8454
        %v8471 = vadd.f32 %v8439, %v8455
        %v8472 = vadd.f32 %v8440, %v8456
        %v8473 = vadd.f32 %v8441, %v8457
        %v8474 = vadd.f32 %v8442, %v8458
        %v8475 = vadd.f32 %v8443, %v8459
        %v8476 = vadd.f32 %v8444, %v8460
        %v8477 = vadd.f32 %v8445, %v8461
        %v8478 = vadd.f32 %v8446, %v8462
        %v8479 = vadd.f32 %v8447, %v8463
        %v8496 = vrot.slane %v8464, 2
        %v8497 = vrot.slane %v8464, 4
        %v8498 = vrot.slane %v8464, 6
        %v8499 = vrot.slane %v8465, 2
        %v8500 = vrot.slane %v8465, 4
        %v8501 = vrot.slane %v8465, 6
        %v8502 = vrot.slane %v8466, 2
        %v8503 = vrot.slane %v8466, 4
        %v8504 = vrot.slane %v8466, 6
        %v8505 = vrot.slane %v8467, 2
        %v8506 = vrot.slane %v8467, 4
        %v8507 = vrot.slane %v8467, 6
        %v8508 = vrot.slane %v8468, 2
        %v8509 = vrot.slane %v8468, 4
        %v8510 = vrot.slane %v8468, 6
        %v8511 = vrot.slane %v8469, 2
        %v8512 = vrot.slane %v8469, 4
        %v8513 = vrot.slane %v8469, 6
        %v8514 = vrot.slane %v8470, 2
        %v8515 = vrot.slane %v8470, 4
        %v8516 = vrot.slane %v8470, 6
        %v8517 = vrot.slane %v8471, 2
        %v8518 = vrot.slane %v8471, 4
        %v8519 = vrot.slane %v8471, 6
        %v8520 = vrot.slane %v8472, 2
        %v8521 = vrot.slane %v8472, 4
        %v8522 = vrot.slane %v8472, 6
        %v8523 = vrot.slane %v8473, 2
        %v8524 = vrot.slane %v8473, 4
        %v8525 = vrot.slane %v8473, 6
        %v8526 = vrot.slane %v8474, 2
        %v8527 = vrot.slane %v8474, 4
        %v8528 = vrot.slane %v8474, 6
        %v8529 = vrot.slane %v8475, 2
        %v8530 = vrot.slane %v8475, 4
        %v8531 = vrot.slane %v8475, 6
        %v8532 = vrot.slane %v8476, 2
        %v8533 = vrot.slane %v8476, 4
        %v8534 = vrot.slane %v8476, 6
        %v8535 = vrot.slane %v8477, 2
        %v8536 = vrot.slane %v8477, 4
        %v8537 = vrot.slane %v8477, 6
        %v8538 = vrot.slane %v8478, 2
        %v8539 = vrot.slane %v8478, 4
        %v8540 = vrot.slane %v8478, 6
        %v8541 = vrot.slane %v8479, 2
        %v8542 = vrot.slane %v8479, 4
        %v8543 = vrot.slane %v8479, 6
        %v8592 = vmul.f32 %v8464, 0.11111111
        %v8593 = vmul.f32 %v8496, 0.11111111
        %v8594 = vmul.f32 %v8497, 0.11111111
        %v8595 = vmul.f32 %v8498, 0.11111111
        %v8596 = vmul.f32 %v8465, 0.11111111
        %v8597 = vmul.f32 %v8499, 0.11111111
        %v8598 = vmul.f32 %v8500, 0.11111111
        %v8599 = vmul.f32 %v8501, 0.11111111
        %v8600 = vmul.f32 %v8466, 0.11111111
        %v8601 = vmul.f32 %v8502, 0.11111111
        %v8602 = vmul.f32 %v8503, 0.11111111
        %v8603 = vmul.f32 %v8504, 0.11111111
        %v8604 = vmul.f32 %v8467, 0.11111111
        %v8605 = vmul.f32 %v8505, 0.11111111
        %v8606 = vmul.f32 %v8506, 0.11111111
        %v8607 = vmul.f32 %v8507, 0.11111111
        %v8608 = vmul.f32 %v8468, 0.11111111
        %v8609 = vmul.f32 %v8508, 0.11111111
        %v8610 = vmul.f32 %v8509, 0.11111111
        %v8611 = vmul.f32 %v8510, 0.11111111
        %v8612 = vmul.f32 %v8469, 0.11111111
        %v8613 = vmul.f32 %v8511, 0.11111111
        %v8614 = vmul.f32 %v8512, 0.11111111
        %v8615 = vmul.f32 %v8513, 0.11111111
        %v8616 = vmul.f32 %v8470, 0.11111111
        %v8617 = vmul.f32 %v8514, 0.11111111
        %v8618 = vmul.f32 %v8515, 0.11111111
        %v8619 = vmul.f32 %v8516, 0.11111111
        %v8620 = vmul.f32 %v8471, 0.11111111
        %v8621 = vmul.f32 %v8517, 0.11111111
        %v8622 = vmul.f32 %v8518, 0.11111111
        %v8623 = vmul.f32 %v8519, 0.11111111
        %v8624 = vmul.f32 %v8472, 0.11111111
        %v8625 = vmul.f32 %v8520, 0.11111111
        %v8626 = vmul.f32 %v8521, 0.11111111
        %v8627 = vmul.f32 %v8522, 0.11111111
        %v8628 = vmul.f32 %v8473, 0.11111111
        %v8629 = vmul.f32 %v8523, 0.11111111
        %v8630 = vmul.f32 %v8524, 0.11111111
        %v8631 = vmul.f32 %v8525, 0.11111111
        %v8632 = vmul.f32 %v8474, 0.11111111
        %v8633 = vmul.f32 %v8526, 0.11111111
        %v8634 = vmul.f32 %v8527, 0.11111111
        %v8635 = vmul.f32 %v8528, 0.11111111
        %v8636 = vmul.f32 %v8475, 0.11111111
        %v8637 = vmul.f32 %v8529, 0.11111111
        %v8638 = vmul.f32 %v8530, 0.11111111
        %v8639 = vmul.f32 %v8531, 0.11111111
        %v8640 = vmul.f32 %v8476, 0.11111111
        %v8641 = vmul.f32 %v8532, 0.11111111
        %v8642 = vmul.f32 %v8533, 0.11111111
        %v8643 = vmul.f32 %v8534, 0.11111111
        %v8644 = vmul.f32 %v8477, 0.11111111
        %v8645 = vmul.f32 %v8535, 0.11111111
        %v8646 = vmul.f32 %v8536, 0.11111111
        %v8647 = vmul.f32 %v8537, 0.11111111
        %v8648 = vmul.f32 %v8478, 0.11111111
        %v8649 = vmul.f32 %v8538, 0.11111111
        %v8650 = vmul.f32 %v8539, 0.11111111
        %v8651 = vmul.f32 %v8540, 0.11111111
        %v8652 = vmul.f32 %v8479, 0.11111111
        %v8653 = vmul.f32 %v8541, 0.11111111
        %v8654 = vmul.f32 %v8542, 0.11111111
        %v8655 = vmul.f32 %v8543, 0.11111111
        %v8656 = vxor.u32 %v8592, 2147483648
        %v8657 = vxor.u32 %v8593, 2147483648
        %v8658 = vxor.u32 %v8594, 2147483648
        %v8659 = vxor.u32 %v8595, 2147483648
        %v8660 = vxor.u32 %v8596, 2147483648
        %v8661 = vxor.u32 %v8597, 2147483648
        %v8662 = vxor.u32 %v8598, 2147483648
        %v8663 = vxor.u32 %v8599, 2147483648
        %v8664 = vxor.u32 %v8600, 2147483648
        %v8665 = vxor.u32 %v8601, 2147483648
        %v8666 = vxor.u32 %v8602, 2147483648
        %v8667 = vxor.u32 %v8603, 2147483648
        %v8668 = vxor.u32 %v8604, 2147483648
        %v8669 = vxor.u32 %v8605, 2147483648
        %v8670 = vxor.u32 %v8606, 2147483648
        %v8671 = vxor.u32 %v8607, 2147483648
        %v8672 = vxor.u32 %v8608, 2147483648
        %v8673 = vxor.u32 %v8609, 2147483648
        %v8674 = vxor.u32 %v8610, 2147483648
        %v8675 = vxor.u32 %v8611, 2147483648
        %v8676 = vxor.u32 %v8612, 2147483648
        %v8677 = vxor.u32 %v8613, 2147483648
        %v8678 = vxor.u32 %v8614, 2147483648
        %v8679 = vxor.u32 %v8615, 2147483648
        %v8680 = vxor.u32 %v8616, 2147483648
        %v8681 = vxor.u32 %v8617, 2147483648
        %v8682 = vxor.u32 %v8618, 2147483648
        %v8683 = vxor.u32 %v8619, 2147483648
        %v8684 = vxor.u32 %v8620, 2147483648
        %v8685 = vxor.u32 %v8621, 2147483648
        %v8686 = vxor.u32 %v8622, 2147483648
        %v8687 = vxor.u32 %v8623, 2147483648
        %v8688 = vxor.u32 %v8624, 2147483648
        %v8689 = vxor.u32 %v8625, 2147483648
        %v8690 = vxor.u32 %v8626, 2147483648
        %v8691 = vxor.u32 %v8627, 2147483648
        %v8692 = vxor.u32 %v8628, 2147483648
        %v8693 = vxor.u32 %v8629, 2147483648
        %v8694 = vxor.u32 %v8630, 2147483648
        %v8695 = vxor.u32 %v8631, 2147483648
        %v8696 = vxor.u32 %v8632, 2147483648
        %v8697 = vxor.u32 %v8633, 2147483648
        %v8698 = vxor.u32 %v8634, 2147483648
        %v8699 = vxor.u32 %v8635, 2147483648
        %v8700 = vxor.u32 %v8636, 2147483648
        %v8701 = vxor.u32 %v8637, 2147483648
        %v8702 = vxor.u32 %v8638, 2147483648
        %v8703 = vxor.u32 %v8639, 2147483648
        %v8704 = vxor.u32 %v8640, 2147483648
        %v8705 = vxor.u32 %v8641, 2147483648
        %v8706 = vxor.u32 %v8642, 2147483648
        %v8707 = vxor.u32 %v8643, 2147483648
        %v8708 = vxor.u32 %v8644, 2147483648
        %v8709 = vxor.u32 %v8645, 2147483648
        %v8710 = vxor.u32 %v8646, 2147483648
        %v8711 = vxor.u32 %v8647, 2147483648
        %v8712 = vxor.u32 %v8648, 2147483648
        %v8713 = vxor.u32 %v8649, 2147483648
        %v8714 = vxor.u32 %v8650, 2147483648
        %v8715 = vxor.u32 %v8651, 2147483648
        %v8716 = vxor.u32 %v8652, 2147483648
        %v8717 = vxor.u32 %v8653, 2147483648
        %v8718 = vxor.u32 %v8654, 2147483648
        %v8719 = vxor.u32 %v8655, 2147483648
        %v8720 = vmul.f32 %v8656, 1.442695
        %v8721 = vpow.pop %v8720
        %v8722 = vmul.f32 %v8657, 1.442695
        %v8723 = vpow.pop %v8722
        %v8724 = vmul.f32 %v8658, 1.442695
        %v8725 = vpow.pop %v8724
        %v8726 = vmul.f32 %v8659, 1.442695
        %v8727 = vpow.pop %v8726
        %v8728 = vmul.f32 %v8660, 1.442695
        %v8729 = vpow.pop %v8728
        %v8730 = vmul.f32 %v8661, 1.442695
        %v8731 = vpow.pop %v8730
        %v8732 = vmul.f32 %v8662, 1.442695
        %v8733 = vpow.pop %v8732
        %v8734 = vmul.f32 %v8663, 1.442695
        %v8735 = vpow.pop %v8734
        %v8736 = vmul.f32 %v8664, 1.442695
        %v8737 = vpow.pop %v8736
        %v8738 = vmul.f32 %v8665, 1.442695
        %v8739 = vpow.pop %v8738
        %v8740 = vmul.f32 %v8666, 1.442695
        %v8741 = vpow.pop %v8740
        %v8742 = vmul.f32 %v8667, 1.442695
        %v8743 = vpow.pop %v8742
        %v8744 = vmul.f32 %v8668, 1.442695
        %v8745 = vpow.pop %v8744
        %v8746 = vmul.f32 %v8669, 1.442695
        %v8747 = vpow.pop %v8746
        %v8748 = vmul.f32 %v8670, 1.442695
        %v8749 = vpow.pop %v8748
        %v8750 = vmul.f32 %v8671, 1.442695
        %v8751 = vpow.pop %v8750
        %v8752 = vmul.f32 %v8672, 1.442695
        %v8753 = vpow.pop %v8752
        %v8754 = vmul.f32 %v8673, 1.442695
        %v8755 = vpow.pop %v8754
        %v8756 = vmul.f32 %v8674, 1.442695
        %v8757 = vpow.pop %v8756
        %v8758 = vmul.f32 %v8675, 1.442695
        %v8759 = vpow.pop %v8758
        %v8760 = vmul.f32 %v8676, 1.442695
        %v8761 = vpow.pop %v8760
        %v8762 = vmul.f32 %v8677, 1.442695
        %v8763 = vpow.pop %v8762
        %v8764 = vmul.f32 %v8678, 1.442695
        %v8765 = vpow.pop %v8764
        %v8766 = vmul.f32 %v8679, 1.442695
        %v8767 = vpow.pop %v8766
        %v8768 = vmul.f32 %v8680, 1.442695
        %v8769 = vpow.pop %v8768
        %v8770 = vmul.f32 %v8681, 1.442695
        %v8771 = vpow.pop %v8770
        %v8772 = vmul.f32 %v8682, 1.442695
        %v8773 = vpow.pop %v8772
        %v8774 = vmul.f32 %v8683, 1.442695
        %v8775 = vpow.pop %v8774
        %v8776 = vmul.f32 %v8684, 1.442695
        %v8777 = vpow.pop %v8776
        %v8778 = vmul.f32 %v8685, 1.442695
        %v8779 = vpow.pop %v8778
        %v8780 = vmul.f32 %v8686, 1.442695
        %v8781 = vpow.pop %v8780
        %v8782 = vmul.f32 %v8687, 1.442695
        %v8783 = vpow.pop %v8782
        %v8784 = vmul.f32 %v8688, 1.442695
        %v8785 = vpow.pop %v8784
        %v8786 = vmul.f32 %v8689, 1.442695
        %v8787 = vpow.pop %v8786
        %v8788 = vmul.f32 %v8690, 1.442695
        %v8789 = vpow.pop %v8788
        %v8790 = vmul.f32 %v8691, 1.442695
        %v8791 = vpow.pop %v8790
        %v8792 = vmul.f32 %v8692, 1.442695
        %v8793 = vpow.pop %v8792
        %v8794 = vmul.f32 %v8693, 1.442695
        %v8795 = vpow.pop %v8794
        %v8796 = vmul.f32 %v8694, 1.442695
        %v8797 = vpow.pop %v8796
        %v8798 = vmul.f32 %v8695, 1.442695
        %v8799 = vpow.pop %v8798
        %v8800 = vmul.f32 %v8696, 1.442695
        %v8801 = vpow.pop %v8800
        %v8802 = vmul.f32 %v8697, 1.442695
        %v8803 = vpow.pop %v8802
        %v8804 = vmul.f32 %v8698, 1.442695
        %v8805 = vpow.pop %v8804
        %v8806 = vmul.f32 %v8699, 1.442695
        %v8807 = vpow.pop %v8806
        %v8808 = vmul.f32 %v8700, 1.442695
        %v8809 = vpow.pop %v8808
        %v8810 = vmul.f32 %v8701, 1.442695
        %v8811 = vpow.pop %v8810
        %v8812 = vmul.f32 %v8702, 1.442695
        %v8813 = vpow.pop %v8812
        %v8814 = vmul.f32 %v8703, 1.442695
        %v8815 = vpow.pop %v8814
        %v8816 = vmul.f32 %v8704, 1.442695
        %v8817 = vpow.pop %v8816
        %v8818 = vmul.f32 %v8705, 1.442695
        %v8819 = vpow.pop %v8818
        %v8820 = vmul.f32 %v8706, 1.442695
        %v8821 = vpow.pop %v8820
        %v8822 = vmul.f32 %v8707, 1.442695
        %v8823 = vpow.pop %v8822
        %v8824 = vmul.f32 %v8708, 1.442695
        %v8825 = vpow.pop %v8824
        %v8826 = vmul.f32 %v8709, 1.442695
        %v8827 = vpow.pop %v8826
        %v8828 = vmul.f32 %v8710, 1.442695
        %v8829 = vpow.pop %v8828
        %v8830 = vmul.f32 %v8711, 1.442695
        %v8831 = vpow.pop %v8830
        %v8832 = vmul.f32 %v8712, 1.442695
        %v8833 = vpow.pop %v8832
        %v8834 = vmul.f32 %v8713, 1.442695
        %v8835 = vpow.pop %v8834
        %v8836 = vmul.f32 %v8714, 1.442695
        %v8837 = vpow.pop %v8836
        %v8838 = vmul.f32 %v8715, 1.442695
        %v8839 = vpow.pop %v8838
        %v8840 = vmul.f32 %v8716, 1.442695
        %v8841 = vpow.pop %v8840
        %v8842 = vmul.f32 %v8717, 1.442695
        %v8843 = vpow.pop %v8842
        %v8844 = vmul.f32 %v8718, 1.442695
        %v8845 = vpow.pop %v8844
        %v8846 = vmul.f32 %v8719, 1.442695
        %v8847 = vpow.pop %v8846
        %v8848 = vadd.f32 %v8721, 1.0
        %v8849 = vadd.f32 %v8723, 1.0
        %v8850 = vadd.f32 %v8725, 1.0
        %v8851 = vadd.f32 %v8727, 1.0
        %v8852 = vadd.f32 %v8729, 1.0
        %v8853 = vadd.f32 %v8731, 1.0
        %v8854 = vadd.f32 %v8733, 1.0
        %v8855 = vadd.f32 %v8735, 1.0
        %v8856 = vadd.f32 %v8737, 1.0
        %v8857 = vadd.f32 %v8739, 1.0
        %v8858 = vadd.f32 %v8741, 1.0
        %v8859 = vadd.f32 %v8743, 1.0
        %v8860 = vadd.f32 %v8745, 1.0
        %v8861 = vadd.f32 %v8747, 1.0
        %v8862 = vadd.f32 %v8749, 1.0
        %v8863 = vadd.f32 %v8751, 1.0
        %v8864 = vadd.f32 %v8753, 1.0
        %v8865 = vadd.f32 %v8755, 1.0
        %v8866 = vadd.f32 %v8757, 1.0
        %v8867 = vadd.f32 %v8759, 1.0
        %v8868 = vadd.f32 %v8761, 1.0
        %v8869 = vadd.f32 %v8763, 1.0
        %v8870 = vadd.f32 %v8765, 1.0
        %v8871 = vadd.f32 %v8767, 1.0
        %v8872 = vadd.f32 %v8769, 1.0
        %v8873 = vadd.f32 %v8771, 1.0
        %v8874 = vadd.f32 %v8773, 1.0
        %v8875 = vadd.f32 %v8775, 1.0
        %v8876 = vadd.f32 %v8777, 1.0
        %v8877 = vadd.f32 %v8779, 1.0
        %v8878 = vadd.f32 %v8781, 1.0
        %v8879 = vadd.f32 %v8783, 1.0
        %v8880 = vadd.f32 %v8785, 1.0
        %v8881 = vadd.f32 %v8787, 1.0
        %v8882 = vadd.f32 %v8789, 1.0
        %v8883 = vadd.f32 %v8791, 1.0
        %v8884 = vadd.f32 %v8793, 1.0
        %v8885 = vadd.f32 %v8795, 1.0
        %v8886 = vadd.f32 %v8797, 1.0
        %v8887 = vadd.f32 %v8799, 1.0
        %v8888 = vadd.f32 %v8801, 1.0
        %v8889 = vadd.f32 %v8803, 1.0
        %v8890 = vadd.f32 %v8805, 1.0
        %v8891 = vadd.f32 %v8807, 1.0
        %v8892 = vadd.f32 %v8809, 1.0
        %v8893 = vadd.f32 %v8811, 1.0
        %v8894 = vadd.f32 %v8813, 1.0
        %v8895 = vadd.f32 %v8815, 1.0
        %v8896 = vadd.f32 %v8817, 1.0
        %v8897 = vadd.f32 %v8819, 1.0
        %v8898 = vadd.f32 %v8821, 1.0
        %v8899 = vadd.f32 %v8823, 1.0
        %v8900 = vadd.f32 %v8825, 1.0
        %v8901 = vadd.f32 %v8827, 1.0
        %v8902 = vadd.f32 %v8829, 1.0
        %v8903 = vadd.f32 %v8831, 1.0
        %v8904 = vadd.f32 %v8833, 1.0
        %v8905 = vadd.f32 %v8835, 1.0
        %v8906 = vadd.f32 %v8837, 1.0
        %v8907 = vadd.f32 %v8839, 1.0
        %v8908 = vadd.f32 %v8841, 1.0
        %v8909 = vadd.f32 %v8843, 1.0
        %v8910 = vadd.f32 %v8845, 1.0
        %v8911 = vadd.f32 %v8847, 1.0
        %v8912 = vrcp.pop %v8848
        %v8913 = vmul.f32 %v8848, %v8912
        %v8914 = vsub.f32 1.0, %v8913
        %v8915 = vmul.f32 %v8912, %v8914
        %v8916 = vadd.f32 %v8912, %v8915
        %vm8917 = vweird.f32 %v8848
        %vm8918 = vweird.f32 %v8912
        %vm8919 = vmor %vm8917, %vm8918
        %v8920 = vsel %vm8919, %v8912, %v8916
        %v8921 = vand.u32 2147483647, %v8848
        %vm8922 = vcmp.eq.f32.partialorder %v8921, 8.507059e+37
        %v8923 = vand.u32 %v8848, 2147483648
        %v8924 = vor.u32 1.1754944e-38, %v8923
        %v8925 = vsel %vm8922, %v8924, %v8920
        %v8926 = vmul.f32 1.0, %v8925
        %v8927 = vrcp.pop %v8849
        %v8928 = vmul.f32 %v8849, %v8927
        %v8929 = vsub.f32 1.0, %v8928
        %v8930 = vmul.f32 %v8927, %v8929
        %v8931 = vadd.f32 %v8927, %v8930
        %vm8932 = vweird.f32 %v8849
        %vm8933 = vweird.f32 %v8927
        %vm8934 = vmor %vm8932, %vm8933
        %v8935 = vsel %vm8934, %v8927, %v8931
        %v8936 = vand.u32 2147483647, %v8849
        %vm8937 = vcmp.eq.f32.partialorder %v8936, 8.507059e+37
        %v8938 = vand.u32 %v8849, 2147483648
        %v8939 = vor.u32 1.1754944e-38, %v8938
        %v8940 = vsel %vm8937, %v8939, %v8935
        %v8941 = vmul.f32 1.0, %v8940
        %v8942 = vrcp.pop %v8850
        %v8943 = vmul.f32 %v8850, %v8942
        %v8944 = vsub.f32 1.0, %v8943
        %v8945 = vmul.f32 %v8942, %v8944
        %v8946 = vadd.f32 %v8942, %v8945
        %vm8947 = vweird.f32 %v8850
        %vm8948 = vweird.f32 %v8942
        %vm8949 = vmor %vm8947, %vm8948
        %v8950 = vsel %vm8949, %v8942, %v8946
        %v8951 = vand.u32 2147483647, %v8850
        %vm8952 = vcmp.eq.f32.partialorder %v8951, 8.507059e+37
        %v8953 = vand.u32 %v8850, 2147483648
        %v8954 = vor.u32 1.1754944e-38, %v8953
        %v8955 = vsel %vm8952, %v8954, %v8950
        %v8956 = vmul.f32 1.0, %v8955
        %v8957 = vrcp.pop %v8851
        %v8958 = vmul.f32 %v8851, %v8957
        %v8959 = vsub.f32 1.0, %v8958
        %v8960 = vmul.f32 %v8957, %v8959
        %v8961 = vadd.f32 %v8957, %v8960
        %vm8962 = vweird.f32 %v8851
        %vm8963 = vweird.f32 %v8957
        %vm8964 = vmor %vm8962, %vm8963
        %v8965 = vsel %vm8964, %v8957, %v8961
        %v8966 = vand.u32 2147483647, %v8851
        %vm8967 = vcmp.eq.f32.partialorder %v8966, 8.507059e+37
        %v8968 = vand.u32 %v8851, 2147483648
        %v8969 = vor.u32 1.1754944e-38, %v8968
        %v8970 = vsel %vm8967, %v8969, %v8965
        %v8971 = vmul.f32 1.0, %v8970
        %v8972 = vrcp.pop %v8852
        %v8973 = vmul.f32 %v8852, %v8972
        %v8974 = vsub.f32 1.0, %v8973
        %v8975 = vmul.f32 %v8972, %v8974
        %v8976 = vadd.f32 %v8972, %v8975
        %vm8977 = vweird.f32 %v8852
        %vm8978 = vweird.f32 %v8972
        %vm8979 = vmor %vm8977, %vm8978
        %v8980 = vsel %vm8979, %v8972, %v8976
        %v8981 = vand.u32 2147483647, %v8852
        %vm8982 = vcmp.eq.f32.partialorder %v8981, 8.507059e+37
        %v8983 = vand.u32 %v8852, 2147483648
        %v8984 = vor.u32 1.1754944e-38, %v8983
        %v8985 = vsel %vm8982, %v8984, %v8980
        %v8986 = vmul.f32 1.0, %v8985
        %v8987 = vrcp.pop %v8853
        %v8988 = vmul.f32 %v8853, %v8987
        %v8989 = vsub.f32 1.0, %v8988
        %v8990 = vmul.f32 %v8987, %v8989
        %v8991 = vadd.f32 %v8987, %v8990
        %vm8992 = vweird.f32 %v8853
        %vm8993 = vweird.f32 %v8987
        %vm8994 = vmor %vm8992, %vm8993
        %v8995 = vsel %vm8994, %v8987, %v8991
        %v8996 = vand.u32 2147483647, %v8853
        %vm8997 = vcmp.eq.f32.partialorder %v8996, 8.507059e+37
        %v8998 = vand.u32 %v8853, 2147483648
        %v8999 = vor.u32 1.1754944e-38, %v8998
        %v9000 = vsel %vm8997, %v8999, %v8995
        %v9001 = vmul.f32 1.0, %v9000
        %v9002 = vrcp.pop %v8854
        %v9003 = vmul.f32 %v8854, %v9002
        %v9004 = vsub.f32 1.0, %v9003
        %v9005 = vmul.f32 %v9002, %v9004
        %v9006 = vadd.f32 %v9002, %v9005
        %vm9007 = vweird.f32 %v8854
        %vm9008 = vweird.f32 %v9002
        %vm9009 = vmor %vm9007, %vm9008
        %v9010 = vsel %vm9009, %v9002, %v9006
        %v9011 = vand.u32 2147483647, %v8854
        %vm9012 = vcmp.eq.f32.partialorder %v9011, 8.507059e+37
        %v9013 = vand.u32 %v8854, 2147483648
        %v9014 = vor.u32 1.1754944e-38, %v9013
        %v9015 = vsel %vm9012, %v9014, %v9010
        %v9016 = vmul.f32 1.0, %v9015
        %v9017 = vrcp.pop %v8855
        %v9018 = vmul.f32 %v8855, %v9017
        %v9019 = vsub.f32 1.0, %v9018
        %v9020 = vmul.f32 %v9017, %v9019
        %v9021 = vadd.f32 %v9017, %v9020
        %vm9022 = vweird.f32 %v8855
        %vm9023 = vweird.f32 %v9017
        %vm9024 = vmor %vm9022, %vm9023
        %v9025 = vsel %vm9024, %v9017, %v9021
        %v9026 = vand.u32 2147483647, %v8855
        %vm9027 = vcmp.eq.f32.partialorder %v9026, 8.507059e+37
        %v9028 = vand.u32 %v8855, 2147483648
        %v9029 = vor.u32 1.1754944e-38, %v9028
        %v9030 = vsel %vm9027, %v9029, %v9025
        %v9031 = vmul.f32 1.0, %v9030
        %v9032 = vrcp.pop %v8856
        %v9033 = vmul.f32 %v8856, %v9032
        %v9034 = vsub.f32 1.0, %v9033
        %v9035 = vmul.f32 %v9032, %v9034
        %v9036 = vadd.f32 %v9032, %v9035
        %vm9037 = vweird.f32 %v8856
        %vm9038 = vweird.f32 %v9032
        %vm9039 = vmor %vm9037, %vm9038
        %v9040 = vsel %vm9039, %v9032, %v9036
        %v9041 = vand.u32 2147483647, %v8856
        %vm9042 = vcmp.eq.f32.partialorder %v9041, 8.507059e+37
        %v9043 = vand.u32 %v8856, 2147483648
        %v9044 = vor.u32 1.1754944e-38, %v9043
        %v9045 = vsel %vm9042, %v9044, %v9040
        %v9046 = vmul.f32 1.0, %v9045
        %v9047 = vrcp.pop %v8857
        %v9048 = vmul.f32 %v8857, %v9047
        %v9049 = vsub.f32 1.0, %v9048
        %v9050 = vmul.f32 %v9047, %v9049
        %v9051 = vadd.f32 %v9047, %v9050
        %vm9052 = vweird.f32 %v8857
        %vm9053 = vweird.f32 %v9047
        %vm9054 = vmor %vm9052, %vm9053
        %v9055 = vsel %vm9054, %v9047, %v9051
        %v9056 = vand.u32 2147483647, %v8857
        %vm9057 = vcmp.eq.f32.partialorder %v9056, 8.507059e+37
        %v9058 = vand.u32 %v8857, 2147483648
        %v9059 = vor.u32 1.1754944e-38, %v9058
        %v9060 = vsel %vm9057, %v9059, %v9055
        %v9061 = vmul.f32 1.0, %v9060
        %v9062 = vrcp.pop %v8858
        %v9063 = vmul.f32 %v8858, %v9062
        %v9064 = vsub.f32 1.0, %v9063
        %v9065 = vmul.f32 %v9062, %v9064
        %v9066 = vadd.f32 %v9062, %v9065
        %vm9067 = vweird.f32 %v8858
        %vm9068 = vweird.f32 %v9062
        %vm9069 = vmor %vm9067, %vm9068
        %v9070 = vsel %vm9069, %v9062, %v9066
        %v9071 = vand.u32 2147483647, %v8858
        %vm9072 = vcmp.eq.f32.partialorder %v9071, 8.507059e+37
        %v9073 = vand.u32 %v8858, 2147483648
        %v9074 = vor.u32 1.1754944e-38, %v9073
        %v9075 = vsel %vm9072, %v9074, %v9070
        %v9076 = vmul.f32 1.0, %v9075
        %v9077 = vrcp.pop %v8859
        %v9078 = vmul.f32 %v8859, %v9077
        %v9079 = vsub.f32 1.0, %v9078
        %v9080 = vmul.f32 %v9077, %v9079
        %v9081 = vadd.f32 %v9077, %v9080
        %vm9082 = vweird.f32 %v8859
        %vm9083 = vweird.f32 %v9077
        %vm9084 = vmor %vm9082, %vm9083
        %v9085 = vsel %vm9084, %v9077, %v9081
        %v9086 = vand.u32 2147483647, %v8859
        %vm9087 = vcmp.eq.f32.partialorder %v9086, 8.507059e+37
        %v9088 = vand.u32 %v8859, 2147483648
        %v9089 = vor.u32 1.1754944e-38, %v9088
        %v9090 = vsel %vm9087, %v9089, %v9085
        %v9091 = vmul.f32 1.0, %v9090
        %v9092 = vrcp.pop %v8860
        %v9093 = vmul.f32 %v8860, %v9092
        %v9094 = vsub.f32 1.0, %v9093
        %v9095 = vmul.f32 %v9092, %v9094
        %v9096 = vadd.f32 %v9092, %v9095
        %vm9097 = vweird.f32 %v8860
        %vm9098 = vweird.f32 %v9092
        %vm9099 = vmor %vm9097, %vm9098
        %v9100 = vsel %vm9099, %v9092, %v9096
        %v9101 = vand.u32 2147483647, %v8860
        %vm9102 = vcmp.eq.f32.partialorder %v9101, 8.507059e+37
        %v9103 = vand.u32 %v8860, 2147483648
        %v9104 = vor.u32 1.1754944e-38, %v9103
        %v9105 = vsel %vm9102, %v9104, %v9100
        %v9106 = vmul.f32 1.0, %v9105
        %v9107 = vrcp.pop %v8861
        %v9108 = vmul.f32 %v8861, %v9107
        %v9109 = vsub.f32 1.0, %v9108
        %v9110 = vmul.f32 %v9107, %v9109
        %v9111 = vadd.f32 %v9107, %v9110
        %vm9112 = vweird.f32 %v8861
        %vm9113 = vweird.f32 %v9107
        %vm9114 = vmor %vm9112, %vm9113
        %v9115 = vsel %vm9114, %v9107, %v9111
        %v9116 = vand.u32 2147483647, %v8861
        %vm9117 = vcmp.eq.f32.partialorder %v9116, 8.507059e+37
        %v9118 = vand.u32 %v8861, 2147483648
        %v9119 = vor.u32 1.1754944e-38, %v9118
        %v9120 = vsel %vm9117, %v9119, %v9115
        %v9121 = vmul.f32 1.0, %v9120
        %v9122 = vrcp.pop %v8862
        %v9123 = vmul.f32 %v8862, %v9122
        %v9124 = vsub.f32 1.0, %v9123
        %v9125 = vmul.f32 %v9122, %v9124
        %v9126 = vadd.f32 %v9122, %v9125
        %vm9127 = vweird.f32 %v8862
        %vm9128 = vweird.f32 %v9122
        %vm9129 = vmor %vm9127, %vm9128
        %v9130 = vsel %vm9129, %v9122, %v9126
        %v9131 = vand.u32 2147483647, %v8862
        %vm9132 = vcmp.eq.f32.partialorder %v9131, 8.507059e+37
        %v9133 = vand.u32 %v8862, 2147483648
        %v9134 = vor.u32 1.1754944e-38, %v9133
        %v9135 = vsel %vm9132, %v9134, %v9130
        %v9136 = vmul.f32 1.0, %v9135
        %v9137 = vrcp.pop %v8863
        %v9138 = vmul.f32 %v8863, %v9137
        %v9139 = vsub.f32 1.0, %v9138
        %v9140 = vmul.f32 %v9137, %v9139
        %v9141 = vadd.f32 %v9137, %v9140
        %vm9142 = vweird.f32 %v8863
        %vm9143 = vweird.f32 %v9137
        %vm9144 = vmor %vm9142, %vm9143
        %v9145 = vsel %vm9144, %v9137, %v9141
        %v9146 = vand.u32 2147483647, %v8863
        %vm9147 = vcmp.eq.f32.partialorder %v9146, 8.507059e+37
        %v9148 = vand.u32 %v8863, 2147483648
        %v9149 = vor.u32 1.1754944e-38, %v9148
        %v9150 = vsel %vm9147, %v9149, %v9145
        %v9151 = vmul.f32 1.0, %v9150
        %v9152 = vrcp.pop %v8864
        %v9153 = vmul.f32 %v8864, %v9152
        %v9154 = vsub.f32 1.0, %v9153
        %v9155 = vmul.f32 %v9152, %v9154
        %v9156 = vadd.f32 %v9152, %v9155
        %vm9157 = vweird.f32 %v8864
        %vm9158 = vweird.f32 %v9152
        %vm9159 = vmor %vm9157, %vm9158
        %v9160 = vsel %vm9159, %v9152, %v9156
        %v9161 = vand.u32 2147483647, %v8864
        %vm9162 = vcmp.eq.f32.partialorder %v9161, 8.507059e+37
        %v9163 = vand.u32 %v8864, 2147483648
        %v9164 = vor.u32 1.1754944e-38, %v9163
        %v9165 = vsel %vm9162, %v9164, %v9160
        %v9166 = vmul.f32 1.0, %v9165
        %v9167 = vrcp.pop %v8865
        %v9168 = vmul.f32 %v8865, %v9167
        %v9169 = vsub.f32 1.0, %v9168
        %v9170 = vmul.f32 %v9167, %v9169
        %v9171 = vadd.f32 %v9167, %v9170
        %vm9172 = vweird.f32 %v8865
        %vm9173 = vweird.f32 %v9167
        %vm9174 = vmor %vm9172, %vm9173
        %v9175 = vsel %vm9174, %v9167, %v9171
        %v9176 = vand.u32 2147483647, %v8865
        %vm9177 = vcmp.eq.f32.partialorder %v9176, 8.507059e+37
        %v9178 = vand.u32 %v8865, 2147483648
        %v9179 = vor.u32 1.1754944e-38, %v9178
        %v9180 = vsel %vm9177, %v9179, %v9175
        %v9181 = vmul.f32 1.0, %v9180
        %v9182 = vrcp.pop %v8866
        %v9183 = vmul.f32 %v8866, %v9182
        %v9184 = vsub.f32 1.0, %v9183
        %v9185 = vmul.f32 %v9182, %v9184
        %v9186 = vadd.f32 %v9182, %v9185
        %vm9187 = vweird.f32 %v8866
        %vm9188 = vweird.f32 %v9182
        %vm9189 = vmor %vm9187, %vm9188
        %v9190 = vsel %vm9189, %v9182, %v9186
        %v9191 = vand.u32 2147483647, %v8866
        %vm9192 = vcmp.eq.f32.partialorder %v9191, 8.507059e+37
        %v9193 = vand.u32 %v8866, 2147483648
        %v9194 = vor.u32 1.1754944e-38, %v9193
        %v9195 = vsel %vm9192, %v9194, %v9190
        %v9196 = vmul.f32 1.0, %v9195
        %v9197 = vrcp.pop %v8867
        %v9198 = vmul.f32 %v8867, %v9197
        %v9199 = vsub.f32 1.0, %v9198
        %v9200 = vmul.f32 %v9197, %v9199
        %v9201 = vadd.f32 %v9197, %v9200
        %vm9202 = vweird.f32 %v8867
        %vm9203 = vweird.f32 %v9197
        %vm9204 = vmor %vm9202, %vm9203
        %v9205 = vsel %vm9204, %v9197, %v9201
        %v9206 = vand.u32 2147483647, %v8867
        %vm9207 = vcmp.eq.f32.partialorder %v9206, 8.507059e+37
        %v9208 = vand.u32 %v8867, 2147483648
        %v9209 = vor.u32 1.1754944e-38, %v9208
        %v9210 = vsel %vm9207, %v9209, %v9205
        %v9211 = vmul.f32 1.0, %v9210
        %v9212 = vrcp.pop %v8868
        %v9213 = vmul.f32 %v8868, %v9212
        %v9214 = vsub.f32 1.0, %v9213
        %v9215 = vmul.f32 %v9212, %v9214
        %v9216 = vadd.f32 %v9212, %v9215
        %vm9217 = vweird.f32 %v8868
        %vm9218 = vweird.f32 %v9212
        %vm9219 = vmor %vm9217, %vm9218
        %v9220 = vsel %vm9219, %v9212, %v9216
        %v9221 = vand.u32 2147483647, %v8868
        %vm9222 = vcmp.eq.f32.partialorder %v9221, 8.507059e+37
        %v9223 = vand.u32 %v8868, 2147483648
        %v9224 = vor.u32 1.1754944e-38, %v9223
        %v9225 = vsel %vm9222, %v9224, %v9220
        %v9226 = vmul.f32 1.0, %v9225
        %v9227 = vrcp.pop %v8869
        %v9228 = vmul.f32 %v8869, %v9227
        %v9229 = vsub.f32 1.0, %v9228
        %v9230 = vmul.f32 %v9227, %v9229
        %v9231 = vadd.f32 %v9227, %v9230
        %vm9232 = vweird.f32 %v8869
        %vm9233 = vweird.f32 %v9227
        %vm9234 = vmor %vm9232, %vm9233
        %v9235 = vsel %vm9234, %v9227, %v9231
        %v9236 = vand.u32 2147483647, %v8869
        %vm9237 = vcmp.eq.f32.partialorder %v9236, 8.507059e+37
        %v9238 = vand.u32 %v8869, 2147483648
        %v9239 = vor.u32 1.1754944e-38, %v9238
        %v9240 = vsel %vm9237, %v9239, %v9235
        %v9241 = vmul.f32 1.0, %v9240
        %v9242 = vrcp.pop %v8870
        %v9243 = vmul.f32 %v8870, %v9242
        %v9244 = vsub.f32 1.0, %v9243
        %v9245 = vmul.f32 %v9242, %v9244
        %v9246 = vadd.f32 %v9242, %v9245
        %vm9247 = vweird.f32 %v8870
        %vm9248 = vweird.f32 %v9242
        %vm9249 = vmor %vm9247, %vm9248
        %v9250 = vsel %vm9249, %v9242, %v9246
        %v9251 = vand.u32 2147483647, %v8870
        %vm9252 = vcmp.eq.f32.partialorder %v9251, 8.507059e+37
        %v9253 = vand.u32 %v8870, 2147483648
        %v9254 = vor.u32 1.1754944e-38, %v9253
        %v9255 = vsel %vm9252, %v9254, %v9250
        %v9256 = vmul.f32 1.0, %v9255
        %v9257 = vrcp.pop %v8871
        %v9258 = vmul.f32 %v8871, %v9257
        %v9259 = vsub.f32 1.0, %v9258
        %v9260 = vmul.f32 %v9257, %v9259
        %v9261 = vadd.f32 %v9257, %v9260
        %vm9262 = vweird.f32 %v8871
        %vm9263 = vweird.f32 %v9257
        %vm9264 = vmor %vm9262, %vm9263
        %v9265 = vsel %vm9264, %v9257, %v9261
        %v9266 = vand.u32 2147483647, %v8871
        %vm9267 = vcmp.eq.f32.partialorder %v9266, 8.507059e+37
        %v9268 = vand.u32 %v8871, 2147483648
        %v9269 = vor.u32 1.1754944e-38, %v9268
        %v9270 = vsel %vm9267, %v9269, %v9265
        %v9271 = vmul.f32 1.0, %v9270
        %v9272 = vrcp.pop %v8872
        %v9273 = vmul.f32 %v8872, %v9272
        %v9274 = vsub.f32 1.0, %v9273
        %v9275 = vmul.f32 %v9272, %v9274
        %v9276 = vadd.f32 %v9272, %v9275
        %vm9277 = vweird.f32 %v8872
        %vm9278 = vweird.f32 %v9272
        %vm9279 = vmor %vm9277, %vm9278
        %v9280 = vsel %vm9279, %v9272, %v9276
        %v9281 = vand.u32 2147483647, %v8872
        %vm9282 = vcmp.eq.f32.partialorder %v9281, 8.507059e+37
        %v9283 = vand.u32 %v8872, 2147483648
        %v9284 = vor.u32 1.1754944e-38, %v9283
        %v9285 = vsel %vm9282, %v9284, %v9280
        %v9286 = vmul.f32 1.0, %v9285
        %v9287 = vrcp.pop %v8873
        %v9288 = vmul.f32 %v8873, %v9287
        %v9289 = vsub.f32 1.0, %v9288
        %v9290 = vmul.f32 %v9287, %v9289
        %v9291 = vadd.f32 %v9287, %v9290
        %vm9292 = vweird.f32 %v8873
        %vm9293 = vweird.f32 %v9287
        %vm9294 = vmor %vm9292, %vm9293
        %v9295 = vsel %vm9294, %v9287, %v9291
        %v9296 = vand.u32 2147483647, %v8873
        %vm9297 = vcmp.eq.f32.partialorder %v9296, 8.507059e+37
        %v9298 = vand.u32 %v8873, 2147483648
        %v9299 = vor.u32 1.1754944e-38, %v9298
        %v9300 = vsel %vm9297, %v9299, %v9295
        %v9301 = vmul.f32 1.0, %v9300
        %v9302 = vrcp.pop %v8874
        %v9303 = vmul.f32 %v8874, %v9302
        %v9304 = vsub.f32 1.0, %v9303
        %v9305 = vmul.f32 %v9302, %v9304
        %v9306 = vadd.f32 %v9302, %v9305
        %vm9307 = vweird.f32 %v8874
        %vm9308 = vweird.f32 %v9302
        %vm9309 = vmor %vm9307, %vm9308
        %v9310 = vsel %vm9309, %v9302, %v9306
        %v9311 = vand.u32 2147483647, %v8874
        %vm9312 = vcmp.eq.f32.partialorder %v9311, 8.507059e+37
        %v9313 = vand.u32 %v8874, 2147483648
        %v9314 = vor.u32 1.1754944e-38, %v9313
        %v9315 = vsel %vm9312, %v9314, %v9310
        %v9316 = vmul.f32 1.0, %v9315
        %v9317 = vrcp.pop %v8875
        %v9318 = vmul.f32 %v8875, %v9317
        %v9319 = vsub.f32 1.0, %v9318
        %v9320 = vmul.f32 %v9317, %v9319
        %v9321 = vadd.f32 %v9317, %v9320
        %vm9322 = vweird.f32 %v8875
        %vm9323 = vweird.f32 %v9317
        %vm9324 = vmor %vm9322, %vm9323
        %v9325 = vsel %vm9324, %v9317, %v9321
        %v9326 = vand.u32 2147483647, %v8875
        %vm9327 = vcmp.eq.f32.partialorder %v9326, 8.507059e+37
        %v9328 = vand.u32 %v8875, 2147483648
        %v9329 = vor.u32 1.1754944e-38, %v9328
        %v9330 = vsel %vm9327, %v9329, %v9325
        %v9331 = vmul.f32 1.0, %v9330
        %v9332 = vrcp.pop %v8876
        %v9333 = vmul.f32 %v8876, %v9332
        %v9334 = vsub.f32 1.0, %v9333
        %v9335 = vmul.f32 %v9332, %v9334
        %v9336 = vadd.f32 %v9332, %v9335
        %vm9337 = vweird.f32 %v8876
        %vm9338 = vweird.f32 %v9332
        %vm9339 = vmor %vm9337, %vm9338
        %v9340 = vsel %vm9339, %v9332, %v9336
        %v9341 = vand.u32 2147483647, %v8876
        %vm9342 = vcmp.eq.f32.partialorder %v9341, 8.507059e+37
        %v9343 = vand.u32 %v8876, 2147483648
        %v9344 = vor.u32 1.1754944e-38, %v9343
        %v9345 = vsel %vm9342, %v9344, %v9340
        %v9346 = vmul.f32 1.0, %v9345
        %v9347 = vrcp.pop %v8877
        %v9348 = vmul.f32 %v8877, %v9347
        %v9349 = vsub.f32 1.0, %v9348
        %v9350 = vmul.f32 %v9347, %v9349
        %v9351 = vadd.f32 %v9347, %v9350
        %vm9352 = vweird.f32 %v8877
        %vm9353 = vweird.f32 %v9347
        %vm9354 = vmor %vm9352, %vm9353
        %v9355 = vsel %vm9354, %v9347, %v9351
        %v9356 = vand.u32 2147483647, %v8877
        %vm9357 = vcmp.eq.f32.partialorder %v9356, 8.507059e+37
        %v9358 = vand.u32 %v8877, 2147483648
        %v9359 = vor.u32 1.1754944e-38, %v9358
        %v9360 = vsel %vm9357, %v9359, %v9355
        %v9361 = vmul.f32 1.0, %v9360
        %v9362 = vrcp.pop %v8878
        %v9363 = vmul.f32 %v8878, %v9362
        %v9364 = vsub.f32 1.0, %v9363
        %v9365 = vmul.f32 %v9362, %v9364
        %v9366 = vadd.f32 %v9362, %v9365
        %vm9367 = vweird.f32 %v8878
        %vm9368 = vweird.f32 %v9362
        %vm9369 = vmor %vm9367, %vm9368
        %v9370 = vsel %vm9369, %v9362, %v9366
        %v9371 = vand.u32 2147483647, %v8878
        %vm9372 = vcmp.eq.f32.partialorder %v9371, 8.507059e+37
        %v9373 = vand.u32 %v8878, 2147483648
        %v9374 = vor.u32 1.1754944e-38, %v9373
        %v9375 = vsel %vm9372, %v9374, %v9370
        %v9376 = vmul.f32 1.0, %v9375
        %v9377 = vrcp.pop %v8879
        %v9378 = vmul.f32 %v8879, %v9377
        %v9379 = vsub.f32 1.0, %v9378
        %v9380 = vmul.f32 %v9377, %v9379
        %v9381 = vadd.f32 %v9377, %v9380
        %vm9382 = vweird.f32 %v8879
        %vm9383 = vweird.f32 %v9377
        %vm9384 = vmor %vm9382, %vm9383
        %v9385 = vsel %vm9384, %v9377, %v9381
        %v9386 = vand.u32 2147483647, %v8879
        %vm9387 = vcmp.eq.f32.partialorder %v9386, 8.507059e+37
        %v9388 = vand.u32 %v8879, 2147483648
        %v9389 = vor.u32 1.1754944e-38, %v9388
        %v9390 = vsel %vm9387, %v9389, %v9385
        %v9391 = vmul.f32 1.0, %v9390
        %v9392 = vrcp.pop %v8880
        %v9393 = vmul.f32 %v8880, %v9392
        %v9394 = vsub.f32 1.0, %v9393
        %v9395 = vmul.f32 %v9392, %v9394
        %v9396 = vadd.f32 %v9392, %v9395
        %vm9397 = vweird.f32 %v8880
        %vm9398 = vweird.f32 %v9392
        %vm9399 = vmor %vm9397, %vm9398
        %v9400 = vsel %vm9399, %v9392, %v9396
        %v9401 = vand.u32 2147483647, %v8880
        %vm9402 = vcmp.eq.f32.partialorder %v9401, 8.507059e+37
        %v9403 = vand.u32 %v8880, 2147483648
        %v9404 = vor.u32 1.1754944e-38, %v9403
        %v9405 = vsel %vm9402, %v9404, %v9400
        %v9406 = vmul.f32 1.0, %v9405
        %v9407 = vrcp.pop %v8881
        %v9408 = vmul.f32 %v8881, %v9407
        %v9409 = vsub.f32 1.0, %v9408
        %v9410 = vmul.f32 %v9407, %v9409
        %v9411 = vadd.f32 %v9407, %v9410
        %vm9412 = vweird.f32 %v8881
        %vm9413 = vweird.f32 %v9407
        %vm9414 = vmor %vm9412, %vm9413
        %v9415 = vsel %vm9414, %v9407, %v9411
        %v9416 = vand.u32 2147483647, %v8881
        %vm9417 = vcmp.eq.f32.partialorder %v9416, 8.507059e+37
        %v9418 = vand.u32 %v8881, 2147483648
        %v9419 = vor.u32 1.1754944e-38, %v9418
        %v9420 = vsel %vm9417, %v9419, %v9415
        %v9421 = vmul.f32 1.0, %v9420
        %v9422 = vrcp.pop %v8882
        %v9423 = vmul.f32 %v8882, %v9422
        %v9424 = vsub.f32 1.0, %v9423
        %v9425 = vmul.f32 %v9422, %v9424
        %v9426 = vadd.f32 %v9422, %v9425
        %vm9427 = vweird.f32 %v8882
        %vm9428 = vweird.f32 %v9422
        %vm9429 = vmor %vm9427, %vm9428
        %v9430 = vsel %vm9429, %v9422, %v9426
        %v9431 = vand.u32 2147483647, %v8882
        %vm9432 = vcmp.eq.f32.partialorder %v9431, 8.507059e+37
        %v9433 = vand.u32 %v8882, 2147483648
        %v9434 = vor.u32 1.1754944e-38, %v9433
        %v9435 = vsel %vm9432, %v9434, %v9430
        %v9436 = vmul.f32 1.0, %v9435
        %v9437 = vrcp.pop %v8883
        %v9438 = vmul.f32 %v8883, %v9437
        %v9439 = vsub.f32 1.0, %v9438
        %v9440 = vmul.f32 %v9437, %v9439
        %v9441 = vadd.f32 %v9437, %v9440
        %vm9442 = vweird.f32 %v8883
        %vm9443 = vweird.f32 %v9437
        %vm9444 = vmor %vm9442, %vm9443
        %v9445 = vsel %vm9444, %v9437, %v9441
        %v9446 = vand.u32 2147483647, %v8883
        %vm9447 = vcmp.eq.f32.partialorder %v9446, 8.507059e+37
        %v9448 = vand.u32 %v8883, 2147483648
        %v9449 = vor.u32 1.1754944e-38, %v9448
        %v9450 = vsel %vm9447, %v9449, %v9445
        %v9451 = vmul.f32 1.0, %v9450
        %v9452 = vrcp.pop %v8884
        %v9453 = vmul.f32 %v8884, %v9452
        %v9454 = vsub.f32 1.0, %v9453
        %v9455 = vmul.f32 %v9452, %v9454
        %v9456 = vadd.f32 %v9452, %v9455
        %vm9457 = vweird.f32 %v8884
        %vm9458 = vweird.f32 %v9452
        %vm9459 = vmor %vm9457, %vm9458
        %v9460 = vsel %vm9459, %v9452, %v9456
        %v9461 = vand.u32 2147483647, %v8884
        %vm9462 = vcmp.eq.f32.partialorder %v9461, 8.507059e+37
        %v9463 = vand.u32 %v8884, 2147483648
        %v9464 = vor.u32 1.1754944e-38, %v9463
        %v9465 = vsel %vm9462, %v9464, %v9460
        %v9466 = vmul.f32 1.0, %v9465
        %v9467 = vrcp.pop %v8885
        %v9468 = vmul.f32 %v8885, %v9467
        %v9469 = vsub.f32 1.0, %v9468
        %v9470 = vmul.f32 %v9467, %v9469
        %v9471 = vadd.f32 %v9467, %v9470
        %vm9472 = vweird.f32 %v8885
        %vm9473 = vweird.f32 %v9467
        %vm9474 = vmor %vm9472, %vm9473
        %v9475 = vsel %vm9474, %v9467, %v9471
        %v9476 = vand.u32 2147483647, %v8885
        %vm9477 = vcmp.eq.f32.partialorder %v9476, 8.507059e+37
        %v9478 = vand.u32 %v8885, 2147483648
        %v9479 = vor.u32 1.1754944e-38, %v9478
        %v9480 = vsel %vm9477, %v9479, %v9475
        %v9481 = vmul.f32 1.0, %v9480
        %v9482 = vrcp.pop %v8886
        %v9483 = vmul.f32 %v8886, %v9482
        %v9484 = vsub.f32 1.0, %v9483
        %v9485 = vmul.f32 %v9482, %v9484
        %v9486 = vadd.f32 %v9482, %v9485
        %vm9487 = vweird.f32 %v8886
        %vm9488 = vweird.f32 %v9482
        %vm9489 = vmor %vm9487, %vm9488
        %v9490 = vsel %vm9489, %v9482, %v9486
        %v9491 = vand.u32 2147483647, %v8886
        %vm9492 = vcmp.eq.f32.partialorder %v9491, 8.507059e+37
        %v9493 = vand.u32 %v8886, 2147483648
        %v9494 = vor.u32 1.1754944e-38, %v9493
        %v9495 = vsel %vm9492, %v9494, %v9490
        %v9496 = vmul.f32 1.0, %v9495
        %v9497 = vrcp.pop %v8887
        %v9498 = vmul.f32 %v8887, %v9497
        %v9499 = vsub.f32 1.0, %v9498
        %v9500 = vmul.f32 %v9497, %v9499
        %v9501 = vadd.f32 %v9497, %v9500
        %vm9502 = vweird.f32 %v8887
        %vm9503 = vweird.f32 %v9497
        %vm9504 = vmor %vm9502, %vm9503
        %v9505 = vsel %vm9504, %v9497, %v9501
        %v9506 = vand.u32 2147483647, %v8887
        %vm9507 = vcmp.eq.f32.partialorder %v9506, 8.507059e+37
        %v9508 = vand.u32 %v8887, 2147483648
        %v9509 = vor.u32 1.1754944e-38, %v9508
        %v9510 = vsel %vm9507, %v9509, %v9505
        %v9511 = vmul.f32 1.0, %v9510
        %v9512 = vrcp.pop %v8888
        %v9513 = vmul.f32 %v8888, %v9512
        %v9514 = vsub.f32 1.0, %v9513
        %v9515 = vmul.f32 %v9512, %v9514
        %v9516 = vadd.f32 %v9512, %v9515
        %vm9517 = vweird.f32 %v8888
        %vm9518 = vweird.f32 %v9512
        %vm9519 = vmor %vm9517, %vm9518
        %v9520 = vsel %vm9519, %v9512, %v9516
        %v9521 = vand.u32 2147483647, %v8888
        %vm9522 = vcmp.eq.f32.partialorder %v9521, 8.507059e+37
        %v9523 = vand.u32 %v8888, 2147483648
        %v9524 = vor.u32 1.1754944e-38, %v9523
        %v9525 = vsel %vm9522, %v9524, %v9520
        %v9526 = vmul.f32 1.0, %v9525
        %v9527 = vrcp.pop %v8889
        %v9528 = vmul.f32 %v8889, %v9527
        %v9529 = vsub.f32 1.0, %v9528
        %v9530 = vmul.f32 %v9527, %v9529
        %v9531 = vadd.f32 %v9527, %v9530
        %vm9532 = vweird.f32 %v8889
        %vm9533 = vweird.f32 %v9527
        %vm9534 = vmor %vm9532, %vm9533
        %v9535 = vsel %vm9534, %v9527, %v9531
        %v9536 = vand.u32 2147483647, %v8889
        %vm9537 = vcmp.eq.f32.partialorder %v9536, 8.507059e+37
        %v9538 = vand.u32 %v8889, 2147483648
        %v9539 = vor.u32 1.1754944e-38, %v9538
        %v9540 = vsel %vm9537, %v9539, %v9535
        %v9541 = vmul.f32 1.0, %v9540
        %v9542 = vrcp.pop %v8890
        %v9543 = vmul.f32 %v8890, %v9542
        %v9544 = vsub.f32 1.0, %v9543
        %v9545 = vmul.f32 %v9542, %v9544
        %v9546 = vadd.f32 %v9542, %v9545
        %vm9547 = vweird.f32 %v8890
        %vm9548 = vweird.f32 %v9542
        %vm9549 = vmor %vm9547, %vm9548
        %v9550 = vsel %vm9549, %v9542, %v9546
        %v9551 = vand.u32 2147483647, %v8890
        %vm9552 = vcmp.eq.f32.partialorder %v9551, 8.507059e+37
        %v9553 = vand.u32 %v8890, 2147483648
        %v9554 = vor.u32 1.1754944e-38, %v9553
        %v9555 = vsel %vm9552, %v9554, %v9550
        %v9556 = vmul.f32 1.0, %v9555
        %v9557 = vrcp.pop %v8891
        %v9558 = vmul.f32 %v8891, %v9557
        %v9559 = vsub.f32 1.0, %v9558
        %v9560 = vmul.f32 %v9557, %v9559
        %v9561 = vadd.f32 %v9557, %v9560
        %vm9562 = vweird.f32 %v8891
        %vm9563 = vweird.f32 %v9557
        %vm9564 = vmor %vm9562, %vm9563
        %v9565 = vsel %vm9564, %v9557, %v9561
        %v9566 = vand.u32 2147483647, %v8891
        %vm9567 = vcmp.eq.f32.partialorder %v9566, 8.507059e+37
        %v9568 = vand.u32 %v8891, 2147483648
        %v9569 = vor.u32 1.1754944e-38, %v9568
        %v9570 = vsel %vm9567, %v9569, %v9565
        %v9571 = vmul.f32 1.0, %v9570
        %v9572 = vrcp.pop %v8892
        %v9573 = vmul.f32 %v8892, %v9572
        %v9574 = vsub.f32 1.0, %v9573
        %v9575 = vmul.f32 %v9572, %v9574
        %v9576 = vadd.f32 %v9572, %v9575
        %vm9577 = vweird.f32 %v8892
        %vm9578 = vweird.f32 %v9572
        %vm9579 = vmor %vm9577, %vm9578
        %v9580 = vsel %vm9579, %v9572, %v9576
        %v9581 = vand.u32 2147483647, %v8892
        %vm9582 = vcmp.eq.f32.partialorder %v9581, 8.507059e+37
        %v9583 = vand.u32 %v8892, 2147483648
        %v9584 = vor.u32 1.1754944e-38, %v9583
        %v9585 = vsel %vm9582, %v9584, %v9580
        %v9586 = vmul.f32 1.0, %v9585
        %v9587 = vrcp.pop %v8893
        %v9588 = vmul.f32 %v8893, %v9587
        %v9589 = vsub.f32 1.0, %v9588
        %v9590 = vmul.f32 %v9587, %v9589
        %v9591 = vadd.f32 %v9587, %v9590
        %vm9592 = vweird.f32 %v8893
        %vm9593 = vweird.f32 %v9587
        %vm9594 = vmor %vm9592, %vm9593
        %v9595 = vsel %vm9594, %v9587, %v9591
        %v9596 = vand.u32 2147483647, %v8893
        %vm9597 = vcmp.eq.f32.partialorder %v9596, 8.507059e+37
        %v9598 = vand.u32 %v8893, 2147483648
        %v9599 = vor.u32 1.1754944e-38, %v9598
        %v9600 = vsel %vm9597, %v9599, %v9595
        %v9601 = vmul.f32 1.0, %v9600
        %v9602 = vrcp.pop %v8894
        %v9603 = vmul.f32 %v8894, %v9602
        %v9604 = vsub.f32 1.0, %v9603
        %v9605 = vmul.f32 %v9602, %v9604
        %v9606 = vadd.f32 %v9602, %v9605
        %vm9607 = vweird.f32 %v8894
        %vm9608 = vweird.f32 %v9602
        %vm9609 = vmor %vm9607, %vm9608
        %v9610 = vsel %vm9609, %v9602, %v9606
        %v9611 = vand.u32 2147483647, %v8894
        %vm9612 = vcmp.eq.f32.partialorder %v9611, 8.507059e+37
        %v9613 = vand.u32 %v8894, 2147483648
        %v9614 = vor.u32 1.1754944e-38, %v9613
        %v9615 = vsel %vm9612, %v9614, %v9610
        %v9616 = vmul.f32 1.0, %v9615
        %v9617 = vrcp.pop %v8895
        %v9618 = vmul.f32 %v8895, %v9617
        %v9619 = vsub.f32 1.0, %v9618
        %v9620 = vmul.f32 %v9617, %v9619
        %v9621 = vadd.f32 %v9617, %v9620
        %vm9622 = vweird.f32 %v8895
        %vm9623 = vweird.f32 %v9617
        %vm9624 = vmor %vm9622, %vm9623
        %v9625 = vsel %vm9624, %v9617, %v9621
        %v9626 = vand.u32 2147483647, %v8895
        %vm9627 = vcmp.eq.f32.partialorder %v9626, 8.507059e+37
        %v9628 = vand.u32 %v8895, 2147483648
        %v9629 = vor.u32 1.1754944e-38, %v9628
        %v9630 = vsel %vm9627, %v9629, %v9625
        %v9631 = vmul.f32 1.0, %v9630
        %v9632 = vrcp.pop %v8896
        %v9633 = vmul.f32 %v8896, %v9632
        %v9634 = vsub.f32 1.0, %v9633
        %v9635 = vmul.f32 %v9632, %v9634
        %v9636 = vadd.f32 %v9632, %v9635
        %vm9637 = vweird.f32 %v8896
        %vm9638 = vweird.f32 %v9632
        %vm9639 = vmor %vm9637, %vm9638
        %v9640 = vsel %vm9639, %v9632, %v9636
        %v9641 = vand.u32 2147483647, %v8896
        %vm9642 = vcmp.eq.f32.partialorder %v9641, 8.507059e+37
        %v9643 = vand.u32 %v8896, 2147483648
        %v9644 = vor.u32 1.1754944e-38, %v9643
        %v9645 = vsel %vm9642, %v9644, %v9640
        %v9646 = vmul.f32 1.0, %v9645
        %v9647 = vrcp.pop %v8897
        %v9648 = vmul.f32 %v8897, %v9647
        %v9649 = vsub.f32 1.0, %v9648
        %v9650 = vmul.f32 %v9647, %v9649
        %v9651 = vadd.f32 %v9647, %v9650
        %vm9652 = vweird.f32 %v8897
        %vm9653 = vweird.f32 %v9647
        %vm9654 = vmor %vm9652, %vm9653
        %v9655 = vsel %vm9654, %v9647, %v9651
        %v9656 = vand.u32 2147483647, %v8897
        %vm9657 = vcmp.eq.f32.partialorder %v9656, 8.507059e+37
        %v9658 = vand.u32 %v8897, 2147483648
        %v9659 = vor.u32 1.1754944e-38, %v9658
        %v9660 = vsel %vm9657, %v9659, %v9655
        %v9661 = vmul.f32 1.0, %v9660
        %v9662 = vrcp.pop %v8898
        %v9663 = vmul.f32 %v8898, %v9662
        %v9664 = vsub.f32 1.0, %v9663
        %v9665 = vmul.f32 %v9662, %v9664
        %v9666 = vadd.f32 %v9662, %v9665
        %vm9667 = vweird.f32 %v8898
        %vm9668 = vweird.f32 %v9662
        %vm9669 = vmor %vm9667, %vm9668
        %v9670 = vsel %vm9669, %v9662, %v9666
        %v9671 = vand.u32 2147483647, %v8898
        %vm9672 = vcmp.eq.f32.partialorder %v9671, 8.507059e+37
        %v9673 = vand.u32 %v8898, 2147483648
        %v9674 = vor.u32 1.1754944e-38, %v9673
        %v9675 = vsel %vm9672, %v9674, %v9670
        %v9676 = vmul.f32 1.0, %v9675
        %v9677 = vrcp.pop %v8899
        %v9678 = vmul.f32 %v8899, %v9677
        %v9679 = vsub.f32 1.0, %v9678
        %v9680 = vmul.f32 %v9677, %v9679
        %v9681 = vadd.f32 %v9677, %v9680
        %vm9682 = vweird.f32 %v8899
        %vm9683 = vweird.f32 %v9677
        %vm9684 = vmor %vm9682, %vm9683
        %v9685 = vsel %vm9684, %v9677, %v9681
        %v9686 = vand.u32 2147483647, %v8899
        %vm9687 = vcmp.eq.f32.partialorder %v9686, 8.507059e+37
        %v9688 = vand.u32 %v8899, 2147483648
        %v9689 = vor.u32 1.1754944e-38, %v9688
        %v9690 = vsel %vm9687, %v9689, %v9685
        %v9691 = vmul.f32 1.0, %v9690
        %v9692 = vrcp.pop %v8900
        %v9693 = vmul.f32 %v8900, %v9692
        %v9694 = vsub.f32 1.0, %v9693
        %v9695 = vmul.f32 %v9692, %v9694
        %v9696 = vadd.f32 %v9692, %v9695
        %vm9697 = vweird.f32 %v8900
        %vm9698 = vweird.f32 %v9692
        %vm9699 = vmor %vm9697, %vm9698
        %v9700 = vsel %vm9699, %v9692, %v9696
        %v9701 = vand.u32 2147483647, %v8900
        %vm9702 = vcmp.eq.f32.partialorder %v9701, 8.507059e+37
        %v9703 = vand.u32 %v8900, 2147483648
        %v9704 = vor.u32 1.1754944e-38, %v9703
        %v9705 = vsel %vm9702, %v9704, %v9700
        %v9706 = vmul.f32 1.0, %v9705
        %v9707 = vrcp.pop %v8901
        %v9708 = vmul.f32 %v8901, %v9707
        %v9709 = vsub.f32 1.0, %v9708
        %v9710 = vmul.f32 %v9707, %v9709
        %v9711 = vadd.f32 %v9707, %v9710
        %vm9712 = vweird.f32 %v8901
        %vm9713 = vweird.f32 %v9707
        %vm9714 = vmor %vm9712, %vm9713
        %v9715 = vsel %vm9714, %v9707, %v9711
        %v9716 = vand.u32 2147483647, %v8901
        %vm9717 = vcmp.eq.f32.partialorder %v9716, 8.507059e+37
        %v9718 = vand.u32 %v8901, 2147483648
        %v9719 = vor.u32 1.1754944e-38, %v9718
        %v9720 = vsel %vm9717, %v9719, %v9715
        %v9721 = vmul.f32 1.0, %v9720
        %v9722 = vrcp.pop %v8902
        %v9723 = vmul.f32 %v8902, %v9722
        %v9724 = vsub.f32 1.0, %v9723
        %v9725 = vmul.f32 %v9722, %v9724
        %v9726 = vadd.f32 %v9722, %v9725
        %vm9727 = vweird.f32 %v8902
        %vm9728 = vweird.f32 %v9722
        %vm9729 = vmor %vm9727, %vm9728
        %v9730 = vsel %vm9729, %v9722, %v9726
        %v9731 = vand.u32 2147483647, %v8902
        %vm9732 = vcmp.eq.f32.partialorder %v9731, 8.507059e+37
        %v9733 = vand.u32 %v8902, 2147483648
        %v9734 = vor.u32 1.1754944e-38, %v9733
        %v9735 = vsel %vm9732, %v9734, %v9730
        %v9736 = vmul.f32 1.0, %v9735
        %v9737 = vrcp.pop %v8903
        %v9738 = vmul.f32 %v8903, %v9737
        %v9739 = vsub.f32 1.0, %v9738
        %v9740 = vmul.f32 %v9737, %v9739
        %v9741 = vadd.f32 %v9737, %v9740
        %vm9742 = vweird.f32 %v8903
        %vm9743 = vweird.f32 %v9737
        %vm9744 = vmor %vm9742, %vm9743
        %v9745 = vsel %vm9744, %v9737, %v9741
        %v9746 = vand.u32 2147483647, %v8903
        %vm9747 = vcmp.eq.f32.partialorder %v9746, 8.507059e+37
        %v9748 = vand.u32 %v8903, 2147483648
        %v9749 = vor.u32 1.1754944e-38, %v9748
        %v9750 = vsel %vm9747, %v9749, %v9745
        %v9751 = vmul.f32 1.0, %v9750
        %v9752 = vrcp.pop %v8904
        %v9753 = vmul.f32 %v8904, %v9752
        %v9754 = vsub.f32 1.0, %v9753
        %v9755 = vmul.f32 %v9752, %v9754
        %v9756 = vadd.f32 %v9752, %v9755
        %vm9757 = vweird.f32 %v8904
        %vm9758 = vweird.f32 %v9752
        %vm9759 = vmor %vm9757, %vm9758
        %v9760 = vsel %vm9759, %v9752, %v9756
        %v9761 = vand.u32 2147483647, %v8904
        %vm9762 = vcmp.eq.f32.partialorder %v9761, 8.507059e+37
        %v9763 = vand.u32 %v8904, 2147483648
        %v9764 = vor.u32 1.1754944e-38, %v9763
        %v9765 = vsel %vm9762, %v9764, %v9760
        %v9766 = vmul.f32 1.0, %v9765
        %v9767 = vrcp.pop %v8905
        %v9768 = vmul.f32 %v8905, %v9767
        %v9769 = vsub.f32 1.0, %v9768
        %v9770 = vmul.f32 %v9767, %v9769
        %v9771 = vadd.f32 %v9767, %v9770
        %vm9772 = vweird.f32 %v8905
        %vm9773 = vweird.f32 %v9767
        %vm9774 = vmor %vm9772, %vm9773
        %v9775 = vsel %vm9774, %v9767, %v9771
        %v9776 = vand.u32 2147483647, %v8905
        %vm9777 = vcmp.eq.f32.partialorder %v9776, 8.507059e+37
        %v9778 = vand.u32 %v8905, 2147483648
        %v9779 = vor.u32 1.1754944e-38, %v9778
        %v9780 = vsel %vm9777, %v9779, %v9775
        %v9781 = vmul.f32 1.0, %v9780
        %v9782 = vrcp.pop %v8906
        %v9783 = vmul.f32 %v8906, %v9782
        %v9784 = vsub.f32 1.0, %v9783
        %v9785 = vmul.f32 %v9782, %v9784
        %v9786 = vadd.f32 %v9782, %v9785
        %vm9787 = vweird.f32 %v8906
        %vm9788 = vweird.f32 %v9782
        %vm9789 = vmor %vm9787, %vm9788
        %v9790 = vsel %vm9789, %v9782, %v9786
        %v9791 = vand.u32 2147483647, %v8906
        %vm9792 = vcmp.eq.f32.partialorder %v9791, 8.507059e+37
        %v9793 = vand.u32 %v8906, 2147483648
        %v9794 = vor.u32 1.1754944e-38, %v9793
        %v9795 = vsel %vm9792, %v9794, %v9790
        %v9796 = vmul.f32 1.0, %v9795
        %v9797 = vrcp.pop %v8907
        %v9798 = vmul.f32 %v8907, %v9797
        %v9799 = vsub.f32 1.0, %v9798
        %v9800 = vmul.f32 %v9797, %v9799
        %v9801 = vadd.f32 %v9797, %v9800
        %vm9802 = vweird.f32 %v8907
        %vm9803 = vweird.f32 %v9797
        %vm9804 = vmor %vm9802, %vm9803
        %v9805 = vsel %vm9804, %v9797, %v9801
        %v9806 = vand.u32 2147483647, %v8907
        %vm9807 = vcmp.eq.f32.partialorder %v9806, 8.507059e+37
        %v9808 = vand.u32 %v8907, 2147483648
        %v9809 = vor.u32 1.1754944e-38, %v9808
        %v9810 = vsel %vm9807, %v9809, %v9805
        %v9811 = vmul.f32 1.0, %v9810
        %v9812 = vrcp.pop %v8908
        %v9813 = vmul.f32 %v8908, %v9812
        %v9814 = vsub.f32 1.0, %v9813
        %v9815 = vmul.f32 %v9812, %v9814
        %v9816 = vadd.f32 %v9812, %v9815
        %vm9817 = vweird.f32 %v8908
        %vm9818 = vweird.f32 %v9812
        %vm9819 = vmor %vm9817, %vm9818
        %v9820 = vsel %vm9819, %v9812, %v9816
        %v9821 = vand.u32 2147483647, %v8908
        %vm9822 = vcmp.eq.f32.partialorder %v9821, 8.507059e+37
        %v9823 = vand.u32 %v8908, 2147483648
        %v9824 = vor.u32 1.1754944e-38, %v9823
        %v9825 = vsel %vm9822, %v9824, %v9820
        %v9826 = vmul.f32 1.0, %v9825
        %v9827 = vrcp.pop %v8909
        %v9828 = vmul.f32 %v8909, %v9827
        %v9829 = vsub.f32 1.0, %v9828
        %v9830 = vmul.f32 %v9827, %v9829
        %v9831 = vadd.f32 %v9827, %v9830
        %vm9832 = vweird.f32 %v8909
        %vm9833 = vweird.f32 %v9827
        %vm9834 = vmor %vm9832, %vm9833
        %v9835 = vsel %vm9834, %v9827, %v9831
        %v9836 = vand.u32 2147483647, %v8909
        %vm9837 = vcmp.eq.f32.partialorder %v9836, 8.507059e+37
        %v9838 = vand.u32 %v8909, 2147483648
        %v9839 = vor.u32 1.1754944e-38, %v9838
        %v9840 = vsel %vm9837, %v9839, %v9835
        %v9841 = vmul.f32 1.0, %v9840
        %v9842 = vrcp.pop %v8910
        %v9843 = vmul.f32 %v8910, %v9842
        %v9844 = vsub.f32 1.0, %v9843
        %v9845 = vmul.f32 %v9842, %v9844
        %v9846 = vadd.f32 %v9842, %v9845
        %vm9847 = vweird.f32 %v8910
        %vm9848 = vweird.f32 %v9842
        %vm9849 = vmor %vm9847, %vm9848
        %v9850 = vsel %vm9849, %v9842, %v9846
        %v9851 = vand.u32 2147483647, %v8910
        %vm9852 = vcmp.eq.f32.partialorder %v9851, 8.507059e+37
        %v9853 = vand.u32 %v8910, 2147483648
        %v9854 = vor.u32 1.1754944e-38, %v9853
        %v9855 = vsel %vm9852, %v9854, %v9850
        %v9856 = vmul.f32 1.0, %v9855
        %v9857 = vrcp.pop %v8911
        %v9858 = vmul.f32 %v8911, %v9857
        %v9859 = vsub.f32 1.0, %v9858
        %v9860 = vmul.f32 %v9857, %v9859
        %v9861 = vadd.f32 %v9857, %v9860
        %vm9862 = vweird.f32 %v8911
        %vm9863 = vweird.f32 %v9857
        %vm9864 = vmor %vm9862, %vm9863
        %v9865 = vsel %vm9864, %v9857, %v9861
        %v9866 = vand.u32 2147483647, %v8911
        %vm9867 = vcmp.eq.f32.partialorder %v9866, 8.507059e+37
        %v9868 = vand.u32 %v8911, 2147483648
        %v9869 = vor.u32 1.1754944e-38, %v9868
        %v9870 = vsel %vm9867, %v9869, %v9865
        %v9871 = vmul.f32 1.0, %v9870
        %v9872 = vmul.f32 %v8592, %v8926
        %v9873 = vmul.f32 %v8593, %v8941
        %v9874 = vmul.f32 %v8594, %v8956
        %v9875 = vmul.f32 %v8595, %v8971
        %v9876 = vmul.f32 %v8596, %v8986
        %v9877 = vmul.f32 %v8597, %v9001
        %v9878 = vmul.f32 %v8598, %v9016
        %v9879 = vmul.f32 %v8599, %v9031
        %v9880 = vmul.f32 %v8600, %v9046
        %v9881 = vmul.f32 %v8601, %v9061
        %v9882 = vmul.f32 %v8602, %v9076
        %v9883 = vmul.f32 %v8603, %v9091
        %v9884 = vmul.f32 %v8604, %v9106
        %v9885 = vmul.f32 %v8605, %v9121
        %v9886 = vmul.f32 %v8606, %v9136
        %v9887 = vmul.f32 %v8607, %v9151
        %v9888 = vmul.f32 %v8608, %v9166
        %v9889 = vmul.f32 %v8609, %v9181
        %v9890 = vmul.f32 %v8610, %v9196
        %v9891 = vmul.f32 %v8611, %v9211
        %v9892 = vmul.f32 %v8612, %v9226
        %v9893 = vmul.f32 %v8613, %v9241
        %v9894 = vmul.f32 %v8614, %v9256
        %v9895 = vmul.f32 %v8615, %v9271
        %v9896 = vmul.f32 %v8616, %v9286
        %v9897 = vmul.f32 %v8617, %v9301
        %v9898 = vmul.f32 %v8618, %v9316
        %v9899 = vmul.f32 %v8619, %v9331
        %v9900 = vmul.f32 %v8620, %v9346
        %v9901 = vmul.f32 %v8621, %v9361
        %v9902 = vmul.f32 %v8622, %v9376
        %v9903 = vmul.f32 %v8623, %v9391
        %v9904 = vmul.f32 %v8624, %v9406
        %v9905 = vmul.f32 %v8625, %v9421
        %v9906 = vmul.f32 %v8626, %v9436
        %v9907 = vmul.f32 %v8627, %v9451
        %v9908 = vmul.f32 %v8628, %v9466
        %v9909 = vmul.f32 %v8629, %v9481
        %v9910 = vmul.f32 %v8630, %v9496
        %v9911 = vmul.f32 %v8631, %v9511
        %v9912 = vmul.f32 %v8632, %v9526
        %v9913 = vmul.f32 %v8633, %v9541
        %v9914 = vmul.f32 %v8634, %v9556
        %v9915 = vmul.f32 %v8635, %v9571
        %v9916 = vmul.f32 %v8636, %v9586
        %v9917 = vmul.f32 %v8637, %v9601
        %v9918 = vmul.f32 %v8638, %v9616
        %v9919 = vmul.f32 %v8639, %v9631
        %v9920 = vmul.f32 %v8640, %v9646
        %v9921 = vmul.f32 %v8641, %v9661
        %v9922 = vmul.f32 %v8642, %v9676
        %v9923 = vmul.f32 %v8643, %v9691
        %v9924 = vmul.f32 %v8644, %v9706
        %v9925 = vmul.f32 %v8645, %v9721
        %v9926 = vmul.f32 %v8646, %v9736
        %v9927 = vmul.f32 %v8647, %v9751
        %v9928 = vmul.f32 %v8648, %v9766
        %v9929 = vmul.f32 %v8649, %v9781
        %v9930 = vmul.f32 %v8650, %v9796
        %v9931 = vmul.f32 %v8651, %v9811
        %v9932 = vmul.f32 %v8652, %v9826
        %v9933 = vmul.f32 %v8653, %v9841
        %v9934 = vmul.f32 %v8654, %v9856
        %v9935 = vmul.f32 %v8655, %v9871
        %v10000 = vperm.slane %v9872, 0
        %v10001 = vperm.slane %v9873, 0
        %v10002 = vperm.slane %v9874, 0
        %v10003 = vperm.slane %v9875, 0
        %v10004 = vperm.slane %v9876, 0
        %v10005 = vperm.slane %v9877, 0
        %v10006 = vperm.slane %v9878, 0
        %v10007 = vperm.slane %v9879, 0
        %v10008 = vperm.slane %v9880, 0
        %v10009 = vperm.slane %v9881, 0
        %v10010 = vperm.slane %v9882, 0
        %v10011 = vperm.slane %v9883, 0
        %v10012 = vperm.slane %v9884, 0
        %v10013 = vperm.slane %v9885, 0
        %v10014 = vperm.slane %v9886, 0
        %v10015 = vperm.slane %v9887, 0
        %v10016 = vperm.slane %v9888, 0
        %v10017 = vperm.slane %v9889, 0
        %v10018 = vperm.slane %v9890, 0
        %v10019 = vperm.slane %v9891, 0
        %v10020 = vperm.slane %v9892, 0
        %v10021 = vperm.slane %v9893, 0
        %v10022 = vperm.slane %v9894, 0
        %v10023 = vperm.slane %v9895, 0
        %v10024 = vperm.slane %v9896, 0
        %v10025 = vperm.slane %v9897, 0
        %v10026 = vperm.slane %v9898, 0
        %v10027 = vperm.slane %v9899, 0
        %v10028 = vperm.slane %v9900, 0
        %v10029 = vperm.slane %v9901, 0
        %v10030 = vperm.slane %v9902, 0
        %v10031 = vperm.slane %v9903, 0
        %v10032 = vperm.slane %v9904, 0
        %v10033 = vperm.slane %v9905, 0
        %v10034 = vperm.slane %v9906, 0
        %v10035 = vperm.slane %v9907, 0
        %v10036 = vperm.slane %v9908, 0
        %v10037 = vperm.slane %v9909, 0
        %v10038 = vperm.slane %v9910, 0
        %v10039 = vperm.slane %v9911, 0
        %v10040 = vperm.slane %v9912, 0
        %v10041 = vperm.slane %v9913, 0
        %v10042 = vperm.slane %v9914, 0
        %v10043 = vperm.slane %v9915, 0
        %v10044 = vperm.slane %v9916, 0
        %v10045 = vperm.slane %v9917, 0
        %v10046 = vperm.slane %v9918, 0
        %v10047 = vperm.slane %v9919, 0
        %v10048 = vperm.slane %v9920, 0
        %v10049 = vperm.slane %v9921, 0
        %v10050 = vperm.slane %v9922, 0
        %v10051 = vperm.slane %v9923, 0
        %v10052 = vperm.slane %v9924, 0
        %v10053 = vperm.slane %v9925, 0
        %v10054 = vperm.slane %v9926, 0
        %v10055 = vperm.slane %v9927, 0
        %v10056 = vperm.slane %v9928, 0
        %v10057 = vperm.slane %v9929, 0
        %v10058 = vperm.slane %v9930, 0
        %v10059 = vperm.slane %v9931, 0
        %v10060 = vperm.slane %v9932, 0
        %v10061 = vperm.slane %v9933, 0
        %v10062 = vperm.slane %v9934, 0
        %v10063 = vperm.slane %v9935, 0
        %vm10064 = vcmask 1041409
        %v10065 = vsel %vm10064, %v10001, %v10000
        %vm10066 = vcmask 1042434
        %v10067 = vsel %vm10066, %v10002, %v10065
        %vm10068 = vcmask 1043459
        %v10069 = vsel %vm10068, %v10003, %v10067
        %vm10070 = vcmask 1044484
        %v10071 = vsel %vm10070, %v10004, %v10069
        %vm10072 = vcmask 1045509
        %v10073 = vsel %vm10072, %v10005, %v10071
        %vm10074 = vcmask 1046534
        %v10075 = vsel %vm10074, %v10006, %v10073
        %vm10076 = vcmask 1047559
        %v10077 = vsel %vm10076, %v10007, %v10075
        %v10078 = vsel %vm10064, %v10009, %v10008
        %v10079 = vsel %vm10066, %v10010, %v10078
        %v10080 = vsel %vm10068, %v10011, %v10079
        %v10081 = vsel %vm10070, %v10012, %v10080
        %v10082 = vsel %vm10072, %v10013, %v10081
        %v10083 = vsel %vm10074, %v10014, %v10082
        %v10084 = vsel %vm10076, %v10015, %v10083
        %v10085 = vsel %vm10064, %v10017, %v10016
        %v10086 = vsel %vm10066, %v10018, %v10085
        %v10087 = vsel %vm10068, %v10019, %v10086
        %v10088 = vsel %vm10070, %v10020, %v10087
        %v10089 = vsel %vm10072, %v10021, %v10088
        %v10090 = vsel %vm10074, %v10022, %v10089
        %v10091 = vsel %vm10076, %v10023, %v10090
        %v10092 = vsel %vm10064, %v10025, %v10024
        %v10093 = vsel %vm10066, %v10026, %v10092
        %v10094 = vsel %vm10068, %v10027, %v10093
        %v10095 = vsel %vm10070, %v10028, %v10094
        %v10096 = vsel %vm10072, %v10029, %v10095
        %v10097 = vsel %vm10074, %v10030, %v10096
        %v10098 = vsel %vm10076, %v10031, %v10097
        %v10099 = vsel %vm10064, %v10033, %v10032
        %v10100 = vsel %vm10066, %v10034, %v10099
        %v10101 = vsel %vm10068, %v10035, %v10100
        %v10102 = vsel %vm10070, %v10036, %v10101
        %v10103 = vsel %vm10072, %v10037, %v10102
        %v10104 = vsel %vm10074, %v10038, %v10103
        %v10105 = vsel %vm10076, %v10039, %v10104
        %v10106 = vsel %vm10064, %v10041, %v10040
        %v10107 = vsel %vm10066, %v10042, %v10106
        %v10108 = vsel %vm10068, %v10043, %v10107
        %v10109 = vsel %vm10070, %v10044, %v10108
        %v10110 = vsel %vm10072, %v10045, %v10109
        %v10111 = vsel %vm10074, %v10046, %v10110
        %v10112 = vsel %vm10076, %v10047, %v10111
        %v10113 = vsel %vm10064, %v10049, %v10048
        %v10114 = vsel %vm10066, %v10050, %v10113
        %v10115 = vsel %vm10068, %v10051, %v10114
        %v10116 = vsel %vm10070, %v10052, %v10115
        %v10117 = vsel %vm10072, %v10053, %v10116
        %v10118 = vsel %vm10074, %v10054, %v10117
        %v10119 = vsel %vm10076, %v10055, %v10118
        %v10120 = vsel %vm10064, %v10057, %v10056
        %v10121 = vsel %vm10066, %v10058, %v10120
        %v10122 = vsel %vm10068, %v10059, %v10121
        %v10123 = vsel %vm10070, %v10060, %v10122
        %v10124 = vsel %vm10072, %v10061, %v10123
        %v10125 = vsel %vm10074, %v10062, %v10124
        %v10126 = vsel %vm10076, %v10063, %v10125
        %10135 = vst.msk [vmem:[%s417] sm:$0xff] %vm472, %v10077
        %10136 = vst.msk [vmem:[%s417 + $0x8] sm:$0xff] %vm472, %v10084
        %10137 = vst.msk [vmem:[%s417 + $0x10] sm:$0xff] %vm472, %v10091
        %10138 = vst.msk [vmem:[%s417 + $0x18] sm:$0xff] %vm472, %v10098
        %10139 = vst.msk [vmem:[%s417 + $0x20] sm:$0xff] %vm472, %v10105
        %10140 = vst.msk [vmem:[%s417 + $0x28] sm:$0xff] %vm472, %v10112
        %10141 = vst.msk [vmem:[%s417 + $0x30] sm:$0xff] %vm472, %v10119
        %10142 = vst.msk [vmem:[%s417 + $0x38] sm:$0xff] %vm472, %v10126
        %s10143 = sand.u32 %s296, 1
        %s10144 = scalar_lea.sflag [#allocation8], %s10143
        %s10145 = sand.u32 %s296, 1
        %s10146 = smul.addr %s10145, 64
        %s10147 = scalar_lea.vmem [#allocation7], %s10146
        // Predicated region
        $region69: #{tpu_custom_call.1} parent=67 // pred_check
          %p10148 = pneg %p306
        $region70: #{tpu_custom_call.1} parent=67 // pred_check_branch
          %10150 = sbr.rel (%p10148) target = $region72
        $region71: #{tpu_custom_call.1} parent=67 // pred_region
          %10152 = vsyncadd %s10144, 0
          %s10153 = smul.addr %s26, 8
          %s10154 = smul.addr %s10153, 8
          %s10155 = scalar_lea.hbm %s12, %s10154
          %s10156 = sshll.u32 %s10147, 4
          %s10157 = int_to_ptr.vmem [resolvable:$true] %s10156
          %s10158 = sshll.u32 %s10155, 4
          %s10159 = int_to_ptr.hbm [resolvable:$true] %s10158
          %10164 = dma.vmem_to_hbm [thread:$0]  %s10157, 1024, %s10159, %s10144, 128, 128, 8
        $region72: #{tpu_custom_call.1} parent=67 // pred_fallthru
          _
      $region68: #{tpu_custom_call.1} parent=5 // pred_fallthru
        _
      %p10165 = scmp.le.s32.totalorder 2, %s21
      // Predicated region
      $region73: #{tpu_custom_call.1} parent=5 // pred_check
        %p10166 = pneg %p10165
      $region74: #{tpu_custom_call.1} parent=5 // pred_check_branch
        %10168 = sbr.rel (%p10166) target = $region76
      $region75: #{tpu_custom_call.1} parent=5 // pred_region
        %s10169 = ssub.s32 %s21, 2
        // Predicated region
        $region77: #{tpu_custom_call.1} parent=75 // pred_check
          %p10170 = pneg %p312
        $region78: #{tpu_custom_call.1} parent=75 // pred_check_branch
          %10172 = sbr.rel (%p10170) target = $region80
        $region79: #{tpu_custom_call.1} parent=75 // pred_region
          %s10173 = sand.u32 %s297, 1
          %s10174 = scalar_lea.sflag [#allocation8], %s10173
          %s10175 = sand.u32 %s297, 1
          %s10176 = smul.addr %s10175, 64
          %s10177 = scalar_lea.vmem [#allocation7], %s10176
          %10179 = dma.done %s10174, 1024
        $region80: #{tpu_custom_call.1} parent=75 // pred_fallthru
          _
      $region76: #{tpu_custom_call.1} parent=5 // pred_fallthru
        _
    $region6: #{tpu_custom_call.1} parent=1 // loop_footer
      %s25 = sadd.s32 1, %s21
    $region7: #{tpu_custom_call.1} parent=1 // loop_footer_branch
      %20 = sbr.rel target = $region3
    $region8: #{tpu_custom_call.1} parent=1 // loop_exit
      _
    %10180 = vsyncpa [#allocation8], 1
    %s10181 = scalar_lea.sflag [#allocation8], 1
    %10182 = vsyncpa %s10181, 1

</llo_original>
